<compile_context>
chip_gen: v7x
topology: tpu7x:2x2x1
jax: 0.10.0
libtpu: 0.0.40
codegen_flags: <defaults>
</compile_context>

<pallas_src>
import functools

import jax
import jax.numpy as jnp
import numpy as np
from jax import lax
from jax.experimental import pallas as pl
from jax.experimental.pallas import tpu as pltpu

F32_EPS = float(jnp.finfo(jnp.float32).eps)  # TAC GroupNorm eps (torch f32 eps)
GN_EPS = 1e-8                                # nn.GroupNorm eps inside DepthConv1d
LANE = 128

# packed per-block column-parameter slab layout (each entry is a (C, 1) column)
_COL_ORDER = ("b1", "b2", "b3", "gamma", "beta", "b_in",
              "g1_w", "g1_b", "db", "g2_w", "g2_b", "b_res")
_NCOL = len(_COL_ORDER)
(_B1, _B2, _B3, _GAMMA, _BETA, _BIN,
 _G1W, _G1B, _DB, _G2W, _G2B, _BRES) = range(_NCOL)


def _prelu(x, a):
    return jnp.where(x >= 0, x, a * x)


# --------------------------- fused GC_TCN kernel -----------------------------
def _gc_tcn_chunk_kernel(x_ref,
                         w1_ref, w2_ref, w3_ref, win_ref, wres_ref, dw_ref,
                         cols_ref, mred_ref, mbc_ref, masks_ref,
                         alphas_ref,                  # SMEM (NB*5,) PReLU slopes
                         o_ref,
                         tac_ref,                     # VMEM scratch (Nd, Wl)
                         *, num_group, bblk, lp, block_offsets, offset_row):
    G = num_group
    NB = w1_ref.shape[0]
    Hh = w1_ref.shape[1]
    Hc = win_ref.shape[1]
    Nd = x_ref.shape[0]
    Wl = x_ref.shape[1]
    BLw = bblk * lp

    cols = cols_ref[...]                   # (Cmax, NB*_NCOL) packed biases/gains
    mred = mred_ref[...]                   # (Wl, S)  segment reduce (mask & 1/L folded in)
    mbc = mbc_ref[...]                     # (S, Wl)  segment broadcast-back
    masks = masks_ref[...]                 # (R, Wl)  row0 = valid, rows 1.. per tap offset
    valid = masks[0:1, :] > 0.5            # hoisted once
    tap_valid = {}                         # offset -> hoisted bool mask

    def col_param(blk, j, rows):
        c = blk * _NCOL + j
        return cols[0:rows, c:c + 1]       # (rows, 1)

    def mm(w, a):
        # bf16 operands when the packed weights are bf16; accumulate in f32.
        return jnp.dot(w, a.astype(w.dtype), preferred_element_type=jnp.float32)

    def gnorm(z, weight, bias, eps, inv_c):
        # GroupNorm(1, C) per (batch, group) segment; stats batched on the MXU.
        zm = jnp.where(valid, z, 0.0)
        rows = jnp.concatenate(
            [jnp.sum(zm, axis=0, keepdims=True),
             jnp.sum(zm * zm, axis=0, keepdims=True)], axis=0)        # (2, Wl)
        seg = jnp.dot(rows, mred, preferred_element_type=jnp.float32)  # (2, S)
        stat = jnp.dot(seg, mbc, preferred_element_type=jnp.float32)   # (2, Wl)
        mu = stat[0:1, :] * inv_c
        var = stat[1:2, :] * inv_c - mu * mu
        return (z - mu) * lax.rsqrt(var + eps) * weight + bias

    cur = x_ref[...]                                          # (Nd, Wl) f32

    for blk in range(NB):                                      # fused block chain
        a_in = alphas_ref[blk * 5 + 0]
        a_mean = alphas_ref[blk * 5 + 1]
        a_out = alphas_ref[blk * 5 + 2]
        a1 = alphas_ref[blk * 5 + 3]
        a2 = alphas_ref[blk * 5 + 4]

        # --------------------------------- TAC -------------------------------
        y1 = _prelu(mm(w1_ref[blk], cur) + col_param(blk, _B1, Hh), a_in)
        msum = y1[:, 0:BLw]                                    # group mean
        for g in range(1, G):
            msum = msum + y1[:, g * BLw:(g + 1) * BLw]
        y2 = _prelu(mm(w2_ref[blk], msum * (1.0 / G))
                    + col_param(blk, _B2, Hh), a_mean)         # (Hh, Bblk*Lp)
        y2t = jnp.concatenate([y2] * G, axis=1) if G > 1 else y2
        stacked = jnp.concatenate([y1, y2t], axis=0)           # (2Hh, Wl)
        z = _prelu(mm(w3_ref[blk], stacked) + col_param(blk, _B3, Nd), a_out)
        zn = gnorm(z, col_param(blk, _GAMMA, Nd), col_param(blk, _BETA, Nd),
                   F32_EPS, 1.0 / Nd)
        tac_ref[...] = cur + zn            # TAC residual -> VMEM (frees vregs)

        # ----------------------------- DepthConv1d ---------------------------
        y = _prelu(mm(win_ref[blk], tac_ref[...]) + col_param(blk, _BIN, Hc), a1)
        y = gnorm(y, col_param(blk, _G1W, Hc), col_param(blk, _G1B, Hc),
                  GN_EPS, 1.0 / Hc)
        dwb = dw_ref[blk]                  # (Hc, K) f32 depthwise taps (VPU math)
        acc = None
        for k, off in enumerate(block_offsets[blk]):
            if off == 0:
                tap = y
            else:
                # tap[t] = y[t + off] within the segment, zero outside [0, L)
                tap = pltpu.roll(y, shift=(-off) % Wl, axis=1)
                if off not in tap_valid:
                    r = offset_row[off]
                    tap_valid[off] = masks[r:r + 1, :] > 0.5
                tap = jnp.where(tap_valid[off], tap, 0.0)
            term = dwb[:, k:k + 1] * tap
            acc = term if acc is None else acc + term
        y = _prelu(acc + col_param(blk, _DB, Hc), a2)
        y = gnorm(y, col_param(blk, _G2W, Hc), col_param(blk, _G2B, Hc),
                  GN_EPS, 1.0 / Hc)
        res = mm(wres_ref[blk], y) + col_param(blk, _BRES, Nd)  # 1x1 res conv
        cur = tac_ref[...] + res           # GC_TCN residual

    o_ref[...] = jnp.where(valid, cur, 0.0)


# --------------------------- sizing / VMEM helpers ----------------------------
def _padded_size(shape, itemsize):
    s = list(shape)
    s[-1] = -(-s[-1] // 128) * 128
    if len(s) >= 2:
        s[-2] = -(-s[-2] // 8) * 8
    n = 1
    for d in s:
        n *= d
    return n * itemsize


def _padded_bytes(a):
    return _padded_size(a.shape, a.dtype.itemsize)


def _vmem_cap_bytes():
    try:
        return int(pltpu.get_tpu_info().vmem_capacity_bytes) * 3 // 4
    except Exception:
        return 48 << 20        # conservative: 3/4 of v7x's 64 MiB physical VMEM


def _vmem_budget(nd, hh, hc, wl, param_bytes):
    f4 = 4
    io = 2 * 2 * nd * wl * f4                      # in + out blocks, double buffered
    live = 16 * max(2 * hh, hc, nd) * wl * f4      # generous wide f32 intermediates
    scratch = nd * wl * f4
    est = io + 2 * param_bytes + live + scratch
    return int(min(max(2 * est, 8 << 20), _vmem_cap_bytes()))


def _chunk_blocks(blocks, use_bf16, max_param_bytes):
    """Greedy split of the block chain so resident params fit the VMEM budget."""
    wb = 2 if use_bf16 else 4

    def blk_bytes(b):
        hh, nd = b["w1"].shape
        hc = b["w_in"].shape[0]
        k = b["dw"].shape[1]
        shapes = [(hh, nd), (hh, hh), (nd, 2 * hh), (hc, nd), (nd, hc)]
        n = sum(_padded_size(s, wb) for s in shapes)
        n += _padded_size((hc, k), 4) + _padded_size((max(hh, hc, nd), _NCOL), 4)
        return 2 * n                                # double-buffered const params

    chunks, cur, cur_bytes = [], [], 0
    for b in blocks:
        nb = blk_bytes(b)
        if cur and cur_bytes + nb > max_param_bytes:
            chunks.append(cur)
            cur, cur_bytes = [], 0
        cur.append(b)
        cur_bytes += nb
    if cur:
        chunks.append(cur)
    return chunks


def _const_map(ndim):
    return lambda c, _n=ndim: (0,) * _n


# ------------------------------ chunk launcher --------------------------------
def _run_gc_chunk(xr, blocks, *, G, Bblk, Lp, lv, mred, mbc, use_bf16):
    Nd, TOT = xr.shape
    Wl = G * Bblk * Lp
    Bc = TOT // Wl
    Hh = blocks[0]["w1"].shape[0]
    Hc = blocks[0]["w_in"].shape[0]
    K = blocks[0]["dw"].shape[1]
    wdt = jnp.bfloat16 if use_bf16 else jnp.float32

    # packed parameters: one array per weight type (leading block axis), one
    # column slab for every bias/gain, one SMEM vector for the PReLU slopes.
    W1 = jnp.stack([b["w1"] for b in blocks]).astype(wdt)
    W2 = jnp.stack([b["w2"] for b in blocks]).astype(wdt)
    W3 = jnp.stack([jnp.concatenate([b["w3a"], b["w3b"]], axis=1)
                    for b in blocks]).astype(wdt)
    WIN = jnp.stack([b["w_in"] for b in blocks]).astype(wdt)
    WRES = jnp.stack([b["w_res"] for b in blocks]).astype(wdt)
    DW = jnp.stack([b["dw"] for b in blocks]).astype(jnp.float32)

    Cmax = max(Hh, Hc, Nd)

    def _col(v):
        return jnp.pad(v.astype(jnp.float32), ((0, Cmax - v.shape[0]), (0, 0)))

    cols = jnp.concatenate([_col(b[name]) for b in blocks for name in _COL_ORDER],
                           axis=1)
    alphas = jnp.concatenate([b["alphas"] for b in blocks]).astype(jnp.float32)

    # per-block tap offsets + shared per-offset validity masks (built host-side)
    block_offsets = []
    offset_row = {}
    cs = np.arange(Wl) % Lp
    mask_rows = [cs < lv]
    for b in blocks:
        d, pad = int(b["dilation"]), int(b["padding"])
        offs = tuple(k * d - pad for k in range(K))
        block_offsets.append(offs)
        for off in offs:
            if off != 0 and off not in offset_row:
                offset_row[off] = len(mask_rows)
                mask_rows.append((cs + off >= 0) & (cs + off < lv))
    masks = jnp.asarray(np.stack(mask_rows).astype(np.float32))
    block_offsets = tuple(block_offsets)

    kernel = functools.partial(_gc_tcn_chunk_kernel, num_group=G, bblk=Bblk,
                               lp=Lp, block_offsets=block_offsets,
                               offset_row=offset_row)

    vmem_params = [W1, W2, W3, WIN, WRES, DW, cols, mred, mbc, masks]
    in_specs = [pl.BlockSpec((Nd, Wl), lambda c: (0, c))]
    in_specs += [pl.BlockSpec(q.shape, _const_map(q.ndim)) for q in vmem_params]
    in_specs += [pl.BlockSpec(memory_space=pltpu.MemorySpace.SMEM)]

    param_bytes = sum(_padded_bytes(q) for q in vmem_params)

    return pl.pallas_call(
        kernel,
        out_shape=jax.ShapeDtypeStruct((Nd, TOT), jnp.float32),
        grid=(Bc,),
        in_specs=in_specs,
        out_specs=pl.BlockSpec((Nd, Wl), lambda c: (0, c)),
        scratch_shapes=[pltpu.VMEM((Nd, Wl), jnp.float32)],
        input_output_aliases={0: 0},
        compiler_params=pltpu.CompilerParams(
            dimension_semantics=("parallel",),
            vmem_limit_bytes=_vmem_budget(Nd, Hh, Hc, Wl, param_bytes)),
    )(xr, *vmem_params, alphas)


# ------------------------------- GC_TCN glue ----------------------------------
def gc_tcn_forward(x, blocks, num_group, *, batch_chunks=None, use_bf16=False,
                   max_param_bytes=24 << 20):
    B, Nfull, L = x.shape
    G = num_group
    Nd = Nfull // G
    Lp = -(-L // LANE) * LANE
    if batch_chunks is None:
        batch_chunks = 2 if (B >= 2 and B % 2 == 0) else 1
    Bc = batch_chunks
    assert B % Bc == 0
    Bblk = B // Bc
    S = G * Bblk
    Wl = S * Lp

    # Fold (batch, group) into a lane-dense (Nd, Bc*G*Bblk*Lp) slab once in the
    # wrapper (free layout plumbing); all fused blocks reuse it.
    xr = x.reshape(B, G, Nd, L)
    if Lp != L:
        xr = jnp.pad(xr, ((0, 0), (0, 0), (0, 0), (0, Lp - L)))
    xr = xr.reshape(Bc, Bblk, G, Nd, Lp)
    xr = jnp.transpose(xr, (3, 0, 2, 1, 4)).reshape(Nd, Bc * Wl)

    # Per-(batch, group) GroupNorm segment reduce / broadcast matrices: the
    # valid-lane mask and the 1/L factor are folded into the reduce matrix.
    lane = np.arange(Wl)
    seg = lane // Lp
    valid = (lane % Lp) < L
    mred = jnp.asarray(((seg[:, None] == np.arange(S)[None, :]) & valid[:, None])
                       .astype(np.float32) / float(L))
    mbc = jnp.asarray((np.arange(S)[:, None] == seg[None, :]).astype(np.float32))

    for chunk in _chunk_blocks(blocks, use_bf16, max_param_bytes):
        xr = _run_gc_chunk(xr, chunk, G=G, Bblk=Bblk, Lp=Lp, lv=L,
                           mred=mred, mbc=mbc, use_bf16=use_bf16)

    xr = xr.reshape(Nd, Bc, G, Bblk, Lp)
    xr = jnp.transpose(xr, (1, 3, 2, 0, 4)).reshape(B, G, Nd, Lp)
    return xr[..., :L].reshape(B, Nfull, L)


def init_params(key, input_dim, hidden_dim, num_group, layer, stack, kernel):
    Nd = input_dim // num_group            # per-group input channels
    Hc = hidden_dim // num_group           # per-group TCN hidden channels
    Hh = hidden_dim * 3 // num_group       # TAC hidden size
    blocks = []
    for s in range(stack):
        for i in range(layer):
            key, *ks = jax.random.split(key, 14)

            def rnd(k, shape, scale=0.1):
                return (scale * jax.random.normal(k, shape)).astype(jnp.float32)

            blk = dict(
                # TAC
                w1=rnd(ks[0], (Hh, Nd)), b1=rnd(ks[1], (Hh, 1)),
                w2=rnd(ks[2], (Hh, Hh)), b2=rnd(ks[3], (Hh, 1)),
                w3a=rnd(ks[4], (Nd, Hh)), w3b=rnd(ks[5], (Nd, Hh)),
                b3=rnd(ks[6], (Nd, 1)),
                gamma=jnp.ones((Nd, 1), jnp.float32),
                beta=jnp.zeros((Nd, 1), jnp.float32),
                # DepthConv1d
                w_in=rnd(ks[7], (Hc, Nd)), b_in=rnd(ks[8], (Hc, 1)),
                g1_w=jnp.ones((Hc, 1), jnp.float32),
                g1_b=jnp.zeros((Hc, 1), jnp.float32),
                dw=rnd(ks[9], (Hc, kernel)), db=rnd(ks[10], (Hc, 1)),
                g2_w=jnp.ones((Hc, 1), jnp.float32),
                g2_b=jnp.zeros((Hc, 1), jnp.float32),
                w_res=rnd(ks[11], (Nd, Hc)), b_res=rnd(ks[12], (Nd, 1)),
                # PReLU slopes: [TAC in, TAC mean, TAC out, TCN 1, TCN 2]
                alphas=jnp.full((5,), 0.25, jnp.float32),
                dilation=2 ** i, padding=2 ** i,   # dilated=True path of GC_TCN
            )
            blocks.append(blk)
    return blocks


# --------------------------- pure-JAX reference -------------------------------
def _reference_forward(x, blocks, num_group):
    """Plain XLA reference of the same forward pass (for verification)."""
    def gn(v, w, b, eps):
        mu = jnp.mean(v, axis=(-2, -1), keepdims=True)
        var = jnp.mean((v - mu) ** 2, axis=(-2, -1), keepdims=True)
        return (v - mu) / jnp.sqrt(var + eps) * w + b

    B, Nf, L = x.shape
    G = num_group
    out = x.reshape(B, G, Nf // G, L)
    hp = lax.Precision.HIGHEST
    for p in blocks:
        a = p["alphas"]
        # TAC
        y1 = _prelu(jnp.einsum("hn,bgnl->bghl", p["w1"], out, precision=hp)
                    + p["b1"], a[0])
        m = _prelu(jnp.einsum("hk,bkl->bhl", p["w2"], jnp.mean(y1, axis=1),
                              precision=hp) + p["b2"], a[1])
        z = (jnp.einsum("nh,bghl->bgnl", p["w3a"], y1, precision=hp)
             + jnp.einsum("nh,bhl->bnl", p["w3b"], m, precision=hp)[:, None]
             + p["b3"])
        tac = out + gn(_prelu(z, a[2]), p["gamma"], p["beta"], F32_EPS)
        # DepthConv1d
        y = _prelu(jnp.einsum("hn,bgnl->bghl", p["w_in"], tac, precision=hp)
                   + p["b_in"], a[3])
        y = gn(y, p["g1_w"], p["g1_b"], GN_EPS)
        d, pad, K = int(p["dilation"]), int(p["padding"]), p["dw"].shape[1]
        ypad = jnp.pad(y, ((0, 0), (0, 0), (0, 0), (pad, pad)))
        conv = sum(p["dw"][:, k][None, None, :, None] * ypad[..., k * d:k * d + L]
                   for k in range(K)) + p["db"]
        y = gn(_prelu(conv, a[4]), p["g2_w"], p["g2_b"], GN_EPS)
        res = jnp.einsum("nh,bghl->bgnl", p["w_res"], y, precision=hp) + p["b_res"]
        out = tac + res
    return out.reshape(B, Nf, L)


if __name__ == "__main__":
    key = jax.random.PRNGKey(0)
    B, input_dim, hidden_dim, L = 4, 16, 16, 100   # L=100 exercises lane padding to 128
    num_group, layer, stack, kernel = 2, 2, 2, 3

    k_in, k_p = jax.random.split(key)
    x = jax.random.normal(k_in, (B, input_dim, L), jnp.float32)
    blocks = init_params(k_p, input_dim, hidden_dim, num_group, layer, stack, kernel)

    fwd = jax.jit(lambda v: gc_tcn_forward(v, blocks, num_group))
    out = jax.block_until_ready(fwd(x))

    assert out.shape == (B, input_dim, L)
    assert bool(jnp.all(jnp.isfinite(out)))

    ref = jax.block_until_ready(_reference_forward(x, blocks, num_group))
    err = float(jnp.max(jnp.abs(out - ref)))
    scale = float(jnp.max(jnp.abs(ref)))
    assert err <= 5e-3 * (1.0 + scale), f"kernel/reference mismatch: {err} (scale {scale})"

    print("KERNEL_OK")
</pallas_src>

<mosaic_0001>
module attributes {stable_mosaic.version = 11 : i64} {
  func.func @_gc_tcn_chunk_kernel(%arg0: i32, %arg1: memref<8x512xf32, #tpu.memory_space<vmem>>, %arg2: memref<4x24x8xf32, #tpu.memory_space<vmem>>, %arg3: memref<4x24x24xf32, #tpu.memory_space<vmem>>, %arg4: memref<4x8x48xf32, #tpu.memory_space<vmem>>, %arg5: memref<4x8x8xf32, #tpu.memory_space<vmem>>, %arg6: memref<4x8x8xf32, #tpu.memory_space<vmem>>, %arg7: memref<4x8x3xf32, #tpu.memory_space<vmem>>, %arg8: memref<24x48xf32, #tpu.memory_space<vmem>>, %arg9: memref<512x4xf32, #tpu.memory_space<vmem>>, %arg10: memref<4x512xf32, #tpu.memory_space<vmem>>, %arg11: memref<5x512xf32, #tpu.memory_space<vmem>>, %arg12: memref<20xf32, #tpu.memory_space<smem>>, %arg13: memref<8x512xf32, #tpu.memory_space<vmem>>, %arg14: memref<8x512xf32, #tpu.memory_space<vmem>>) attributes {dimension_semantics = [#tpu.dimension_semantics<parallel>], iteration_bounds = array<i64: 2>, scalar_prefetch = 0 : i64, scratch_operands = 1 : i64, tpu.core_type = #tpu.core_type<tc>, window_params = [{transform_indices = @transform_0, window_bounds = array<i64: 8, 512>}, {pipeline_mode = #tpu.pipeline_mode<synchronous>, transform_indices = @transform_1, window_bounds = array<i64: 4, 24, 8>}, {pipeline_mode = #tpu.pipeline_mode<synchronous>, transform_indices = @transform_2, window_bounds = array<i64: 4, 24, 24>}, {pipeline_mode = #tpu.pipeline_mode<synchronous>, transform_indices = @transform_3, window_bounds = array<i64: 4, 8, 48>}, {pipeline_mode = #tpu.pipeline_mode<synchronous>, transform_indices = @transform_4, window_bounds = array<i64: 4, 8, 8>}, {pipeline_mode = #tpu.pipeline_mode<synchronous>, transform_indices = @transform_5, window_bounds = array<i64: 4, 8, 8>}, {pipeline_mode = #tpu.pipeline_mode<synchronous>, transform_indices = @transform_6, window_bounds = array<i64: 4, 8, 3>}, {pipeline_mode = #tpu.pipeline_mode<synchronous>, transform_indices = @transform_7, window_bounds = array<i64: 24, 48>}, {pipeline_mode = #tpu.pipeline_mode<synchronous>, transform_indices = @transform_8, window_bounds = array<i64: 512, 4>}, {pipeline_mode = #tpu.pipeline_mode<synchronous>, transform_indices = @transform_9, window_bounds = array<i64: 4, 512>}, {pipeline_mode = #tpu.pipeline_mode<synchronous>, transform_indices = @transform_10, window_bounds = array<i64: 5, 512>}, {transform_indices = @transform_11, window_bounds = array<i64: 20>}, {transform_indices = @transform_12, window_bounds = array<i64: 8, 512>}]} {
    %c0 = arith.constant 0 : index
    %c0_0 = arith.constant 0 : index
    %0 = vector.load %arg8[%c0, %c0_0] : memref<24x48xf32, #tpu.memory_space<vmem>>, vector<24x48xf32>
    %c0_1 = arith.constant 0 : index
    %c0_2 = arith.constant 0 : index
    %1 = vector.load %arg9[%c0_1, %c0_2] : memref<512x4xf32, #tpu.memory_space<vmem>>, vector<512x4xf32>
    %c0_3 = arith.constant 0 : index
    %c0_4 = arith.constant 0 : index
    %2 = vector.load %arg10[%c0_3, %c0_4] : memref<4x512xf32, #tpu.memory_space<vmem>>, vector<4x512xf32>
    %c0_5 = arith.constant 0 : index
    %c0_6 = arith.constant 0 : index
    %3 = vector.load %arg11[%c0_5, %c0_6] : memref<5x512xf32, #tpu.memory_space<vmem>>, vector<5x512xf32>
    %4 = vector.extract_strided_slice %3 {offsets = [0, 0], sizes = [1, 512], strides = [1, 1]} : vector<5x512xf32> to vector<1x512xf32>
    %cst = arith.constant 5.000000e-01 : f32
    %5 = vector.broadcast %cst : f32 to vector<1x512xf32>
    %6 = arith.cmpf ogt, %4, %5 : vector<1x512xf32>
    %c0_7 = arith.constant 0 : index
    %c0_8 = arith.constant 0 : index
    %7 = vector.load %arg1[%c0_7, %c0_8] : memref<8x512xf32, #tpu.memory_space<vmem>>, vector<8x512xf32>
    %c0_9 = arith.constant 0 : index
    %8 = memref.load %arg12[%c0_9] : memref<20xf32, #tpu.memory_space<smem>>
    %c1 = arith.constant 1 : index
    %9 = memref.load %arg12[%c1] : memref<20xf32, #tpu.memory_space<smem>>
    %c2 = arith.constant 2 : index
    %10 = memref.load %arg12[%c2] : memref<20xf32, #tpu.memory_space<smem>>
    %c3 = arith.constant 3 : index
    %11 = memref.load %arg12[%c3] : memref<20xf32, #tpu.memory_space<smem>>
    %c4 = arith.constant 4 : index
    %12 = memref.load %arg12[%c4] : memref<20xf32, #tpu.memory_space<smem>>
    %c0_10 = arith.constant 0 : index
    %c0_11 = arith.constant 0 : index
    %c0_12 = arith.constant 0 : index
    %13 = vector.load %arg2[%c0_10, %c0_11, %c0_12] : memref<4x24x8xf32, #tpu.memory_space<vmem>>, vector<1x24x8xf32>
    %14 = vector.shape_cast %13 : vector<1x24x8xf32> to vector<24x8xf32>
    %cst_13 = arith.constant dense<0.000000e+00> : vector<24x512xf32>
    %15 = tpu.matmul %14, %7, %cst_13 {dimension_numbers = #tpu.dot_dimension_numbers<[1], [0], [0], [1], [0, 0, 1, 1], [], []>} : vector<24x8xf32>, vector<8x512xf32>, vector<24x512xf32> -> vector<24x512xf32>
    %16 = vector.extract_strided_slice %0 {offsets = [0, 0], sizes = [24, 1], strides = [1, 1]} : vector<24x48xf32> to vector<24x1xf32>
    %17 = vector.broadcast %16 : vector<24x1xf32> to vector<24x512xf32>
    %18 = arith.addf %15, %17 : vector<24x512xf32>
    %cst_14 = arith.constant 0.000000e+00 : f32
    %19 = vector.broadcast %cst_14 : f32 to vector<24x512xf32>
    %20 = arith.cmpf oge, %18, %19 : vector<24x512xf32>
    %21 = vector.broadcast %8 : f32 to vector<24x512xf32>
    %22 = arith.mulf %21, %18 : vector<24x512xf32>
    %23 = arith.select %20, %18, %22 : vector<24x512xi1>, vector<24x512xf32>
    %24 = vector.extract_strided_slice %23 {offsets = [0, 0], sizes = [24, 256], strides = [1, 1]} : vector<24x512xf32> to vector<24x256xf32>
    %25 = vector.extract_strided_slice %23 {offsets = [0, 256], sizes = [24, 256], strides = [1, 1]} : vector<24x512xf32> to vector<24x256xf32>
    %26 = arith.addf %24, %25 : vector<24x256xf32>
    %c0_15 = arith.constant 0 : index
    %c0_16 = arith.constant 0 : index
    %c0_17 = arith.constant 0 : index
    %27 = vector.load %arg3[%c0_15, %c0_16, %c0_17] : memref<4x24x24xf32, #tpu.memory_space<vmem>>, vector<1x24x24xf32>
    %28 = vector.shape_cast %27 : vector<1x24x24xf32> to vector<24x24xf32>
    %cst_18 = arith.constant 5.000000e-01 : f32
    %29 = vector.broadcast %cst_18 : f32 to vector<24x256xf32>
    %30 = arith.mulf %26, %29 : vector<24x256xf32>
    %cst_19 = arith.constant dense<0.000000e+00> : vector<24x256xf32>
    %31 = tpu.matmul %28, %30, %cst_19 {dimension_numbers = #tpu.dot_dimension_numbers<[1], [0], [0], [1], [0, 0, 1, 1], [], []>} : vector<24x24xf32>, vector<24x256xf32>, vector<24x256xf32> -> vector<24x256xf32>
    %32 = vector.extract_strided_slice %0 {offsets = [0, 1], sizes = [24, 1], strides = [1, 1]} : vector<24x48xf32> to vector<24x1xf32>
    %33 = vector.broadcast %32 : vector<24x1xf32> to vector<24x256xf32>
    %34 = arith.addf %31, %33 : vector<24x256xf32>
    %cst_20 = arith.constant 0.000000e+00 : f32
    %35 = vector.broadcast %cst_20 : f32 to vector<24x256xf32>
    %36 = arith.cmpf oge, %34, %35 : vector<24x256xf32>
    %37 = vector.broadcast %9 : f32 to vector<24x256xf32>
    %38 = arith.mulf %37, %34 : vector<24x256xf32>
    %39 = arith.select %36, %34, %38 : vector<24x256xi1>, vector<24x256xf32>
    %40 = tpu.concatenate %39, %39 in 1 : vector<24x256xf32>, vector<24x256xf32> -> vector<24x512xf32>
    %41 = tpu.concatenate %23, %40 in 0 : vector<24x512xf32>, vector<24x512xf32> -> vector<48x512xf32>
    %c0_21 = arith.constant 0 : index
    %c0_22 = arith.constant 0 : index
    %c0_23 = arith.constant 0 : index
    %42 = vector.load %arg4[%c0_21, %c0_22, %c0_23] : memref<4x8x48xf32, #tpu.memory_space<vmem>>, vector<1x8x48xf32>
    %43 = vector.shape_cast %42 : vector<1x8x48xf32> to vector<8x48xf32>
    %cst_24 = arith.constant dense<0.000000e+00> : vector<8x512xf32>
    %44 = tpu.matmul %43, %41, %cst_24 {dimension_numbers = #tpu.dot_dimension_numbers<[1], [0], [0], [1], [0, 0, 1, 1], [], []>} : vector<8x48xf32>, vector<48x512xf32>, vector<8x512xf32> -> vector<8x512xf32>
    %45 = vector.extract_strided_slice %0 {offsets = [0, 2], sizes = [8, 1], strides = [1, 1]} : vector<24x48xf32> to vector<8x1xf32>
    %46 = vector.broadcast %45 : vector<8x1xf32> to vector<8x512xf32>
    %47 = arith.addf %44, %46 : vector<8x512xf32>
    %cst_25 = arith.constant 0.000000e+00 : f32
    %48 = vector.broadcast %cst_25 : f32 to vector<8x512xf32>
    %49 = arith.cmpf oge, %47, %48 : vector<8x512xf32>
    %50 = vector.broadcast %10 : f32 to vector<8x512xf32>
    %51 = arith.mulf %50, %47 : vector<8x512xf32>
    %52 = arith.select %49, %47, %51 : vector<8x512xi1>, vector<8x512xf32>
    %53 = vector.extract_strided_slice %0 {offsets = [0, 3], sizes = [8, 1], strides = [1, 1]} : vector<24x48xf32> to vector<8x1xf32>
    %54 = vector.extract_strided_slice %0 {offsets = [0, 4], sizes = [8, 1], strides = [1, 1]} : vector<24x48xf32> to vector<8x1xf32>
    %cst_26 = arith.constant 0.000000e+00 : f32
    %55 = vector.shape_cast %6 : vector<1x512xi1> to vector<1x512xi1>
    %56 = vector.broadcast %55 : vector<1x512xi1> to vector<8x512xi1>
    %57 = vector.broadcast %cst_26 : f32 to vector<8x512xf32>
    %58 = arith.select %56, %52, %57 : vector<8x512xi1>, vector<8x512xf32>
    %cst_27 = arith.constant dense<0.000000e+00> : vector<512xf32>
    %59 = vector.multi_reduction <add>, %58, %cst_27 [0] : vector<8x512xf32> to vector<512xf32>
    %60 = vector.shape_cast %59 : vector<512xf32> to vector<1x512xf32>
    %61 = arith.mulf %58, %58 : vector<8x512xf32>
    %cst_28 = arith.constant dense<0.000000e+00> : vector<512xf32>
    %62 = vector.multi_reduction <add>, %61, %cst_28 [0] : vector<8x512xf32> to vector<512xf32>
    %63 = vector.shape_cast %62 : vector<512xf32> to vector<1x512xf32>
    %64 = tpu.concatenate %60, %63 in 0 : vector<1x512xf32>, vector<1x512xf32> -> vector<2x512xf32>
    %cst_29 = arith.constant dense<0.000000e+00> : vector<2x4xf32>
    %65 = tpu.matmul %64, %1, %cst_29 {dimension_numbers = #tpu.dot_dimension_numbers<[1], [0], [0], [1], [0, 0, 1, 1], [], []>} : vector<2x512xf32>, vector<512x4xf32>, vector<2x4xf32> -> vector<2x4xf32>
    %cst_30 = arith.constant dense<0.000000e+00> : vector<2x512xf32>
    %66 = tpu.matmul %65, %2, %cst_30 {dimension_numbers = #tpu.dot_dimension_numbers<[1], [0], [0], [1], [0, 0, 1, 1], [], []>} : vector<2x4xf32>, vector<4x512xf32>, vector<2x512xf32> -> vector<2x512xf32>
    %67 = vector.extract_strided_slice %66 {offsets = [0, 0], sizes = [1, 512], strides = [1, 1]} : vector<2x512xf32> to vector<1x512xf32>
    %cst_31 = arith.constant 1.250000e-01 : f32
    %68 = vector.broadcast %cst_31 : f32 to vector<1x512xf32>
    %69 = arith.mulf %67, %68 : vector<1x512xf32>
    %70 = vector.extract_strided_slice %66 {offsets = [1, 0], sizes = [1, 512], strides = [1, 1]} : vector<2x512xf32> to vector<1x512xf32>
    %cst_32 = arith.constant 1.250000e-01 : f32
    %71 = vector.broadcast %cst_32 : f32 to vector<1x512xf32>
    %72 = arith.mulf %70, %71 : vector<1x512xf32>
    %73 = arith.mulf %69, %69 : vector<1x512xf32>
    %74 = arith.subf %72, %73 : vector<1x512xf32>
    %75 = vector.broadcast %69 : vector<1x512xf32> to vector<8x512xf32>
    %76 = arith.subf %52, %75 : vector<8x512xf32>
    %cst_33 = arith.constant 1.1920929E-7 : f32
    %77 = vector.broadcast %cst_33 : f32 to vector<1x512xf32>
    %78 = arith.addf %74, %77 : vector<1x512xf32>
    %79 = math.rsqrt %78 : vector<1x512xf32>
    %80 = vector.broadcast %79 : vector<1x512xf32> to vector<8x512xf32>
    %81 = arith.mulf %76, %80 : vector<8x512xf32>
    %82 = vector.broadcast %53 : vector<8x1xf32> to vector<8x512xf32>
    %83 = arith.mulf %81, %82 : vector<8x512xf32>
    %84 = vector.broadcast %54 : vector<8x1xf32> to vector<8x512xf32>
    %85 = arith.addf %83, %84 : vector<8x512xf32>
    %86 = arith.addf %7, %85 : vector<8x512xf32>
    %c0_34 = arith.constant 0 : index
    %c0_35 = arith.constant 0 : index
    %87 = vector.load %arg14[%c0_34, %c0_35] : memref<8x512xf32, #tpu.memory_space<vmem>>, vector<8x512xf32>
    tpu.vector_store %arg14[%c0_34, %c0_35], %86 {strides = array<i32>} : memref<8x512xf32, #tpu.memory_space<vmem>>, vector<8x512xf32>,
    %c0_36 = arith.constant 0 : index
    %c0_37 = arith.constant 0 : index
    %c0_38 = arith.constant 0 : index
    %88 = vector.load %arg5[%c0_36, %c0_37, %c0_38] : memref<4x8x8xf32, #tpu.memory_space<vmem>>, vector<1x8x8xf32>
    %89 = vector.shape_cast %88 : vector<1x8x8xf32> to vector<8x8xf32>
    %c0_39 = arith.constant 0 : index
    %c0_40 = arith.constant 0 : index
    %90 = vector.load %arg14[%c0_39, %c0_40] : memref<8x512xf32, #tpu.memory_space<vmem>>, vector<8x512xf32>
    %cst_41 = arith.constant dense<0.000000e+00> : vector<8x512xf32>
    %91 = tpu.matmul %89, %90, %cst_41 {dimension_numbers = #tpu.dot_dimension_numbers<[1], [0], [0], [1], [0, 0, 1, 1], [], []>} : vector<8x8xf32>, vector<8x512xf32>, vector<8x512xf32> -> vector<8x512xf32>
    %92 = vector.extract_strided_slice %0 {offsets = [0, 5], sizes = [8, 1], strides = [1, 1]} : vector<24x48xf32> to vector<8x1xf32>
    %93 = vector.broadcast %92 : vector<8x1xf32> to vector<8x512xf32>
    %94 = arith.addf %91, %93 : vector<8x512xf32>
    %cst_42 = arith.constant 0.000000e+00 : f32
    %95 = vector.broadcast %cst_42 : f32 to vector<8x512xf32>
    %96 = arith.cmpf oge, %94, %95 : vector<8x512xf32>
    %97 = vector.broadcast %11 : f32 to vector<8x512xf32>
    %98 = arith.mulf %97, %94 : vector<8x512xf32>
    %99 = arith.select %96, %94, %98 : vector<8x512xi1>, vector<8x512xf32>
    %100 = vector.extract_strided_slice %0 {offsets = [0, 6], sizes = [8, 1], strides = [1, 1]} : vector<24x48xf32> to vector<8x1xf32>
    %101 = vector.extract_strided_slice %0 {offsets = [0, 7], sizes = [8, 1], strides = [1, 1]} : vector<24x48xf32> to vector<8x1xf32>
    %cst_43 = arith.constant 0.000000e+00 : f32
    %102 = vector.shape_cast %6 : vector<1x512xi1> to vector<1x512xi1>
    %103 = vector.broadcast %102 : vector<1x512xi1> to vector<8x512xi1>
    %104 = vector.broadcast %cst_43 : f32 to vector<8x512xf32>
    %105 = arith.select %103, %99, %104 : vector<8x512xi1>, vector<8x512xf32>
    %cst_44 = arith.constant dense<0.000000e+00> : vector<512xf32>
    %106 = vector.multi_reduction <add>, %105, %cst_44 [0] : vector<8x512xf32> to vector<512xf32>
    %107 = vector.shape_cast %106 : vector<512xf32> to vector<1x512xf32>
    %108 = arith.mulf %105, %105 : vector<8x512xf32>
    %cst_45 = arith.constant dense<0.000000e+00> : vector<512xf32>
    %109 = vector.multi_reduction <add>, %108, %cst_45 [0] : vector<8x512xf32> to vector<512xf32>
    %110 = vector.shape_cast %109 : vector<512xf32> to vector<1x512xf32>
    %111 = tpu.concatenate %107, %110 in 0 : vector<1x512xf32>, vector<1x512xf32> -> vector<2x512xf32>
    %cst_46 = arith.constant dense<0.000000e+00> : vector<2x4xf32>
    %112 = tpu.matmul %111, %1, %cst_46 {dimension_numbers = #tpu.dot_dimension_numbers<[1], [0], [0], [1], [0, 0, 1, 1], [], []>} : vector<2x512xf32>, vector<512x4xf32>, vector<2x4xf32> -> vector<2x4xf32>
    %cst_47 = arith.constant dense<0.000000e+00> : vector<2x512xf32>
    %113 = tpu.matmul %112, %2, %cst_47 {dimension_numbers = #tpu.dot_dimension_numbers<[1], [0], [0], [1], [0, 0, 1, 1], [], []>} : vector<2x4xf32>, vector<4x512xf32>, vector<2x512xf32> -> vector<2x512xf32>
    %114 = vector.extract_strided_slice %113 {offsets = [0, 0], sizes = [1, 512], strides = [1, 1]} : vector<2x512xf32> to vector<1x512xf32>
    %cst_48 = arith.constant 1.250000e-01 : f32
    %115 = vector.broadcast %cst_48 : f32 to vector<1x512xf32>
    %116 = arith.mulf %114, %115 : vector<1x512xf32>
    %117 = vector.extract_strided_slice %113 {offsets = [1, 0], sizes = [1, 512], strides = [1, 1]} : vector<2x512xf32> to vector<1x512xf32>
    %cst_49 = arith.constant 1.250000e-01 : f32
    %118 = vector.broadcast %cst_49 : f32 to vector<1x512xf32>
    %119 = arith.mulf %117, %118 : vector<1x512xf32>
    %120 = arith.mulf %116, %116 : vector<1x512xf32>
    %121 = arith.subf %119, %120 : vector<1x512xf32>
    %122 = vector.broadcast %116 : vector<1x512xf32> to vector<8x512xf32>
    %123 = arith.subf %99, %122 : vector<8x512xf32>
    %cst_50 = arith.constant 9.99999993E-9 : f32
    %124 = vector.broadcast %cst_50 : f32 to vector<1x512xf32>
    %125 = arith.addf %121, %124 : vector<1x512xf32>
    %126 = math.rsqrt %125 : vector<1x512xf32>
    %127 = vector.broadcast %126 : vector<1x512xf32> to vector<8x512xf32>
    %128 = arith.mulf %123, %127 : vector<8x512xf32>
    %129 = vector.broadcast %100 : vector<8x1xf32> to vector<8x512xf32>
    %130 = arith.mulf %128, %129 : vector<8x512xf32>
    %131 = vector.broadcast %101 : vector<8x1xf32> to vector<8x512xf32>
    %132 = arith.addf %130, %131 : vector<8x512xf32>
    %c0_51 = arith.constant 0 : index
    %c0_52 = arith.constant 0 : index
    %c0_53 = arith.constant 0 : index
    %133 = vector.load %arg7[%c0_51, %c0_52, %c0_53] : memref<4x8x3xf32, #tpu.memory_space<vmem>>, vector<1x8x3xf32>
    %134 = vector.shape_cast %133 : vector<1x8x3xf32> to vector<8x3xf32>
    %c1_i32 = arith.constant 1 : i32
    %135 = tpu.dynamic_rotate %132 by %c1_i32 dim 1 : vector<8x512xf32>, i32 -> vector<8x512xf32>
    %136 = vector.extract_strided_slice %3 {offsets = [1, 0], sizes = [1, 512], strides = [1, 1]} : vector<5x512xf32> to vector<1x512xf32>
    %cst_54 = arith.constant 5.000000e-01 : f32
    %137 = vector.broadcast %cst_54 : f32 to vector<1x512xf32>
    %138 = arith.cmpf ogt, %136, %137 : vector<1x512xf32>
    %cst_55 = arith.constant 0.000000e+00 : f32
    %139 = vector.shape_cast %138 : vector<1x512xi1> to vector<1x512xi1>
    %140 = vector.broadcast %139 : vector<1x512xi1> to vector<8x512xi1>
    %141 = vector.broadcast %cst_55 : f32 to vector<8x512xf32>
    %142 = arith.select %140, %135, %141 : vector<8x512xi1>, vector<8x512xf32>
    %143 = vector.extract_strided_slice %134 {offsets = [0, 0], sizes = [8, 1], strides = [1, 1]} : vector<8x3xf32> to vector<8x1xf32>
    %144 = vector.broadcast %143 : vector<8x1xf32> to vector<8x512xf32>
    %145 = arith.mulf %144, %142 : vector<8x512xf32>
    %146 = vector.extract_strided_slice %134 {offsets = [0, 1], sizes = [8, 1], strides = [1, 1]} : vector<8x3xf32> to vector<8x1xf32>
    %147 = vector.broadcast %146 : vector<8x1xf32> to vector<8x512xf32>
    %148 = arith.mulf %147, %132 : vector<8x512xf32>
    %149 = arith.addf %145, %148 : vector<8x512xf32>
    %c511_i32 = arith.constant 511 : i32
    %150 = tpu.dynamic_rotate %132 by %c511_i32 dim 1 : vector<8x512xf32>, i32 -> vector<8x512xf32>
    %151 = vector.extract_strided_slice %3 {offsets = [2, 0], sizes = [1, 512], strides = [1, 1]} : vector<5x512xf32> to vector<1x512xf32>
    %cst_56 = arith.constant 5.000000e-01 : f32
    %152 = vector.broadcast %cst_56 : f32 to vector<1x512xf32>
    %153 = arith.cmpf ogt, %151, %152 : vector<1x512xf32>
    %cst_57 = arith.constant 0.000000e+00 : f32
    %154 = vector.shape_cast %153 : vector<1x512xi1> to vector<1x512xi1>
    %155 = vector.broadcast %154 : vector<1x512xi1> to vector<8x512xi1>
    %156 = vector.broadcast %cst_57 : f32 to vector<8x512xf32>
    %157 = arith.select %155, %150, %156 : vector<8x512xi1>, vector<8x512xf32>
    %158 = vector.extract_strided_slice %134 {offsets = [0, 2], sizes = [8, 1], strides = [1, 1]} : vector<8x3xf32> to vector<8x1xf32>
    %159 = vector.broadcast %158 : vector<8x1xf32> to vector<8x512xf32>
    %160 = arith.mulf %159, %157 : vector<8x512xf32>
    %161 = arith.addf %149, %160 : vector<8x512xf32>
    %162 = vector.extract_strided_slice %0 {offsets = [0, 8], sizes = [8, 1], strides = [1, 1]} : vector<24x48xf32> to vector<8x1xf32>
    %163 = vector.broadcast %162 : vector<8x1xf32> to vector<8x512xf32>
    %164 = arith.addf %161, %163 : vector<8x512xf32>
    %cst_58 = arith.constant 0.000000e+00 : f32
    %165 = vector.broadcast %cst_58 : f32 to vector<8x512xf32>
    %166 = arith.cmpf oge, %164, %165 : vector<8x512xf32>
    %167 = vector.broadcast %12 : f32 to vector<8x512xf32>
    %168 = arith.mulf %167, %164 : vector<8x512xf32>
    %169 = arith.select %166, %164, %168 : vector<8x512xi1>, vector<8x512xf32>
    %170 = vector.extract_strided_slice %0 {offsets = [0, 9], sizes = [8, 1], strides = [1, 1]} : vector<24x48xf32> to vector<8x1xf32>
    %171 = vector.extract_strided_slice %0 {offsets = [0, 10], sizes = [8, 1], strides = [1, 1]} : vector<24x48xf32> to vector<8x1xf32>
    %cst_59 = arith.constant 0.000000e+00 : f32
    %172 = vector.shape_cast %6 : vector<1x512xi1> to vector<1x512xi1>
    %173 = vector.broadcast %172 : vector<1x512xi1> to vector<8x512xi1>
    %174 = vector.broadcast %cst_59 : f32 to vector<8x512xf32>
    %175 = arith.select %173, %169, %174 : vector<8x512xi1>, vector<8x512xf32>
    %cst_60 = arith.constant dense<0.000000e+00> : vector<512xf32>
    %176 = vector.multi_reduction <add>, %175, %cst_60 [0] : vector<8x512xf32> to vector<512xf32>
    %177 = vector.shape_cast %176 : vector<512xf32> to vector<1x512xf32>
    %178 = arith.mulf %175, %175 : vector<8x512xf32>
    %cst_61 = arith.constant dense<0.000000e+00> : vector<512xf32>
    %179 = vector.multi_reduction <add>, %178, %cst_61 [0] : vector<8x512xf32> to vector<512xf32>
    %180 = vector.shape_cast %179 : vector<512xf32> to vector<1x512xf32>
    %181 = tpu.concatenate %177, %180 in 0 : vector<1x512xf32>, vector<1x512xf32> -> vector<2x512xf32>
    %cst_62 = arith.constant dense<0.000000e+00> : vector<2x4xf32>
    %182 = tpu.matmul %181, %1, %cst_62 {dimension_numbers = #tpu.dot_dimension_numbers<[1], [0], [0], [1], [0, 0, 1, 1], [], []>} : vector<2x512xf32>, vector<512x4xf32>, vector<2x4xf32> -> vector<2x4xf32>
    %cst_63 = arith.constant dense<0.000000e+00> : vector<2x512xf32>
    %183 = tpu.matmul %182, %2, %cst_63 {dimension_numbers = #tpu.dot_dimension_numbers<[1], [0], [0], [1], [0, 0, 1, 1], [], []>} : vector<2x4xf32>, vector<4x512xf32>, vector<2x512xf32> -> vector<2x512xf32>
    %184 = vector.extract_strided_slice %183 {offsets = [0, 0], sizes = [1, 512], strides = [1, 1]} : vector<2x512xf32> to vector<1x512xf32>
    %cst_64 = arith.constant 1.250000e-01 : f32
    %185 = vector.broadcast %cst_64 : f32 to vector<1x512xf32>
    %186 = arith.mulf %184, %185 : vector<1x512xf32>
    %187 = vector.extract_strided_slice %183 {offsets = [1, 0], sizes = [1, 512], strides = [1, 1]} : vector<2x512xf32> to vector<1x512xf32>
    %cst_65 = arith.constant 1.250000e-01 : f32
    %188 = vector.broadcast %cst_65 : f32 to vector<1x512xf32>
    %189 = arith.mulf %187, %188 : vector<1x512xf32>
    %190 = arith.mulf %186, %186 : vector<1x512xf32>
    %191 = arith.subf %189, %190 : vector<1x512xf32>
    %192 = vector.broadcast %186 : vector<1x512xf32> to vector<8x512xf32>
    %193 = arith.subf %169, %192 : vector<8x512xf32>
    %cst_66 = arith.constant 9.99999993E-9 : f32
    %194 = vector.broadcast %cst_66 : f32 to vector<1x512xf32>
    %195 = arith.addf %191, %194 : vector<1x512xf32>
    %196 = math.rsqrt %195 : vector<1x512xf32>
    %197 = vector.broadcast %196 : vector<1x512xf32> to vector<8x512xf32>
    %198 = arith.mulf %193, %197 : vector<8x512xf32>
    %199 = vector.broadcast %170 : vector<8x1xf32> to vector<8x512xf32>
    %200 = arith.mulf %198, %199 : vector<8x512xf32>
    %201 = vector.broadcast %171 : vector<8x1xf32> to vector<8x512xf32>
    %202 = arith.addf %200, %201 : vector<8x512xf32>
    %c0_67 = arith.constant 0 : index
    %c0_68 = arith.constant 0 : index
    %c0_69 = arith.constant 0 : index
    %203 = vector.load %arg6[%c0_67, %c0_68, %c0_69] : memref<4x8x8xf32, #tpu.memory_space<vmem>>, vector<1x8x8xf32>
    %204 = vector.shape_cast %203 : vector<1x8x8xf32> to vector<8x8xf32>
    %cst_70 = arith.constant dense<0.000000e+00> : vector<8x512xf32>
    %205 = tpu.matmul %204, %202, %cst_70 {dimension_numbers = #tpu.dot_dimension_numbers<[1], [0], [0], [1], [0, 0, 1, 1], [], []>} : vector<8x8xf32>, vector<8x512xf32>, vector<8x512xf32> -> vector<8x512xf32>
    %206 = vector.extract_strided_slice %0 {offsets = [0, 11], sizes = [8, 1], strides = [1, 1]} : vector<24x48xf32> to vector<8x1xf32>
    %207 = vector.broadcast %206 : vector<8x1xf32> to vector<8x512xf32>
    %208 = arith.addf %205, %207 : vector<8x512xf32>
    %c0_71 = arith.constant 0 : index
    %c0_72 = arith.constant 0 : index
    %209 = vector.load %arg14[%c0_71, %c0_72] : memref<8x512xf32, #tpu.memory_space<vmem>>, vector<8x512xf32>
    %210 = arith.addf %209, %208 : vector<8x512xf32>
    %c5 = arith.constant 5 : index
    %211 = memref.load %arg12[%c5] : memref<20xf32, #tpu.memory_space<smem>>
    %c6 = arith.constant 6 : index
    %212 = memref.load %arg12[%c6] : memref<20xf32, #tpu.memory_space<smem>>
    %c7 = arith.constant 7 : index
    %213 = memref.load %arg12[%c7] : memref<20xf32, #tpu.memory_space<smem>>
    %c8 = arith.constant 8 : index
    %214 = memref.load %arg12[%c8] : memref<20xf32, #tpu.memory_space<smem>>
    %c9 = arith.constant 9 : index
    %215 = memref.load %arg12[%c9] : memref<20xf32, #tpu.memory_space<smem>>
    %c1_73 = arith.constant 1 : index
    %c0_74 = arith.constant 0 : index
    %c0_75 = arith.constant 0 : index
    %216 = vector.load %arg2[%c1_73, %c0_74, %c0_75] : memref<4x24x8xf32, #tpu.memory_space<vmem>>, vector<1x24x8xf32>
    %217 = vector.shape_cast %216 : vector<1x24x8xf32> to vector<24x8xf32>
    %cst_76 = arith.constant dense<0.000000e+00> : vector<24x512xf32>
    %218 = tpu.matmul %217, %210, %cst_76 {dimension_numbers = #tpu.dot_dimension_numbers<[1], [0], [0], [1], [0, 0, 1, 1], [], []>} : vector<24x8xf32>, vector<8x512xf32>, vector<24x512xf32> -> vector<24x512xf32>
    %219 = vector.extract_strided_slice %0 {offsets = [0, 12], sizes = [24, 1], strides = [1, 1]} : vector<24x48xf32> to vector<24x1xf32>
    %220 = vector.broadcast %219 : vector<24x1xf32> to vector<24x512xf32>
    %221 = arith.addf %218, %220 : vector<24x512xf32>
    %cst_77 = arith.constant 0.000000e+00 : f32
    %222 = vector.broadcast %cst_77 : f32 to vector<24x512xf32>
    %223 = arith.cmpf oge, %221, %222 : vector<24x512xf32>
    %224 = vector.broadcast %211 : f32 to vector<24x512xf32>
    %225 = arith.mulf %224, %221 : vector<24x512xf32>
    %226 = arith.select %223, %221, %225 : vector<24x512xi1>, vector<24x512xf32>
    %227 = vector.extract_strided_slice %226 {offsets = [0, 0], sizes = [24, 256], strides = [1, 1]} : vector<24x512xf32> to vector<24x256xf32>
    %228 = vector.extract_strided_slice %226 {offsets = [0, 256], sizes = [24, 256], strides = [1, 1]} : vector<24x512xf32> to vector<24x256xf32>
    %229 = arith.addf %227, %228 : vector<24x256xf32>
    %c1_78 = arith.constant 1 : index
    %c0_79 = arith.constant 0 : index
    %c0_80 = arith.constant 0 : index
    %230 = vector.load %arg3[%c1_78, %c0_79, %c0_80] : memref<4x24x24xf32, #tpu.memory_space<vmem>>, vector<1x24x24xf32>
    %231 = vector.shape_cast %230 : vector<1x24x24xf32> to vector<24x24xf32>
    %cst_81 = arith.constant 5.000000e-01 : f32
    %232 = vector.broadcast %cst_81 : f32 to vector<24x256xf32>
    %233 = arith.mulf %229, %232 : vector<24x256xf32>
    %cst_82 = arith.constant dense<0.000000e+00> : vector<24x256xf32>
    %234 = tpu.matmul %231, %233, %cst_82 {dimension_numbers = #tpu.dot_dimension_numbers<[1], [0], [0], [1], [0, 0, 1, 1], [], []>} : vector<24x24xf32>, vector<24x256xf32>, vector<24x256xf32> -> vector<24x256xf32>
    %235 = vector.extract_strided_slice %0 {offsets = [0, 13], sizes = [24, 1], strides = [1, 1]} : vector<24x48xf32> to vector<24x1xf32>
    %236 = vector.broadcast %235 : vector<24x1xf32> to vector<24x256xf32>
    %237 = arith.addf %234, %236 : vector<24x256xf32>
    %cst_83 = arith.constant 0.000000e+00 : f32
    %238 = vector.broadcast %cst_83 : f32 to vector<24x256xf32>
    %239 = arith.cmpf oge, %237, %238 : vector<24x256xf32>
    %240 = vector.broadcast %212 : f32 to vector<24x256xf32>
    %241 = arith.mulf %240, %237 : vector<24x256xf32>
    %242 = arith.select %239, %237, %241 : vector<24x256xi1>, vector<24x256xf32>
    %243 = tpu.concatenate %242, %242 in 1 : vector<24x256xf32>, vector<24x256xf32> -> vector<24x512xf32>
    %244 = tpu.concatenate %226, %243 in 0 : vector<24x512xf32>, vector<24x512xf32> -> vector<48x512xf32>
    %c1_84 = arith.constant 1 : index
    %c0_85 = arith.constant 0 : index
    %c0_86 = arith.constant 0 : index
    %245 = vector.load %arg4[%c1_84, %c0_85, %c0_86] : memref<4x8x48xf32, #tpu.memory_space<vmem>>, vector<1x8x48xf32>
    %246 = vector.shape_cast %245 : vector<1x8x48xf32> to vector<8x48xf32>
    %cst_87 = arith.constant dense<0.000000e+00> : vector<8x512xf32>
    %247 = tpu.matmul %246, %244, %cst_87 {dimension_numbers = #tpu.dot_dimension_numbers<[1], [0], [0], [1], [0, 0, 1, 1], [], []>} : vector<8x48xf32>, vector<48x512xf32>, vector<8x512xf32> -> vector<8x512xf32>
    %248 = vector.extract_strided_slice %0 {offsets = [0, 14], sizes = [8, 1], strides = [1, 1]} : vector<24x48xf32> to vector<8x1xf32>
    %249 = vector.broadcast %248 : vector<8x1xf32> to vector<8x512xf32>
    %250 = arith.addf %247, %249 : vector<8x512xf32>
    %cst_88 = arith.constant 0.000000e+00 : f32
    %251 = vector.broadcast %cst_88 : f32 to vector<8x512xf32>
    %252 = arith.cmpf oge, %250, %251 : vector<8x512xf32>
    %253 = vector.broadcast %213 : f32 to vector<8x512xf32>
    %254 = arith.mulf %253, %250 : vector<8x512xf32>
    %255 = arith.select %252, %250, %254 : vector<8x512xi1>, vector<8x512xf32>
    %256 = vector.extract_strided_slice %0 {offsets = [0, 15], sizes = [8, 1], strides = [1, 1]} : vector<24x48xf32> to vector<8x1xf32>
    %257 = vector.extract_strided_slice %0 {offsets = [0, 16], sizes = [8, 1], strides = [1, 1]} : vector<24x48xf32> to vector<8x1xf32>
    %cst_89 = arith.constant 0.000000e+00 : f32
    %258 = vector.shape_cast %6 : vector<1x512xi1> to vector<1x512xi1>
    %259 = vector.broadcast %258 : vector<1x512xi1> to vector<8x512xi1>
    %260 = vector.broadcast %cst_89 : f32 to vector<8x512xf32>
    %261 = arith.select %259, %255, %260 : vector<8x512xi1>, vector<8x512xf32>
    %cst_90 = arith.constant dense<0.000000e+00> : vector<512xf32>
    %262 = vector.multi_reduction <add>, %261, %cst_90 [0] : vector<8x512xf32> to vector<512xf32>
    %263 = vector.shape_cast %262 : vector<512xf32> to vector<1x512xf32>
    %264 = arith.mulf %261, %261 : vector<8x512xf32>
    %cst_91 = arith.constant dense<0.000000e+00> : vector<512xf32>
    %265 = vector.multi_reduction <add>, %264, %cst_91 [0] : vector<8x512xf32> to vector<512xf32>
    %266 = vector.shape_cast %265 : vector<512xf32> to vector<1x512xf32>
    %267 = tpu.concatenate %263, %266 in 0 : vector<1x512xf32>, vector<1x512xf32> -> vector<2x512xf32>
    %cst_92 = arith.constant dense<0.000000e+00> : vector<2x4xf32>
    %268 = tpu.matmul %267, %1, %cst_92 {dimension_numbers = #tpu.dot_dimension_numbers<[1], [0], [0], [1], [0, 0, 1, 1], [], []>} : vector<2x512xf32>, vector<512x4xf32>, vector<2x4xf32> -> vector<2x4xf32>
    %cst_93 = arith.constant dense<0.000000e+00> : vector<2x512xf32>
    %269 = tpu.matmul %268, %2, %cst_93 {dimension_numbers = #tpu.dot_dimension_numbers<[1], [0], [0], [1], [0, 0, 1, 1], [], []>} : vector<2x4xf32>, vector<4x512xf32>, vector<2x512xf32> -> vector<2x512xf32>
    %270 = vector.extract_strided_slice %269 {offsets = [0, 0], sizes = [1, 512], strides = [1, 1]} : vector<2x512xf32> to vector<1x512xf32>
    %cst_94 = arith.constant 1.250000e-01 : f32
    %271 = vector.broadcast %cst_94 : f32 to vector<1x512xf32>
    %272 = arith.mulf %270, %271 : vector<1x512xf32>
    %273 = vector.extract_strided_slice %269 {offsets = [1, 0], sizes = [1, 512], strides = [1, 1]} : vector<2x512xf32> to vector<1x512xf32>
    %cst_95 = arith.constant 1.250000e-01 : f32
    %274 = vector.broadcast %cst_95 : f32 to vector<1x512xf32>
    %275 = arith.mulf %273, %274 : vector<1x512xf32>
    %276 = arith.mulf %272, %272 : vector<1x512xf32>
    %277 = arith.subf %275, %276 : vector<1x512xf32>
    %278 = vector.broadcast %272 : vector<1x512xf32> to vector<8x512xf32>
    %279 = arith.subf %255, %278 : vector<8x512xf32>
    %cst_96 = arith.constant 1.1920929E-7 : f32
    %280 = vector.broadcast %cst_96 : f32 to vector<1x512xf32>
    %281 = arith.addf %277, %280 : vector<1x512xf32>
    %282 = math.rsqrt %281 : vector<1x512xf32>
    %283 = vector.broadcast %282 : vector<1x512xf32> to vector<8x512xf32>
    %284 = arith.mulf %279, %283 : vector<8x512xf32>
    %285 = vector.broadcast %256 : vector<8x1xf32> to vector<8x512xf32>
    %286 = arith.mulf %284, %285 : vector<8x512xf32>
    %287 = vector.broadcast %257 : vector<8x1xf32> to vector<8x512xf32>
    %288 = arith.addf %286, %287 : vector<8x512xf32>
    %289 = arith.addf %210, %288 : vector<8x512xf32>
    %c0_97 = arith.constant 0 : index
    %c0_98 = arith.constant 0 : index
    %290 = vector.load %arg14[%c0_97, %c0_98] : memref<8x512xf32, #tpu.memory_space<vmem>>, vector<8x512xf32>
    tpu.vector_store %arg14[%c0_97, %c0_98], %289 {strides = array<i32>} : memref<8x512xf32, #tpu.memory_space<vmem>>, vector<8x512xf32>,
    %c1_99 = arith.constant 1 : index
    %c0_100 = arith.constant 0 : index
    %c0_101 = arith.constant 0 : index
    %291 = vector.load %arg5[%c1_99, %c0_100, %c0_101] : memref<4x8x8xf32, #tpu.memory_space<vmem>>, vector<1x8x8xf32>
    %292 = vector.shape_cast %291 : vector<1x8x8xf32> to vector<8x8xf32>
    %c0_102 = arith.constant 0 : index
    %c0_103 = arith.constant 0 : index
    %293 = vector.load %arg14[%c0_102, %c0_103] : memref<8x512xf32, #tpu.memory_space<vmem>>, vector<8x512xf32>
    %cst_104 = arith.constant dense<0.000000e+00> : vector<8x512xf32>
    %294 = tpu.matmul %292, %293, %cst_104 {dimension_numbers = #tpu.dot_dimension_numbers<[1], [0], [0], [1], [0, 0, 1, 1], [], []>} : vector<8x8xf32>, vector<8x512xf32>, vector<8x512xf32> -> vector<8x512xf32>
    %295 = vector.extract_strided_slice %0 {offsets = [0, 17], sizes = [8, 1], strides = [1, 1]} : vector<24x48xf32> to vector<8x1xf32>
    %296 = vector.broadcast %295 : vector<8x1xf32> to vector<8x512xf32>
    %297 = arith.addf %294, %296 : vector<8x512xf32>
    %cst_105 = arith.constant 0.000000e+00 : f32
    %298 = vector.broadcast %cst_105 : f32 to vector<8x512xf32>
    %299 = arith.cmpf oge, %297, %298 : vector<8x512xf32>
    %300 = vector.broadcast %214 : f32 to vector<8x512xf32>
    %301 = arith.mulf %300, %297 : vector<8x512xf32>
    %302 = arith.select %299, %297, %301 : vector<8x512xi1>, vector<8x512xf32>
    %303 = vector.extract_strided_slice %0 {offsets = [0, 18], sizes = [8, 1], strides = [1, 1]} : vector<24x48xf32> to vector<8x1xf32>
    %304 = vector.extract_strided_slice %0 {offsets = [0, 19], sizes = [8, 1], strides = [1, 1]} : vector<24x48xf32> to vector<8x1xf32>
    %cst_106 = arith.constant 0.000000e+00 : f32
    %305 = vector.shape_cast %6 : vector<1x512xi1> to vector<1x512xi1>
    %306 = vector.broadcast %305 : vector<1x512xi1> to vector<8x512xi1>
    %307 = vector.broadcast %cst_106 : f32 to vector<8x512xf32>
    %308 = arith.select %306, %302, %307 : vector<8x512xi1>, vector<8x512xf32>
    %cst_107 = arith.constant dense<0.000000e+00> : vector<512xf32>
    %309 = vector.multi_reduction <add>, %308, %cst_107 [0] : vector<8x512xf32> to vector<512xf32>
    %310 = vector.shape_cast %309 : vector<512xf32> to vector<1x512xf32>
    %311 = arith.mulf %308, %308 : vector<8x512xf32>
    %cst_108 = arith.constant dense<0.000000e+00> : vector<512xf32>
    %312 = vector.multi_reduction <add>, %311, %cst_108 [0] : vector<8x512xf32> to vector<512xf32>
    %313 = vector.shape_cast %312 : vector<512xf32> to vector<1x512xf32>
    %314 = tpu.concatenate %310, %313 in 0 : vector<1x512xf32>, vector<1x512xf32> -> vector<2x512xf32>
    %cst_109 = arith.constant dense<0.000000e+00> : vector<2x4xf32>
    %315 = tpu.matmul %314, %1, %cst_109 {dimension_numbers = #tpu.dot_dimension_numbers<[1], [0], [0], [1], [0, 0, 1, 1], [], []>} : vector<2x512xf32>, vector<512x4xf32>, vector<2x4xf32> -> vector<2x4xf32>
    %cst_110 = arith.constant dense<0.000000e+00> : vector<2x512xf32>
    %316 = tpu.matmul %315, %2, %cst_110 {dimension_numbers = #tpu.dot_dimension_numbers<[1], [0], [0], [1], [0, 0, 1, 1], [], []>} : vector<2x4xf32>, vector<4x512xf32>, vector<2x512xf32> -> vector<2x512xf32>
    %317 = vector.extract_strided_slice %316 {offsets = [0, 0], sizes = [1, 512], strides = [1, 1]} : vector<2x512xf32> to vector<1x512xf32>
    %cst_111 = arith.constant 1.250000e-01 : f32
    %318 = vector.broadcast %cst_111 : f32 to vector<1x512xf32>
    %319 = arith.mulf %317, %318 : vector<1x512xf32>
    %320 = vector.extract_strided_slice %316 {offsets = [1, 0], sizes = [1, 512], strides = [1, 1]} : vector<2x512xf32> to vector<1x512xf32>
    %cst_112 = arith.constant 1.250000e-01 : f32
    %321 = vector.broadcast %cst_112 : f32 to vector<1x512xf32>
    %322 = arith.mulf %320, %321 : vector<1x512xf32>
    %323 = arith.mulf %319, %319 : vector<1x512xf32>
    %324 = arith.subf %322, %323 : vector<1x512xf32>
    %325 = vector.broadcast %319 : vector<1x512xf32> to vector<8x512xf32>
    %326 = arith.subf %302, %325 : vector<8x512xf32>
    %cst_113 = arith.constant 9.99999993E-9 : f32
    %327 = vector.broadcast %cst_113 : f32 to vector<1x512xf32>
    %328 = arith.addf %324, %327 : vector<1x512xf32>
    %329 = math.rsqrt %328 : vector<1x512xf32>
    %330 = vector.broadcast %329 : vector<1x512xf32> to vector<8x512xf32>
    %331 = arith.mulf %326, %330 : vector<8x512xf32>
    %332 = vector.broadcast %303 : vector<8x1xf32> to vector<8x512xf32>
    %333 = arith.mulf %331, %332 : vector<8x512xf32>
    %334 = vector.broadcast %304 : vector<8x1xf32> to vector<8x512xf32>
    %335 = arith.addf %333, %334 : vector<8x512xf32>
    %c1_114 = arith.constant 1 : index
    %c0_115 = arith.constant 0 : index
    %c0_116 = arith.constant 0 : index
    %336 = vector.load %arg7[%c1_114, %c0_115, %c0_116] : memref<4x8x3xf32, #tpu.memory_space<vmem>>, vector<1x8x3xf32>
    %337 = vector.shape_cast %336 : vector<1x8x3xf32> to vector<8x3xf32>
    %c2_i32 = arith.constant 2 : i32
    %338 = tpu.dynamic_rotate %335 by %c2_i32 dim 1 : vector<8x512xf32>, i32 -> vector<8x512xf32>
    %339 = vector.extract_strided_slice %3 {offsets = [3, 0], sizes = [1, 512], strides = [1, 1]} : vector<5x512xf32> to vector<1x512xf32>
    %cst_117 = arith.constant 5.000000e-01 : f32
    %340 = vector.broadcast %cst_117 : f32 to vector<1x512xf32>
    %341 = arith.cmpf ogt, %339, %340 : vector<1x512xf32>
    %cst_118 = arith.constant 0.000000e+00 : f32
    %342 = vector.shape_cast %341 : vector<1x512xi1> to vector<1x512xi1>
    %343 = vector.broadcast %342 : vector<1x512xi1> to vector<8x512xi1>
    %344 = vector.broadcast %cst_118 : f32 to vector<8x512xf32>
    %345 = arith.select %343, %338, %344 : vector<8x512xi1>, vector<8x512xf32>
    %346 = vector.extract_strided_slice %337 {offsets = [0, 0], sizes = [8, 1], strides = [1, 1]} : vector<8x3xf32> to vector<8x1xf32>
    %347 = vector.broadcast %346 : vector<8x1xf32> to vector<8x512xf32>
    %348 = arith.mulf %347, %345 : vector<8x512xf32>
    %349 = vector.extract_strided_slice %337 {offsets = [0, 1], sizes = [8, 1], strides = [1, 1]} : vector<8x3xf32> to vector<8x1xf32>
    %350 = vector.broadcast %349 : vector<8x1xf32> to vector<8x512xf32>
    %351 = arith.mulf %350, %335 : vector<8x512xf32>
    %352 = arith.addf %348, %351 : vector<8x512xf32>
    %c510_i32 = arith.constant 510 : i32
    %353 = tpu.dynamic_rotate %335 by %c510_i32 dim 1 : vector<8x512xf32>, i32 -> vector<8x512xf32>
    %354 = vector.extract_strided_slice %3 {offsets = [4, 0], sizes = [1, 512], strides = [1, 1]} : vector<5x512xf32> to vector<1x512xf32>
    %cst_119 = arith.constant 5.000000e-01 : f32
    %355 = vector.broadcast %cst_119 : f32 to vector<1x512xf32>
    %356 = arith.cmpf ogt, %354, %355 : vector<1x512xf32>
    %cst_120 = arith.constant 0.000000e+00 : f32
    %357 = vector.shape_cast %356 : vector<1x512xi1> to vector<1x512xi1>
    %358 = vector.broadcast %357 : vector<1x512xi1> to vector<8x512xi1>
    %359 = vector.broadcast %cst_120 : f32 to vector<8x512xf32>
    %360 = arith.select %358, %353, %359 : vector<8x512xi1>, vector<8x512xf32>
    %361 = vector.extract_strided_slice %337 {offsets = [0, 2], sizes = [8, 1], strides = [1, 1]} : vector<8x3xf32> to vector<8x1xf32>
    %362 = vector.broadcast %361 : vector<8x1xf32> to vector<8x512xf32>
    %363 = arith.mulf %362, %360 : vector<8x512xf32>
    %364 = arith.addf %352, %363 : vector<8x512xf32>
    %365 = vector.extract_strided_slice %0 {offsets = [0, 20], sizes = [8, 1], strides = [1, 1]} : vector<24x48xf32> to vector<8x1xf32>
    %366 = vector.broadcast %365 : vector<8x1xf32> to vector<8x512xf32>
    %367 = arith.addf %364, %366 : vector<8x512xf32>
    %cst_121 = arith.constant 0.000000e+00 : f32
    %368 = vector.broadcast %cst_121 : f32 to vector<8x512xf32>
    %369 = arith.cmpf oge, %367, %368 : vector<8x512xf32>
    %370 = vector.broadcast %215 : f32 to vector<8x512xf32>
    %371 = arith.mulf %370, %367 : vector<8x512xf32>
    %372 = arith.select %369, %367, %371 : vector<8x512xi1>, vector<8x512xf32>
    %373 = vector.extract_strided_slice %0 {offsets = [0, 21], sizes = [8, 1], strides = [1, 1]} : vector<24x48xf32> to vector<8x1xf32>
    %374 = vector.extract_strided_slice %0 {offsets = [0, 22], sizes = [8, 1], strides = [1, 1]} : vector<24x48xf32> to vector<8x1xf32>
    %cst_122 = arith.constant 0.000000e+00 : f32
    %375 = vector.shape_cast %6 : vector<1x512xi1> to vector<1x512xi1>
    %376 = vector.broadcast %375 : vector<1x512xi1> to vector<8x512xi1>
    %377 = vector.broadcast %cst_122 : f32 to vector<8x512xf32>
    %378 = arith.select %376, %372, %377 : vector<8x512xi1>, vector<8x512xf32>
    %cst_123 = arith.constant dense<0.000000e+00> : vector<512xf32>
    %379 = vector.multi_reduction <add>, %378, %cst_123 [0] : vector<8x512xf32> to vector<512xf32>
    %380 = vector.shape_cast %379 : vector<512xf32> to vector<1x512xf32>
    %381 = arith.mulf %378, %378 : vector<8x512xf32>
    %cst_124 = arith.constant dense<0.000000e+00> : vector<512xf32>
    %382 = vector.multi_reduction <add>, %381, %cst_124 [0] : vector<8x512xf32> to vector<512xf32>
    %383 = vector.shape_cast %382 : vector<512xf32> to vector<1x512xf32>
    %384 = tpu.concatenate %380, %383 in 0 : vector<1x512xf32>, vector<1x512xf32> -> vector<2x512xf32>
    %cst_125 = arith.constant dense<0.000000e+00> : vector<2x4xf32>
    %385 = tpu.matmul %384, %1, %cst_125 {dimension_numbers = #tpu.dot_dimension_numbers<[1], [0], [0], [1], [0, 0, 1, 1], [], []>} : vector<2x512xf32>, vector<512x4xf32>, vector<2x4xf32> -> vector<2x4xf32>
    %cst_126 = arith.constant dense<0.000000e+00> : vector<2x512xf32>
    %386 = tpu.matmul %385, %2, %cst_126 {dimension_numbers = #tpu.dot_dimension_numbers<[1], [0], [0], [1], [0, 0, 1, 1], [], []>} : vector<2x4xf32>, vector<4x512xf32>, vector<2x512xf32> -> vector<2x512xf32>
    %387 = vector.extract_strided_slice %386 {offsets = [0, 0], sizes = [1, 512], strides = [1, 1]} : vector<2x512xf32> to vector<1x512xf32>
    %cst_127 = arith.constant 1.250000e-01 : f32
    %388 = vector.broadcast %cst_127 : f32 to vector<1x512xf32>
    %389 = arith.mulf %387, %388 : vector<1x512xf32>
    %390 = vector.extract_strided_slice %386 {offsets = [1, 0], sizes = [1, 512], strides = [1, 1]} : vector<2x512xf32> to vector<1x512xf32>
    %cst_128 = arith.constant 1.250000e-01 : f32
    %391 = vector.broadcast %cst_128 : f32 to vector<1x512xf32>
    %392 = arith.mulf %390, %391 : vector<1x512xf32>
    %393 = arith.mulf %389, %389 : vector<1x512xf32>
    %394 = arith.subf %392, %393 : vector<1x512xf32>
    %395 = vector.broadcast %389 : vector<1x512xf32> to vector<8x512xf32>
    %396 = arith.subf %372, %395 : vector<8x512xf32>
    %cst_129 = arith.constant 9.99999993E-9 : f32
    %397 = vector.broadcast %cst_129 : f32 to vector<1x512xf32>
    %398 = arith.addf %394, %397 : vector<1x512xf32>
    %399 = math.rsqrt %398 : vector<1x512xf32>
    %400 = vector.broadcast %399 : vector<1x512xf32> to vector<8x512xf32>
    %401 = arith.mulf %396, %400 : vector<8x512xf32>
    %402 = vector.broadcast %373 : vector<8x1xf32> to vector<8x512xf32>
    %403 = arith.mulf %401, %402 : vector<8x512xf32>
    %404 = vector.broadcast %374 : vector<8x1xf32> to vector<8x512xf32>
    %405 = arith.addf %403, %404 : vector<8x512xf32>
    %c1_130 = arith.constant 1 : index
    %c0_131 = arith.constant 0 : index
    %c0_132 = arith.constant 0 : index
    %406 = vector.load %arg6[%c1_130, %c0_131, %c0_132] : memref<4x8x8xf32, #tpu.memory_space<vmem>>, vector<1x8x8xf32>
    %407 = vector.shape_cast %406 : vector<1x8x8xf32> to vector<8x8xf32>
    %cst_133 = arith.constant dense<0.000000e+00> : vector<8x512xf32>
    %408 = tpu.matmul %407, %405, %cst_133 {dimension_numbers = #tpu.dot_dimension_numbers<[1], [0], [0], [1], [0, 0, 1, 1], [], []>} : vector<8x8xf32>, vector<8x512xf32>, vector<8x512xf32> -> vector<8x512xf32>
    %409 = vector.extract_strided_slice %0 {offsets = [0, 23], sizes = [8, 1], strides = [1, 1]} : vector<24x48xf32> to vector<8x1xf32>
    %410 = vector.broadcast %409 : vector<8x1xf32> to vector<8x512xf32>
    %411 = arith.addf %408, %410 : vector<8x512xf32>
    %c0_134 = arith.constant 0 : index
    %c0_135 = arith.constant 0 : index
    %412 = vector.load %arg14[%c0_134, %c0_135] : memref<8x512xf32, #tpu.memory_space<vmem>>, vector<8x512xf32>
    %413 = arith.addf %412, %411 : vector<8x512xf32>
    %c10 = arith.constant 10 : index
    %414 = memref.load %arg12[%c10] : memref<20xf32, #tpu.memory_space<smem>>
    %c11 = arith.constant 11 : index
    %415 = memref.load %arg12[%c11] : memref<20xf32, #tpu.memory_space<smem>>
    %c12 = arith.constant 12 : index
    %416 = memref.load %arg12[%c12] : memref<20xf32, #tpu.memory_space<smem>>
    %c13 = arith.constant 13 : index
    %417 = memref.load %arg12[%c13] : memref<20xf32, #tpu.memory_space<smem>>
    %c14 = arith.constant 14 : index
    %418 = memref.load %arg12[%c14] : memref<20xf32, #tpu.memory_space<smem>>
    %c2_136 = arith.constant 2 : index
    %c0_137 = arith.constant 0 : index
    %c0_138 = arith.constant 0 : index
    %419 = vector.load %arg2[%c2_136, %c0_137, %c0_138] : memref<4x24x8xf32, #tpu.memory_space<vmem>>, vector<1x24x8xf32>
    %420 = vector.shape_cast %419 : vector<1x24x8xf32> to vector<24x8xf32>
    %cst_139 = arith.constant dense<0.000000e+00> : vector<24x512xf32>
    %421 = tpu.matmul %420, %413, %cst_139 {dimension_numbers = #tpu.dot_dimension_numbers<[1], [0], [0], [1], [0, 0, 1, 1], [], []>} : vector<24x8xf32>, vector<8x512xf32>, vector<24x512xf32> -> vector<24x512xf32>
    %422 = vector.extract_strided_slice %0 {offsets = [0, 24], sizes = [24, 1], strides = [1, 1]} : vector<24x48xf32> to vector<24x1xf32>
    %423 = vector.broadcast %422 : vector<24x1xf32> to vector<24x512xf32>
    %424 = arith.addf %421, %423 : vector<24x512xf32>
    %cst_140 = arith.constant 0.000000e+00 : f32
    %425 = vector.broadcast %cst_140 : f32 to vector<24x512xf32>
    %426 = arith.cmpf oge, %424, %425 : vector<24x512xf32>
    %427 = vector.broadcast %414 : f32 to vector<24x512xf32>
    %428 = arith.mulf %427, %424 : vector<24x512xf32>
    %429 = arith.select %426, %424, %428 : vector<24x512xi1>, vector<24x512xf32>
    %430 = vector.extract_strided_slice %429 {offsets = [0, 0], sizes = [24, 256], strides = [1, 1]} : vector<24x512xf32> to vector<24x256xf32>
    %431 = vector.extract_strided_slice %429 {offsets = [0, 256], sizes = [24, 256], strides = [1, 1]} : vector<24x512xf32> to vector<24x256xf32>
    %432 = arith.addf %430, %431 : vector<24x256xf32>
    %c2_141 = arith.constant 2 : index
    %c0_142 = arith.constant 0 : index
    %c0_143 = arith.constant 0 : index
    %433 = vector.load %arg3[%c2_141, %c0_142, %c0_143] : memref<4x24x24xf32, #tpu.memory_space<vmem>>, vector<1x24x24xf32>
    %434 = vector.shape_cast %433 : vector<1x24x24xf32> to vector<24x24xf32>
    %cst_144 = arith.constant 5.000000e-01 : f32
    %435 = vector.broadcast %cst_144 : f32 to vector<24x256xf32>
    %436 = arith.mulf %432, %435 : vector<24x256xf32>
    %cst_145 = arith.constant dense<0.000000e+00> : vector<24x256xf32>
    %437 = tpu.matmul %434, %436, %cst_145 {dimension_numbers = #tpu.dot_dimension_numbers<[1], [0], [0], [1], [0, 0, 1, 1], [], []>} : vector<24x24xf32>, vector<24x256xf32>, vector<24x256xf32> -> vector<24x256xf32>
    %438 = vector.extract_strided_slice %0 {offsets = [0, 25], sizes = [24, 1], strides = [1, 1]} : vector<24x48xf32> to vector<24x1xf32>
    %439 = vector.broadcast %438 : vector<24x1xf32> to vector<24x256xf32>
    %440 = arith.addf %437, %439 : vector<24x256xf32>
    %cst_146 = arith.constant 0.000000e+00 : f32
    %441 = vector.broadcast %cst_146 : f32 to vector<24x256xf32>
    %442 = arith.cmpf oge, %440, %441 : vector<24x256xf32>
    %443 = vector.broadcast %415 : f32 to vector<24x256xf32>
    %444 = arith.mulf %443, %440 : vector<24x256xf32>
    %445 = arith.select %442, %440, %444 : vector<24x256xi1>, vector<24x256xf32>
    %446 = tpu.concatenate %445, %445 in 1 : vector<24x256xf32>, vector<24x256xf32> -> vector<24x512xf32>
    %447 = tpu.concatenate %429, %446 in 0 : vector<24x512xf32>, vector<24x512xf32> -> vector<48x512xf32>
    %c2_147 = arith.constant 2 : index
    %c0_148 = arith.constant 0 : index
    %c0_149 = arith.constant 0 : index
    %448 = vector.load %arg4[%c2_147, %c0_148, %c0_149] : memref<4x8x48xf32, #tpu.memory_space<vmem>>, vector<1x8x48xf32>
    %449 = vector.shape_cast %448 : vector<1x8x48xf32> to vector<8x48xf32>
    %cst_150 = arith.constant dense<0.000000e+00> : vector<8x512xf32>
    %450 = tpu.matmul %449, %447, %cst_150 {dimension_numbers = #tpu.dot_dimension_numbers<[1], [0], [0], [1], [0, 0, 1, 1], [], []>} : vector<8x48xf32>, vector<48x512xf32>, vector<8x512xf32> -> vector<8x512xf32>
    %451 = vector.extract_strided_slice %0 {offsets = [0, 26], sizes = [8, 1], strides = [1, 1]} : vector<24x48xf32> to vector<8x1xf32>
    %452 = vector.broadcast %451 : vector<8x1xf32> to vector<8x512xf32>
    %453 = arith.addf %450, %452 : vector<8x512xf32>
    %cst_151 = arith.constant 0.000000e+00 : f32
    %454 = vector.broadcast %cst_151 : f32 to vector<8x512xf32>
    %455 = arith.cmpf oge, %453, %454 : vector<8x512xf32>
    %456 = vector.broadcast %416 : f32 to vector<8x512xf32>
    %457 = arith.mulf %456, %453 : vector<8x512xf32>
    %458 = arith.select %455, %453, %457 : vector<8x512xi1>, vector<8x512xf32>
    %459 = vector.extract_strided_slice %0 {offsets = [0, 27], sizes = [8, 1], strides = [1, 1]} : vector<24x48xf32> to vector<8x1xf32>
    %460 = vector.extract_strided_slice %0 {offsets = [0, 28], sizes = [8, 1], strides = [1, 1]} : vector<24x48xf32> to vector<8x1xf32>
    %cst_152 = arith.constant 0.000000e+00 : f32
    %461 = vector.shape_cast %6 : vector<1x512xi1> to vector<1x512xi1>
    %462 = vector.broadcast %461 : vector<1x512xi1> to vector<8x512xi1>
    %463 = vector.broadcast %cst_152 : f32 to vector<8x512xf32>
    %464 = arith.select %462, %458, %463 : vector<8x512xi1>, vector<8x512xf32>
    %cst_153 = arith.constant dense<0.000000e+00> : vector<512xf32>
    %465 = vector.multi_reduction <add>, %464, %cst_153 [0] : vector<8x512xf32> to vector<512xf32>
    %466 = vector.shape_cast %465 : vector<512xf32> to vector<1x512xf32>
    %467 = arith.mulf %464, %464 : vector<8x512xf32>
    %cst_154 = arith.constant dense<0.000000e+00> : vector<512xf32>
    %468 = vector.multi_reduction <add>, %467, %cst_154 [0] : vector<8x512xf32> to vector<512xf32>
    %469 = vector.shape_cast %468 : vector<512xf32> to vector<1x512xf32>
    %470 = tpu.concatenate %466, %469 in 0 : vector<1x512xf32>, vector<1x512xf32> -> vector<2x512xf32>
    %cst_155 = arith.constant dense<0.000000e+00> : vector<2x4xf32>
    %471 = tpu.matmul %470, %1, %cst_155 {dimension_numbers = #tpu.dot_dimension_numbers<[1], [0], [0], [1], [0, 0, 1, 1], [], []>} : vector<2x512xf32>, vector<512x4xf32>, vector<2x4xf32> -> vector<2x4xf32>
    %cst_156 = arith.constant dense<0.000000e+00> : vector<2x512xf32>
    %472 = tpu.matmul %471, %2, %cst_156 {dimension_numbers = #tpu.dot_dimension_numbers<[1], [0], [0], [1], [0, 0, 1, 1], [], []>} : vector<2x4xf32>, vector<4x512xf32>, vector<2x512xf32> -> vector<2x512xf32>
    %473 = vector.extract_strided_slice %472 {offsets = [0, 0], sizes = [1, 512], strides = [1, 1]} : vector<2x512xf32> to vector<1x512xf32>
    %cst_157 = arith.constant 1.250000e-01 : f32
    %474 = vector.broadcast %cst_157 : f32 to vector<1x512xf32>
    %475 = arith.mulf %473, %474 : vector<1x512xf32>
    %476 = vector.extract_strided_slice %472 {offsets = [1, 0], sizes = [1, 512], strides = [1, 1]} : vector<2x512xf32> to vector<1x512xf32>
    %cst_158 = arith.constant 1.250000e-01 : f32
    %477 = vector.broadcast %cst_158 : f32 to vector<1x512xf32>
    %478 = arith.mulf %476, %477 : vector<1x512xf32>
    %479 = arith.mulf %475, %475 : vector<1x512xf32>
    %480 = arith.subf %478, %479 : vector<1x512xf32>
    %481 = vector.broadcast %475 : vector<1x512xf32> to vector<8x512xf32>
    %482 = arith.subf %458, %481 : vector<8x512xf32>
    %cst_159 = arith.constant 1.1920929E-7 : f32
    %483 = vector.broadcast %cst_159 : f32 to vector<1x512xf32>
    %484 = arith.addf %480, %483 : vector<1x512xf32>
    %485 = math.rsqrt %484 : vector<1x512xf32>
    %486 = vector.broadcast %485 : vector<1x512xf32> to vector<8x512xf32>
    %487 = arith.mulf %482, %486 : vector<8x512xf32>
    %488 = vector.broadcast %459 : vector<8x1xf32> to vector<8x512xf32>
    %489 = arith.mulf %487, %488 : vector<8x512xf32>
    %490 = vector.broadcast %460 : vector<8x1xf32> to vector<8x512xf32>
    %491 = arith.addf %489, %490 : vector<8x512xf32>
    %492 = arith.addf %413, %491 : vector<8x512xf32>
    %c0_160 = arith.constant 0 : index
    %c0_161 = arith.constant 0 : index
    %493 = vector.load %arg14[%c0_160, %c0_161] : memref<8x512xf32, #tpu.memory_space<vmem>>, vector<8x512xf32>
    tpu.vector_store %arg14[%c0_160, %c0_161], %492 {strides = array<i32>} : memref<8x512xf32, #tpu.memory_space<vmem>>, vector<8x512xf32>,
    %c2_162 = arith.constant 2 : index
    %c0_163 = arith.constant 0 : index
    %c0_164 = arith.constant 0 : index
    %494 = vector.load %arg5[%c2_162, %c0_163, %c0_164] : memref<4x8x8xf32, #tpu.memory_space<vmem>>, vector<1x8x8xf32>
    %495 = vector.shape_cast %494 : vector<1x8x8xf32> to vector<8x8xf32>
    %c0_165 = arith.constant 0 : index
    %c0_166 = arith.constant 0 : index
    %496 = vector.load %arg14[%c0_165, %c0_166] : memref<8x512xf32, #tpu.memory_space<vmem>>, vector<8x512xf32>
    %cst_167 = arith.constant dense<0.000000e+00> : vector<8x512xf32>
    %497 = tpu.matmul %495, %496, %cst_167 {dimension_numbers = #tpu.dot_dimension_numbers<[1], [0], [0], [1], [0, 0, 1, 1], [], []>} : vector<8x8xf32>, vector<8x512xf32>, vector<8x512xf32> -> vector<8x512xf32>
    %498 = vector.extract_strided_slice %0 {offsets = [0, 29], sizes = [8, 1], strides = [1, 1]} : vector<24x48xf32> to vector<8x1xf32>
    %499 = vector.broadcast %498 : vector<8x1xf32> to vector<8x512xf32>
    %500 = arith.addf %497, %499 : vector<8x512xf32>
    %cst_168 = arith.constant 0.000000e+00 : f32
    %501 = vector.broadcast %cst_168 : f32 to vector<8x512xf32>
    %502 = arith.cmpf oge, %500, %501 : vector<8x512xf32>
    %503 = vector.broadcast %417 : f32 to vector<8x512xf32>
    %504 = arith.mulf %503, %500 : vector<8x512xf32>
    %505 = arith.select %502, %500, %504 : vector<8x512xi1>, vector<8x512xf32>
    %506 = vector.extract_strided_slice %0 {offsets = [0, 30], sizes = [8, 1], strides = [1, 1]} : vector<24x48xf32> to vector<8x1xf32>
    %507 = vector.extract_strided_slice %0 {offsets = [0, 31], sizes = [8, 1], strides = [1, 1]} : vector<24x48xf32> to vector<8x1xf32>
    %cst_169 = arith.constant 0.000000e+00 : f32
    %508 = vector.shape_cast %6 : vector<1x512xi1> to vector<1x512xi1>
    %509 = vector.broadcast %508 : vector<1x512xi1> to vector<8x512xi1>
    %510 = vector.broadcast %cst_169 : f32 to vector<8x512xf32>
    %511 = arith.select %509, %505, %510 : vector<8x512xi1>, vector<8x512xf32>
    %cst_170 = arith.constant dense<0.000000e+00> : vector<512xf32>
    %512 = vector.multi_reduction <add>, %511, %cst_170 [0] : vector<8x512xf32> to vector<512xf32>
    %513 = vector.shape_cast %512 : vector<512xf32> to vector<1x512xf32>
    %514 = arith.mulf %511, %511 : vector<8x512xf32>
    %cst_171 = arith.constant dense<0.000000e+00> : vector<512xf32>
    %515 = vector.multi_reduction <add>, %514, %cst_171 [0] : vector<8x512xf32> to vector<512xf32>
    %516 = vector.shape_cast %515 : vector<512xf32> to vector<1x512xf32>
    %517 = tpu.concatenate %513, %516 in 0 : vector<1x512xf32>, vector<1x512xf32> -> vector<2x512xf32>
    %cst_172 = arith.constant dense<0.000000e+00> : vector<2x4xf32>
    %518 = tpu.matmul %517, %1, %cst_172 {dimension_numbers = #tpu.dot_dimension_numbers<[1], [0], [0], [1], [0, 0, 1, 1], [], []>} : vector<2x512xf32>, vector<512x4xf32>, vector<2x4xf32> -> vector<2x4xf32>
    %cst_173 = arith.constant dense<0.000000e+00> : vector<2x512xf32>
    %519 = tpu.matmul %518, %2, %cst_173 {dimension_numbers = #tpu.dot_dimension_numbers<[1], [0], [0], [1], [0, 0, 1, 1], [], []>} : vector<2x4xf32>, vector<4x512xf32>, vector<2x512xf32> -> vector<2x512xf32>
    %520 = vector.extract_strided_slice %519 {offsets = [0, 0], sizes = [1, 512], strides = [1, 1]} : vector<2x512xf32> to vector<1x512xf32>
    %cst_174 = arith.constant 1.250000e-01 : f32
    %521 = vector.broadcast %cst_174 : f32 to vector<1x512xf32>
    %522 = arith.mulf %520, %521 : vector<1x512xf32>
    %523 = vector.extract_strided_slice %519 {offsets = [1, 0], sizes = [1, 512], strides = [1, 1]} : vector<2x512xf32> to vector<1x512xf32>
    %cst_175 = arith.constant 1.250000e-01 : f32
    %524 = vector.broadcast %cst_175 : f32 to vector<1x512xf32>
    %525 = arith.mulf %523, %524 : vector<1x512xf32>
    %526 = arith.mulf %522, %522 : vector<1x512xf32>
    %527 = arith.subf %525, %526 : vector<1x512xf32>
    %528 = vector.broadcast %522 : vector<1x512xf32> to vector<8x512xf32>
    %529 = arith.subf %505, %528 : vector<8x512xf32>
    %cst_176 = arith.constant 9.99999993E-9 : f32
    %530 = vector.broadcast %cst_176 : f32 to vector<1x512xf32>
    %531 = arith.addf %527, %530 : vector<1x512xf32>
    %532 = math.rsqrt %531 : vector<1x512xf32>
    %533 = vector.broadcast %532 : vector<1x512xf32> to vector<8x512xf32>
    %534 = arith.mulf %529, %533 : vector<8x512xf32>
    %535 = vector.broadcast %506 : vector<8x1xf32> to vector<8x512xf32>
    %536 = arith.mulf %534, %535 : vector<8x512xf32>
    %537 = vector.broadcast %507 : vector<8x1xf32> to vector<8x512xf32>
    %538 = arith.addf %536, %537 : vector<8x512xf32>
    %c2_177 = arith.constant 2 : index
    %c0_178 = arith.constant 0 : index
    %c0_179 = arith.constant 0 : index
    %539 = vector.load %arg7[%c2_177, %c0_178, %c0_179] : memref<4x8x3xf32, #tpu.memory_space<vmem>>, vector<1x8x3xf32>
    %540 = vector.shape_cast %539 : vector<1x8x3xf32> to vector<8x3xf32>
    %c1_i32_180 = arith.constant 1 : i32
    %541 = tpu.dynamic_rotate %538 by %c1_i32_180 dim 1 : vector<8x512xf32>, i32 -> vector<8x512xf32>
    %cst_181 = arith.constant 0.000000e+00 : f32
    %542 = vector.shape_cast %138 : vector<1x512xi1> to vector<1x512xi1>
    %543 = vector.broadcast %542 : vector<1x512xi1> to vector<8x512xi1>
    %544 = vector.broadcast %cst_181 : f32 to vector<8x512xf32>
    %545 = arith.select %543, %541, %544 : vector<8x512xi1>, vector<8x512xf32>
    %546 = vector.extract_strided_slice %540 {offsets = [0, 0], sizes = [8, 1], strides = [1, 1]} : vector<8x3xf32> to vector<8x1xf32>
    %547 = vector.broadcast %546 : vector<8x1xf32> to vector<8x512xf32>
    %548 = arith.mulf %547, %545 : vector<8x512xf32>
    %549 = vector.extract_strided_slice %540 {offsets = [0, 1], sizes = [8, 1], strides = [1, 1]} : vector<8x3xf32> to vector<8x1xf32>
    %550 = vector.broadcast %549 : vector<8x1xf32> to vector<8x512xf32>
    %551 = arith.mulf %550, %538 : vector<8x512xf32>
    %552 = arith.addf %548, %551 : vector<8x512xf32>
    %c511_i32_182 = arith.constant 511 : i32
    %553 = tpu.dynamic_rotate %538 by %c511_i32_182 dim 1 : vector<8x512xf32>, i32 -> vector<8x512xf32>
    %cst_183 = arith.constant 0.000000e+00 : f32
    %554 = vector.shape_cast %153 : vector<1x512xi1> to vector<1x512xi1>
    %555 = vector.broadcast %554 : vector<1x512xi1> to vector<8x512xi1>
    %556 = vector.broadcast %cst_183 : f32 to vector<8x512xf32>
    %557 = arith.select %555, %553, %556 : vector<8x512xi1>, vector<8x512xf32>
    %558 = vector.extract_strided_slice %540 {offsets = [0, 2], sizes = [8, 1], strides = [1, 1]} : vector<8x3xf32> to vector<8x1xf32>
    %559 = vector.broadcast %558 : vector<8x1xf32> to vector<8x512xf32>
    %560 = arith.mulf %559, %557 : vector<8x512xf32>
    %561 = arith.addf %552, %560 : vector<8x512xf32>
    %562 = vector.extract_strided_slice %0 {offsets = [0, 32], sizes = [8, 1], strides = [1, 1]} : vector<24x48xf32> to vector<8x1xf32>
    %563 = vector.broadcast %562 : vector<8x1xf32> to vector<8x512xf32>
    %564 = arith.addf %561, %563 : vector<8x512xf32>
    %cst_184 = arith.constant 0.000000e+00 : f32
    %565 = vector.broadcast %cst_184 : f32 to vector<8x512xf32>
    %566 = arith.cmpf oge, %564, %565 : vector<8x512xf32>
    %567 = vector.broadcast %418 : f32 to vector<8x512xf32>
    %568 = arith.mulf %567, %564 : vector<8x512xf32>
    %569 = arith.select %566, %564, %568 : vector<8x512xi1>, vector<8x512xf32>
    %570 = vector.extract_strided_slice %0 {offsets = [0, 33], sizes = [8, 1], strides = [1, 1]} : vector<24x48xf32> to vector<8x1xf32>
    %571 = vector.extract_strided_slice %0 {offsets = [0, 34], sizes = [8, 1], strides = [1, 1]} : vector<24x48xf32> to vector<8x1xf32>
    %cst_185 = arith.constant 0.000000e+00 : f32
    %572 = vector.shape_cast %6 : vector<1x512xi1> to vector<1x512xi1>
    %573 = vector.broadcast %572 : vector<1x512xi1> to vector<8x512xi1>
    %574 = vector.broadcast %cst_185 : f32 to vector<8x512xf32>
    %575 = arith.select %573, %569, %574 : vector<8x512xi1>, vector<8x512xf32>
    %cst_186 = arith.constant dense<0.000000e+00> : vector<512xf32>
    %576 = vector.multi_reduction <add>, %575, %cst_186 [0] : vector<8x512xf32> to vector<512xf32>
    %577 = vector.shape_cast %576 : vector<512xf32> to vector<1x512xf32>
    %578 = arith.mulf %575, %575 : vector<8x512xf32>
    %cst_187 = arith.constant dense<0.000000e+00> : vector<512xf32>
    %579 = vector.multi_reduction <add>, %578, %cst_187 [0] : vector<8x512xf32> to vector<512xf32>
    %580 = vector.shape_cast %579 : vector<512xf32> to vector<1x512xf32>
    %581 = tpu.concatenate %577, %580 in 0 : vector<1x512xf32>, vector<1x512xf32> -> vector<2x512xf32>
    %cst_188 = arith.constant dense<0.000000e+00> : vector<2x4xf32>
    %582 = tpu.matmul %581, %1, %cst_188 {dimension_numbers = #tpu.dot_dimension_numbers<[1], [0], [0], [1], [0, 0, 1, 1], [], []>} : vector<2x512xf32>, vector<512x4xf32>, vector<2x4xf32> -> vector<2x4xf32>
    %cst_189 = arith.constant dense<0.000000e+00> : vector<2x512xf32>
    %583 = tpu.matmul %582, %2, %cst_189 {dimension_numbers = #tpu.dot_dimension_numbers<[1], [0], [0], [1], [0, 0, 1, 1], [], []>} : vector<2x4xf32>, vector<4x512xf32>, vector<2x512xf32> -> vector<2x512xf32>
    %584 = vector.extract_strided_slice %583 {offsets = [0, 0], sizes = [1, 512], strides = [1, 1]} : vector<2x512xf32> to vector<1x512xf32>
    %cst_190 = arith.constant 1.250000e-01 : f32
    %585 = vector.broadcast %cst_190 : f32 to vector<1x512xf32>
    %586 = arith.mulf %584, %585 : vector<1x512xf32>
    %587 = vector.extract_strided_slice %583 {offsets = [1, 0], sizes = [1, 512], strides = [1, 1]} : vector<2x512xf32> to vector<1x512xf32>
    %cst_191 = arith.constant 1.250000e-01 : f32
    %588 = vector.broadcast %cst_191 : f32 to vector<1x512xf32>
    %589 = arith.mulf %587, %588 : vector<1x512xf32>
    %590 = arith.mulf %586, %586 : vector<1x512xf32>
    %591 = arith.subf %589, %590 : vector<1x512xf32>
    %592 = vector.broadcast %586 : vector<1x512xf32> to vector<8x512xf32>
    %593 = arith.subf %569, %592 : vector<8x512xf32>
    %cst_192 = arith.constant 9.99999993E-9 : f32
    %594 = vector.broadcast %cst_192 : f32 to vector<1x512xf32>
    %595 = arith.addf %591, %594 : vector<1x512xf32>
    %596 = math.rsqrt %595 : vector<1x512xf32>
    %597 = vector.broadcast %596 : vector<1x512xf32> to vector<8x512xf32>
    %598 = arith.mulf %593, %597 : vector<8x512xf32>
    %599 = vector.broadcast %570 : vector<8x1xf32> to vector<8x512xf32>
    %600 = arith.mulf %598, %599 : vector<8x512xf32>
    %601 = vector.broadcast %571 : vector<8x1xf32> to vector<8x512xf32>
    %602 = arith.addf %600, %601 : vector<8x512xf32>
    %c2_193 = arith.constant 2 : index
    %c0_194 = arith.constant 0 : index
    %c0_195 = arith.constant 0 : index
    %603 = vector.load %arg6[%c2_193, %c0_194, %c0_195] : memref<4x8x8xf32, #tpu.memory_space<vmem>>, vector<1x8x8xf32>
    %604 = vector.shape_cast %603 : vector<1x8x8xf32> to vector<8x8xf32>
    %cst_196 = arith.constant dense<0.000000e+00> : vector<8x512xf32>
    %605 = tpu.matmul %604, %602, %cst_196 {dimension_numbers = #tpu.dot_dimension_numbers<[1], [0], [0], [1], [0, 0, 1, 1], [], []>} : vector<8x8xf32>, vector<8x512xf32>, vector<8x512xf32> -> vector<8x512xf32>
    %606 = vector.extract_strided_slice %0 {offsets = [0, 35], sizes = [8, 1], strides = [1, 1]} : vector<24x48xf32> to vector<8x1xf32>
    %607 = vector.broadcast %606 : vector<8x1xf32> to vector<8x512xf32>
    %608 = arith.addf %605, %607 : vector<8x512xf32>
    %c0_197 = arith.constant 0 : index
    %c0_198 = arith.constant 0 : index
    %609 = vector.load %arg14[%c0_197, %c0_198] : memref<8x512xf32, #tpu.memory_space<vmem>>, vector<8x512xf32>
    %610 = arith.addf %609, %608 : vector<8x512xf32>
    %c15 = arith.constant 15 : index
    %611 = memref.load %arg12[%c15] : memref<20xf32, #tpu.memory_space<smem>>
    %c16 = arith.constant 16 : index
    %612 = memref.load %arg12[%c16] : memref<20xf32, #tpu.memory_space<smem>>
    %c17 = arith.constant 17 : index
    %613 = memref.load %arg12[%c17] : memref<20xf32, #tpu.memory_space<smem>>
    %c18 = arith.constant 18 : index
    %614 = memref.load %arg12[%c18] : memref<20xf32, #tpu.memory_space<smem>>
    %c19 = arith.constant 19 : index
    %615 = memref.load %arg12[%c19] : memref<20xf32, #tpu.memory_space<smem>>
    %c3_199 = arith.constant 3 : index
    %c0_200 = arith.constant 0 : index
    %c0_201 = arith.constant 0 : index
    %616 = vector.load %arg2[%c3_199, %c0_200, %c0_201] : memref<4x24x8xf32, #tpu.memory_space<vmem>>, vector<1x24x8xf32>
    %617 = vector.shape_cast %616 : vector<1x24x8xf32> to vector<24x8xf32>
    %cst_202 = arith.constant dense<0.000000e+00> : vector<24x512xf32>
    %618 = tpu.matmul %617, %610, %cst_202 {dimension_numbers = #tpu.dot_dimension_numbers<[1], [0], [0], [1], [0, 0, 1, 1], [], []>} : vector<24x8xf32>, vector<8x512xf32>, vector<24x512xf32> -> vector<24x512xf32>
    %619 = vector.extract_strided_slice %0 {offsets = [0, 36], sizes = [24, 1], strides = [1, 1]} : vector<24x48xf32> to vector<24x1xf32>
    %620 = vector.broadcast %619 : vector<24x1xf32> to vector<24x512xf32>
    %621 = arith.addf %618, %620 : vector<24x512xf32>
    %cst_203 = arith.constant 0.000000e+00 : f32
    %622 = vector.broadcast %cst_203 : f32 to vector<24x512xf32>
    %623 = arith.cmpf oge, %621, %622 : vector<24x512xf32>
    %624 = vector.broadcast %611 : f32 to vector<24x512xf32>
    %625 = arith.mulf %624, %621 : vector<24x512xf32>
    %626 = arith.select %623, %621, %625 : vector<24x512xi1>, vector<24x512xf32>
    %627 = vector.extract_strided_slice %626 {offsets = [0, 0], sizes = [24, 256], strides = [1, 1]} : vector<24x512xf32> to vector<24x256xf32>
    %628 = vector.extract_strided_slice %626 {offsets = [0, 256], sizes = [24, 256], strides = [1, 1]} : vector<24x512xf32> to vector<24x256xf32>
    %629 = arith.addf %627, %628 : vector<24x256xf32>
    %c3_204 = arith.constant 3 : index
    %c0_205 = arith.constant 0 : index
    %c0_206 = arith.constant 0 : index
    %630 = vector.load %arg3[%c3_204, %c0_205, %c0_206] : memref<4x24x24xf32, #tpu.memory_space<vmem>>, vector<1x24x24xf32>
    %631 = vector.shape_cast %630 : vector<1x24x24xf32> to vector<24x24xf32>
    %cst_207 = arith.constant 5.000000e-01 : f32
    %632 = vector.broadcast %cst_207 : f32 to vector<24x256xf32>
    %633 = arith.mulf %629, %632 : vector<24x256xf32>
    %cst_208 = arith.constant dense<0.000000e+00> : vector<24x256xf32>
    %634 = tpu.matmul %631, %633, %cst_208 {dimension_numbers = #tpu.dot_dimension_numbers<[1], [0], [0], [1], [0, 0, 1, 1], [], []>} : vector<24x24xf32>, vector<24x256xf32>, vector<24x256xf32> -> vector<24x256xf32>
    %635 = vector.extract_strided_slice %0 {offsets = [0, 37], sizes = [24, 1], strides = [1, 1]} : vector<24x48xf32> to vector<24x1xf32>
    %636 = vector.broadcast %635 : vector<24x1xf32> to vector<24x256xf32>
    %637 = arith.addf %634, %636 : vector<24x256xf32>
    %cst_209 = arith.constant 0.000000e+00 : f32
    %638 = vector.broadcast %cst_209 : f32 to vector<24x256xf32>
    %639 = arith.cmpf oge, %637, %638 : vector<24x256xf32>
    %640 = vector.broadcast %612 : f32 to vector<24x256xf32>
    %641 = arith.mulf %640, %637 : vector<24x256xf32>
    %642 = arith.select %639, %637, %641 : vector<24x256xi1>, vector<24x256xf32>
    %643 = tpu.concatenate %642, %642 in 1 : vector<24x256xf32>, vector<24x256xf32> -> vector<24x512xf32>
    %644 = tpu.concatenate %626, %643 in 0 : vector<24x512xf32>, vector<24x512xf32> -> vector<48x512xf32>
    %c3_210 = arith.constant 3 : index
    %c0_211 = arith.constant 0 : index
    %c0_212 = arith.constant 0 : index
    %645 = vector.load %arg4[%c3_210, %c0_211, %c0_212] : memref<4x8x48xf32, #tpu.memory_space<vmem>>, vector<1x8x48xf32>
    %646 = vector.shape_cast %645 : vector<1x8x48xf32> to vector<8x48xf32>
    %cst_213 = arith.constant dense<0.000000e+00> : vector<8x512xf32>
    %647 = tpu.matmul %646, %644, %cst_213 {dimension_numbers = #tpu.dot_dimension_numbers<[1], [0], [0], [1], [0, 0, 1, 1], [], []>} : vector<8x48xf32>, vector<48x512xf32>, vector<8x512xf32> -> vector<8x512xf32>
    %648 = vector.extract_strided_slice %0 {offsets = [0, 38], sizes = [8, 1], strides = [1, 1]} : vector<24x48xf32> to vector<8x1xf32>
    %649 = vector.broadcast %648 : vector<8x1xf32> to vector<8x512xf32>
    %650 = arith.addf %647, %649 : vector<8x512xf32>
    %cst_214 = arith.constant 0.000000e+00 : f32
    %651 = vector.broadcast %cst_214 : f32 to vector<8x512xf32>
    %652 = arith.cmpf oge, %650, %651 : vector<8x512xf32>
    %653 = vector.broadcast %613 : f32 to vector<8x512xf32>
    %654 = arith.mulf %653, %650 : vector<8x512xf32>
    %655 = arith.select %652, %650, %654 : vector<8x512xi1>, vector<8x512xf32>
    %656 = vector.extract_strided_slice %0 {offsets = [0, 39], sizes = [8, 1], strides = [1, 1]} : vector<24x48xf32> to vector<8x1xf32>
    %657 = vector.extract_strided_slice %0 {offsets = [0, 40], sizes = [8, 1], strides = [1, 1]} : vector<24x48xf32> to vector<8x1xf32>
    %cst_215 = arith.constant 0.000000e+00 : f32
    %658 = vector.shape_cast %6 : vector<1x512xi1> to vector<1x512xi1>
    %659 = vector.broadcast %658 : vector<1x512xi1> to vector<8x512xi1>
    %660 = vector.broadcast %cst_215 : f32 to vector<8x512xf32>
    %661 = arith.select %659, %655, %660 : vector<8x512xi1>, vector<8x512xf32>
    %cst_216 = arith.constant dense<0.000000e+00> : vector<512xf32>
    %662 = vector.multi_reduction <add>, %661, %cst_216 [0] : vector<8x512xf32> to vector<512xf32>
    %663 = vector.shape_cast %662 : vector<512xf32> to vector<1x512xf32>
    %664 = arith.mulf %661, %661 : vector<8x512xf32>
    %cst_217 = arith.constant dense<0.000000e+00> : vector<512xf32>
    %665 = vector.multi_reduction <add>, %664, %cst_217 [0] : vector<8x512xf32> to vector<512xf32>
    %666 = vector.shape_cast %665 : vector<512xf32> to vector<1x512xf32>
    %667 = tpu.concatenate %663, %666 in 0 : vector<1x512xf32>, vector<1x512xf32> -> vector<2x512xf32>
    %cst_218 = arith.constant dense<0.000000e+00> : vector<2x4xf32>
    %668 = tpu.matmul %667, %1, %cst_218 {dimension_numbers = #tpu.dot_dimension_numbers<[1], [0], [0], [1], [0, 0, 1, 1], [], []>} : vector<2x512xf32>, vector<512x4xf32>, vector<2x4xf32> -> vector<2x4xf32>
    %cst_219 = arith.constant dense<0.000000e+00> : vector<2x512xf32>
    %669 = tpu.matmul %668, %2, %cst_219 {dimension_numbers = #tpu.dot_dimension_numbers<[1], [0], [0], [1], [0, 0, 1, 1], [], []>} : vector<2x4xf32>, vector<4x512xf32>, vector<2x512xf32> -> vector<2x512xf32>
    %670 = vector.extract_strided_slice %669 {offsets = [0, 0], sizes = [1, 512], strides = [1, 1]} : vector<2x512xf32> to vector<1x512xf32>
    %cst_220 = arith.constant 1.250000e-01 : f32
    %671 = vector.broadcast %cst_220 : f32 to vector<1x512xf32>
    %672 = arith.mulf %670, %671 : vector<1x512xf32>
    %673 = vector.extract_strided_slice %669 {offsets = [1, 0], sizes = [1, 512], strides = [1, 1]} : vector<2x512xf32> to vector<1x512xf32>
    %cst_221 = arith.constant 1.250000e-01 : f32
    %674 = vector.broadcast %cst_221 : f32 to vector<1x512xf32>
    %675 = arith.mulf %673, %674 : vector<1x512xf32>
    %676 = arith.mulf %672, %672 : vector<1x512xf32>
    %677 = arith.subf %675, %676 : vector<1x512xf32>
    %678 = vector.broadcast %672 : vector<1x512xf32> to vector<8x512xf32>
    %679 = arith.subf %655, %678 : vector<8x512xf32>
    %cst_222 = arith.constant 1.1920929E-7 : f32
    %680 = vector.broadcast %cst_222 : f32 to vector<1x512xf32>
    %681 = arith.addf %677, %680 : vector<1x512xf32>
    %682 = math.rsqrt %681 : vector<1x512xf32>
    %683 = vector.broadcast %682 : vector<1x512xf32> to vector<8x512xf32>
    %684 = arith.mulf %679, %683 : vector<8x512xf32>
    %685 = vector.broadcast %656 : vector<8x1xf32> to vector<8x512xf32>
    %686 = arith.mulf %684, %685 : vector<8x512xf32>
    %687 = vector.broadcast %657 : vector<8x1xf32> to vector<8x512xf32>
    %688 = arith.addf %686, %687 : vector<8x512xf32>
    %689 = arith.addf %610, %688 : vector<8x512xf32>
    %c0_223 = arith.constant 0 : index
    %c0_224 = arith.constant 0 : index
    %690 = vector.load %arg14[%c0_223, %c0_224] : memref<8x512xf32, #tpu.memory_space<vmem>>, vector<8x512xf32>
    tpu.vector_store %arg14[%c0_223, %c0_224], %689 {strides = array<i32>} : memref<8x512xf32, #tpu.memory_space<vmem>>, vector<8x512xf32>,
    %c3_225 = arith.constant 3 : index
    %c0_226 = arith.constant 0 : index
    %c0_227 = arith.constant 0 : index
    %691 = vector.load %arg5[%c3_225, %c0_226, %c0_227] : memref<4x8x8xf32, #tpu.memory_space<vmem>>, vector<1x8x8xf32>
    %692 = vector.shape_cast %691 : vector<1x8x8xf32> to vector<8x8xf32>
    %c0_228 = arith.constant 0 : index
    %c0_229 = arith.constant 0 : index
    %693 = vector.load %arg14[%c0_228, %c0_229] : memref<8x512xf32, #tpu.memory_space<vmem>>, vector<8x512xf32>
    %cst_230 = arith.constant dense<0.000000e+00> : vector<8x512xf32>
    %694 = tpu.matmul %692, %693, %cst_230 {dimension_numbers = #tpu.dot_dimension_numbers<[1], [0], [0], [1], [0, 0, 1, 1], [], []>} : vector<8x8xf32>, vector<8x512xf32>, vector<8x512xf32> -> vector<8x512xf32>
    %695 = vector.extract_strided_slice %0 {offsets = [0, 41], sizes = [8, 1], strides = [1, 1]} : vector<24x48xf32> to vector<8x1xf32>
    %696 = vector.broadcast %695 : vector<8x1xf32> to vector<8x512xf32>
    %697 = arith.addf %694, %696 : vector<8x512xf32>
    %cst_231 = arith.constant 0.000000e+00 : f32
    %698 = vector.broadcast %cst_231 : f32 to vector<8x512xf32>
    %699 = arith.cmpf oge, %697, %698 : vector<8x512xf32>
    %700 = vector.broadcast %614 : f32 to vector<8x512xf32>
    %701 = arith.mulf %700, %697 : vector<8x512xf32>
    %702 = arith.select %699, %697, %701 : vector<8x512xi1>, vector<8x512xf32>
    %703 = vector.extract_strided_slice %0 {offsets = [0, 42], sizes = [8, 1], strides = [1, 1]} : vector<24x48xf32> to vector<8x1xf32>
    %704 = vector.extract_strided_slice %0 {offsets = [0, 43], sizes = [8, 1], strides = [1, 1]} : vector<24x48xf32> to vector<8x1xf32>
    %cst_232 = arith.constant 0.000000e+00 : f32
    %705 = vector.shape_cast %6 : vector<1x512xi1> to vector<1x512xi1>
    %706 = vector.broadcast %705 : vector<1x512xi1> to vector<8x512xi1>
    %707 = vector.broadcast %cst_232 : f32 to vector<8x512xf32>
    %708 = arith.select %706, %702, %707 : vector<8x512xi1>, vector<8x512xf32>
    %cst_233 = arith.constant dense<0.000000e+00> : vector<512xf32>
    %709 = vector.multi_reduction <add>, %708, %cst_233 [0] : vector<8x512xf32> to vector<512xf32>
    %710 = vector.shape_cast %709 : vector<512xf32> to vector<1x512xf32>
    %711 = arith.mulf %708, %708 : vector<8x512xf32>
    %cst_234 = arith.constant dense<0.000000e+00> : vector<512xf32>
    %712 = vector.multi_reduction <add>, %711, %cst_234 [0] : vector<8x512xf32> to vector<512xf32>
    %713 = vector.shape_cast %712 : vector<512xf32> to vector<1x512xf32>
    %714 = tpu.concatenate %710, %713 in 0 : vector<1x512xf32>, vector<1x512xf32> -> vector<2x512xf32>
    %cst_235 = arith.constant dense<0.000000e+00> : vector<2x4xf32>
    %715 = tpu.matmul %714, %1, %cst_235 {dimension_numbers = #tpu.dot_dimension_numbers<[1], [0], [0], [1], [0, 0, 1, 1], [], []>} : vector<2x512xf32>, vector<512x4xf32>, vector<2x4xf32> -> vector<2x4xf32>
    %cst_236 = arith.constant dense<0.000000e+00> : vector<2x512xf32>
    %716 = tpu.matmul %715, %2, %cst_236 {dimension_numbers = #tpu.dot_dimension_numbers<[1], [0], [0], [1], [0, 0, 1, 1], [], []>} : vector<2x4xf32>, vector<4x512xf32>, vector<2x512xf32> -> vector<2x512xf32>
    %717 = vector.extract_strided_slice %716 {offsets = [0, 0], sizes = [1, 512], strides = [1, 1]} : vector<2x512xf32> to vector<1x512xf32>
    %cst_237 = arith.constant 1.250000e-01 : f32
    %718 = vector.broadcast %cst_237 : f32 to vector<1x512xf32>
    %719 = arith.mulf %717, %718 : vector<1x512xf32>
    %720 = vector.extract_strided_slice %716 {offsets = [1, 0], sizes = [1, 512], strides = [1, 1]} : vector<2x512xf32> to vector<1x512xf32>
    %cst_238 = arith.constant 1.250000e-01 : f32
    %721 = vector.broadcast %cst_238 : f32 to vector<1x512xf32>
    %722 = arith.mulf %720, %721 : vector<1x512xf32>
    %723 = arith.mulf %719, %719 : vector<1x512xf32>
    %724 = arith.subf %722, %723 : vector<1x512xf32>
    %725 = vector.broadcast %719 : vector<1x512xf32> to vector<8x512xf32>
    %726 = arith.subf %702, %725 : vector<8x512xf32>
    %cst_239 = arith.constant 9.99999993E-9 : f32
    %727 = vector.broadcast %cst_239 : f32 to vector<1x512xf32>
    %728 = arith.addf %724, %727 : vector<1x512xf32>
    %729 = math.rsqrt %728 : vector<1x512xf32>
    %730 = vector.broadcast %729 : vector<1x512xf32> to vector<8x512xf32>
    %731 = arith.mulf %726, %730 : vector<8x512xf32>
    %732 = vector.broadcast %703 : vector<8x1xf32> to vector<8x512xf32>
    %733 = arith.mulf %731, %732 : vector<8x512xf32>
    %734 = vector.broadcast %704 : vector<8x1xf32> to vector<8x512xf32>
    %735 = arith.addf %733, %734 : vector<8x512xf32>
    %c3_240 = arith.constant 3 : index
    %c0_241 = arith.constant 0 : index
    %c0_242 = arith.constant 0 : index
    %736 = vector.load %arg7[%c3_240, %c0_241, %c0_242] : memref<4x8x3xf32, #tpu.memory_space<vmem>>, vector<1x8x3xf32>
    %737 = vector.shape_cast %736 : vector<1x8x3xf32> to vector<8x3xf32>
    %c2_i32_243 = arith.constant 2 : i32
    %738 = tpu.dynamic_rotate %735 by %c2_i32_243 dim 1 : vector<8x512xf32>, i32 -> vector<8x512xf32>
    %cst_244 = arith.constant 0.000000e+00 : f32
    %739 = vector.shape_cast %341 : vector<1x512xi1> to vector<1x512xi1>
    %740 = vector.broadcast %739 : vector<1x512xi1> to vector<8x512xi1>
    %741 = vector.broadcast %cst_244 : f32 to vector<8x512xf32>
    %742 = arith.select %740, %738, %741 : vector<8x512xi1>, vector<8x512xf32>
    %743 = vector.extract_strided_slice %737 {offsets = [0, 0], sizes = [8, 1], strides = [1, 1]} : vector<8x3xf32> to vector<8x1xf32>
    %744 = vector.broadcast %743 : vector<8x1xf32> to vector<8x512xf32>
    %745 = arith.mulf %744, %742 : vector<8x512xf32>
    %746 = vector.extract_strided_slice %737 {offsets = [0, 1], sizes = [8, 1], strides = [1, 1]} : vector<8x3xf32> to vector<8x1xf32>
    %747 = vector.broadcast %746 : vector<8x1xf32> to vector<8x512xf32>
    %748 = arith.mulf %747, %735 : vector<8x512xf32>
    %749 = arith.addf %745, %748 : vector<8x512xf32>
    %c510_i32_245 = arith.constant 510 : i32
    %750 = tpu.dynamic_rotate %735 by %c510_i32_245 dim 1 : vector<8x512xf32>, i32 -> vector<8x512xf32>
    %cst_246 = arith.constant 0.000000e+00 : f32
    %751 = vector.shape_cast %356 : vector<1x512xi1> to vector<1x512xi1>
    %752 = vector.broadcast %751 : vector<1x512xi1> to vector<8x512xi1>
    %753 = vector.broadcast %cst_246 : f32 to vector<8x512xf32>
    %754 = arith.select %752, %750, %753 : vector<8x512xi1>, vector<8x512xf32>
    %755 = vector.extract_strided_slice %737 {offsets = [0, 2], sizes = [8, 1], strides = [1, 1]} : vector<8x3xf32> to vector<8x1xf32>
    %756 = vector.broadcast %755 : vector<8x1xf32> to vector<8x512xf32>
    %757 = arith.mulf %756, %754 : vector<8x512xf32>
    %758 = arith.addf %749, %757 : vector<8x512xf32>
    %759 = vector.extract_strided_slice %0 {offsets = [0, 44], sizes = [8, 1], strides = [1, 1]} : vector<24x48xf32> to vector<8x1xf32>
    %760 = vector.broadcast %759 : vector<8x1xf32> to vector<8x512xf32>
    %761 = arith.addf %758, %760 : vector<8x512xf32>
    %cst_247 = arith.constant 0.000000e+00 : f32
    %762 = vector.broadcast %cst_247 : f32 to vector<8x512xf32>
    %763 = arith.cmpf oge, %761, %762 : vector<8x512xf32>
    %764 = vector.broadcast %615 : f32 to vector<8x512xf32>
    %765 = arith.mulf %764, %761 : vector<8x512xf32>
    %766 = arith.select %763, %761, %765 : vector<8x512xi1>, vector<8x512xf32>
    %767 = vector.extract_strided_slice %0 {offsets = [0, 45], sizes = [8, 1], strides = [1, 1]} : vector<24x48xf32> to vector<8x1xf32>
    %768 = vector.extract_strided_slice %0 {offsets = [0, 46], sizes = [8, 1], strides = [1, 1]} : vector<24x48xf32> to vector<8x1xf32>
    %cst_248 = arith.constant 0.000000e+00 : f32
    %769 = vector.shape_cast %6 : vector<1x512xi1> to vector<1x512xi1>
    %770 = vector.broadcast %769 : vector<1x512xi1> to vector<8x512xi1>
    %771 = vector.broadcast %cst_248 : f32 to vector<8x512xf32>
    %772 = arith.select %770, %766, %771 : vector<8x512xi1>, vector<8x512xf32>
    %cst_249 = arith.constant dense<0.000000e+00> : vector<512xf32>
    %773 = vector.multi_reduction <add>, %772, %cst_249 [0] : vector<8x512xf32> to vector<512xf32>
    %774 = vector.shape_cast %773 : vector<512xf32> to vector<1x512xf32>
    %775 = arith.mulf %772, %772 : vector<8x512xf32>
    %cst_250 = arith.constant dense<0.000000e+00> : vector<512xf32>
    %776 = vector.multi_reduction <add>, %775, %cst_250 [0] : vector<8x512xf32> to vector<512xf32>
    %777 = vector.shape_cast %776 : vector<512xf32> to vector<1x512xf32>
    %778 = tpu.concatenate %774, %777 in 0 : vector<1x512xf32>, vector<1x512xf32> -> vector<2x512xf32>
    %cst_251 = arith.constant dense<0.000000e+00> : vector<2x4xf32>
    %779 = tpu.matmul %778, %1, %cst_251 {dimension_numbers = #tpu.dot_dimension_numbers<[1], [0], [0], [1], [0, 0, 1, 1], [], []>} : vector<2x512xf32>, vector<512x4xf32>, vector<2x4xf32> -> vector<2x4xf32>
    %cst_252 = arith.constant dense<0.000000e+00> : vector<2x512xf32>
    %780 = tpu.matmul %779, %2, %cst_252 {dimension_numbers = #tpu.dot_dimension_numbers<[1], [0], [0], [1], [0, 0, 1, 1], [], []>} : vector<2x4xf32>, vector<4x512xf32>, vector<2x512xf32> -> vector<2x512xf32>
    %781 = vector.extract_strided_slice %780 {offsets = [0, 0], sizes = [1, 512], strides = [1, 1]} : vector<2x512xf32> to vector<1x512xf32>
    %cst_253 = arith.constant 1.250000e-01 : f32
    %782 = vector.broadcast %cst_253 : f32 to vector<1x512xf32>
    %783 = arith.mulf %781, %782 : vector<1x512xf32>
    %784 = vector.extract_strided_slice %780 {offsets = [1, 0], sizes = [1, 512], strides = [1, 1]} : vector<2x512xf32> to vector<1x512xf32>
    %cst_254 = arith.constant 1.250000e-01 : f32
    %785 = vector.broadcast %cst_254 : f32 to vector<1x512xf32>
    %786 = arith.mulf %784, %785 : vector<1x512xf32>
    %787 = arith.mulf %783, %783 : vector<1x512xf32>
    %788 = arith.subf %786, %787 : vector<1x512xf32>
    %789 = vector.broadcast %783 : vector<1x512xf32> to vector<8x512xf32>
    %790 = arith.subf %766, %789 : vector<8x512xf32>
    %cst_255 = arith.constant 9.99999993E-9 : f32
    %791 = vector.broadcast %cst_255 : f32 to vector<1x512xf32>
    %792 = arith.addf %788, %791 : vector<1x512xf32>
    %793 = math.rsqrt %792 : vector<1x512xf32>
    %794 = vector.broadcast %793 : vector<1x512xf32> to vector<8x512xf32>
    %795 = arith.mulf %790, %794 : vector<8x512xf32>
    %796 = vector.broadcast %767 : vector<8x1xf32> to vector<8x512xf32>
    %797 = arith.mulf %795, %796 : vector<8x512xf32>
    %798 = vector.broadcast %768 : vector<8x1xf32> to vector<8x512xf32>
    %799 = arith.addf %797, %798 : vector<8x512xf32>
    %c3_256 = arith.constant 3 : index
    %c0_257 = arith.constant 0 : index
    %c0_258 = arith.constant 0 : index
    %800 = vector.load %arg6[%c3_256, %c0_257, %c0_258] : memref<4x8x8xf32, #tpu.memory_space<vmem>>, vector<1x8x8xf32>
    %801 = vector.shape_cast %800 : vector<1x8x8xf32> to vector<8x8xf32>
    %cst_259 = arith.constant dense<0.000000e+00> : vector<8x512xf32>
    %802 = tpu.matmul %801, %799, %cst_259 {dimension_numbers = #tpu.dot_dimension_numbers<[1], [0], [0], [1], [0, 0, 1, 1], [], []>} : vector<8x8xf32>, vector<8x512xf32>, vector<8x512xf32> -> vector<8x512xf32>
    %803 = vector.extract_strided_slice %0 {offsets = [0, 47], sizes = [8, 1], strides = [1, 1]} : vector<24x48xf32> to vector<8x1xf32>
    %804 = vector.broadcast %803 : vector<8x1xf32> to vector<8x512xf32>
    %805 = arith.addf %802, %804 : vector<8x512xf32>
    %c0_260 = arith.constant 0 : index
    %c0_261 = arith.constant 0 : index
    %806 = vector.load %arg14[%c0_260, %c0_261] : memref<8x512xf32, #tpu.memory_space<vmem>>, vector<8x512xf32>
    %807 = arith.addf %806, %805 : vector<8x512xf32>
    %cst_262 = arith.constant 0.000000e+00 : f32
    %808 = vector.shape_cast %6 : vector<1x512xi1> to vector<1x512xi1>
    %809 = vector.broadcast %808 : vector<1x512xi1> to vector<8x512xi1>
    %810 = vector.broadcast %cst_262 : f32 to vector<8x512xf32>
    %811 = arith.select %809, %807, %810 : vector<8x512xi1>, vector<8x512xf32>
    %c0_263 = arith.constant 0 : index
    %c0_264 = arith.constant 0 : index
    %812 = vector.load %arg13[%c0_263, %c0_264] : memref<8x512xf32, #tpu.memory_space<vmem>>, vector<8x512xf32>
    tpu.vector_store %arg13[%c0_263, %c0_264], %811 {strides = array<i32>} : memref<8x512xf32, #tpu.memory_space<vmem>>, vector<8x512xf32>,
    return
  }
  func.func @transform_0(%arg0: i32) -> (i32, i32) {
    %c0_i32 = arith.constant 0 : i32
    %c0_i32_0 = arith.constant 0 : i32
    return %c0_i32, %arg0 : i32, i32
  }
  func.func @transform_1(%arg0: i32) -> (i32, i32, i32) {
    %c0_i32 = arith.constant 0 : i32
    %c0_i32_0 = arith.constant 0 : i32
    %c0_i32_1 = arith.constant 0 : i32
    %c0_i32_2 = arith.constant 0 : i32
    return %c0_i32, %c0_i32_0, %c0_i32_1 : i32, i32, i32
  }
  func.func @transform_2(%arg0: i32) -> (i32, i32, i32) {
    %c0_i32 = arith.constant 0 : i32
    %c0_i32_0 = arith.constant 0 : i32
    %c0_i32_1 = arith.constant 0 : i32
    %c0_i32_2 = arith.constant 0 : i32
    return %c0_i32, %c0_i32_0, %c0_i32_1 : i32, i32, i32
  }
  func.func @transform_3(%arg0: i32) -> (i32, i32, i32) {
    %c0_i32 = arith.constant 0 : i32
    %c0_i32_0 = arith.constant 0 : i32
    %c0_i32_1 = arith.constant 0 : i32
    %c0_i32_2 = arith.constant 0 : i32
    return %c0_i32, %c0_i32_0, %c0_i32_1 : i32, i32, i32
  }
  func.func @transform_4(%arg0: i32) -> (i32, i32, i32) {
    %c0_i32 = arith.constant 0 : i32
    %c0_i32_0 = arith.constant 0 : i32
    %c0_i32_1 = arith.constant 0 : i32
    %c0_i32_2 = arith.constant 0 : i32
    return %c0_i32, %c0_i32_0, %c0_i32_1 : i32, i32, i32
  }
  func.func @transform_5(%arg0: i32) -> (i32, i32, i32) {
    %c0_i32 = arith.constant 0 : i32
    %c0_i32_0 = arith.constant 0 : i32
    %c0_i32_1 = arith.constant 0 : i32
    %c0_i32_2 = arith.constant 0 : i32
    return %c0_i32, %c0_i32_0, %c0_i32_1 : i32, i32, i32
  }
  func.func @transform_6(%arg0: i32) -> (i32, i32, i32) {
    %c0_i32 = arith.constant 0 : i32
    %c0_i32_0 = arith.constant 0 : i32
    %c0_i32_1 = arith.constant 0 : i32
    %c0_i32_2 = arith.constant 0 : i32
    return %c0_i32, %c0_i32_0, %c0_i32_1 : i32, i32, i32
  }
  func.func @transform_7(%arg0: i32) -> (i32, i32) {
    %c0_i32 = arith.constant 0 : i32
    %c0_i32_0 = arith.constant 0 : i32
    %c0_i32_1 = arith.constant 0 : i32
    return %c0_i32, %c0_i32_0 : i32, i32
  }
  func.func @transform_8(%arg0: i32) -> (i32, i32) {
    %c0_i32 = arith.constant 0 : i32
    %c0_i32_0 = arith.constant 0 : i32
    %c0_i32_1 = arith.constant 0 : i32
    return %c0_i32, %c0_i32_0 : i32, i32
  }
  func.func @transform_9(%arg0: i32) -> (i32, i32) {
    %c0_i32 = arith.constant 0 : i32
    %c0_i32_0 = arith.constant 0 : i32
    %c0_i32_1 = arith.constant 0 : i32
    return %c0_i32, %c0_i32_0 : i32, i32
  }
  func.func @transform_10(%arg0: i32) -> (i32, i32) {
    %c0_i32 = arith.constant 0 : i32
    %c0_i32_0 = arith.constant 0 : i32
    %c0_i32_1 = arith.constant 0 : i32
    return %c0_i32, %c0_i32_0 : i32, i32
  }
  func.func @transform_11(%arg0: i32) -> i32 {
    %c0_i32 = arith.constant 0 : i32
    %c0_i32_0 = arith.constant 0 : i32
    return %c0_i32 : i32
  }
  func.func @transform_12(%arg0: i32) -> (i32, i32) {
    %c0_i32 = arith.constant 0 : i32
    %c0_i32_0 = arith.constant 0 : i32
    return %c0_i32, %arg0 : i32, i32
  }
}

</mosaic_0001>

<llo_original>
// kernel: _lambda_.1
$region0: #{_lambda_.1}
  #allocation0 [shape = 'u32[]', space=smem, size = 0x4, offset = 0x4, fixed_abs, tag = 'smem constant byte address 0x4 - core index']
  #allocation1 [shape = 'u32[144,128]{1,0:T(1,128)}', space=vmem, size = 0x12000, scoped, tag = 'internal scratch']
  #allocation2 [shape = 'f32[8,512]{1,0:T(8,128)}', space=vmem, size = 0x4000, scoped, tag = 'scratch operand']
  %s0 = inlined_call_operand.vmem [shape: f32[8,1024], index: 0, kind: input, shape index: {}, may-alias: {0,12}]
  %s1 = inlined_call_operand.vmem [shape: f32[4,24,8], index: 1, kind: input, shape index: {}]
  %s2 = inlined_call_operand.vmem [shape: f32[4,24,24], index: 2, kind: input, shape index: {}]
  %s3 = inlined_call_operand.vmem [shape: f32[4,8,48], index: 3, kind: input, shape index: {}]
  %s4 = inlined_call_operand.vmem [shape: f32[4,8,8], index: 4, kind: input, shape index: {}]
  %s5 = inlined_call_operand.vmem [shape: f32[4,8,8], index: 5, kind: input, shape index: {}]
  %s6 = inlined_call_operand.vmem [shape: f32[4,8,3], index: 6, kind: input, shape index: {}]
  %s7 = inlined_call_operand.vmem [shape: f32[24,48], index: 7, kind: input, shape index: {}]
  %s8 = inlined_call_operand.vmem [shape: f32[512,4], index: 8, kind: input, shape index: {}]
  %s9 = inlined_call_operand.vmem [shape: f32[4,512], index: 9, kind: input, shape index: {}]
  %s10 = inlined_call_operand.vmem [shape: f32[5,512], index: 10, kind: input, shape index: {}]
  %s11 = inlined_call_operand.vmem [shape: f32[20], index: 11, kind: input, shape index: {}]
  %s12 = inlined_call_operand.vmem [shape: f32[8,1024], index: 12, kind: output, shape index: {}, may-alias: {0,12}]
  %s13 = sld [smem:[#allocation0]]
  $region85: #{_lambda_.1} parent=0
    _
  %s15 = ssub.s32 1, %s13
  %s16 = scalar_select 0, %s15, %s13
  $region1: #{_lambda_.1} parent=0
    #allocation3 [shape = 'u8[512]{0}', space=smem, size = 0x200, scoped, tag = 'input window, operand 11, single buffered']
    #allocation4 [shape = 's32[2]{0}', space=sflag, size = 0x8, scoped, tag = 'scoped memory for _lambda_.1']
    %17 = vsyncpa [#allocation4], 0
    loop: start=0, step=1, limit=4
    $region2: #{_lambda_.1} parent=1 // loop_pre_header
      _
    $region3: #{_lambda_.1} parent=1 // loop_header
      %s19 = sphi 0, %s23
      %p20 = scmp.ge.s32.totalorder %s19, 4
      %s29 = sphi 0, %s31
      %s32 = sphi 0, %s29
      %s33 = sphi 0, %s32
      %s49 = sphi 0, %s33
      %s53 = sphi 0, %s53
      %s55 = sphi 0, %s53
      %s56 = sphi 0, %s55
      %s70 = sphi 0, %s56
      %s74 = sphi 0, %s74
      %s76 = sphi 0, %s74
      %s77 = sphi 0, %s76
      %s91 = sphi 0, %s77
      %s95 = sphi 0, %s95
      %s97 = sphi 0, %s95
      %s98 = sphi 0, %s97
      %s112 = sphi 0, %s98
      %s116 = sphi 0, %s116
      %s118 = sphi 0, %s116
      %s119 = sphi 0, %s118
      %s133 = sphi 0, %s119
      %s137 = sphi 0, %s137
      %s139 = sphi 0, %s137
      %s140 = sphi 0, %s139
      %s154 = sphi 0, %s140
      %s158 = sphi 0, %s158
      %s160 = sphi 0, %s158
      %s161 = sphi 0, %s160
      %s175 = sphi 0, %s161
      %s179 = sphi 0, %s179
      %s181 = sphi 0, %s179
      %s182 = sphi 0, %s181
      %s196 = sphi 0, %s182
      %s200 = sphi 0, %s200
      %s202 = sphi 0, %s200
      %s203 = sphi 0, %s202
      %s217 = sphi 0, %s203
      %s221 = sphi 0, %s221
      %s223 = sphi 0, %s221
      %s224 = sphi 0, %s223
      %s238 = sphi 0, %s224
      %s242 = sphi 0, %s242
      %s244 = sphi 0, %s242
      %s245 = sphi 0, %s244
      %s259 = sphi 0, %s245
      %s263 = sphi 0, %s263
      %s265 = sphi 0, %s263
      %s266 = sphi 0, %s265
      %s280 = sphi 0, %s266
      %s286 = sphi 0, %s288
      %s289 = sphi 0, %s286
      %s290 = sphi 0, %s289
      %s306 = sphi 0, %s290
    $region4: #{_lambda_.1} parent=1 // loop_header_branch
      %22 = sbr.rel (%p20) target = $region8
    $region5: #{_lambda_.1} parent=1 // loop_body
      %s24 = ssub.s32 %s19, 1
      %s25 = ssub.s32 %s19, 2
      %s26 = sadd.s32 %s19, 1
      %s27 = ssub.s32 %s19, %s26
      %p28 = scmp.eq.s32.totalorder %s27, 0
      %s30 = sadd.s32 %s29, 1
      %s31 = scalar_select %p28, %s29, %s30
      %p34 = pneg %p28
      %p35 = scmp.eq.s32.totalorder %s19, 1
      %p36 = por %p34, %p35
      %p37 = scmp.ne.s32.totalorder %s29, %s32
      %p38 = scmp.eq.s32.totalorder %s19, 0
      %p39 = por %p37, %p38
      %p40 = scmp.ne.s32.totalorder %s29, %s32
      %p41 = scmp.eq.s32.totalorder %s24, 1
      %p42 = por %p40, %p41
      %p43 = scmp.ne.s32.totalorder %s32, %s33
      %p44 = scmp.eq.s32.totalorder %s24, 0
      %p45 = por %p43, %p44
      %p46 = scmp.ne.s32.totalorder %s32, %s33
      %p47 = scmp.eq.s32.totalorder %s25, 1
      %p48 = por %p46, %p47
      %p50 = scmp.ne.s32.totalorder %s33, %s49
      %p51 = scmp.eq.s32.totalorder %s25, 0
      %p52 = por %p50, %p51
      %s54 = sadd.s32 %s53, 1
      %p57 = scmp.eq.s32.totalorder %s19, 1
      %p58 = scmp.ne.s32.totalorder %s53, %s55
      %p59 = scmp.eq.s32.totalorder %s19, 0
      %p60 = por %p58, %p59
      %p61 = scmp.ne.s32.totalorder %s53, %s55
      %p62 = scmp.eq.s32.totalorder %s24, 1
      %p63 = por %p61, %p62
      %p64 = scmp.ne.s32.totalorder %s55, %s56
      %p65 = scmp.eq.s32.totalorder %s24, 0
      %p66 = por %p64, %p65
      %p67 = scmp.ne.s32.totalorder %s55, %s56
      %p68 = scmp.eq.s32.totalorder %s25, 1
      %p69 = por %p67, %p68
      %p71 = scmp.ne.s32.totalorder %s56, %s70
      %p72 = scmp.eq.s32.totalorder %s25, 0
      %p73 = por %p71, %p72
      %s75 = sadd.s32 %s74, 1
      %p78 = scmp.eq.s32.totalorder %s19, 1
      %p79 = scmp.ne.s32.totalorder %s74, %s76
      %p80 = scmp.eq.s32.totalorder %s19, 0
      %p81 = por %p79, %p80
      %p82 = scmp.ne.s32.totalorder %s74, %s76
      %p83 = scmp.eq.s32.totalorder %s24, 1
      %p84 = por %p82, %p83
      %p85 = scmp.ne.s32.totalorder %s76, %s77
      %p86 = scmp.eq.s32.totalorder %s24, 0
      %p87 = por %p85, %p86
      %p88 = scmp.ne.s32.totalorder %s76, %s77
      %p89 = scmp.eq.s32.totalorder %s25, 1
      %p90 = por %p88, %p89
      %p92 = scmp.ne.s32.totalorder %s77, %s91
      %p93 = scmp.eq.s32.totalorder %s25, 0
      %p94 = por %p92, %p93
      %s96 = sadd.s32 %s95, 1
      %p99 = scmp.eq.s32.totalorder %s19, 1
      %p100 = scmp.ne.s32.totalorder %s95, %s97
      %p101 = scmp.eq.s32.totalorder %s19, 0
      %p102 = por %p100, %p101
      %p103 = scmp.ne.s32.totalorder %s95, %s97
      %p104 = scmp.eq.s32.totalorder %s24, 1
      %p105 = por %p103, %p104
      %p106 = scmp.ne.s32.totalorder %s97, %s98
      %p107 = scmp.eq.s32.totalorder %s24, 0
      %p108 = por %p106, %p107
      %p109 = scmp.ne.s32.totalorder %s97, %s98
      %p110 = scmp.eq.s32.totalorder %s25, 1
      %p111 = por %p109, %p110
      %p113 = scmp.ne.s32.totalorder %s98, %s112
      %p114 = scmp.eq.s32.totalorder %s25, 0
      %p115 = por %p113, %p114
      %s117 = sadd.s32 %s116, 1
      %p120 = scmp.eq.s32.totalorder %s19, 1
      %p121 = scmp.ne.s32.totalorder %s116, %s118
      %p122 = scmp.eq.s32.totalorder %s19, 0
      %p123 = por %p121, %p122
      %p124 = scmp.ne.s32.totalorder %s116, %s118
      %p125 = scmp.eq.s32.totalorder %s24, 1
      %p126 = por %p124, %p125
      %p127 = scmp.ne.s32.totalorder %s118, %s119
      %p128 = scmp.eq.s32.totalorder %s24, 0
      %p129 = por %p127, %p128
      %p130 = scmp.ne.s32.totalorder %s118, %s119
      %p131 = scmp.eq.s32.totalorder %s25, 1
      %p132 = por %p130, %p131
      %p134 = scmp.ne.s32.totalorder %s119, %s133
      %p135 = scmp.eq.s32.totalorder %s25, 0
      %p136 = por %p134, %p135
      %s138 = sadd.s32 %s137, 1
      %p141 = scmp.eq.s32.totalorder %s19, 1
      %p142 = scmp.ne.s32.totalorder %s137, %s139
      %p143 = scmp.eq.s32.totalorder %s19, 0
      %p144 = por %p142, %p143
      %p145 = scmp.ne.s32.totalorder %s137, %s139
      %p146 = scmp.eq.s32.totalorder %s24, 1
      %p147 = por %p145, %p146
      %p148 = scmp.ne.s32.totalorder %s139, %s140
      %p149 = scmp.eq.s32.totalorder %s24, 0
      %p150 = por %p148, %p149
      %p151 = scmp.ne.s32.totalorder %s139, %s140
      %p152 = scmp.eq.s32.totalorder %s25, 1
      %p153 = por %p151, %p152
      %p155 = scmp.ne.s32.totalorder %s140, %s154
      %p156 = scmp.eq.s32.totalorder %s25, 0
      %p157 = por %p155, %p156
      %s159 = sadd.s32 %s158, 1
      %p162 = scmp.eq.s32.totalorder %s19, 1
      %p163 = scmp.ne.s32.totalorder %s158, %s160
      %p164 = scmp.eq.s32.totalorder %s19, 0
      %p165 = por %p163, %p164
      %p166 = scmp.ne.s32.totalorder %s158, %s160
      %p167 = scmp.eq.s32.totalorder %s24, 1
      %p168 = por %p166, %p167
      %p169 = scmp.ne.s32.totalorder %s160, %s161
      %p170 = scmp.eq.s32.totalorder %s24, 0
      %p171 = por %p169, %p170
      %p172 = scmp.ne.s32.totalorder %s160, %s161
      %p173 = scmp.eq.s32.totalorder %s25, 1
      %p174 = por %p172, %p173
      %p176 = scmp.ne.s32.totalorder %s161, %s175
      %p177 = scmp.eq.s32.totalorder %s25, 0
      %p178 = por %p176, %p177
      %s180 = sadd.s32 %s179, 1
      %p183 = scmp.eq.s32.totalorder %s19, 1
      %p184 = scmp.ne.s32.totalorder %s179, %s181
      %p185 = scmp.eq.s32.totalorder %s19, 0
      %p186 = por %p184, %p185
      %p187 = scmp.ne.s32.totalorder %s179, %s181
      %p188 = scmp.eq.s32.totalorder %s24, 1
      %p189 = por %p187, %p188
      %p190 = scmp.ne.s32.totalorder %s181, %s182
      %p191 = scmp.eq.s32.totalorder %s24, 0
      %p192 = por %p190, %p191
      %p193 = scmp.ne.s32.totalorder %s181, %s182
      %p194 = scmp.eq.s32.totalorder %s25, 1
      %p195 = por %p193, %p194
      %p197 = scmp.ne.s32.totalorder %s182, %s196
      %p198 = scmp.eq.s32.totalorder %s25, 0
      %p199 = por %p197, %p198
      %s201 = sadd.s32 %s200, 1
      %p204 = scmp.eq.s32.totalorder %s19, 1
      %p205 = scmp.ne.s32.totalorder %s200, %s202
      %p206 = scmp.eq.s32.totalorder %s19, 0
      %p207 = por %p205, %p206
      %p208 = scmp.ne.s32.totalorder %s200, %s202
      %p209 = scmp.eq.s32.totalorder %s24, 1
      %p210 = por %p208, %p209
      %p211 = scmp.ne.s32.totalorder %s202, %s203
      %p212 = scmp.eq.s32.totalorder %s24, 0
      %p213 = por %p211, %p212
      %p214 = scmp.ne.s32.totalorder %s202, %s203
      %p215 = scmp.eq.s32.totalorder %s25, 1
      %p216 = por %p214, %p215
      %p218 = scmp.ne.s32.totalorder %s203, %s217
      %p219 = scmp.eq.s32.totalorder %s25, 0
      %p220 = por %p218, %p219
      %s222 = sadd.s32 %s221, 1
      %p225 = scmp.eq.s32.totalorder %s19, 1
      %p226 = scmp.ne.s32.totalorder %s221, %s223
      %p227 = scmp.eq.s32.totalorder %s19, 0
      %p228 = por %p226, %p227
      %p229 = scmp.ne.s32.totalorder %s221, %s223
      %p230 = scmp.eq.s32.totalorder %s24, 1
      %p231 = por %p229, %p230
      %p232 = scmp.ne.s32.totalorder %s223, %s224
      %p233 = scmp.eq.s32.totalorder %s24, 0
      %p234 = por %p232, %p233
      %p235 = scmp.ne.s32.totalorder %s223, %s224
      %p236 = scmp.eq.s32.totalorder %s25, 1
      %p237 = por %p235, %p236
      %p239 = scmp.ne.s32.totalorder %s224, %s238
      %p240 = scmp.eq.s32.totalorder %s25, 0
      %p241 = por %p239, %p240
      %s243 = sadd.s32 %s242, 1
      %p246 = scmp.eq.s32.totalorder %s19, 1
      %p247 = scmp.ne.s32.totalorder %s242, %s244
      %p248 = scmp.eq.s32.totalorder %s19, 0
      %p249 = por %p247, %p248
      %p250 = scmp.ne.s32.totalorder %s242, %s244
      %p251 = scmp.eq.s32.totalorder %s24, 1
      %p252 = por %p250, %p251
      %p253 = scmp.ne.s32.totalorder %s244, %s245
      %p254 = scmp.eq.s32.totalorder %s24, 0
      %p255 = por %p253, %p254
      %p256 = scmp.ne.s32.totalorder %s244, %s245
      %p257 = scmp.eq.s32.totalorder %s25, 1
      %p258 = por %p256, %p257
      %p260 = scmp.ne.s32.totalorder %s245, %s259
      %p261 = scmp.eq.s32.totalorder %s25, 0
      %p262 = por %p260, %p261
      %s264 = sadd.s32 %s263, 1
      %p267 = scmp.eq.s32.totalorder %s19, 1
      %p268 = scmp.ne.s32.totalorder %s263, %s265
      %p269 = scmp.eq.s32.totalorder %s19, 0
      %p270 = por %p268, %p269
      %p271 = scmp.ne.s32.totalorder %s263, %s265
      %p272 = scmp.eq.s32.totalorder %s24, 1
      %p273 = por %p271, %p272
      %p274 = scmp.ne.s32.totalorder %s265, %s266
      %p275 = scmp.eq.s32.totalorder %s24, 0
      %p276 = por %p274, %p275
      %p277 = scmp.ne.s32.totalorder %s265, %s266
      %p278 = scmp.eq.s32.totalorder %s25, 1
      %p279 = por %p277, %p278
      %p281 = scmp.ne.s32.totalorder %s266, %s280
      %p282 = scmp.eq.s32.totalorder %s25, 0
      %p283 = por %p281, %p282
      %s284 = ssub.s32 %s19, %s26
      %p285 = scmp.eq.s32.totalorder %s284, 0
      %s287 = sadd.s32 %s286, 1
      %s288 = scalar_select %p285, %s286, %s287
      %p291 = pneg %p285
      %p292 = scmp.eq.s32.totalorder %s19, 1
      %p293 = por %p291, %p292
      %p294 = scmp.ne.s32.totalorder %s286, %s289
      %p295 = scmp.eq.s32.totalorder %s19, 0
      %p296 = por %p294, %p295
      %p297 = scmp.ne.s32.totalorder %s286, %s289
      %p298 = scmp.eq.s32.totalorder %s24, 1
      %p299 = por %p297, %p298
      %p300 = scmp.ne.s32.totalorder %s289, %s290
      %p301 = scmp.eq.s32.totalorder %s24, 0
      %p302 = por %p300, %p301
      %p303 = scmp.ne.s32.totalorder %s289, %s290
      %p304 = scmp.eq.s32.totalorder %s25, 1
      %p305 = por %p303, %p304
      %p307 = scmp.ne.s32.totalorder %s290, %s306
      %p308 = scmp.eq.s32.totalorder %s25, 0
      %p309 = por %p307, %p308
      %p310 = scmp.le.s32.totalorder 1, %s19
      %p311 = scmp.lt.s32.totalorder %s19, 3
      %p312 = pnand %p310, %p311
      %p313 = pneg %p312
      // Predicated region
      $region9: #{_lambda_.1} parent=5 // pred_check
        _
      $region10: #{_lambda_.1} parent=5 // pred_check_branch
        %315 = sbr.rel (%p312) target = $region12
      $region11: #{_lambda_.1} parent=5 // pred_region
        %s316 = ssub.s32 %s19, 1
        // Predicated region
        $region13: #{_lambda_.1} parent=11 // pred_check
          %p317 = pneg %p66
        $region14: #{_lambda_.1} parent=11 // pred_check_branch
          %319 = sbr.rel (%p317) target = $region16
        $region15: #{_lambda_.1} parent=11 // pred_region
          _
        $region16: #{_lambda_.1} parent=11 // pred_fallthru
          _
        // Predicated region
        $region17: #{_lambda_.1} parent=11 // pred_check
          %p320 = pneg %p87
        $region18: #{_lambda_.1} parent=11 // pred_check_branch
          %322 = sbr.rel (%p320) target = $region20
        $region19: #{_lambda_.1} parent=11 // pred_region
          _
        $region20: #{_lambda_.1} parent=11 // pred_fallthru
          _
        // Predicated region
        $region21: #{_lambda_.1} parent=11 // pred_check
          %p323 = pneg %p108
        $region22: #{_lambda_.1} parent=11 // pred_check_branch
          %325 = sbr.rel (%p323) target = $region24
        $region23: #{_lambda_.1} parent=11 // pred_region
          _
        $region24: #{_lambda_.1} parent=11 // pred_fallthru
          _
        // Predicated region
        $region25: #{_lambda_.1} parent=11 // pred_check
          %p326 = pneg %p129
        $region26: #{_lambda_.1} parent=11 // pred_check_branch
          %328 = sbr.rel (%p326) target = $region28
        $region27: #{_lambda_.1} parent=11 // pred_region
          _
        $region28: #{_lambda_.1} parent=11 // pred_fallthru
          _
        // Predicated region
        $region29: #{_lambda_.1} parent=11 // pred_check
          %p329 = pneg %p150
        $region30: #{_lambda_.1} parent=11 // pred_check_branch
          %331 = sbr.rel (%p329) target = $region32
        $region31: #{_lambda_.1} parent=11 // pred_region
          _
        $region32: #{_lambda_.1} parent=11 // pred_fallthru
          _
        // Predicated region
        $region33: #{_lambda_.1} parent=11 // pred_check
          %p332 = pneg %p171
        $region34: #{_lambda_.1} parent=11 // pred_check_branch
          %334 = sbr.rel (%p332) target = $region36
        $region35: #{_lambda_.1} parent=11 // pred_region
          _
        $region36: #{_lambda_.1} parent=11 // pred_fallthru
          _
        // Predicated region
        $region37: #{_lambda_.1} parent=11 // pred_check
          %p335 = pneg %p192
        $region38: #{_lambda_.1} parent=11 // pred_check_branch
          %337 = sbr.rel (%p335) target = $region40
        $region39: #{_lambda_.1} parent=11 // pred_region
          _
        $region40: #{_lambda_.1} parent=11 // pred_fallthru
          _
        // Predicated region
        $region41: #{_lambda_.1} parent=11 // pred_check
          %p338 = pneg %p213
        $region42: #{_lambda_.1} parent=11 // pred_check_branch
          %340 = sbr.rel (%p338) target = $region44
        $region43: #{_lambda_.1} parent=11 // pred_region
          _
        $region44: #{_lambda_.1} parent=11 // pred_fallthru
          _
        // Predicated region
        $region45: #{_lambda_.1} parent=11 // pred_check
          %p341 = pneg %p234
        $region46: #{_lambda_.1} parent=11 // pred_check_branch
          %343 = sbr.rel (%p341) target = $region48
        $region47: #{_lambda_.1} parent=11 // pred_region
          _
        $region48: #{_lambda_.1} parent=11 // pred_fallthru
          _
        // Predicated region
        $region49: #{_lambda_.1} parent=11 // pred_check
          %p344 = pneg %p255
        $region50: #{_lambda_.1} parent=11 // pred_check_branch
          %346 = sbr.rel (%p344) target = $region52
        $region51: #{_lambda_.1} parent=11 // pred_region
          _
        $region52: #{_lambda_.1} parent=11 // pred_fallthru
          _
        // Predicated region
        $region53: #{_lambda_.1} parent=11 // pred_check
          %p347 = pneg %p276
        $region54: #{_lambda_.1} parent=11 // pred_check_branch
          %349 = sbr.rel (%p347) target = $region56
        $region55: #{_lambda_.1} parent=11 // pred_region
          %s351 = ssub.s32 16, 16
          %352 = vsyncadd [#allocation4], %s351
          %s354 = sshll.u32 %s11, 4
          %s355 = int_to_ptr.vmem [resolvable:$true] %s354
          %357 = dma.vmem_to_smem %s355, 16, [#allocation3], [#allocation4]
        $region56: #{_lambda_.1} parent=11 // pred_fallthru
          _
      $region12: #{_lambda_.1} parent=5 // pred_fallthru
        _
      %p358 = scmp.lt.s32.totalorder %s19, 2
      // Predicated region
      $region57: #{_lambda_.1} parent=5 // pred_check
        %p359 = pneg %p358
      $region58: #{_lambda_.1} parent=5 // pred_check_branch
        %361 = sbr.rel (%p359) target = $region60
      $region59: #{_lambda_.1} parent=5 // pred_region
        // Predicated region
        $region61: #{_lambda_.1} parent=59 // pred_check
          %p362 = pneg %p39
        $region62: #{_lambda_.1} parent=59 // pred_check_branch
          %364 = sbr.rel (%p362) target = $region64
        $region63: #{_lambda_.1} parent=59 // pred_region
          %s365 = smul.u32 4, %s19
          %p366 = scmp.lt.s32.totalorder %s365, 7
          %s367 = scalar_select %p366, %s365, 7
          %s368 = smul.addr %s367, 8
          %s369 = scalar_lea.vmem %s0, %s368
          %s370 = smul.u32 4, %s19
        $region64: #{_lambda_.1} parent=59 // pred_fallthru
          _
      $region60: #{_lambda_.1} parent=5 // pred_fallthru
        _
      %p371 = scmp.le.s32.totalorder 1, %s19
      %p372 = scmp.lt.s32.totalorder %s19, 3
      %p373 = pnand %p371, %p372
      %p374 = pneg %p373
      // Predicated region
      $region65: #{_lambda_.1} parent=5 // pred_check
        _
      $region66: #{_lambda_.1} parent=5 // pred_check_branch
        %376 = sbr.rel (%p373) target = $region68
      $region67: #{_lambda_.1} parent=5 // pred_region
        %s377 = ssub.s32 %s19, 1
        // Predicated region
        $region69: #{_lambda_.1} parent=67 // pred_check
          %p378 = pneg %p276
        $region70: #{_lambda_.1} parent=67 // pred_check_branch
          %380 = sbr.rel (%p378) target = $region72
        $region71: #{_lambda_.1} parent=67 // pred_region
          %381 = dma.done [#allocation4], 16
        $region72: #{_lambda_.1} parent=67 // pred_fallthru
          _
        %382 = sfence
        %s383 = smul.u32 4, %s24
        %p384 = scmp.lt.s32.totalorder %s383, 7
        %s385 = scalar_select %p384, %s383, 7
        %s386 = smul.addr %s385, 8
        %s387 = scalar_lea.vmem %s0, %s386
        %p388 = pneg %p45
        %p389 = pneg %p42
        %p390 = pneg %p66
        %p391 = pneg %p63
        %p392 = pneg %p87
        %p393 = pneg %p84
        %p394 = pneg %p108
        %p395 = pneg %p105
        %p396 = pneg %p129
        %p397 = pneg %p126
        %p398 = pneg %p150
        %p399 = pneg %p147
        %p400 = pneg %p171
        %p401 = pneg %p168
        %p402 = pneg %p192
        %p403 = pneg %p189
        %p404 = pneg %p213
        %p405 = pneg %p210
        %p406 = pneg %p234
        %p407 = pneg %p231
        %p408 = pneg %p255
        %p409 = pneg %p252
        %p410 = pneg %p276
        %p411 = pneg %p273
        %p412 = pneg %p302
        %p413 = pneg %p299
        %s414 = smul.u32 4, %s24
        %p415 = scmp.lt.s32.totalorder %s414, 7
        %s416 = scalar_select %p415, %s414, 7
        %s417 = smul.addr %s416, 8
        %s418 = scalar_lea.vmem %s12, %s417
        %s419 = smul.u32 4, %s24
        %p420 = scmp.lt.s32.totalorder %s419, 7
        %s421 = scalar_select %p420, %s419, 7
        %s422 = smul.addr %s421, 8
        %s423 = scalar_lea.vmem %s0, %s422
        %s424 = smul.u32 4, %s24
        %s425 = smul.u32 4, %s24
        %p426 = scmp.lt.s32.totalorder %s425, 7
        %s427 = scalar_select %p426, %s425, 7
        %s428 = smul.addr %s427, 8
        %s429 = scalar_lea.vmem %s12, %s428
        %s430 = smul.u32 4, %s24
        %v431 = vld [vmem:[%s7] sm:$0xff]
        %v432 = vld [vmem:[%s7 + $0x8] sm:$0xff]
        %v433 = vld [vmem:[%s7 + $0x10] sm:$0xff]
        %v434 = vld [vmem:[%s8] sm:$0xff]
        %v435 = vld [vmem:[%s8 + $0x8] sm:$0xff]
        %v436 = vld [vmem:[%s8 + $0x10] sm:$0xff]
        %v437 = vld [vmem:[%s8 + $0x18] sm:$0xff]
        %v438 = vld [vmem:[%s8 + $0x20] sm:$0xff]
        %v439 = vld [vmem:[%s8 + $0x28] sm:$0xff]
        %v440 = vld [vmem:[%s8 + $0x30] sm:$0xff]
        %v441 = vld [vmem:[%s8 + $0x38] sm:$0xff]
        %v442 = vld [vmem:[%s8 + $0x40] sm:$0xff]
        %v443 = vld [vmem:[%s8 + $0x48] sm:$0xff]
        %v444 = vld [vmem:[%s8 + $0x50] sm:$0xff]
        %v445 = vld [vmem:[%s8 + $0x58] sm:$0xff]
        %v446 = vld [vmem:[%s8 + $0x60] sm:$0xff]
        %v447 = vld [vmem:[%s8 + $0x68] sm:$0xff]
        %v448 = vld [vmem:[%s8 + $0x70] sm:$0xff]
        %v449 = vld [vmem:[%s8 + $0x78] sm:$0xff]
        %v450 = vld [vmem:[%s8 + $0x80] sm:$0xff]
        %v451 = vld [vmem:[%s8 + $0x88] sm:$0xff]
        %v452 = vld [vmem:[%s8 + $0x90] sm:$0xff]
        %v453 = vld [vmem:[%s8 + $0x98] sm:$0xff]
        %v454 = vld [vmem:[%s8 + $0xa0] sm:$0xff]
        %v455 = vld [vmem:[%s8 + $0xa8] sm:$0xff]
        %v456 = vld [vmem:[%s8 + $0xb0] sm:$0xff]
        %v457 = vld [vmem:[%s8 + $0xb8] sm:$0xff]
        %v458 = vld [vmem:[%s8 + $0xc0] sm:$0xff]
        %v459 = vld [vmem:[%s8 + $0xc8] sm:$0xff]
        %v460 = vld [vmem:[%s8 + $0xd0] sm:$0xff]
        %v461 = vld [vmem:[%s8 + $0xd8] sm:$0xff]
        %v462 = vld [vmem:[%s8 + $0xe0] sm:$0xff]
        %v463 = vld [vmem:[%s8 + $0xe8] sm:$0xff]
        %v464 = vld [vmem:[%s8 + $0xf0] sm:$0xff]
        %v465 = vld [vmem:[%s8 + $0xf8] sm:$0xff]
        %v466 = vld [vmem:[%s8 + $0x100] sm:$0xff]
        %v467 = vld [vmem:[%s8 + $0x108] sm:$0xff]
        %v468 = vld [vmem:[%s8 + $0x110] sm:$0xff]
        %v469 = vld [vmem:[%s8 + $0x118] sm:$0xff]
        %v470 = vld [vmem:[%s8 + $0x120] sm:$0xff]
        %v471 = vld [vmem:[%s8 + $0x128] sm:$0xff]
        %v472 = vld [vmem:[%s8 + $0x130] sm:$0xff]
        %v473 = vld [vmem:[%s8 + $0x138] sm:$0xff]
        %v474 = vld [vmem:[%s8 + $0x140] sm:$0xff]
        %v475 = vld [vmem:[%s8 + $0x148] sm:$0xff]
        %v476 = vld [vmem:[%s8 + $0x150] sm:$0xff]
        %v477 = vld [vmem:[%s8 + $0x158] sm:$0xff]
        %v478 = vld [vmem:[%s8 + $0x160] sm:$0xff]
        %v479 = vld [vmem:[%s8 + $0x168] sm:$0xff]
        %v480 = vld [vmem:[%s8 + $0x170] sm:$0xff]
        %v481 = vld [vmem:[%s8 + $0x178] sm:$0xff]
        %v482 = vld [vmem:[%s8 + $0x180] sm:$0xff]
        %v483 = vld [vmem:[%s8 + $0x188] sm:$0xff]
        %v484 = vld [vmem:[%s8 + $0x190] sm:$0xff]
        %v485 = vld [vmem:[%s8 + $0x198] sm:$0xff]
        %v486 = vld [vmem:[%s8 + $0x1a0] sm:$0xff]
        %v487 = vld [vmem:[%s8 + $0x1a8] sm:$0xff]
        %v488 = vld [vmem:[%s8 + $0x1b0] sm:$0xff]
        %v489 = vld [vmem:[%s8 + $0x1b8] sm:$0xff]
        %v490 = vld [vmem:[%s8 + $0x1c0] sm:$0xff]
        %v491 = vld [vmem:[%s8 + $0x1c8] sm:$0xff]
        %v492 = vld [vmem:[%s8 + $0x1d0] sm:$0xff]
        %v493 = vld [vmem:[%s8 + $0x1d8] sm:$0xff]
        %v494 = vld [vmem:[%s8 + $0x1e0] sm:$0xff]
        %v495 = vld [vmem:[%s8 + $0x1e8] sm:$0xff]
        %v496 = vld [vmem:[%s8 + $0x1f0] sm:$0xff]
        %v497 = vld [vmem:[%s8 + $0x1f8] sm:$0xff]
        %v498 = vld [vmem:[%s9] sm:$0xff]
        %v499 = vld [vmem:[%s9 + $0x8] sm:$0xff]
        %v500 = vld [vmem:[%s10] sm:$0x1f]
        %v501 = vld [vmem:[%s10 + $0x8] sm:$0x1f]
        %v502 = vld [vmem:[%s10 + $0x10] sm:$0x1f]
        %v503 = vld [vmem:[%s10 + $0x18] sm:$0x1f]
        %vm504 = vcmp.gt.f32.partialorder %v500, 0.5
        %vm505 = vcmp.gt.f32.partialorder %v501, 0.5
        %vm506 = vcmp.gt.f32.partialorder %v502, 0.5
        %vm507 = vcmp.gt.f32.partialorder %v503, 0.5
        %v508 = vld [vmem:[%s423] sm:$0xff]
        %v509 = vld [vmem:[%s423 + $0x8] sm:$0xff]
        %v510 = vld [vmem:[%s423 + $0x10] sm:$0xff]
        %v511 = vld [vmem:[%s423 + $0x18] sm:$0xff]
        %s512 = sld [smem:[#allocation3]]
        %s513 = sld [smem:[#allocation3 + $0x1]]
        %s514 = sld [smem:[#allocation3 + $0x2]]
        %s515 = sld [smem:[#allocation3 + $0x3]]
        %s516 = sld [smem:[#allocation3 + $0x4]]
        %v517 = vld [vmem:[%s1] sm:$0xff]
        %v518 = vld [vmem:[%s1 + $0x8] sm:$0xff]
        %v519 = vld [vmem:[%s1 + $0x10] sm:$0xff]
        %521 = vset.pattern.permute.xlu0 0
        %522 = vperm.xlu0 %521, %v431
        %v523 = vpop.permute.xlu0 %522
        %526 = vset.pattern.permute.xlu0 0
        %527 = vperm.xlu0 %526, %v432
        %v528 = vpop.permute.xlu0 %527
        %531 = vset.pattern.permute.xlu0 0
        %532 = vperm.xlu0 %531, %v433
        %v533 = vpop.permute.xlu0 %532
        %vm535 = vcmask 64512
        %v537 = vsel %vm535, %v517, 0
        %v540 = vsel %vm535, %v518, 0
        %v543 = vsel %vm535, %v519, 0
        %545 = vmatprep.subr.mxu0 %v509
        %546 = vmatpush1.msra.mxu0 %v508
        %547 = vmatprep.subr.mxu0 0.0
        %548 = vmatpush1.msra.mxu0 0.0
        %549 = vmatprep.subr.mxu0 0.0
        %550 = vmatpush1.msra.mxu0 0.0
        %551 = vmatprep.subr.mxu0 0.0
        %552 = vmatpush1.msra.mxu0 0.0
        %553 = vmatprep.subr.mxu0 0.0
        %554 = vmatpush1.msra.mxu0 0.0
        %555 = vmatprep.subr.mxu0 0.0
        %556 = vmatpush1.msra.mxu0 0.0
        %557 = vmatprep.subr.mxu0 0.0
        %558 = vmatpush1.msra.mxu0 0.0
        %559 = vmatprep.subr.mxu0 0.0
        %560 = vmatpush1.msra.mxu0 0.0
        %561 = vmatprep.subr.mxu0 0.0
        %562 = vmatpush1.msra.mxu0 0.0
        %563 = vmatprep.subr.mxu0 0.0
        %564 = vmatpush1.msra.mxu0 0.0
        %565 = vmatprep.subr.mxu0 0.0
        %566 = vmatpush1.msra.mxu0 0.0
        %567 = vmatprep.subr.mxu0 0.0
        %568 = vmatpush1.msra.mxu0 0.0
        %569 = vmatprep.subr.mxu0 0.0
        %570 = vmatpush1.msra.mxu0 0.0
        %571 = vmatprep.subr.mxu0 0.0
        %572 = vmatpush1.msra.mxu0 0.0
        %573 = vmatprep.subr.mxu0 0.0
        %574 = vmatpush1.msra.mxu0 0.0
        %575 = vmatprep.subr.mxu0 0.0
        %576 = vmatpush1.msra.mxu0 0.0
        %577 = vmatprep.subr.mxu0 0.0
        %578 = vmatpush1.msra.mxu0 0.0
        %579 = vmatprep.subr.mxu0 0.0
        %580 = vmatpush1.msra.mxu0 0.0
        %581 = vmatprep.subr.mxu0 0.0
        %582 = vmatpush1.msra.mxu0 0.0
        %583 = vmatprep.subr.mxu0 0.0
        %584 = vmatpush1.msra.mxu0 0.0
        %585 = vmatprep.subr.mxu0 0.0
        %586 = vmatpush1.msra.mxu0 0.0
        %587 = vmatprep.subr.mxu0 0.0
        %588 = vmatpush1.msra.mxu0 0.0
        %589 = vmatprep.subr.mxu0 0.0
        %590 = vmatpush1.msra.mxu0 0.0
        %591 = vmatprep.subr.mxu0 0.0
        %592 = vmatpush1.msra.mxu0 0.0
        %593 = vmatprep.subr.mxu0 0.0
        %594 = vmatpush1.msra.mxu0 0.0
        %595 = vmatprep.subr.mxu0 0.0
        %596 = vmatpush1.msra.mxu0 0.0
        %597 = vmatprep.subr.mxu0 0.0
        %598 = vmatpush1.msra.mxu0 0.0
        %599 = vmatprep.subr.mxu0 0.0
        %600 = vmatpush1.msra.mxu0 0.0
        %601 = vmatprep.subr.mxu0 0.0
        %602 = vmatpush1.msra.mxu0 0.0
        %603 = vmatprep.subr.mxu0 0.0
        %604 = vmatpush1.msra.mxu0 0.0
        %605 = vmatprep.subr.mxu0 0.0
        %606 = vmatpush1.msra.mxu0 0.0
        %607 = vmatprep.subr.mxu0 0.0
        %608 = vmatpush1.msra.mxu0 0.0
        %609 = vmatprep.mubr.f32.mxu0 0.0
        %610 = vmatmul.mubr.f32.gmra.mrb[0].mxu0 %v537
        %v611 = vpop.f32.mrb[0].mxu0
        %v612 = vadd.f32 %v523, %v611
        %v613 = vpop.f32.mrb[0].mxu0
        %v614 = vadd.f32 %v523, %v613
        %615 = vmatprep.mubr.f32.mxu0 0.0
        %616 = vmatmul.mubr.f32.gmra.mrb[0].mxu0 %v540
        %v617 = vpop.f32.mrb[0].mxu0
        %v618 = vadd.f32 %v528, %v617
        %v619 = vpop.f32.mrb[0].mxu0
        %v620 = vadd.f32 %v528, %v619
        %621 = vmatprep.mubr.f32.mxu0 0.0
        %622 = vmatmul.mubr.f32.gmra.mrb[0].mxu0 %v543
        %v623 = vpop.f32.mrb[0].mxu0
        %v624 = vadd.f32 %v533, %v623
        %v625 = vpop.f32.mrb[0].mxu0
        %v626 = vadd.f32 %v533, %v625
        %627 = vdwg.mxu0
        %628 = vmatprep.subr.mxu0 %v511
        %629 = vmatpush1.msra.mxu0 %v510
        %630 = vmatprep.subr.mxu0 0.0
        %631 = vmatpush1.msra.mxu0 0.0
        %632 = vmatprep.subr.mxu0 0.0
        %633 = vmatpush1.msra.mxu0 0.0
        %634 = vmatprep.subr.mxu0 0.0
        %635 = vmatpush1.msra.mxu0 0.0
        %636 = vmatprep.subr.mxu0 0.0
        %637 = vmatpush1.msra.mxu0 0.0
        %638 = vmatprep.subr.mxu0 0.0
        %639 = vmatpush1.msra.mxu0 0.0
        %640 = vmatprep.subr.mxu0 0.0
        %641 = vmatpush1.msra.mxu0 0.0
        %642 = vmatprep.subr.mxu0 0.0
        %643 = vmatpush1.msra.mxu0 0.0
        %644 = vmatprep.subr.mxu0 0.0
        %645 = vmatpush1.msra.mxu0 0.0
        %646 = vmatprep.subr.mxu0 0.0
        %647 = vmatpush1.msra.mxu0 0.0
        %648 = vmatprep.subr.mxu0 0.0
        %649 = vmatpush1.msra.mxu0 0.0
        %650 = vmatprep.subr.mxu0 0.0
        %651 = vmatpush1.msra.mxu0 0.0
        %652 = vmatprep.subr.mxu0 0.0
        %653 = vmatpush1.msra.mxu0 0.0
        %654 = vmatprep.subr.mxu0 0.0
        %655 = vmatpush1.msra.mxu0 0.0
        %656 = vmatprep.subr.mxu0 0.0
        %657 = vmatpush1.msra.mxu0 0.0
        %658 = vmatprep.subr.mxu0 0.0
        %659 = vmatpush1.msra.mxu0 0.0
        %660 = vmatprep.subr.mxu0 0.0
        %661 = vmatpush1.msra.mxu0 0.0
        %662 = vmatprep.subr.mxu0 0.0
        %663 = vmatpush1.msra.mxu0 0.0
        %664 = vmatprep.subr.mxu0 0.0
        %665 = vmatpush1.msra.mxu0 0.0
        %666 = vmatprep.subr.mxu0 0.0
        %667 = vmatpush1.msra.mxu0 0.0
        %668 = vmatprep.subr.mxu0 0.0
        %669 = vmatpush1.msra.mxu0 0.0
        %670 = vmatprep.subr.mxu0 0.0
        %671 = vmatpush1.msra.mxu0 0.0
        %672 = vmatprep.subr.mxu0 0.0
        %673 = vmatpush1.msra.mxu0 0.0
        %674 = vmatprep.subr.mxu0 0.0
        %675 = vmatpush1.msra.mxu0 0.0
        %676 = vmatprep.subr.mxu0 0.0
        %677 = vmatpush1.msra.mxu0 0.0
        %678 = vmatprep.subr.mxu0 0.0
        %679 = vmatpush1.msra.mxu0 0.0
        %680 = vmatprep.subr.mxu0 0.0
        %681 = vmatpush1.msra.mxu0 0.0
        %682 = vmatprep.subr.mxu0 0.0
        %683 = vmatpush1.msra.mxu0 0.0
        %684 = vmatprep.subr.mxu0 0.0
        %685 = vmatpush1.msra.mxu0 0.0
        %686 = vmatprep.subr.mxu0 0.0
        %687 = vmatpush1.msra.mxu0 0.0
        %688 = vmatprep.subr.mxu0 0.0
        %689 = vmatpush1.msra.mxu0 0.0
        %690 = vmatprep.subr.mxu0 0.0
        %691 = vmatpush1.msra.mxu0 0.0
        %692 = vmatprep.mubr.f32.mxu0 0.0
        %693 = vmatmul.mubr.f32.gmra.mrb[0].mxu0 %v537
        %v694 = vpop.f32.mrb[0].mxu0
        %v695 = vadd.f32 %v523, %v694
        %v696 = vpop.f32.mrb[0].mxu0
        %v697 = vadd.f32 %v523, %v696
        %698 = vmatprep.mubr.f32.mxu0 0.0
        %699 = vmatmul.mubr.f32.gmra.mrb[0].mxu0 %v540
        %v700 = vpop.f32.mrb[0].mxu0
        %v701 = vadd.f32 %v528, %v700
        %v702 = vpop.f32.mrb[0].mxu0
        %v703 = vadd.f32 %v528, %v702
        %704 = vmatprep.mubr.f32.mxu0 0.0
        %705 = vmatmul.mubr.f32.gmra.mrb[0].mxu0 %v543
        %v706 = vpop.f32.mrb[0].mxu0
        %v707 = vadd.f32 %v533, %v706
        %v708 = vpop.f32.mrb[0].mxu0
        %v709 = vadd.f32 %v533, %v708
        %710 = vdwg.mxu0
        %vm711 = vcmp.ge.f32.partialorder %v612, 0.0
        %vm712 = vcmp.ge.f32.partialorder %v614, 0.0
        %vm713 = vcmp.ge.f32.partialorder %v695, 0.0
        %vm714 = vcmp.ge.f32.partialorder %v697, 0.0
        %vm715 = vcmp.ge.f32.partialorder %v618, 0.0
        %vm716 = vcmp.ge.f32.partialorder %v620, 0.0
        %vm717 = vcmp.ge.f32.partialorder %v701, 0.0
        %vm718 = vcmp.ge.f32.partialorder %v703, 0.0
        %vm719 = vcmp.ge.f32.partialorder %v624, 0.0
        %vm720 = vcmp.ge.f32.partialorder %v626, 0.0
        %vm721 = vcmp.ge.f32.partialorder %v707, 0.0
        %vm722 = vcmp.ge.f32.partialorder %v709, 0.0
        %v723 = vstv %s512
        %v724 = vmul.f32 %v723, %v612
        %v725 = vmul.f32 %v723, %v614
        %v726 = vmul.f32 %v723, %v695
        %v727 = vmul.f32 %v723, %v697
        %v728 = vmul.f32 %v723, %v618
        %v729 = vmul.f32 %v723, %v620
        %v730 = vmul.f32 %v723, %v701
        %v731 = vmul.f32 %v723, %v703
        %v732 = vmul.f32 %v723, %v624
        %v733 = vmul.f32 %v723, %v626
        %v734 = vmul.f32 %v723, %v707
        %v735 = vmul.f32 %v723, %v709
        %v736 = vsel %vm711, %v612, %v724
        %v737 = vsel %vm712, %v614, %v725
        %v738 = vsel %vm713, %v695, %v726
        %v739 = vsel %vm714, %v697, %v727
        %v740 = vsel %vm715, %v618, %v728
        %v741 = vsel %vm716, %v620, %v729
        %v742 = vsel %vm717, %v701, %v730
        %v743 = vsel %vm718, %v703, %v731
        %v744 = vsel %vm719, %v624, %v732
        %v745 = vsel %vm720, %v626, %v733
        %v746 = vsel %vm721, %v707, %v734
        %v747 = vsel %vm722, %v709, %v735
        %v748 = vadd.f32 %v736, %v738
        %v749 = vadd.f32 %v737, %v739
        %v750 = vadd.f32 %v740, %v742
        %v751 = vadd.f32 %v741, %v743
        %v752 = vadd.f32 %v744, %v746
        %v753 = vadd.f32 %v745, %v747
        %v754 = vld [vmem:[%s2] sm:$0xff]
        %v755 = vld [vmem:[%s2 + $0x8] sm:$0xff]
        %v756 = vld [vmem:[%s2 + $0x10] sm:$0xff]
        %v757 = vmul.f32 %v748, 0.5
        %v758 = vmul.f32 %v749, 0.5
        %v759 = vmul.f32 %v750, 0.5
        %v760 = vmul.f32 %v751, 0.5
        %v761 = vmul.f32 %v752, 0.5
        %v762 = vmul.f32 %v753, 0.5
        %763 = vset.pattern.permute.xlu0 1
        %764 = vperm.xlu0 %763, %v431
        %v765 = vpop.permute.xlu0 %764
        %767 = vset.pattern.permute.xlu0 1
        %768 = vperm.xlu0 %767, %v432
        %v769 = vpop.permute.xlu0 %768
        %771 = vset.pattern.permute.xlu0 1
        %772 = vperm.xlu0 %771, %v433
        %v773 = vpop.permute.xlu0 %772
        %vm775 = vcmask 195584
        %v777 = vsel %vm775, %v754, 0
        %v780 = vsel %vm775, %v755, 0
        %v783 = vsel %vm775, %v756, 0
        %785 = vmatprep.subr.mxu0 %v758
        %786 = vmatpush1.msra.mxu0 %v757
        %787 = vmatprep.subr.mxu0 %v760
        %788 = vmatpush1.msra.mxu0 %v759
        %789 = vmatprep.subr.mxu0 %v762
        %790 = vmatpush1.msra.mxu0 %v761
        %791 = vmatprep.subr.mxu0 0.0
        %792 = vmatpush1.msra.mxu0 0.0
        %793 = vmatprep.subr.mxu0 0.0
        %794 = vmatpush1.msra.mxu0 0.0
        %795 = vmatprep.subr.mxu0 0.0
        %796 = vmatpush1.msra.mxu0 0.0
        %797 = vmatprep.subr.mxu0 0.0
        %798 = vmatpush1.msra.mxu0 0.0
        %799 = vmatprep.subr.mxu0 0.0
        %800 = vmatpush1.msra.mxu0 0.0
        %801 = vmatprep.subr.mxu0 0.0
        %802 = vmatpush1.msra.mxu0 0.0
        %803 = vmatprep.subr.mxu0 0.0
        %804 = vmatpush1.msra.mxu0 0.0
        %805 = vmatprep.subr.mxu0 0.0
        %806 = vmatpush1.msra.mxu0 0.0
        %807 = vmatprep.subr.mxu0 0.0
        %808 = vmatpush1.msra.mxu0 0.0
        %809 = vmatprep.subr.mxu0 0.0
        %810 = vmatpush1.msra.mxu0 0.0
        %811 = vmatprep.subr.mxu0 0.0
        %812 = vmatpush1.msra.mxu0 0.0
        %813 = vmatprep.subr.mxu0 0.0
        %814 = vmatpush1.msra.mxu0 0.0
        %815 = vmatprep.subr.mxu0 0.0
        %816 = vmatpush1.msra.mxu0 0.0
        %817 = vmatprep.subr.mxu0 0.0
        %818 = vmatpush1.msra.mxu0 0.0
        %819 = vmatprep.subr.mxu0 0.0
        %820 = vmatpush1.msra.mxu0 0.0
        %821 = vmatprep.subr.mxu0 0.0
        %822 = vmatpush1.msra.mxu0 0.0
        %823 = vmatprep.subr.mxu0 0.0
        %824 = vmatpush1.msra.mxu0 0.0
        %825 = vmatprep.subr.mxu0 0.0
        %826 = vmatpush1.msra.mxu0 0.0
        %827 = vmatprep.subr.mxu0 0.0
        %828 = vmatpush1.msra.mxu0 0.0
        %829 = vmatprep.subr.mxu0 0.0
        %830 = vmatpush1.msra.mxu0 0.0
        %831 = vmatprep.subr.mxu0 0.0
        %832 = vmatpush1.msra.mxu0 0.0
        %833 = vmatprep.subr.mxu0 0.0
        %834 = vmatpush1.msra.mxu0 0.0
        %835 = vmatprep.subr.mxu0 0.0
        %836 = vmatpush1.msra.mxu0 0.0
        %837 = vmatprep.subr.mxu0 0.0
        %838 = vmatpush1.msra.mxu0 0.0
        %839 = vmatprep.subr.mxu0 0.0
        %840 = vmatpush1.msra.mxu0 0.0
        %841 = vmatprep.subr.mxu0 0.0
        %842 = vmatpush1.msra.mxu0 0.0
        %843 = vmatprep.subr.mxu0 0.0
        %844 = vmatpush1.msra.mxu0 0.0
        %845 = vmatprep.subr.mxu0 0.0
        %846 = vmatpush1.msra.mxu0 0.0
        %847 = vmatprep.subr.mxu0 0.0
        %848 = vmatpush1.msra.mxu0 0.0
        %849 = vmatprep.mubr.f32.mxu0 0.0
        %850 = vmatmul.mubr.f32.gmra.mrb[0].mxu0 %v777
        %v851 = vpop.f32.mrb[0].mxu0
        %v852 = vadd.f32 %v765, %v851
        %v853 = vpop.f32.mrb[0].mxu0
        %v854 = vadd.f32 %v765, %v853
        %855 = vmatprep.mubr.f32.mxu0 0.0
        %856 = vmatmul.mubr.f32.gmra.mrb[0].mxu0 %v780
        %v857 = vpop.f32.mrb[0].mxu0
        %v858 = vadd.f32 %v769, %v857
        %v859 = vpop.f32.mrb[0].mxu0
        %v860 = vadd.f32 %v769, %v859
        %861 = vmatprep.mubr.f32.mxu0 0.0
        %862 = vmatmul.mubr.f32.gmra.mrb[0].mxu0 %v783
        %v863 = vpop.f32.mrb[0].mxu0
        %v864 = vadd.f32 %v773, %v863
        %v865 = vpop.f32.mrb[0].mxu0
        %v866 = vadd.f32 %v773, %v865
        %867 = vdwg.mxu0
        %vm868 = vcmp.ge.f32.partialorder %v852, 0.0
        %vm869 = vcmp.ge.f32.partialorder %v854, 0.0
        %vm870 = vcmp.ge.f32.partialorder %v858, 0.0
        %vm871 = vcmp.ge.f32.partialorder %v860, 0.0
        %vm872 = vcmp.ge.f32.partialorder %v864, 0.0
        %vm873 = vcmp.ge.f32.partialorder %v866, 0.0
        %v874 = vstv %s513
        %v875 = vmul.f32 %v874, %v852
        %v876 = vmul.f32 %v874, %v854
        %v877 = vmul.f32 %v874, %v858
        %v878 = vmul.f32 %v874, %v860
        %v879 = vmul.f32 %v874, %v864
        %v880 = vmul.f32 %v874, %v866
        %v881 = vsel %vm868, %v852, %v875
        %v882 = vsel %vm869, %v854, %v876
        %v883 = vsel %vm870, %v858, %v877
        %v884 = vsel %vm871, %v860, %v878
        %v885 = vsel %vm872, %v864, %v879
        %v886 = vsel %vm873, %v866, %v880
        %v887 = vld [vmem:[%s3] sm:$0xff]
        %888 = vset.pattern.permute.xlu0 2
        %889 = vperm.xlu0 %888, %v431
        %v890 = vpop.permute.xlu0 %889
        %vm892 = vcmask 392192
        %v894 = vsel %vm892, %v887, 0
        %896 = vmatprep.subr.mxu0 %v737
        %897 = vmatpush1.msra.mxu0 %v736
        %898 = vmatprep.subr.mxu0 %v741
        %899 = vmatpush1.msra.mxu0 %v740
        %900 = vmatprep.subr.mxu0 %v745
        %901 = vmatpush1.msra.mxu0 %v744
        %902 = vmatprep.subr.mxu0 %v882
        %903 = vmatpush1.msra.mxu0 %v881
        %904 = vmatprep.subr.mxu0 %v884
        %905 = vmatpush1.msra.mxu0 %v883
        %906 = vmatprep.subr.mxu0 %v886
        %907 = vmatpush1.msra.mxu0 %v885
        %908 = vmatprep.subr.mxu0 0.0
        %909 = vmatpush1.msra.mxu0 0.0
        %910 = vmatprep.subr.mxu0 0.0
        %911 = vmatpush1.msra.mxu0 0.0
        %912 = vmatprep.subr.mxu0 0.0
        %913 = vmatpush1.msra.mxu0 0.0
        %914 = vmatprep.subr.mxu0 0.0
        %915 = vmatpush1.msra.mxu0 0.0
        %916 = vmatprep.subr.mxu0 0.0
        %917 = vmatpush1.msra.mxu0 0.0
        %918 = vmatprep.subr.mxu0 0.0
        %919 = vmatpush1.msra.mxu0 0.0
        %920 = vmatprep.subr.mxu0 0.0
        %921 = vmatpush1.msra.mxu0 0.0
        %922 = vmatprep.subr.mxu0 0.0
        %923 = vmatpush1.msra.mxu0 0.0
        %924 = vmatprep.subr.mxu0 0.0
        %925 = vmatpush1.msra.mxu0 0.0
        %926 = vmatprep.subr.mxu0 0.0
        %927 = vmatpush1.msra.mxu0 0.0
        %928 = vmatprep.subr.mxu0 0.0
        %929 = vmatpush1.msra.mxu0 0.0
        %930 = vmatprep.subr.mxu0 0.0
        %931 = vmatpush1.msra.mxu0 0.0
        %932 = vmatprep.subr.mxu0 0.0
        %933 = vmatpush1.msra.mxu0 0.0
        %934 = vmatprep.subr.mxu0 0.0
        %935 = vmatpush1.msra.mxu0 0.0
        %936 = vmatprep.subr.mxu0 0.0
        %937 = vmatpush1.msra.mxu0 0.0
        %938 = vmatprep.subr.mxu0 0.0
        %939 = vmatpush1.msra.mxu0 0.0
        %940 = vmatprep.subr.mxu0 0.0
        %941 = vmatpush1.msra.mxu0 0.0
        %942 = vmatprep.subr.mxu0 0.0
        %943 = vmatpush1.msra.mxu0 0.0
        %944 = vmatprep.subr.mxu0 0.0
        %945 = vmatpush1.msra.mxu0 0.0
        %946 = vmatprep.subr.mxu0 0.0
        %947 = vmatpush1.msra.mxu0 0.0
        %948 = vmatprep.subr.mxu0 0.0
        %949 = vmatpush1.msra.mxu0 0.0
        %950 = vmatprep.subr.mxu0 0.0
        %951 = vmatpush1.msra.mxu0 0.0
        %952 = vmatprep.subr.mxu0 0.0
        %953 = vmatpush1.msra.mxu0 0.0
        %954 = vmatprep.subr.mxu0 0.0
        %955 = vmatpush1.msra.mxu0 0.0
        %956 = vmatprep.subr.mxu0 0.0
        %957 = vmatpush1.msra.mxu0 0.0
        %958 = vmatprep.subr.mxu0 0.0
        %959 = vmatpush1.msra.mxu0 0.0
        %960 = vmatprep.mubr.f32.mxu0 0.0
        %961 = vmatmul.mubr.f32.gmra.mrb[0].mxu0 %v894
        %v962 = vpop.f32.mrb[0].mxu0
        %v963 = vadd.f32 %v890, %v962
        %v964 = vpop.f32.mrb[0].mxu0
        %v965 = vadd.f32 %v890, %v964
        %966 = vdwg.mxu0
        %967 = vmatprep.subr.mxu0 %v739
        %968 = vmatpush1.msra.mxu0 %v738
        %969 = vmatprep.subr.mxu0 %v743
        %970 = vmatpush1.msra.mxu0 %v742
        %971 = vmatprep.subr.mxu0 %v747
        %972 = vmatpush1.msra.mxu0 %v746
        %973 = vmatprep.subr.mxu0 %v882
        %974 = vmatpush1.msra.mxu0 %v881
        %975 = vmatprep.subr.mxu0 %v884
        %976 = vmatpush1.msra.mxu0 %v883
        %977 = vmatprep.subr.mxu0 %v886
        %978 = vmatpush1.msra.mxu0 %v885
        %979 = vmatprep.subr.mxu0 0.0
        %980 = vmatpush1.msra.mxu0 0.0
        %981 = vmatprep.subr.mxu0 0.0
        %982 = vmatpush1.msra.mxu0 0.0
        %983 = vmatprep.subr.mxu0 0.0
        %984 = vmatpush1.msra.mxu0 0.0
        %985 = vmatprep.subr.mxu0 0.0
        %986 = vmatpush1.msra.mxu0 0.0
        %987 = vmatprep.subr.mxu0 0.0
        %988 = vmatpush1.msra.mxu0 0.0
        %989 = vmatprep.subr.mxu0 0.0
        %990 = vmatpush1.msra.mxu0 0.0
        %991 = vmatprep.subr.mxu0 0.0
        %992 = vmatpush1.msra.mxu0 0.0
        %993 = vmatprep.subr.mxu0 0.0
        %994 = vmatpush1.msra.mxu0 0.0
        %995 = vmatprep.subr.mxu0 0.0
        %996 = vmatpush1.msra.mxu0 0.0
        %997 = vmatprep.subr.mxu0 0.0
        %998 = vmatpush1.msra.mxu0 0.0
        %999 = vmatprep.subr.mxu0 0.0
        %1000 = vmatpush1.msra.mxu0 0.0
        %1001 = vmatprep.subr.mxu0 0.0
        %1002 = vmatpush1.msra.mxu0 0.0
        %1003 = vmatprep.subr.mxu0 0.0
        %1004 = vmatpush1.msra.mxu0 0.0
        %1005 = vmatprep.subr.mxu0 0.0
        %1006 = vmatpush1.msra.mxu0 0.0
        %1007 = vmatprep.subr.mxu0 0.0
        %1008 = vmatpush1.msra.mxu0 0.0
        %1009 = vmatprep.subr.mxu0 0.0
        %1010 = vmatpush1.msra.mxu0 0.0
        %1011 = vmatprep.subr.mxu0 0.0
        %1012 = vmatpush1.msra.mxu0 0.0
        %1013 = vmatprep.subr.mxu0 0.0
        %1014 = vmatpush1.msra.mxu0 0.0
        %1015 = vmatprep.subr.mxu0 0.0
        %1016 = vmatpush1.msra.mxu0 0.0
        %1017 = vmatprep.subr.mxu0 0.0
        %1018 = vmatpush1.msra.mxu0 0.0
        %1019 = vmatprep.subr.mxu0 0.0
        %1020 = vmatpush1.msra.mxu0 0.0
        %1021 = vmatprep.subr.mxu0 0.0
        %1022 = vmatpush1.msra.mxu0 0.0
        %1023 = vmatprep.subr.mxu0 0.0
        %1024 = vmatpush1.msra.mxu0 0.0
        %1025 = vmatprep.subr.mxu0 0.0
        %1026 = vmatpush1.msra.mxu0 0.0
        %1027 = vmatprep.subr.mxu0 0.0
        %1028 = vmatpush1.msra.mxu0 0.0
        %1029 = vmatprep.subr.mxu0 0.0
        %1030 = vmatpush1.msra.mxu0 0.0
        %1031 = vmatprep.mubr.f32.mxu0 0.0
        %1032 = vmatmul.mubr.f32.gmra.mrb[0].mxu0 %v894
        %v1033 = vpop.f32.mrb[0].mxu0
        %v1034 = vadd.f32 %v890, %v1033
        %v1035 = vpop.f32.mrb[0].mxu0
        %v1036 = vadd.f32 %v890, %v1035
        %1037 = vdwg.mxu0
        %vm1038 = vcmp.ge.f32.partialorder %v963, 0.0
        %vm1039 = vcmp.ge.f32.partialorder %v965, 0.0
        %vm1040 = vcmp.ge.f32.partialorder %v1034, 0.0
        %vm1041 = vcmp.ge.f32.partialorder %v1036, 0.0
        %v1042 = vstv %s514
        %v1043 = vmul.f32 %v1042, %v963
        %v1044 = vmul.f32 %v1042, %v965
        %v1045 = vmul.f32 %v1042, %v1034
        %v1046 = vmul.f32 %v1042, %v1036
        %v1047 = vsel %vm1038, %v963, %v1043
        %v1048 = vsel %vm1039, %v965, %v1044
        %v1049 = vsel %vm1040, %v1034, %v1045
        %v1050 = vsel %vm1041, %v1036, %v1046
        %v1051 = vsel %vm504, 1, 0
        %v1052 = vsel %vm505, 1, 0
        %v1053 = vsel %vm506, 1, 0
        %v1054 = vsel %vm507, 1, 0
        %v1055 = vlaneseq
        %v1056 = vshrl.u32 %v1055, 7
        %v1057 = vsub.s32 0, %v1056
        %v1058 = vrot.slane %v1051, %v1057
        %v1059 = vlaneseq
        %v1060 = vshrl.u32 %v1059, 7
        %v1061 = vsub.s32 0, %v1060
        %v1062 = vrot.slane %v1052, %v1061
        %v1063 = vlaneseq
        %v1064 = vshrl.u32 %v1063, 7
        %v1065 = vsub.s32 0, %v1064
        %v1066 = vrot.slane %v1053, %v1065
        %v1067 = vlaneseq
        %v1068 = vshrl.u32 %v1067, 7
        %v1069 = vsub.s32 0, %v1068
        %v1070 = vrot.slane %v1054, %v1069
        %vm1071 = vcmp.eq.s32.totalorder %v1058, 1
        %vm1072 = vcmp.eq.s32.totalorder %v1062, 1
        %vm1073 = vcmp.eq.s32.totalorder %v1066, 1
        %vm1074 = vcmp.eq.s32.totalorder %v1070, 1
        %v1075 = vsel %vm1071, %v1047, 0.0
        %v1076 = vsel %vm1072, %v1048, 0.0
        %v1077 = vsel %vm1073, %v1049, 0.0
        %v1078 = vsel %vm1074, %v1050, 0.0
        %v1079 = vrot.slane %v1075, 4
        %v1080 = vadd.f32 %v1075, %v1079
        %v1081 = vrot.slane %v1080, 2
        %v1082 = vadd.f32 %v1080, %v1081
        %v1083 = vrot.slane %v1082, 1
        %v1084 = vadd.f32 %v1082, %v1083
        %v1085 = vrot.slane %v1076, 4
        %v1086 = vadd.f32 %v1076, %v1085
        %v1087 = vrot.slane %v1086, 2
        %v1088 = vadd.f32 %v1086, %v1087
        %v1089 = vrot.slane %v1088, 1
        %v1090 = vadd.f32 %v1088, %v1089
        %v1091 = vrot.slane %v1077, 4
        %v1092 = vadd.f32 %v1077, %v1091
        %v1093 = vrot.slane %v1092, 2
        %v1094 = vadd.f32 %v1092, %v1093
        %v1095 = vrot.slane %v1094, 1
        %v1096 = vadd.f32 %v1094, %v1095
        %v1097 = vrot.slane %v1078, 4
        %v1098 = vadd.f32 %v1078, %v1097
        %v1099 = vrot.slane %v1098, 2
        %v1100 = vadd.f32 %v1098, %v1099
        %v1101 = vrot.slane %v1100, 1
        %v1102 = vadd.f32 %v1100, %v1101
        %v1103 = vmul.f32 %v1075, %v1075
        %v1104 = vmul.f32 %v1076, %v1076
        %v1105 = vmul.f32 %v1077, %v1077
        %v1106 = vmul.f32 %v1078, %v1078
        %v1107 = vrot.slane %v1103, 4
        %v1108 = vadd.f32 %v1103, %v1107
        %v1109 = vrot.slane %v1108, 2
        %v1110 = vadd.f32 %v1108, %v1109
        %v1111 = vrot.slane %v1110, 1
        %v1112 = vadd.f32 %v1110, %v1111
        %v1113 = vrot.slane %v1104, 4
        %v1114 = vadd.f32 %v1104, %v1113
        %v1115 = vrot.slane %v1114, 2
        %v1116 = vadd.f32 %v1114, %v1115
        %v1117 = vrot.slane %v1116, 1
        %v1118 = vadd.f32 %v1116, %v1117
        %v1119 = vrot.slane %v1105, 4
        %v1120 = vadd.f32 %v1105, %v1119
        %v1121 = vrot.slane %v1120, 2
        %v1122 = vadd.f32 %v1120, %v1121
        %v1123 = vrot.slane %v1122, 1
        %v1124 = vadd.f32 %v1122, %v1123
        %v1125 = vrot.slane %v1106, 4
        %v1126 = vadd.f32 %v1106, %v1125
        %v1127 = vrot.slane %v1126, 2
        %v1128 = vadd.f32 %v1126, %v1127
        %v1129 = vrot.slane %v1128, 1
        %v1130 = vadd.f32 %v1128, %v1129
        %vm1131 = vcmask 1040384
        %v1132 = vsel %vm1131, %v1084, %v1112
        %v1133 = vsel %vm1131, %v1090, %v1118
        %v1134 = vsel %vm1131, %v1096, %v1124
        %v1135 = vsel %vm1131, %v1102, %v1130
        %1136 = vmatprep.subr.mxu0 0.0
        %1137 = vmatpush1.msra.mxu0 %v434
        %1138 = vmatprep.subr.mxu0 0.0
        %1139 = vmatpush1.msra.mxu0 %v435
        %1140 = vmatprep.subr.mxu0 0.0
        %1141 = vmatpush1.msra.mxu0 %v436
        %1142 = vmatprep.subr.mxu0 0.0
        %1143 = vmatpush1.msra.mxu0 %v437
        %1144 = vmatprep.subr.mxu0 0.0
        %1145 = vmatpush1.msra.mxu0 %v438
        %1146 = vmatprep.subr.mxu0 0.0
        %1147 = vmatpush1.msra.mxu0 %v439
        %1148 = vmatprep.subr.mxu0 0.0
        %1149 = vmatpush1.msra.mxu0 %v440
        %1150 = vmatprep.subr.mxu0 0.0
        %1151 = vmatpush1.msra.mxu0 %v441
        %1152 = vmatprep.subr.mxu0 0.0
        %1153 = vmatpush1.msra.mxu0 %v442
        %1154 = vmatprep.subr.mxu0 0.0
        %1155 = vmatpush1.msra.mxu0 %v443
        %1156 = vmatprep.subr.mxu0 0.0
        %1157 = vmatpush1.msra.mxu0 %v444
        %1158 = vmatprep.subr.mxu0 0.0
        %1159 = vmatpush1.msra.mxu0 %v445
        %1160 = vmatprep.subr.mxu0 0.0
        %1161 = vmatpush1.msra.mxu0 %v446
        %1162 = vmatprep.subr.mxu0 0.0
        %1163 = vmatpush1.msra.mxu0 %v447
        %1164 = vmatprep.subr.mxu0 0.0
        %1165 = vmatpush1.msra.mxu0 %v448
        %1166 = vmatprep.subr.mxu0 0.0
        %1167 = vmatpush1.msra.mxu0 %v449
        %1168 = vmatprep.subr.mxu0 0.0
        %1169 = vmatpush1.msra.mxu0 %v450
        %1170 = vmatprep.subr.mxu0 0.0
        %1171 = vmatpush1.msra.mxu0 %v451
        %1172 = vmatprep.subr.mxu0 0.0
        %1173 = vmatpush1.msra.mxu0 %v452
        %1174 = vmatprep.subr.mxu0 0.0
        %1175 = vmatpush1.msra.mxu0 %v453
        %1176 = vmatprep.subr.mxu0 0.0
        %1177 = vmatpush1.msra.mxu0 %v454
        %1178 = vmatprep.subr.mxu0 0.0
        %1179 = vmatpush1.msra.mxu0 %v455
        %1180 = vmatprep.subr.mxu0 0.0
        %1181 = vmatpush1.msra.mxu0 %v456
        %1182 = vmatprep.subr.mxu0 0.0
        %1183 = vmatpush1.msra.mxu0 %v457
        %1184 = vmatprep.subr.mxu0 0.0
        %1185 = vmatpush1.msra.mxu0 %v458
        %1186 = vmatprep.subr.mxu0 0.0
        %1187 = vmatpush1.msra.mxu0 %v459
        %1188 = vmatprep.subr.mxu0 0.0
        %1189 = vmatpush1.msra.mxu0 %v460
        %1190 = vmatprep.subr.mxu0 0.0
        %1191 = vmatpush1.msra.mxu0 %v461
        %1192 = vmatprep.subr.mxu0 0.0
        %1193 = vmatpush1.msra.mxu0 %v462
        %1194 = vmatprep.subr.mxu0 0.0
        %1195 = vmatpush1.msra.mxu0 %v463
        %1196 = vmatprep.subr.mxu0 0.0
        %1197 = vmatpush1.msra.mxu0 %v464
        %1198 = vmatprep.subr.mxu0 0.0
        %1199 = vmatpush1.msra.mxu0 %v465
        %1200 = vmatprep.mubr.f32.mxu0 %v1133
        %1201 = vmatmul.mubr.f32.gmra.mrb[0].mxu0 %v1132
        %v1202 = vpop.f32.mrb[0].mxu0
        %v1203 = vadd.f32 0.0, %v1202
        %v1204 = vpop.f32.mrb[0].mxu0
        %1205 = vdwg.mxu0
        %1206 = vmatprep.subr.mxu0 0.0
        %1207 = vmatpush1.msra.mxu0 %v466
        %1208 = vmatprep.subr.mxu0 0.0
        %1209 = vmatpush1.msra.mxu0 %v467
        %1210 = vmatprep.subr.mxu0 0.0
        %1211 = vmatpush1.msra.mxu0 %v468
        %1212 = vmatprep.subr.mxu0 0.0
        %1213 = vmatpush1.msra.mxu0 %v469
        %1214 = vmatprep.subr.mxu0 0.0
        %1215 = vmatpush1.msra.mxu0 %v470
        %1216 = vmatprep.subr.mxu0 0.0
        %1217 = vmatpush1.msra.mxu0 %v471
        %1218 = vmatprep.subr.mxu0 0.0
        %1219 = vmatpush1.msra.mxu0 %v472
        %1220 = vmatprep.subr.mxu0 0.0
        %1221 = vmatpush1.msra.mxu0 %v473
        %1222 = vmatprep.subr.mxu0 0.0
        %1223 = vmatpush1.msra.mxu0 %v474
        %1224 = vmatprep.subr.mxu0 0.0
        %1225 = vmatpush1.msra.mxu0 %v475
        %1226 = vmatprep.subr.mxu0 0.0
        %1227 = vmatpush1.msra.mxu0 %v476
        %1228 = vmatprep.subr.mxu0 0.0
        %1229 = vmatpush1.msra.mxu0 %v477
        %1230 = vmatprep.subr.mxu0 0.0
        %1231 = vmatpush1.msra.mxu0 %v478
        %1232 = vmatprep.subr.mxu0 0.0
        %1233 = vmatpush1.msra.mxu0 %v479
        %1234 = vmatprep.subr.mxu0 0.0
        %1235 = vmatpush1.msra.mxu0 %v480
        %1236 = vmatprep.subr.mxu0 0.0
        %1237 = vmatpush1.msra.mxu0 %v481
        %1238 = vmatprep.subr.mxu0 0.0
        %1239 = vmatpush1.msra.mxu0 %v482
        %1240 = vmatprep.subr.mxu0 0.0
        %1241 = vmatpush1.msra.mxu0 %v483
        %1242 = vmatprep.subr.mxu0 0.0
        %1243 = vmatpush1.msra.mxu0 %v484
        %1244 = vmatprep.subr.mxu0 0.0
        %1245 = vmatpush1.msra.mxu0 %v485
        %1246 = vmatprep.subr.mxu0 0.0
        %1247 = vmatpush1.msra.mxu0 %v486
        %1248 = vmatprep.subr.mxu0 0.0
        %1249 = vmatpush1.msra.mxu0 %v487
        %1250 = vmatprep.subr.mxu0 0.0
        %1251 = vmatpush1.msra.mxu0 %v488
        %1252 = vmatprep.subr.mxu0 0.0
        %1253 = vmatpush1.msra.mxu0 %v489
        %1254 = vmatprep.subr.mxu0 0.0
        %1255 = vmatpush1.msra.mxu0 %v490
        %1256 = vmatprep.subr.mxu0 0.0
        %1257 = vmatpush1.msra.mxu0 %v491
        %1258 = vmatprep.subr.mxu0 0.0
        %1259 = vmatpush1.msra.mxu0 %v492
        %1260 = vmatprep.subr.mxu0 0.0
        %1261 = vmatpush1.msra.mxu0 %v493
        %1262 = vmatprep.subr.mxu0 0.0
        %1263 = vmatpush1.msra.mxu0 %v494
        %1264 = vmatprep.subr.mxu0 0.0
        %1265 = vmatpush1.msra.mxu0 %v495
        %1266 = vmatprep.subr.mxu0 0.0
        %1267 = vmatpush1.msra.mxu0 %v496
        %1268 = vmatprep.subr.mxu0 0.0
        %1269 = vmatpush1.msra.mxu0 %v497
        %1270 = vmatprep.mubr.f32.mxu0 %v1135
        %1271 = vmatmul.mubr.f32.gmra.mrb[0].mxu0 %v1134
        %v1272 = vpop.f32.mrb[0].mxu0
        %v1273 = vadd.f32 %v1203, %v1272
        %v1274 = vpop.f32.mrb[0].mxu0
        %1275 = vdwg.mxu0
        %v1278 = vcombine.high %v498, %v498
        %v1279 = vcombine.high %v499, %v499
        %vm1280 = vcmask 31744
        %v1282 = vsel %vm1280, %v1273, 0
        %vm1284 = vcmask 1043456
        %v1285 = vsel %vm1284, %v498, 0
        %v1287 = vsel %vm1284, %v1278, 0
        %v1289 = vsel %vm1284, %v499, 0
        %v1291 = vsel %vm1284, %v1279, 0
        %1293 = vmatprep.subr.mxu0 %v1287
        %1294 = vmatpush1.msra.mxu0 %v1285
        %1295 = vmatprep.subr.mxu0 0.0
        %1296 = vmatpush1.msra.mxu0 0.0
        %1297 = vmatprep.subr.mxu0 0.0
        %1298 = vmatpush1.msra.mxu0 0.0
        %1299 = vmatprep.subr.mxu0 0.0
        %1300 = vmatpush1.msra.mxu0 0.0
        %1301 = vmatprep.subr.mxu0 0.0
        %1302 = vmatpush1.msra.mxu0 0.0
        %1303 = vmatprep.subr.mxu0 0.0
        %1304 = vmatpush1.msra.mxu0 0.0
        %1305 = vmatprep.subr.mxu0 0.0
        %1306 = vmatpush1.msra.mxu0 0.0
        %1307 = vmatprep.subr.mxu0 0.0
        %1308 = vmatpush1.msra.mxu0 0.0
        %1309 = vmatprep.subr.mxu0 0.0
        %1310 = vmatpush1.msra.mxu0 0.0
        %1311 = vmatprep.subr.mxu0 0.0
        %1312 = vmatpush1.msra.mxu0 0.0
        %1313 = vmatprep.subr.mxu0 0.0
        %1314 = vmatpush1.msra.mxu0 0.0
        %1315 = vmatprep.subr.mxu0 0.0
        %1316 = vmatpush1.msra.mxu0 0.0
        %1317 = vmatprep.subr.mxu0 0.0
        %1318 = vmatpush1.msra.mxu0 0.0
        %1319 = vmatprep.subr.mxu0 0.0
        %1320 = vmatpush1.msra.mxu0 0.0
        %1321 = vmatprep.subr.mxu0 0.0
        %1322 = vmatpush1.msra.mxu0 0.0
        %1323 = vmatprep.subr.mxu0 0.0
        %1324 = vmatpush1.msra.mxu0 0.0
        %1325 = vmatprep.subr.mxu0 0.0
        %1326 = vmatpush1.msra.mxu0 0.0
        %1327 = vmatprep.subr.mxu0 0.0
        %1328 = vmatpush1.msra.mxu0 0.0
        %1329 = vmatprep.subr.mxu0 0.0
        %1330 = vmatpush1.msra.mxu0 0.0
        %1331 = vmatprep.subr.mxu0 0.0
        %1332 = vmatpush1.msra.mxu0 0.0
        %1333 = vmatprep.subr.mxu0 0.0
        %1334 = vmatpush1.msra.mxu0 0.0
        %1335 = vmatprep.subr.mxu0 0.0
        %1336 = vmatpush1.msra.mxu0 0.0
        %1337 = vmatprep.subr.mxu0 0.0
        %1338 = vmatpush1.msra.mxu0 0.0
        %1339 = vmatprep.subr.mxu0 0.0
        %1340 = vmatpush1.msra.mxu0 0.0
        %1341 = vmatprep.subr.mxu0 0.0
        %1342 = vmatpush1.msra.mxu0 0.0
        %1343 = vmatprep.subr.mxu0 0.0
        %1344 = vmatpush1.msra.mxu0 0.0
        %1345 = vmatprep.subr.mxu0 0.0
        %1346 = vmatpush1.msra.mxu0 0.0
        %1347 = vmatprep.subr.mxu0 0.0
        %1348 = vmatpush1.msra.mxu0 0.0
        %1349 = vmatprep.subr.mxu0 0.0
        %1350 = vmatpush1.msra.mxu0 0.0
        %1351 = vmatprep.subr.mxu0 0.0
        %1352 = vmatpush1.msra.mxu0 0.0
        %1353 = vmatprep.subr.mxu0 0.0
        %1354 = vmatpush1.msra.mxu0 0.0
        %1355 = vmatprep.subr.mxu0 0.0
        %1356 = vmatpush1.msra.mxu0 0.0
        %1357 = vmatprep.mubr.f32.mxu0 0.0
        %1358 = vmatmul.mubr.f32.gmra.mrb[0].mxu0 %v1282
        %v1359 = vpop.f32.mrb[0].mxu0
        %v1360 = vadd.f32 0.0, %v1359
        %v1361 = vpop.f32.mrb[0].mxu0
        %v1362 = vadd.f32 0.0, %v1361
        %1363 = vdwg.mxu0
        %1364 = vmatprep.subr.mxu0 %v1291
        %1365 = vmatpush1.msra.mxu0 %v1289
        %1366 = vmatprep.subr.mxu0 0.0
        %1367 = vmatpush1.msra.mxu0 0.0
        %1368 = vmatprep.subr.mxu0 0.0
        %1369 = vmatpush1.msra.mxu0 0.0
        %1370 = vmatprep.subr.mxu0 0.0
        %1371 = vmatpush1.msra.mxu0 0.0
        %1372 = vmatprep.subr.mxu0 0.0
        %1373 = vmatpush1.msra.mxu0 0.0
        %1374 = vmatprep.subr.mxu0 0.0
        %1375 = vmatpush1.msra.mxu0 0.0
        %1376 = vmatprep.subr.mxu0 0.0
        %1377 = vmatpush1.msra.mxu0 0.0
        %1378 = vmatprep.subr.mxu0 0.0
        %1379 = vmatpush1.msra.mxu0 0.0
        %1380 = vmatprep.subr.mxu0 0.0
        %1381 = vmatpush1.msra.mxu0 0.0
        %1382 = vmatprep.subr.mxu0 0.0
        %1383 = vmatpush1.msra.mxu0 0.0
        %1384 = vmatprep.subr.mxu0 0.0
        %1385 = vmatpush1.msra.mxu0 0.0
        %1386 = vmatprep.subr.mxu0 0.0
        %1387 = vmatpush1.msra.mxu0 0.0
        %1388 = vmatprep.subr.mxu0 0.0
        %1389 = vmatpush1.msra.mxu0 0.0
        %1390 = vmatprep.subr.mxu0 0.0
        %1391 = vmatpush1.msra.mxu0 0.0
        %1392 = vmatprep.subr.mxu0 0.0
        %1393 = vmatpush1.msra.mxu0 0.0
        %1394 = vmatprep.subr.mxu0 0.0
        %1395 = vmatpush1.msra.mxu0 0.0
        %1396 = vmatprep.subr.mxu0 0.0
        %1397 = vmatpush1.msra.mxu0 0.0
        %1398 = vmatprep.subr.mxu0 0.0
        %1399 = vmatpush1.msra.mxu0 0.0
        %1400 = vmatprep.subr.mxu0 0.0
        %1401 = vmatpush1.msra.mxu0 0.0
        %1402 = vmatprep.subr.mxu0 0.0
        %1403 = vmatpush1.msra.mxu0 0.0
        %1404 = vmatprep.subr.mxu0 0.0
        %1405 = vmatpush1.msra.mxu0 0.0
        %1406 = vmatprep.subr.mxu0 0.0
        %1407 = vmatpush1.msra.mxu0 0.0
        %1408 = vmatprep.subr.mxu0 0.0
        %1409 = vmatpush1.msra.mxu0 0.0
        %1410 = vmatprep.subr.mxu0 0.0
        %1411 = vmatpush1.msra.mxu0 0.0
        %1412 = vmatprep.subr.mxu0 0.0
        %1413 = vmatpush1.msra.mxu0 0.0
        %1414 = vmatprep.subr.mxu0 0.0
        %1415 = vmatpush1.msra.mxu0 0.0
        %1416 = vmatprep.subr.mxu0 0.0
        %1417 = vmatpush1.msra.mxu0 0.0
        %1418 = vmatprep.subr.mxu0 0.0
        %1419 = vmatpush1.msra.mxu0 0.0
        %1420 = vmatprep.subr.mxu0 0.0
        %1421 = vmatpush1.msra.mxu0 0.0
        %1422 = vmatprep.subr.mxu0 0.0
        %1423 = vmatpush1.msra.mxu0 0.0
        %1424 = vmatprep.subr.mxu0 0.0
        %1425 = vmatpush1.msra.mxu0 0.0
        %1426 = vmatprep.subr.mxu0 0.0
        %1427 = vmatpush1.msra.mxu0 0.0
        %1428 = vmatprep.mubr.f32.mxu0 0.0
        %1429 = vmatmul.mubr.f32.gmra.mrb[0].mxu0 %v1282
        %v1430 = vpop.f32.mrb[0].mxu0
        %v1431 = vadd.f32 0.0, %v1430
        %v1432 = vpop.f32.mrb[0].mxu0
        %v1433 = vadd.f32 0.0, %v1432
        %1434 = vdwg.mxu0
        %v1435 = vmul.f32 %v1360, 0.125
        %v1436 = vmul.f32 %v1362, 0.125
        %v1437 = vmul.f32 %v1431, 0.125
        %v1438 = vmul.f32 %v1433, 0.125
        %v1439 = vmul.f32 %v1435, %v1435
        %v1440 = vmul.f32 %v1436, %v1436
        %v1441 = vmul.f32 %v1437, %v1437
        %v1442 = vmul.f32 %v1438, %v1438
        %v1447 = vrot.slane %v1439, 7
        %v1448 = vrot.slane %v1440, 7
        %v1449 = vrot.slane %v1441, 7
        %v1450 = vrot.slane %v1442, 7
        %v1455 = vsub.f32 %v1435, %v1447
        %v1456 = vsub.f32 %v1436, %v1448
        %v1457 = vsub.f32 %v1437, %v1449
        %v1458 = vsub.f32 %v1438, %v1450
        %v1459 = vlaneseq
        %v1460 = vshrl.u32 %v1459, 7
        %v1461 = vsub.s32 0, %v1460
        %v1462 = vrot.slane %v1435, %v1461
        %v1463 = vlaneseq
        %v1464 = vshrl.u32 %v1463, 7
        %v1465 = vsub.s32 0, %v1464
        %v1466 = vrot.slane %v1436, %v1465
        %v1467 = vlaneseq
        %v1468 = vshrl.u32 %v1467, 7
        %v1469 = vsub.s32 0, %v1468
        %v1470 = vrot.slane %v1437, %v1469
        %v1471 = vlaneseq
        %v1472 = vshrl.u32 %v1471, 7
        %v1473 = vsub.s32 0, %v1472
        %v1474 = vrot.slane %v1438, %v1473
        %v1475 = vsub.f32 %v1047, %v1462
        %v1476 = vsub.f32 %v1048, %v1466
        %v1477 = vsub.f32 %v1049, %v1470
        %v1478 = vsub.f32 %v1050, %v1474
        %v1479 = vadd.f32 %v1455, 1.1920929e-07
        %v1480 = vadd.f32 %v1456, 1.1920929e-07
        %v1481 = vadd.f32 %v1457, 1.1920929e-07
        %v1482 = vadd.f32 %v1458, 1.1920929e-07
        %v1483 = vrsqrt.pop %v1479
        %v1484 = vrsqrt.pop %v1480
        %v1485 = vrsqrt.pop %v1481
        %v1486 = vrsqrt.pop %v1482
        %v1487 = vlaneseq
        %v1488 = vshrl.u32 %v1487, 7
        %v1489 = vsub.s32 1, %v1488
        %v1490 = vrot.slane %v1483, %v1489
        %v1491 = vlaneseq
        %v1492 = vshrl.u32 %v1491, 7
        %v1493 = vsub.s32 1, %v1492
        %v1494 = vrot.slane %v1484, %v1493
        %v1495 = vlaneseq
        %v1496 = vshrl.u32 %v1495, 7
        %v1497 = vsub.s32 1, %v1496
        %v1498 = vrot.slane %v1485, %v1497
        %v1499 = vlaneseq
        %v1500 = vshrl.u32 %v1499, 7
        %v1501 = vsub.s32 1, %v1500
        %v1502 = vrot.slane %v1486, %v1501
        %v1503 = vmul.f32 %v1475, %v1490
        %v1504 = vmul.f32 %v1476, %v1494
        %v1505 = vmul.f32 %v1477, %v1498
        %v1506 = vmul.f32 %v1478, %v1502
        %1507 = vset.pattern.permute.xlu0 3
        %1508 = vperm.xlu0 %1507, %v431
        %v1509 = vpop.permute.xlu0 %1508
        %v1511 = vmul.f32 %v1503, %v1509
        %v1512 = vmul.f32 %v1504, %v1509
        %v1513 = vmul.f32 %v1505, %v1509
        %v1514 = vmul.f32 %v1506, %v1509
        %1515 = vset.pattern.permute.xlu0 4
        %1516 = vperm.xlu0 %1515, %v431
        %v1517 = vpop.permute.xlu0 %1516
        %v1519 = vadd.f32 %v1511, %v1517
        %v1520 = vadd.f32 %v1512, %v1517
        %v1521 = vadd.f32 %v1513, %v1517
        %v1522 = vadd.f32 %v1514, %v1517
        %v1523 = vadd.f32 %v508, %v1519
        %v1524 = vadd.f32 %v509, %v1520
        %v1525 = vadd.f32 %v510, %v1521
        %v1526 = vadd.f32 %v511, %v1522
        %1527 = vst [vmem:[#allocation2] sm:$0xff] %v1523
        %1528 = vst [vmem:[#allocation2 + $0x8] sm:$0xff] %v1524
        %1529 = vst [vmem:[#allocation2 + $0x10] sm:$0xff] %v1525
        %1530 = vst [vmem:[#allocation2 + $0x18] sm:$0xff] %v1526
        %v1531 = vld [vmem:[%s4] sm:$0xff]
        %v1532 = vld [vmem:[#allocation2] sm:$0xff]
        %v1533 = vld [vmem:[#allocation2 + $0x8] sm:$0xff]
        %v1534 = vld [vmem:[#allocation2 + $0x10] sm:$0xff]
        %v1535 = vld [vmem:[#allocation2 + $0x18] sm:$0xff]
        %1536 = vset.pattern.permute.xlu0 5
        %1537 = vperm.xlu0 %1536, %v431
        %v1538 = vpop.permute.xlu0 %1537
        %v1541 = vsel %vm535, %v1531, 0
        %1543 = vmatprep.subr.mxu0 %v1533
        %1544 = vmatpush1.msra.mxu0 %v1532
        %1545 = vmatprep.subr.mxu0 0.0
        %1546 = vmatpush1.msra.mxu0 0.0
        %1547 = vmatprep.subr.mxu0 0.0
        %1548 = vmatpush1.msra.mxu0 0.0
        %1549 = vmatprep.subr.mxu0 0.0
        %1550 = vmatpush1.msra.mxu0 0.0
        %1551 = vmatprep.subr.mxu0 0.0
        %1552 = vmatpush1.msra.mxu0 0.0
        %1553 = vmatprep.subr.mxu0 0.0
        %1554 = vmatpush1.msra.mxu0 0.0
        %1555 = vmatprep.subr.mxu0 0.0
        %1556 = vmatpush1.msra.mxu0 0.0
        %1557 = vmatprep.subr.mxu0 0.0
        %1558 = vmatpush1.msra.mxu0 0.0
        %1559 = vmatprep.subr.mxu0 0.0
        %1560 = vmatpush1.msra.mxu0 0.0
        %1561 = vmatprep.subr.mxu0 0.0
        %1562 = vmatpush1.msra.mxu0 0.0
        %1563 = vmatprep.subr.mxu0 0.0
        %1564 = vmatpush1.msra.mxu0 0.0
        %1565 = vmatprep.subr.mxu0 0.0
        %1566 = vmatpush1.msra.mxu0 0.0
        %1567 = vmatprep.subr.mxu0 0.0
        %1568 = vmatpush1.msra.mxu0 0.0
        %1569 = vmatprep.subr.mxu0 0.0
        %1570 = vmatpush1.msra.mxu0 0.0
        %1571 = vmatprep.subr.mxu0 0.0
        %1572 = vmatpush1.msra.mxu0 0.0
        %1573 = vmatprep.subr.mxu0 0.0
        %1574 = vmatpush1.msra.mxu0 0.0
        %1575 = vmatprep.subr.mxu0 0.0
        %1576 = vmatpush1.msra.mxu0 0.0
        %1577 = vmatprep.subr.mxu0 0.0
        %1578 = vmatpush1.msra.mxu0 0.0
        %1579 = vmatprep.subr.mxu0 0.0
        %1580 = vmatpush1.msra.mxu0 0.0
        %1581 = vmatprep.subr.mxu0 0.0
        %1582 = vmatpush1.msra.mxu0 0.0
        %1583 = vmatprep.subr.mxu0 0.0
        %1584 = vmatpush1.msra.mxu0 0.0
        %1585 = vmatprep.subr.mxu0 0.0
        %1586 = vmatpush1.msra.mxu0 0.0
        %1587 = vmatprep.subr.mxu0 0.0
        %1588 = vmatpush1.msra.mxu0 0.0
        %1589 = vmatprep.subr.mxu0 0.0
        %1590 = vmatpush1.msra.mxu0 0.0
        %1591 = vmatprep.subr.mxu0 0.0
        %1592 = vmatpush1.msra.mxu0 0.0
        %1593 = vmatprep.subr.mxu0 0.0
        %1594 = vmatpush1.msra.mxu0 0.0
        %1595 = vmatprep.subr.mxu0 0.0
        %1596 = vmatpush1.msra.mxu0 0.0
        %1597 = vmatprep.subr.mxu0 0.0
        %1598 = vmatpush1.msra.mxu0 0.0
        %1599 = vmatprep.subr.mxu0 0.0
        %1600 = vmatpush1.msra.mxu0 0.0
        %1601 = vmatprep.subr.mxu0 0.0
        %1602 = vmatpush1.msra.mxu0 0.0
        %1603 = vmatprep.subr.mxu0 0.0
        %1604 = vmatpush1.msra.mxu0 0.0
        %1605 = vmatprep.subr.mxu0 0.0
        %1606 = vmatpush1.msra.mxu0 0.0
        %1607 = vmatprep.mubr.f32.mxu0 0.0
        %1608 = vmatmul.mubr.f32.gmra.mrb[0].mxu0 %v1541
        %v1609 = vpop.f32.mrb[0].mxu0
        %v1610 = vadd.f32 %v1538, %v1609
        %v1611 = vpop.f32.mrb[0].mxu0
        %v1612 = vadd.f32 %v1538, %v1611
        %1613 = vdwg.mxu0
        %1614 = vmatprep.subr.mxu0 %v1535
        %1615 = vmatpush1.msra.mxu0 %v1534
        %1616 = vmatprep.subr.mxu0 0.0
        %1617 = vmatpush1.msra.mxu0 0.0
        %1618 = vmatprep.subr.mxu0 0.0
        %1619 = vmatpush1.msra.mxu0 0.0
        %1620 = vmatprep.subr.mxu0 0.0
        %1621 = vmatpush1.msra.mxu0 0.0
        %1622 = vmatprep.subr.mxu0 0.0
        %1623 = vmatpush1.msra.mxu0 0.0
        %1624 = vmatprep.subr.mxu0 0.0
        %1625 = vmatpush1.msra.mxu0 0.0
        %1626 = vmatprep.subr.mxu0 0.0
        %1627 = vmatpush1.msra.mxu0 0.0
        %1628 = vmatprep.subr.mxu0 0.0
        %1629 = vmatpush1.msra.mxu0 0.0
        %1630 = vmatprep.subr.mxu0 0.0
        %1631 = vmatpush1.msra.mxu0 0.0
        %1632 = vmatprep.subr.mxu0 0.0
        %1633 = vmatpush1.msra.mxu0 0.0
        %1634 = vmatprep.subr.mxu0 0.0
        %1635 = vmatpush1.msra.mxu0 0.0
        %1636 = vmatprep.subr.mxu0 0.0
        %1637 = vmatpush1.msra.mxu0 0.0
        %1638 = vmatprep.subr.mxu0 0.0
        %1639 = vmatpush1.msra.mxu0 0.0
        %1640 = vmatprep.subr.mxu0 0.0
        %1641 = vmatpush1.msra.mxu0 0.0
        %1642 = vmatprep.subr.mxu0 0.0
        %1643 = vmatpush1.msra.mxu0 0.0
        %1644 = vmatprep.subr.mxu0 0.0
        %1645 = vmatpush1.msra.mxu0 0.0
        %1646 = vmatprep.subr.mxu0 0.0
        %1647 = vmatpush1.msra.mxu0 0.0
        %1648 = vmatprep.subr.mxu0 0.0
        %1649 = vmatpush1.msra.mxu0 0.0
        %1650 = vmatprep.subr.mxu0 0.0
        %1651 = vmatpush1.msra.mxu0 0.0
        %1652 = vmatprep.subr.mxu0 0.0
        %1653 = vmatpush1.msra.mxu0 0.0
        %1654 = vmatprep.subr.mxu0 0.0
        %1655 = vmatpush1.msra.mxu0 0.0
        %1656 = vmatprep.subr.mxu0 0.0
        %1657 = vmatpush1.msra.mxu0 0.0
        %1658 = vmatprep.subr.mxu0 0.0
        %1659 = vmatpush1.msra.mxu0 0.0
        %1660 = vmatprep.subr.mxu0 0.0
        %1661 = vmatpush1.msra.mxu0 0.0
        %1662 = vmatprep.subr.mxu0 0.0
        %1663 = vmatpush1.msra.mxu0 0.0
        %1664 = vmatprep.subr.mxu0 0.0
        %1665 = vmatpush1.msra.mxu0 0.0
        %1666 = vmatprep.subr.mxu0 0.0
        %1667 = vmatpush1.msra.mxu0 0.0
        %1668 = vmatprep.subr.mxu0 0.0
        %1669 = vmatpush1.msra.mxu0 0.0
        %1670 = vmatprep.subr.mxu0 0.0
        %1671 = vmatpush1.msra.mxu0 0.0
        %1672 = vmatprep.subr.mxu0 0.0
        %1673 = vmatpush1.msra.mxu0 0.0
        %1674 = vmatprep.subr.mxu0 0.0
        %1675 = vmatpush1.msra.mxu0 0.0
        %1676 = vmatprep.subr.mxu0 0.0
        %1677 = vmatpush1.msra.mxu0 0.0
        %1678 = vmatprep.mubr.f32.mxu0 0.0
        %1679 = vmatmul.mubr.f32.gmra.mrb[0].mxu0 %v1541
        %v1680 = vpop.f32.mrb[0].mxu0
        %v1681 = vadd.f32 %v1538, %v1680
        %v1682 = vpop.f32.mrb[0].mxu0
        %v1683 = vadd.f32 %v1538, %v1682
        %1684 = vdwg.mxu0
        %vm1685 = vcmp.ge.f32.partialorder %v1610, 0.0
        %vm1686 = vcmp.ge.f32.partialorder %v1612, 0.0
        %vm1687 = vcmp.ge.f32.partialorder %v1681, 0.0
        %vm1688 = vcmp.ge.f32.partialorder %v1683, 0.0
        %v1689 = vstv %s515
        %v1690 = vmul.f32 %v1689, %v1610
        %v1691 = vmul.f32 %v1689, %v1612
        %v1692 = vmul.f32 %v1689, %v1681
        %v1693 = vmul.f32 %v1689, %v1683
        %v1694 = vsel %vm1685, %v1610, %v1690
        %v1695 = vsel %vm1686, %v1612, %v1691
        %v1696 = vsel %vm1687, %v1681, %v1692
        %v1697 = vsel %vm1688, %v1683, %v1693
        %v1698 = vsel %vm1071, %v1694, 0.0
        %v1699 = vsel %vm1072, %v1695, 0.0
        %v1700 = vsel %vm1073, %v1696, 0.0
        %v1701 = vsel %vm1074, %v1697, 0.0
        %v1702 = vrot.slane %v1698, 4
        %v1703 = vadd.f32 %v1698, %v1702
        %v1704 = vrot.slane %v1703, 2
        %v1705 = vadd.f32 %v1703, %v1704
        %v1706 = vrot.slane %v1705, 1
        %v1707 = vadd.f32 %v1705, %v1706
        %v1708 = vrot.slane %v1699, 4
        %v1709 = vadd.f32 %v1699, %v1708
        %v1710 = vrot.slane %v1709, 2
        %v1711 = vadd.f32 %v1709, %v1710
        %v1712 = vrot.slane %v1711, 1
        %v1713 = vadd.f32 %v1711, %v1712
        %v1714 = vrot.slane %v1700, 4
        %v1715 = vadd.f32 %v1700, %v1714
        %v1716 = vrot.slane %v1715, 2
        %v1717 = vadd.f32 %v1715, %v1716
        %v1718 = vrot.slane %v1717, 1
        %v1719 = vadd.f32 %v1717, %v1718
        %v1720 = vrot.slane %v1701, 4
        %v1721 = vadd.f32 %v1701, %v1720
        %v1722 = vrot.slane %v1721, 2
        %v1723 = vadd.f32 %v1721, %v1722
        %v1724 = vrot.slane %v1723, 1
        %v1725 = vadd.f32 %v1723, %v1724
        %v1726 = vmul.f32 %v1698, %v1698
        %v1727 = vmul.f32 %v1699, %v1699
        %v1728 = vmul.f32 %v1700, %v1700
        %v1729 = vmul.f32 %v1701, %v1701
        %v1730 = vrot.slane %v1726, 4
        %v1731 = vadd.f32 %v1726, %v1730
        %v1732 = vrot.slane %v1731, 2
        %v1733 = vadd.f32 %v1731, %v1732
        %v1734 = vrot.slane %v1733, 1
        %v1735 = vadd.f32 %v1733, %v1734
        %v1736 = vrot.slane %v1727, 4
        %v1737 = vadd.f32 %v1727, %v1736
        %v1738 = vrot.slane %v1737, 2
        %v1739 = vadd.f32 %v1737, %v1738
        %v1740 = vrot.slane %v1739, 1
        %v1741 = vadd.f32 %v1739, %v1740
        %v1742 = vrot.slane %v1728, 4
        %v1743 = vadd.f32 %v1728, %v1742
        %v1744 = vrot.slane %v1743, 2
        %v1745 = vadd.f32 %v1743, %v1744
        %v1746 = vrot.slane %v1745, 1
        %v1747 = vadd.f32 %v1745, %v1746
        %v1748 = vrot.slane %v1729, 4
        %v1749 = vadd.f32 %v1729, %v1748
        %v1750 = vrot.slane %v1749, 2
        %v1751 = vadd.f32 %v1749, %v1750
        %v1752 = vrot.slane %v1751, 1
        %v1753 = vadd.f32 %v1751, %v1752
        %v1754 = vsel %vm1131, %v1707, %v1735
        %v1755 = vsel %vm1131, %v1713, %v1741
        %v1756 = vsel %vm1131, %v1719, %v1747
        %v1757 = vsel %vm1131, %v1725, %v1753
        %1758 = vmatprep.subr.mxu0 0.0
        %1759 = vmatpush1.msra.mxu0 %v434
        %1760 = vmatprep.subr.mxu0 0.0
        %1761 = vmatpush1.msra.mxu0 %v435
        %1762 = vmatprep.subr.mxu0 0.0
        %1763 = vmatpush1.msra.mxu0 %v436
        %1764 = vmatprep.subr.mxu0 0.0
        %1765 = vmatpush1.msra.mxu0 %v437
        %1766 = vmatprep.subr.mxu0 0.0
        %1767 = vmatpush1.msra.mxu0 %v438
        %1768 = vmatprep.subr.mxu0 0.0
        %1769 = vmatpush1.msra.mxu0 %v439
        %1770 = vmatprep.subr.mxu0 0.0
        %1771 = vmatpush1.msra.mxu0 %v440
        %1772 = vmatprep.subr.mxu0 0.0
        %1773 = vmatpush1.msra.mxu0 %v441
        %1774 = vmatprep.subr.mxu0 0.0
        %1775 = vmatpush1.msra.mxu0 %v442
        %1776 = vmatprep.subr.mxu0 0.0
        %1777 = vmatpush1.msra.mxu0 %v443
        %1778 = vmatprep.subr.mxu0 0.0
        %1779 = vmatpush1.msra.mxu0 %v444
        %1780 = vmatprep.subr.mxu0 0.0
        %1781 = vmatpush1.msra.mxu0 %v445
        %1782 = vmatprep.subr.mxu0 0.0
        %1783 = vmatpush1.msra.mxu0 %v446
        %1784 = vmatprep.subr.mxu0 0.0
        %1785 = vmatpush1.msra.mxu0 %v447
        %1786 = vmatprep.subr.mxu0 0.0
        %1787 = vmatpush1.msra.mxu0 %v448
        %1788 = vmatprep.subr.mxu0 0.0
        %1789 = vmatpush1.msra.mxu0 %v449
        %1790 = vmatprep.subr.mxu0 0.0
        %1791 = vmatpush1.msra.mxu0 %v450
        %1792 = vmatprep.subr.mxu0 0.0
        %1793 = vmatpush1.msra.mxu0 %v451
        %1794 = vmatprep.subr.mxu0 0.0
        %1795 = vmatpush1.msra.mxu0 %v452
        %1796 = vmatprep.subr.mxu0 0.0
        %1797 = vmatpush1.msra.mxu0 %v453
        %1798 = vmatprep.subr.mxu0 0.0
        %1799 = vmatpush1.msra.mxu0 %v454
        %1800 = vmatprep.subr.mxu0 0.0
        %1801 = vmatpush1.msra.mxu0 %v455
        %1802 = vmatprep.subr.mxu0 0.0
        %1803 = vmatpush1.msra.mxu0 %v456
        %1804 = vmatprep.subr.mxu0 0.0
        %1805 = vmatpush1.msra.mxu0 %v457
        %1806 = vmatprep.subr.mxu0 0.0
        %1807 = vmatpush1.msra.mxu0 %v458
        %1808 = vmatprep.subr.mxu0 0.0
        %1809 = vmatpush1.msra.mxu0 %v459
        %1810 = vmatprep.subr.mxu0 0.0
        %1811 = vmatpush1.msra.mxu0 %v460
        %1812 = vmatprep.subr.mxu0 0.0
        %1813 = vmatpush1.msra.mxu0 %v461
        %1814 = vmatprep.subr.mxu0 0.0
        %1815 = vmatpush1.msra.mxu0 %v462
        %1816 = vmatprep.subr.mxu0 0.0
        %1817 = vmatpush1.msra.mxu0 %v463
        %1818 = vmatprep.subr.mxu0 0.0
        %1819 = vmatpush1.msra.mxu0 %v464
        %1820 = vmatprep.subr.mxu0 0.0
        %1821 = vmatpush1.msra.mxu0 %v465
        %1822 = vmatprep.mubr.f32.mxu0 %v1755
        %1823 = vmatmul.mubr.f32.gmra.mrb[0].mxu0 %v1754
        %v1824 = vpop.f32.mrb[0].mxu0
        %v1825 = vadd.f32 0.0, %v1824
        %v1826 = vpop.f32.mrb[0].mxu0
        %1827 = vdwg.mxu0
        %1828 = vmatprep.subr.mxu0 0.0
        %1829 = vmatpush1.msra.mxu0 %v466
        %1830 = vmatprep.subr.mxu0 0.0
        %1831 = vmatpush1.msra.mxu0 %v467
        %1832 = vmatprep.subr.mxu0 0.0
        %1833 = vmatpush1.msra.mxu0 %v468
        %1834 = vmatprep.subr.mxu0 0.0
        %1835 = vmatpush1.msra.mxu0 %v469
        %1836 = vmatprep.subr.mxu0 0.0
        %1837 = vmatpush1.msra.mxu0 %v470
        %1838 = vmatprep.subr.mxu0 0.0
        %1839 = vmatpush1.msra.mxu0 %v471
        %1840 = vmatprep.subr.mxu0 0.0
        %1841 = vmatpush1.msra.mxu0 %v472
        %1842 = vmatprep.subr.mxu0 0.0
        %1843 = vmatpush1.msra.mxu0 %v473
        %1844 = vmatprep.subr.mxu0 0.0
        %1845 = vmatpush1.msra.mxu0 %v474
        %1846 = vmatprep.subr.mxu0 0.0
        %1847 = vmatpush1.msra.mxu0 %v475
        %1848 = vmatprep.subr.mxu0 0.0
        %1849 = vmatpush1.msra.mxu0 %v476
        %1850 = vmatprep.subr.mxu0 0.0
        %1851 = vmatpush1.msra.mxu0 %v477
        %1852 = vmatprep.subr.mxu0 0.0
        %1853 = vmatpush1.msra.mxu0 %v478
        %1854 = vmatprep.subr.mxu0 0.0
        %1855 = vmatpush1.msra.mxu0 %v479
        %1856 = vmatprep.subr.mxu0 0.0
        %1857 = vmatpush1.msra.mxu0 %v480
        %1858 = vmatprep.subr.mxu0 0.0
        %1859 = vmatpush1.msra.mxu0 %v481
        %1860 = vmatprep.subr.mxu0 0.0
        %1861 = vmatpush1.msra.mxu0 %v482
        %1862 = vmatprep.subr.mxu0 0.0
        %1863 = vmatpush1.msra.mxu0 %v483
        %1864 = vmatprep.subr.mxu0 0.0
        %1865 = vmatpush1.msra.mxu0 %v484
        %1866 = vmatprep.subr.mxu0 0.0
        %1867 = vmatpush1.msra.mxu0 %v485
        %1868 = vmatprep.subr.mxu0 0.0
        %1869 = vmatpush1.msra.mxu0 %v486
        %1870 = vmatprep.subr.mxu0 0.0
        %1871 = vmatpush1.msra.mxu0 %v487
        %1872 = vmatprep.subr.mxu0 0.0
        %1873 = vmatpush1.msra.mxu0 %v488
        %1874 = vmatprep.subr.mxu0 0.0
        %1875 = vmatpush1.msra.mxu0 %v489
        %1876 = vmatprep.subr.mxu0 0.0
        %1877 = vmatpush1.msra.mxu0 %v490
        %1878 = vmatprep.subr.mxu0 0.0
        %1879 = vmatpush1.msra.mxu0 %v491
        %1880 = vmatprep.subr.mxu0 0.0
        %1881 = vmatpush1.msra.mxu0 %v492
        %1882 = vmatprep.subr.mxu0 0.0
        %1883 = vmatpush1.msra.mxu0 %v493
        %1884 = vmatprep.subr.mxu0 0.0
        %1885 = vmatpush1.msra.mxu0 %v494
        %1886 = vmatprep.subr.mxu0 0.0
        %1887 = vmatpush1.msra.mxu0 %v495
        %1888 = vmatprep.subr.mxu0 0.0
        %1889 = vmatpush1.msra.mxu0 %v496
        %1890 = vmatprep.subr.mxu0 0.0
        %1891 = vmatpush1.msra.mxu0 %v497
        %1892 = vmatprep.mubr.f32.mxu0 %v1757
        %1893 = vmatmul.mubr.f32.gmra.mrb[0].mxu0 %v1756
        %v1894 = vpop.f32.mrb[0].mxu0
        %v1895 = vadd.f32 %v1825, %v1894
        %v1896 = vpop.f32.mrb[0].mxu0
        %1897 = vdwg.mxu0
        %v1899 = vsel %vm1280, %v1895, 0
        %1901 = vmatprep.subr.mxu0 %v1287
        %1902 = vmatpush1.msra.mxu0 %v1285
        %1903 = vmatprep.subr.mxu0 0.0
        %1904 = vmatpush1.msra.mxu0 0.0
        %1905 = vmatprep.subr.mxu0 0.0
        %1906 = vmatpush1.msra.mxu0 0.0
        %1907 = vmatprep.subr.mxu0 0.0
        %1908 = vmatpush1.msra.mxu0 0.0
        %1909 = vmatprep.subr.mxu0 0.0
        %1910 = vmatpush1.msra.mxu0 0.0
        %1911 = vmatprep.subr.mxu0 0.0
        %1912 = vmatpush1.msra.mxu0 0.0
        %1913 = vmatprep.subr.mxu0 0.0
        %1914 = vmatpush1.msra.mxu0 0.0
        %1915 = vmatprep.subr.mxu0 0.0
        %1916 = vmatpush1.msra.mxu0 0.0
        %1917 = vmatprep.subr.mxu0 0.0
        %1918 = vmatpush1.msra.mxu0 0.0
        %1919 = vmatprep.subr.mxu0 0.0
        %1920 = vmatpush1.msra.mxu0 0.0
        %1921 = vmatprep.subr.mxu0 0.0
        %1922 = vmatpush1.msra.mxu0 0.0
        %1923 = vmatprep.subr.mxu0 0.0
        %1924 = vmatpush1.msra.mxu0 0.0
        %1925 = vmatprep.subr.mxu0 0.0
        %1926 = vmatpush1.msra.mxu0 0.0
        %1927 = vmatprep.subr.mxu0 0.0
        %1928 = vmatpush1.msra.mxu0 0.0
        %1929 = vmatprep.subr.mxu0 0.0
        %1930 = vmatpush1.msra.mxu0 0.0
        %1931 = vmatprep.subr.mxu0 0.0
        %1932 = vmatpush1.msra.mxu0 0.0
        %1933 = vmatprep.subr.mxu0 0.0
        %1934 = vmatpush1.msra.mxu0 0.0
        %1935 = vmatprep.subr.mxu0 0.0
        %1936 = vmatpush1.msra.mxu0 0.0
        %1937 = vmatprep.subr.mxu0 0.0
        %1938 = vmatpush1.msra.mxu0 0.0
        %1939 = vmatprep.subr.mxu0 0.0
        %1940 = vmatpush1.msra.mxu0 0.0
        %1941 = vmatprep.subr.mxu0 0.0
        %1942 = vmatpush1.msra.mxu0 0.0
        %1943 = vmatprep.subr.mxu0 0.0
        %1944 = vmatpush1.msra.mxu0 0.0
        %1945 = vmatprep.subr.mxu0 0.0
        %1946 = vmatpush1.msra.mxu0 0.0
        %1947 = vmatprep.subr.mxu0 0.0
        %1948 = vmatpush1.msra.mxu0 0.0
        %1949 = vmatprep.subr.mxu0 0.0
        %1950 = vmatpush1.msra.mxu0 0.0
        %1951 = vmatprep.subr.mxu0 0.0
        %1952 = vmatpush1.msra.mxu0 0.0
        %1953 = vmatprep.subr.mxu0 0.0
        %1954 = vmatpush1.msra.mxu0 0.0
        %1955 = vmatprep.subr.mxu0 0.0
        %1956 = vmatpush1.msra.mxu0 0.0
        %1957 = vmatprep.subr.mxu0 0.0
        %1958 = vmatpush1.msra.mxu0 0.0
        %1959 = vmatprep.subr.mxu0 0.0
        %1960 = vmatpush1.msra.mxu0 0.0
        %1961 = vmatprep.subr.mxu0 0.0
        %1962 = vmatpush1.msra.mxu0 0.0
        %1963 = vmatprep.subr.mxu0 0.0
        %1964 = vmatpush1.msra.mxu0 0.0
        %1965 = vmatprep.mubr.f32.mxu0 0.0
        %1966 = vmatmul.mubr.f32.gmra.mrb[0].mxu0 %v1899
        %v1967 = vpop.f32.mrb[0].mxu0
        %v1968 = vadd.f32 0.0, %v1967
        %v1969 = vpop.f32.mrb[0].mxu0
        %v1970 = vadd.f32 0.0, %v1969
        %1971 = vdwg.mxu0
        %1972 = vmatprep.subr.mxu0 %v1291
        %1973 = vmatpush1.msra.mxu0 %v1289
        %1974 = vmatprep.subr.mxu0 0.0
        %1975 = vmatpush1.msra.mxu0 0.0
        %1976 = vmatprep.subr.mxu0 0.0
        %1977 = vmatpush1.msra.mxu0 0.0
        %1978 = vmatprep.subr.mxu0 0.0
        %1979 = vmatpush1.msra.mxu0 0.0
        %1980 = vmatprep.subr.mxu0 0.0
        %1981 = vmatpush1.msra.mxu0 0.0
        %1982 = vmatprep.subr.mxu0 0.0
        %1983 = vmatpush1.msra.mxu0 0.0
        %1984 = vmatprep.subr.mxu0 0.0
        %1985 = vmatpush1.msra.mxu0 0.0
        %1986 = vmatprep.subr.mxu0 0.0
        %1987 = vmatpush1.msra.mxu0 0.0
        %1988 = vmatprep.subr.mxu0 0.0
        %1989 = vmatpush1.msra.mxu0 0.0
        %1990 = vmatprep.subr.mxu0 0.0
        %1991 = vmatpush1.msra.mxu0 0.0
        %1992 = vmatprep.subr.mxu0 0.0
        %1993 = vmatpush1.msra.mxu0 0.0
        %1994 = vmatprep.subr.mxu0 0.0
        %1995 = vmatpush1.msra.mxu0 0.0
        %1996 = vmatprep.subr.mxu0 0.0
        %1997 = vmatpush1.msra.mxu0 0.0
        %1998 = vmatprep.subr.mxu0 0.0
        %1999 = vmatpush1.msra.mxu0 0.0
        %2000 = vmatprep.subr.mxu0 0.0
        %2001 = vmatpush1.msra.mxu0 0.0
        %2002 = vmatprep.subr.mxu0 0.0
        %2003 = vmatpush1.msra.mxu0 0.0
        %2004 = vmatprep.subr.mxu0 0.0
        %2005 = vmatpush1.msra.mxu0 0.0
        %2006 = vmatprep.subr.mxu0 0.0
        %2007 = vmatpush1.msra.mxu0 0.0
        %2008 = vmatprep.subr.mxu0 0.0
        %2009 = vmatpush1.msra.mxu0 0.0
        %2010 = vmatprep.subr.mxu0 0.0
        %2011 = vmatpush1.msra.mxu0 0.0
        %2012 = vmatprep.subr.mxu0 0.0
        %2013 = vmatpush1.msra.mxu0 0.0
        %2014 = vmatprep.subr.mxu0 0.0
        %2015 = vmatpush1.msra.mxu0 0.0
        %2016 = vmatprep.subr.mxu0 0.0
        %2017 = vmatpush1.msra.mxu0 0.0
        %2018 = vmatprep.subr.mxu0 0.0
        %2019 = vmatpush1.msra.mxu0 0.0
        %2020 = vmatprep.subr.mxu0 0.0
        %2021 = vmatpush1.msra.mxu0 0.0
        %2022 = vmatprep.subr.mxu0 0.0
        %2023 = vmatpush1.msra.mxu0 0.0
        %2024 = vmatprep.subr.mxu0 0.0
        %2025 = vmatpush1.msra.mxu0 0.0
        %2026 = vmatprep.subr.mxu0 0.0
        %2027 = vmatpush1.msra.mxu0 0.0
        %2028 = vmatprep.subr.mxu0 0.0
        %2029 = vmatpush1.msra.mxu0 0.0
        %2030 = vmatprep.subr.mxu0 0.0
        %2031 = vmatpush1.msra.mxu0 0.0
        %2032 = vmatprep.subr.mxu0 0.0
        %2033 = vmatpush1.msra.mxu0 0.0
        %2034 = vmatprep.subr.mxu0 0.0
        %2035 = vmatpush1.msra.mxu0 0.0
        %2036 = vmatprep.mubr.f32.mxu0 0.0
        %2037 = vmatmul.mubr.f32.gmra.mrb[0].mxu0 %v1899
        %v2038 = vpop.f32.mrb[0].mxu0
        %v2039 = vadd.f32 0.0, %v2038
        %v2040 = vpop.f32.mrb[0].mxu0
        %v2041 = vadd.f32 0.0, %v2040
        %2042 = vdwg.mxu0
        %v2043 = vmul.f32 %v1968, 0.125
        %v2044 = vmul.f32 %v1970, 0.125
        %v2045 = vmul.f32 %v2039, 0.125
        %v2046 = vmul.f32 %v2041, 0.125
        %v2047 = vmul.f32 %v2043, %v2043
        %v2048 = vmul.f32 %v2044, %v2044
        %v2049 = vmul.f32 %v2045, %v2045
        %v2050 = vmul.f32 %v2046, %v2046
        %v2055 = vrot.slane %v2047, 7
        %v2056 = vrot.slane %v2048, 7
        %v2057 = vrot.slane %v2049, 7
        %v2058 = vrot.slane %v2050, 7
        %v2063 = vsub.f32 %v2043, %v2055
        %v2064 = vsub.f32 %v2044, %v2056
        %v2065 = vsub.f32 %v2045, %v2057
        %v2066 = vsub.f32 %v2046, %v2058
        %v2067 = vlaneseq
        %v2068 = vshrl.u32 %v2067, 7
        %v2069 = vsub.s32 0, %v2068
        %v2070 = vrot.slane %v2043, %v2069
        %v2071 = vlaneseq
        %v2072 = vshrl.u32 %v2071, 7
        %v2073 = vsub.s32 0, %v2072
        %v2074 = vrot.slane %v2044, %v2073
        %v2075 = vlaneseq
        %v2076 = vshrl.u32 %v2075, 7
        %v2077 = vsub.s32 0, %v2076
        %v2078 = vrot.slane %v2045, %v2077
        %v2079 = vlaneseq
        %v2080 = vshrl.u32 %v2079, 7
        %v2081 = vsub.s32 0, %v2080
        %v2082 = vrot.slane %v2046, %v2081
        %v2083 = vsub.f32 %v1694, %v2070
        %v2084 = vsub.f32 %v1695, %v2074
        %v2085 = vsub.f32 %v1696, %v2078
        %v2086 = vsub.f32 %v1697, %v2082
        %v2087 = vadd.f32 %v2063, 1e-08
        %v2088 = vadd.f32 %v2064, 1e-08
        %v2089 = vadd.f32 %v2065, 1e-08
        %v2090 = vadd.f32 %v2066, 1e-08
        %v2091 = vrsqrt.pop %v2087
        %v2092 = vrsqrt.pop %v2088
        %v2093 = vrsqrt.pop %v2089
        %v2094 = vrsqrt.pop %v2090
        %v2095 = vlaneseq
        %v2096 = vshrl.u32 %v2095, 7
        %v2097 = vsub.s32 1, %v2096
        %v2098 = vrot.slane %v2091, %v2097
        %v2099 = vlaneseq
        %v2100 = vshrl.u32 %v2099, 7
        %v2101 = vsub.s32 1, %v2100
        %v2102 = vrot.slane %v2092, %v2101
        %v2103 = vlaneseq
        %v2104 = vshrl.u32 %v2103, 7
        %v2105 = vsub.s32 1, %v2104
        %v2106 = vrot.slane %v2093, %v2105
        %v2107 = vlaneseq
        %v2108 = vshrl.u32 %v2107, 7
        %v2109 = vsub.s32 1, %v2108
        %v2110 = vrot.slane %v2094, %v2109
        %v2111 = vmul.f32 %v2083, %v2098
        %v2112 = vmul.f32 %v2084, %v2102
        %v2113 = vmul.f32 %v2085, %v2106
        %v2114 = vmul.f32 %v2086, %v2110
        %2115 = vset.pattern.permute.xlu0 6
        %2116 = vperm.xlu0 %2115, %v431
        %v2117 = vpop.permute.xlu0 %2116
        %v2119 = vmul.f32 %v2111, %v2117
        %v2120 = vmul.f32 %v2112, %v2117
        %v2121 = vmul.f32 %v2113, %v2117
        %v2122 = vmul.f32 %v2114, %v2117
        %2123 = vset.pattern.permute.xlu0 7
        %2124 = vperm.xlu0 %2123, %v431
        %v2125 = vpop.permute.xlu0 %2124
        %v2127 = vadd.f32 %v2119, %v2125
        %v2128 = vadd.f32 %v2120, %v2125
        %v2129 = vadd.f32 %v2121, %v2125
        %v2130 = vadd.f32 %v2122, %v2125
        %v2131 = vld [vmem:[%s6] sm:$0xff]
        %2132 = vrot.lane.b32.xlu0 %v2127, 1
        %v2133 = vpop.permute.xlu0 %2132
        %2134 = vrot.lane.b32.xlu0 %v2128, 1
        %v2135 = vpop.permute.xlu0 %2134
        %2136 = vrot.lane.b32.xlu0 %v2129, 1
        %v2137 = vpop.permute.xlu0 %2136
        %2138 = vrot.lane.b32.xlu0 %v2130, 1
        %v2139 = vpop.permute.xlu0 %2138
        %v2140 = vlaneseq
        %v2141 = vand.u32 %v2140, 127
        %vm2142 = vcmp.lt.s32.totalorder %v2141, 1
        %v2143 = vsel %vm2142, %v2137, %v2139
        %v2144 = vsel %vm2142, %v2135, %v2137
        %v2145 = vsel %vm2142, %v2133, %v2135
        %v2146 = vsel %vm2142, %v2139, %v2133
        %v2147 = vlaneseq
        %v2148 = vshrl.u32 %v2147, 7
        %v2149 = vsub.s32 1, %v2148
        %v2150 = vrot.slane %v1051, %v2149
        %v2151 = vlaneseq
        %v2152 = vshrl.u32 %v2151, 7
        %v2153 = vsub.s32 1, %v2152
        %v2154 = vrot.slane %v1052, %v2153
        %v2155 = vlaneseq
        %v2156 = vshrl.u32 %v2155, 7
        %v2157 = vsub.s32 1, %v2156
        %v2158 = vrot.slane %v1053, %v2157
        %v2159 = vlaneseq
        %v2160 = vshrl.u32 %v2159, 7
        %v2161 = vsub.s32 1, %v2160
        %v2162 = vrot.slane %v1054, %v2161
        %vm2163 = vcmp.eq.s32.totalorder %v2150, 1
        %vm2164 = vcmp.eq.s32.totalorder %v2154, 1
        %vm2165 = vcmp.eq.s32.totalorder %v2158, 1
        %vm2166 = vcmp.eq.s32.totalorder %v2162, 1
        %v2167 = vsel %vm2163, %v2146, 0.0
        %v2168 = vsel %vm2164, %v2145, 0.0
        %v2169 = vsel %vm2165, %v2144, 0.0
        %v2170 = vsel %vm2166, %v2143, 0.0
        %2172 = vset.pattern.permute.xlu0 0
        %2173 = vperm.xlu0 %2172, %v2131
        %v2174 = vpop.permute.xlu0 %2173
        %v2176 = vmul.f32 %v2174, %v2167
        %v2177 = vmul.f32 %v2174, %v2168
        %v2178 = vmul.f32 %v2174, %v2169
        %v2179 = vmul.f32 %v2174, %v2170
        %2180 = vset.pattern.permute.xlu0 1
        %2181 = vperm.xlu0 %2180, %v2131
        %v2182 = vpop.permute.xlu0 %2181
        %v2184 = vmul.f32 %v2182, %v2127
        %v2185 = vmul.f32 %v2182, %v2128
        %v2186 = vmul.f32 %v2182, %v2129
        %v2187 = vmul.f32 %v2182, %v2130
        %v2188 = vadd.f32 %v2176, %v2184
        %v2189 = vadd.f32 %v2177, %v2185
        %v2190 = vadd.f32 %v2178, %v2186
        %v2191 = vadd.f32 %v2179, %v2187
        %2192 = vrot.lane.b32.xlu0 %v2127, 127
        %v2193 = vpop.permute.xlu0 %2192
        %2194 = vrot.lane.b32.xlu0 %v2128, 127
        %v2195 = vpop.permute.xlu0 %2194
        %2196 = vrot.lane.b32.xlu0 %v2129, 127
        %v2197 = vpop.permute.xlu0 %2196
        %2198 = vrot.lane.b32.xlu0 %v2130, 127
        %v2199 = vpop.permute.xlu0 %2198
        %vm2200 = vcmp.lt.s32.totalorder %v2141, 127
        %v2201 = vsel %vm2200, %v2197, %v2199
        %v2202 = vsel %vm2200, %v2195, %v2197
        %v2203 = vsel %vm2200, %v2193, %v2195
        %v2204 = vsel %vm2200, %v2199, %v2193
        %v2205 = vlaneseq
        %v2206 = vshrl.u32 %v2205, 7
        %v2207 = vsub.s32 2, %v2206
        %v2208 = vrot.slane %v1051, %v2207
        %v2209 = vlaneseq
        %v2210 = vshrl.u32 %v2209, 7
        %v2211 = vsub.s32 2, %v2210
        %v2212 = vrot.slane %v1052, %v2211
        %v2213 = vlaneseq
        %v2214 = vshrl.u32 %v2213, 7
        %v2215 = vsub.s32 2, %v2214
        %v2216 = vrot.slane %v1053, %v2215
        %v2217 = vlaneseq
        %v2218 = vshrl.u32 %v2217, 7
        %v2219 = vsub.s32 2, %v2218
        %v2220 = vrot.slane %v1054, %v2219
        %vm2221 = vcmp.eq.s32.totalorder %v2208, 1
        %vm2222 = vcmp.eq.s32.totalorder %v2212, 1
        %vm2223 = vcmp.eq.s32.totalorder %v2216, 1
        %vm2224 = vcmp.eq.s32.totalorder %v2220, 1
        %v2225 = vsel %vm2221, %v2203, 0.0
        %v2226 = vsel %vm2222, %v2202, 0.0
        %v2227 = vsel %vm2223, %v2201, 0.0
        %v2228 = vsel %vm2224, %v2204, 0.0
        %2229 = vset.pattern.permute.xlu0 2
        %2230 = vperm.xlu0 %2229, %v2131
        %v2231 = vpop.permute.xlu0 %2230
        %v2233 = vmul.f32 %v2231, %v2225
        %v2234 = vmul.f32 %v2231, %v2226
        %v2235 = vmul.f32 %v2231, %v2227
        %v2236 = vmul.f32 %v2231, %v2228
        %v2237 = vadd.f32 %v2188, %v2233
        %v2238 = vadd.f32 %v2189, %v2234
        %v2239 = vadd.f32 %v2190, %v2235
        %v2240 = vadd.f32 %v2191, %v2236
        %2241 = vset.pattern.permute.xlu0 8
        %2242 = vperm.xlu0 %2241, %v431
        %v2243 = vpop.permute.xlu0 %2242
        %v2245 = vadd.f32 %v2237, %v2243
        %v2246 = vadd.f32 %v2238, %v2243
        %v2247 = vadd.f32 %v2239, %v2243
        %v2248 = vadd.f32 %v2240, %v2243
        %vm2249 = vcmp.ge.f32.partialorder %v2245, 0.0
        %vm2250 = vcmp.ge.f32.partialorder %v2246, 0.0
        %vm2251 = vcmp.ge.f32.partialorder %v2247, 0.0
        %vm2252 = vcmp.ge.f32.partialorder %v2248, 0.0
        %v2253 = vstv %s516
        %v2254 = vmul.f32 %v2253, %v2245
        %v2255 = vmul.f32 %v2253, %v2246
        %v2256 = vmul.f32 %v2253, %v2247
        %v2257 = vmul.f32 %v2253, %v2248
        %v2258 = vsel %vm2249, %v2245, %v2254
        %v2259 = vsel %vm2250, %v2246, %v2255
        %v2260 = vsel %vm2251, %v2247, %v2256
        %v2261 = vsel %vm2252, %v2248, %v2257
        %v2262 = vsel %vm1071, %v2258, 0.0
        %v2263 = vsel %vm1072, %v2259, 0.0
        %v2264 = vsel %vm1073, %v2260, 0.0
        %v2265 = vsel %vm1074, %v2261, 0.0
        %v2266 = vrot.slane %v2262, 4
        %v2267 = vadd.f32 %v2262, %v2266
        %v2268 = vrot.slane %v2267, 2
        %v2269 = vadd.f32 %v2267, %v2268
        %v2270 = vrot.slane %v2269, 1
        %v2271 = vadd.f32 %v2269, %v2270
        %v2272 = vrot.slane %v2263, 4
        %v2273 = vadd.f32 %v2263, %v2272
        %v2274 = vrot.slane %v2273, 2
        %v2275 = vadd.f32 %v2273, %v2274
        %v2276 = vrot.slane %v2275, 1
        %v2277 = vadd.f32 %v2275, %v2276
        %v2278 = vrot.slane %v2264, 4
        %v2279 = vadd.f32 %v2264, %v2278
        %v2280 = vrot.slane %v2279, 2
        %v2281 = vadd.f32 %v2279, %v2280
        %v2282 = vrot.slane %v2281, 1
        %v2283 = vadd.f32 %v2281, %v2282
        %v2284 = vrot.slane %v2265, 4
        %v2285 = vadd.f32 %v2265, %v2284
        %v2286 = vrot.slane %v2285, 2
        %v2287 = vadd.f32 %v2285, %v2286
        %v2288 = vrot.slane %v2287, 1
        %v2289 = vadd.f32 %v2287, %v2288
        %v2290 = vmul.f32 %v2262, %v2262
        %v2291 = vmul.f32 %v2263, %v2263
        %v2292 = vmul.f32 %v2264, %v2264
        %v2293 = vmul.f32 %v2265, %v2265
        %v2294 = vrot.slane %v2290, 4
        %v2295 = vadd.f32 %v2290, %v2294
        %v2296 = vrot.slane %v2295, 2
        %v2297 = vadd.f32 %v2295, %v2296
        %v2298 = vrot.slane %v2297, 1
        %v2299 = vadd.f32 %v2297, %v2298
        %v2300 = vrot.slane %v2291, 4
        %v2301 = vadd.f32 %v2291, %v2300
        %v2302 = vrot.slane %v2301, 2
        %v2303 = vadd.f32 %v2301, %v2302
        %v2304 = vrot.slane %v2303, 1
        %v2305 = vadd.f32 %v2303, %v2304
        %v2306 = vrot.slane %v2292, 4
        %v2307 = vadd.f32 %v2292, %v2306
        %v2308 = vrot.slane %v2307, 2
        %v2309 = vadd.f32 %v2307, %v2308
        %v2310 = vrot.slane %v2309, 1
        %v2311 = vadd.f32 %v2309, %v2310
        %v2312 = vrot.slane %v2293, 4
        %v2313 = vadd.f32 %v2293, %v2312
        %v2314 = vrot.slane %v2313, 2
        %v2315 = vadd.f32 %v2313, %v2314
        %v2316 = vrot.slane %v2315, 1
        %v2317 = vadd.f32 %v2315, %v2316
        %v2318 = vsel %vm1131, %v2271, %v2299
        %v2319 = vsel %vm1131, %v2277, %v2305
        %v2320 = vsel %vm1131, %v2283, %v2311
        %v2321 = vsel %vm1131, %v2289, %v2317
        %2322 = vmatprep.subr.mxu0 0.0
        %2323 = vmatpush1.msra.mxu0 %v434
        %2324 = vmatprep.subr.mxu0 0.0
        %2325 = vmatpush1.msra.mxu0 %v435
        %2326 = vmatprep.subr.mxu0 0.0
        %2327 = vmatpush1.msra.mxu0 %v436
        %2328 = vmatprep.subr.mxu0 0.0
        %2329 = vmatpush1.msra.mxu0 %v437
        %2330 = vmatprep.subr.mxu0 0.0
        %2331 = vmatpush1.msra.mxu0 %v438
        %2332 = vmatprep.subr.mxu0 0.0
        %2333 = vmatpush1.msra.mxu0 %v439
        %2334 = vmatprep.subr.mxu0 0.0
        %2335 = vmatpush1.msra.mxu0 %v440
        %2336 = vmatprep.subr.mxu0 0.0
        %2337 = vmatpush1.msra.mxu0 %v441
        %2338 = vmatprep.subr.mxu0 0.0
        %2339 = vmatpush1.msra.mxu0 %v442
        %2340 = vmatprep.subr.mxu0 0.0
        %2341 = vmatpush1.msra.mxu0 %v443
        %2342 = vmatprep.subr.mxu0 0.0
        %2343 = vmatpush1.msra.mxu0 %v444
        %2344 = vmatprep.subr.mxu0 0.0
        %2345 = vmatpush1.msra.mxu0 %v445
        %2346 = vmatprep.subr.mxu0 0.0
        %2347 = vmatpush1.msra.mxu0 %v446
        %2348 = vmatprep.subr.mxu0 0.0
        %2349 = vmatpush1.msra.mxu0 %v447
        %2350 = vmatprep.subr.mxu0 0.0
        %2351 = vmatpush1.msra.mxu0 %v448
        %2352 = vmatprep.subr.mxu0 0.0
        %2353 = vmatpush1.msra.mxu0 %v449
        %2354 = vmatprep.subr.mxu0 0.0
        %2355 = vmatpush1.msra.mxu0 %v450
        %2356 = vmatprep.subr.mxu0 0.0
        %2357 = vmatpush1.msra.mxu0 %v451
        %2358 = vmatprep.subr.mxu0 0.0
        %2359 = vmatpush1.msra.mxu0 %v452
        %2360 = vmatprep.subr.mxu0 0.0
        %2361 = vmatpush1.msra.mxu0 %v453
        %2362 = vmatprep.subr.mxu0 0.0
        %2363 = vmatpush1.msra.mxu0 %v454
        %2364 = vmatprep.subr.mxu0 0.0
        %2365 = vmatpush1.msra.mxu0 %v455
        %2366 = vmatprep.subr.mxu0 0.0
        %2367 = vmatpush1.msra.mxu0 %v456
        %2368 = vmatprep.subr.mxu0 0.0
        %2369 = vmatpush1.msra.mxu0 %v457
        %2370 = vmatprep.subr.mxu0 0.0
        %2371 = vmatpush1.msra.mxu0 %v458
        %2372 = vmatprep.subr.mxu0 0.0
        %2373 = vmatpush1.msra.mxu0 %v459
        %2374 = vmatprep.subr.mxu0 0.0
        %2375 = vmatpush1.msra.mxu0 %v460
        %2376 = vmatprep.subr.mxu0 0.0
        %2377 = vmatpush1.msra.mxu0 %v461
        %2378 = vmatprep.subr.mxu0 0.0
        %2379 = vmatpush1.msra.mxu0 %v462
        %2380 = vmatprep.subr.mxu0 0.0
        %2381 = vmatpush1.msra.mxu0 %v463
        %2382 = vmatprep.subr.mxu0 0.0
        %2383 = vmatpush1.msra.mxu0 %v464
        %2384 = vmatprep.subr.mxu0 0.0
        %2385 = vmatpush1.msra.mxu0 %v465
        %2386 = vmatprep.mubr.f32.mxu0 %v2319
        %2387 = vmatmul.mubr.f32.gmra.mrb[0].mxu0 %v2318
        %v2388 = vpop.f32.mrb[0].mxu0
        %v2389 = vadd.f32 0.0, %v2388
        %v2390 = vpop.f32.mrb[0].mxu0
        %2391 = vdwg.mxu0
        %2392 = vmatprep.subr.mxu0 0.0
        %2393 = vmatpush1.msra.mxu0 %v466
        %2394 = vmatprep.subr.mxu0 0.0
        %2395 = vmatpush1.msra.mxu0 %v467
        %2396 = vmatprep.subr.mxu0 0.0
        %2397 = vmatpush1.msra.mxu0 %v468
        %2398 = vmatprep.subr.mxu0 0.0
        %2399 = vmatpush1.msra.mxu0 %v469
        %2400 = vmatprep.subr.mxu0 0.0
        %2401 = vmatpush1.msra.mxu0 %v470
        %2402 = vmatprep.subr.mxu0 0.0
        %2403 = vmatpush1.msra.mxu0 %v471
        %2404 = vmatprep.subr.mxu0 0.0
        %2405 = vmatpush1.msra.mxu0 %v472
        %2406 = vmatprep.subr.mxu0 0.0
        %2407 = vmatpush1.msra.mxu0 %v473
        %2408 = vmatprep.subr.mxu0 0.0
        %2409 = vmatpush1.msra.mxu0 %v474
        %2410 = vmatprep.subr.mxu0 0.0
        %2411 = vmatpush1.msra.mxu0 %v475
        %2412 = vmatprep.subr.mxu0 0.0
        %2413 = vmatpush1.msra.mxu0 %v476
        %2414 = vmatprep.subr.mxu0 0.0
        %2415 = vmatpush1.msra.mxu0 %v477
        %2416 = vmatprep.subr.mxu0 0.0
        %2417 = vmatpush1.msra.mxu0 %v478
        %2418 = vmatprep.subr.mxu0 0.0
        %2419 = vmatpush1.msra.mxu0 %v479
        %2420 = vmatprep.subr.mxu0 0.0
        %2421 = vmatpush1.msra.mxu0 %v480
        %2422 = vmatprep.subr.mxu0 0.0
        %2423 = vmatpush1.msra.mxu0 %v481
        %2424 = vmatprep.subr.mxu0 0.0
        %2425 = vmatpush1.msra.mxu0 %v482
        %2426 = vmatprep.subr.mxu0 0.0
        %2427 = vmatpush1.msra.mxu0 %v483
        %2428 = vmatprep.subr.mxu0 0.0
        %2429 = vmatpush1.msra.mxu0 %v484
        %2430 = vmatprep.subr.mxu0 0.0
        %2431 = vmatpush1.msra.mxu0 %v485
        %2432 = vmatprep.subr.mxu0 0.0
        %2433 = vmatpush1.msra.mxu0 %v486
        %2434 = vmatprep.subr.mxu0 0.0
        %2435 = vmatpush1.msra.mxu0 %v487
        %2436 = vmatprep.subr.mxu0 0.0
        %2437 = vmatpush1.msra.mxu0 %v488
        %2438 = vmatprep.subr.mxu0 0.0
        %2439 = vmatpush1.msra.mxu0 %v489
        %2440 = vmatprep.subr.mxu0 0.0
        %2441 = vmatpush1.msra.mxu0 %v490
        %2442 = vmatprep.subr.mxu0 0.0
        %2443 = vmatpush1.msra.mxu0 %v491
        %2444 = vmatprep.subr.mxu0 0.0
        %2445 = vmatpush1.msra.mxu0 %v492
        %2446 = vmatprep.subr.mxu0 0.0
        %2447 = vmatpush1.msra.mxu0 %v493
        %2448 = vmatprep.subr.mxu0 0.0
        %2449 = vmatpush1.msra.mxu0 %v494
        %2450 = vmatprep.subr.mxu0 0.0
        %2451 = vmatpush1.msra.mxu0 %v495
        %2452 = vmatprep.subr.mxu0 0.0
        %2453 = vmatpush1.msra.mxu0 %v496
        %2454 = vmatprep.subr.mxu0 0.0
        %2455 = vmatpush1.msra.mxu0 %v497
        %2456 = vmatprep.mubr.f32.mxu0 %v2321
        %2457 = vmatmul.mubr.f32.gmra.mrb[0].mxu0 %v2320
        %v2458 = vpop.f32.mrb[0].mxu0
        %v2459 = vadd.f32 %v2389, %v2458
        %v2460 = vpop.f32.mrb[0].mxu0
        %2461 = vdwg.mxu0
        %v2463 = vsel %vm1280, %v2459, 0
        %2465 = vmatprep.subr.mxu0 %v1287
        %2466 = vmatpush1.msra.mxu0 %v1285
        %2467 = vmatprep.subr.mxu0 0.0
        %2468 = vmatpush1.msra.mxu0 0.0
        %2469 = vmatprep.subr.mxu0 0.0
        %2470 = vmatpush1.msra.mxu0 0.0
        %2471 = vmatprep.subr.mxu0 0.0
        %2472 = vmatpush1.msra.mxu0 0.0
        %2473 = vmatprep.subr.mxu0 0.0
        %2474 = vmatpush1.msra.mxu0 0.0
        %2475 = vmatprep.subr.mxu0 0.0
        %2476 = vmatpush1.msra.mxu0 0.0
        %2477 = vmatprep.subr.mxu0 0.0
        %2478 = vmatpush1.msra.mxu0 0.0
        %2479 = vmatprep.subr.mxu0 0.0
        %2480 = vmatpush1.msra.mxu0 0.0
        %2481 = vmatprep.subr.mxu0 0.0
        %2482 = vmatpush1.msra.mxu0 0.0
        %2483 = vmatprep.subr.mxu0 0.0
        %2484 = vmatpush1.msra.mxu0 0.0
        %2485 = vmatprep.subr.mxu0 0.0
        %2486 = vmatpush1.msra.mxu0 0.0
        %2487 = vmatprep.subr.mxu0 0.0
        %2488 = vmatpush1.msra.mxu0 0.0
        %2489 = vmatprep.subr.mxu0 0.0
        %2490 = vmatpush1.msra.mxu0 0.0
        %2491 = vmatprep.subr.mxu0 0.0
        %2492 = vmatpush1.msra.mxu0 0.0
        %2493 = vmatprep.subr.mxu0 0.0
        %2494 = vmatpush1.msra.mxu0 0.0
        %2495 = vmatprep.subr.mxu0 0.0
        %2496 = vmatpush1.msra.mxu0 0.0
        %2497 = vmatprep.subr.mxu0 0.0
        %2498 = vmatpush1.msra.mxu0 0.0
        %2499 = vmatprep.subr.mxu0 0.0
        %2500 = vmatpush1.msra.mxu0 0.0
        %2501 = vmatprep.subr.mxu0 0.0
        %2502 = vmatpush1.msra.mxu0 0.0
        %2503 = vmatprep.subr.mxu0 0.0
        %2504 = vmatpush1.msra.mxu0 0.0
        %2505 = vmatprep.subr.mxu0 0.0
        %2506 = vmatpush1.msra.mxu0 0.0
        %2507 = vmatprep.subr.mxu0 0.0
        %2508 = vmatpush1.msra.mxu0 0.0
        %2509 = vmatprep.subr.mxu0 0.0
        %2510 = vmatpush1.msra.mxu0 0.0
        %2511 = vmatprep.subr.mxu0 0.0
        %2512 = vmatpush1.msra.mxu0 0.0
        %2513 = vmatprep.subr.mxu0 0.0
        %2514 = vmatpush1.msra.mxu0 0.0
        %2515 = vmatprep.subr.mxu0 0.0
        %2516 = vmatpush1.msra.mxu0 0.0
        %2517 = vmatprep.subr.mxu0 0.0
        %2518 = vmatpush1.msra.mxu0 0.0
        %2519 = vmatprep.subr.mxu0 0.0
        %2520 = vmatpush1.msra.mxu0 0.0
        %2521 = vmatprep.subr.mxu0 0.0
        %2522 = vmatpush1.msra.mxu0 0.0
        %2523 = vmatprep.subr.mxu0 0.0
        %2524 = vmatpush1.msra.mxu0 0.0
        %2525 = vmatprep.subr.mxu0 0.0
        %2526 = vmatpush1.msra.mxu0 0.0
        %2527 = vmatprep.subr.mxu0 0.0
        %2528 = vmatpush1.msra.mxu0 0.0
        %2529 = vmatprep.mubr.f32.mxu0 0.0
        %2530 = vmatmul.mubr.f32.gmra.mrb[0].mxu0 %v2463
        %v2531 = vpop.f32.mrb[0].mxu0
        %v2532 = vadd.f32 0.0, %v2531
        %v2533 = vpop.f32.mrb[0].mxu0
        %v2534 = vadd.f32 0.0, %v2533
        %2535 = vdwg.mxu0
        %2536 = vmatprep.subr.mxu0 %v1291
        %2537 = vmatpush1.msra.mxu0 %v1289
        %2538 = vmatprep.subr.mxu0 0.0
        %2539 = vmatpush1.msra.mxu0 0.0
        %2540 = vmatprep.subr.mxu0 0.0
        %2541 = vmatpush1.msra.mxu0 0.0
        %2542 = vmatprep.subr.mxu0 0.0
        %2543 = vmatpush1.msra.mxu0 0.0
        %2544 = vmatprep.subr.mxu0 0.0
        %2545 = vmatpush1.msra.mxu0 0.0
        %2546 = vmatprep.subr.mxu0 0.0
        %2547 = vmatpush1.msra.mxu0 0.0
        %2548 = vmatprep.subr.mxu0 0.0
        %2549 = vmatpush1.msra.mxu0 0.0
        %2550 = vmatprep.subr.mxu0 0.0
        %2551 = vmatpush1.msra.mxu0 0.0
        %2552 = vmatprep.subr.mxu0 0.0
        %2553 = vmatpush1.msra.mxu0 0.0
        %2554 = vmatprep.subr.mxu0 0.0
        %2555 = vmatpush1.msra.mxu0 0.0
        %2556 = vmatprep.subr.mxu0 0.0
        %2557 = vmatpush1.msra.mxu0 0.0
        %2558 = vmatprep.subr.mxu0 0.0
        %2559 = vmatpush1.msra.mxu0 0.0
        %2560 = vmatprep.subr.mxu0 0.0
        %2561 = vmatpush1.msra.mxu0 0.0
        %2562 = vmatprep.subr.mxu0 0.0
        %2563 = vmatpush1.msra.mxu0 0.0
        %2564 = vmatprep.subr.mxu0 0.0
        %2565 = vmatpush1.msra.mxu0 0.0
        %2566 = vmatprep.subr.mxu0 0.0
        %2567 = vmatpush1.msra.mxu0 0.0
        %2568 = vmatprep.subr.mxu0 0.0
        %2569 = vmatpush1.msra.mxu0 0.0
        %2570 = vmatprep.subr.mxu0 0.0
        %2571 = vmatpush1.msra.mxu0 0.0
        %2572 = vmatprep.subr.mxu0 0.0
        %2573 = vmatpush1.msra.mxu0 0.0
        %2574 = vmatprep.subr.mxu0 0.0
        %2575 = vmatpush1.msra.mxu0 0.0
        %2576 = vmatprep.subr.mxu0 0.0
        %2577 = vmatpush1.msra.mxu0 0.0
        %2578 = vmatprep.subr.mxu0 0.0
        %2579 = vmatpush1.msra.mxu0 0.0
        %2580 = vmatprep.subr.mxu0 0.0
        %2581 = vmatpush1.msra.mxu0 0.0
        %2582 = vmatprep.subr.mxu0 0.0
        %2583 = vmatpush1.msra.mxu0 0.0
        %2584 = vmatprep.subr.mxu0 0.0
        %2585 = vmatpush1.msra.mxu0 0.0
        %2586 = vmatprep.subr.mxu0 0.0
        %2587 = vmatpush1.msra.mxu0 0.0
        %2588 = vmatprep.subr.mxu0 0.0
        %2589 = vmatpush1.msra.mxu0 0.0
        %2590 = vmatprep.subr.mxu0 0.0
        %2591 = vmatpush1.msra.mxu0 0.0
        %2592 = vmatprep.subr.mxu0 0.0
        %2593 = vmatpush1.msra.mxu0 0.0
        %2594 = vmatprep.subr.mxu0 0.0
        %2595 = vmatpush1.msra.mxu0 0.0
        %2596 = vmatprep.subr.mxu0 0.0
        %2597 = vmatpush1.msra.mxu0 0.0
        %2598 = vmatprep.subr.mxu0 0.0
        %2599 = vmatpush1.msra.mxu0 0.0
        %2600 = vmatprep.mubr.f32.mxu0 0.0
        %2601 = vmatmul.mubr.f32.gmra.mrb[0].mxu0 %v2463
        %v2602 = vpop.f32.mrb[0].mxu0
        %v2603 = vadd.f32 0.0, %v2602
        %v2604 = vpop.f32.mrb[0].mxu0
        %v2605 = vadd.f32 0.0, %v2604
        %2606 = vdwg.mxu0
        %v2607 = vmul.f32 %v2532, 0.125
        %v2608 = vmul.f32 %v2534, 0.125
        %v2609 = vmul.f32 %v2603, 0.125
        %v2610 = vmul.f32 %v2605, 0.125
        %v2611 = vmul.f32 %v2607, %v2607
        %v2612 = vmul.f32 %v2608, %v2608
        %v2613 = vmul.f32 %v2609, %v2609
        %v2614 = vmul.f32 %v2610, %v2610
        %v2619 = vrot.slane %v2611, 7
        %v2620 = vrot.slane %v2612, 7
        %v2621 = vrot.slane %v2613, 7
        %v2622 = vrot.slane %v2614, 7
        %v2627 = vsub.f32 %v2607, %v2619
        %v2628 = vsub.f32 %v2608, %v2620
        %v2629 = vsub.f32 %v2609, %v2621
        %v2630 = vsub.f32 %v2610, %v2622
        %v2631 = vlaneseq
        %v2632 = vshrl.u32 %v2631, 7
        %v2633 = vsub.s32 0, %v2632
        %v2634 = vrot.slane %v2607, %v2633
        %v2635 = vlaneseq
        %v2636 = vshrl.u32 %v2635, 7
        %v2637 = vsub.s32 0, %v2636
        %v2638 = vrot.slane %v2608, %v2637
        %v2639 = vlaneseq
        %v2640 = vshrl.u32 %v2639, 7
        %v2641 = vsub.s32 0, %v2640
        %v2642 = vrot.slane %v2609, %v2641
        %v2643 = vlaneseq
        %v2644 = vshrl.u32 %v2643, 7
        %v2645 = vsub.s32 0, %v2644
        %v2646 = vrot.slane %v2610, %v2645
        %v2647 = vsub.f32 %v2258, %v2634
        %v2648 = vsub.f32 %v2259, %v2638
        %v2649 = vsub.f32 %v2260, %v2642
        %v2650 = vsub.f32 %v2261, %v2646
        %v2651 = vadd.f32 %v2627, 1e-08
        %v2652 = vadd.f32 %v2628, 1e-08
        %v2653 = vadd.f32 %v2629, 1e-08
        %v2654 = vadd.f32 %v2630, 1e-08
        %v2655 = vrsqrt.pop %v2651
        %v2656 = vrsqrt.pop %v2652
        %v2657 = vrsqrt.pop %v2653
        %v2658 = vrsqrt.pop %v2654
        %v2659 = vlaneseq
        %v2660 = vshrl.u32 %v2659, 7
        %v2661 = vsub.s32 1, %v2660
        %v2662 = vrot.slane %v2655, %v2661
        %v2663 = vlaneseq
        %v2664 = vshrl.u32 %v2663, 7
        %v2665 = vsub.s32 1, %v2664
        %v2666 = vrot.slane %v2656, %v2665
        %v2667 = vlaneseq
        %v2668 = vshrl.u32 %v2667, 7
        %v2669 = vsub.s32 1, %v2668
        %v2670 = vrot.slane %v2657, %v2669
        %v2671 = vlaneseq
        %v2672 = vshrl.u32 %v2671, 7
        %v2673 = vsub.s32 1, %v2672
        %v2674 = vrot.slane %v2658, %v2673
        %v2675 = vmul.f32 %v2647, %v2662
        %v2676 = vmul.f32 %v2648, %v2666
        %v2677 = vmul.f32 %v2649, %v2670
        %v2678 = vmul.f32 %v2650, %v2674
        %2679 = vset.pattern.permute.xlu0 9
        %2680 = vperm.xlu0 %2679, %v431
        %v2681 = vpop.permute.xlu0 %2680
        %v2683 = vmul.f32 %v2675, %v2681
        %v2684 = vmul.f32 %v2676, %v2681
        %v2685 = vmul.f32 %v2677, %v2681
        %v2686 = vmul.f32 %v2678, %v2681
        %2687 = vset.pattern.permute.xlu0 10
        %2688 = vperm.xlu0 %2687, %v431
        %v2689 = vpop.permute.xlu0 %2688
        %v2691 = vadd.f32 %v2683, %v2689
        %v2692 = vadd.f32 %v2684, %v2689
        %v2693 = vadd.f32 %v2685, %v2689
        %v2694 = vadd.f32 %v2686, %v2689
        %v2695 = vld [vmem:[%s5] sm:$0xff]
        %2696 = vset.pattern.permute.xlu0 11
        %2697 = vperm.xlu0 %2696, %v431
        %v2698 = vpop.permute.xlu0 %2697
        %v2701 = vsel %vm535, %v2695, 0
        %2703 = vmatprep.subr.mxu0 %v2692
        %2704 = vmatpush1.msra.mxu0 %v2691
        %2705 = vmatprep.subr.mxu0 0.0
        %2706 = vmatpush1.msra.mxu0 0.0
        %2707 = vmatprep.subr.mxu0 0.0
        %2708 = vmatpush1.msra.mxu0 0.0
        %2709 = vmatprep.subr.mxu0 0.0
        %2710 = vmatpush1.msra.mxu0 0.0
        %2711 = vmatprep.subr.mxu0 0.0
        %2712 = vmatpush1.msra.mxu0 0.0
        %2713 = vmatprep.subr.mxu0 0.0
        %2714 = vmatpush1.msra.mxu0 0.0
        %2715 = vmatprep.subr.mxu0 0.0
        %2716 = vmatpush1.msra.mxu0 0.0
        %2717 = vmatprep.subr.mxu0 0.0
        %2718 = vmatpush1.msra.mxu0 0.0
        %2719 = vmatprep.subr.mxu0 0.0
        %2720 = vmatpush1.msra.mxu0 0.0
        %2721 = vmatprep.subr.mxu0 0.0
        %2722 = vmatpush1.msra.mxu0 0.0
        %2723 = vmatprep.subr.mxu0 0.0
        %2724 = vmatpush1.msra.mxu0 0.0
        %2725 = vmatprep.subr.mxu0 0.0
        %2726 = vmatpush1.msra.mxu0 0.0
        %2727 = vmatprep.subr.mxu0 0.0
        %2728 = vmatpush1.msra.mxu0 0.0
        %2729 = vmatprep.subr.mxu0 0.0
        %2730 = vmatpush1.msra.mxu0 0.0
        %2731 = vmatprep.subr.mxu0 0.0
        %2732 = vmatpush1.msra.mxu0 0.0
        %2733 = vmatprep.subr.mxu0 0.0
        %2734 = vmatpush1.msra.mxu0 0.0
        %2735 = vmatprep.subr.mxu0 0.0
        %2736 = vmatpush1.msra.mxu0 0.0
        %2737 = vmatprep.subr.mxu0 0.0
        %2738 = vmatpush1.msra.mxu0 0.0
        %2739 = vmatprep.subr.mxu0 0.0
        %2740 = vmatpush1.msra.mxu0 0.0
        %2741 = vmatprep.subr.mxu0 0.0
        %2742 = vmatpush1.msra.mxu0 0.0
        %2743 = vmatprep.subr.mxu0 0.0
        %2744 = vmatpush1.msra.mxu0 0.0
        %2745 = vmatprep.subr.mxu0 0.0
        %2746 = vmatpush1.msra.mxu0 0.0
        %2747 = vmatprep.subr.mxu0 0.0
        %2748 = vmatpush1.msra.mxu0 0.0
        %2749 = vmatprep.subr.mxu0 0.0
        %2750 = vmatpush1.msra.mxu0 0.0
        %2751 = vmatprep.subr.mxu0 0.0
        %2752 = vmatpush1.msra.mxu0 0.0
        %2753 = vmatprep.subr.mxu0 0.0
        %2754 = vmatpush1.msra.mxu0 0.0
        %2755 = vmatprep.subr.mxu0 0.0
        %2756 = vmatpush1.msra.mxu0 0.0
        %2757 = vmatprep.subr.mxu0 0.0
        %2758 = vmatpush1.msra.mxu0 0.0
        %2759 = vmatprep.subr.mxu0 0.0
        %2760 = vmatpush1.msra.mxu0 0.0
        %2761 = vmatprep.subr.mxu0 0.0
        %2762 = vmatpush1.msra.mxu0 0.0
        %2763 = vmatprep.subr.mxu0 0.0
        %2764 = vmatpush1.msra.mxu0 0.0
        %2765 = vmatprep.subr.mxu0 0.0
        %2766 = vmatpush1.msra.mxu0 0.0
        %2767 = vmatprep.mubr.f32.mxu0 0.0
        %2768 = vmatmul.mubr.f32.gmra.mrb[0].mxu0 %v2701
        %v2769 = vpop.f32.mrb[0].mxu0
        %v2770 = vadd.f32 %v2698, %v2769
        %v2771 = vpop.f32.mrb[0].mxu0
        %v2772 = vadd.f32 %v2698, %v2771
        %2773 = vdwg.mxu0
        %2774 = vmatprep.subr.mxu0 %v2694
        %2775 = vmatpush1.msra.mxu0 %v2693
        %2776 = vmatprep.subr.mxu0 0.0
        %2777 = vmatpush1.msra.mxu0 0.0
        %2778 = vmatprep.subr.mxu0 0.0
        %2779 = vmatpush1.msra.mxu0 0.0
        %2780 = vmatprep.subr.mxu0 0.0
        %2781 = vmatpush1.msra.mxu0 0.0
        %2782 = vmatprep.subr.mxu0 0.0
        %2783 = vmatpush1.msra.mxu0 0.0
        %2784 = vmatprep.subr.mxu0 0.0
        %2785 = vmatpush1.msra.mxu0 0.0
        %2786 = vmatprep.subr.mxu0 0.0
        %2787 = vmatpush1.msra.mxu0 0.0
        %2788 = vmatprep.subr.mxu0 0.0
        %2789 = vmatpush1.msra.mxu0 0.0
        %2790 = vmatprep.subr.mxu0 0.0
        %2791 = vmatpush1.msra.mxu0 0.0
        %2792 = vmatprep.subr.mxu0 0.0
        %2793 = vmatpush1.msra.mxu0 0.0
        %2794 = vmatprep.subr.mxu0 0.0
        %2795 = vmatpush1.msra.mxu0 0.0
        %2796 = vmatprep.subr.mxu0 0.0
        %2797 = vmatpush1.msra.mxu0 0.0
        %2798 = vmatprep.subr.mxu0 0.0
        %2799 = vmatpush1.msra.mxu0 0.0
        %2800 = vmatprep.subr.mxu0 0.0
        %2801 = vmatpush1.msra.mxu0 0.0
        %2802 = vmatprep.subr.mxu0 0.0
        %2803 = vmatpush1.msra.mxu0 0.0
        %2804 = vmatprep.subr.mxu0 0.0
        %2805 = vmatpush1.msra.mxu0 0.0
        %2806 = vmatprep.subr.mxu0 0.0
        %2807 = vmatpush1.msra.mxu0 0.0
        %2808 = vmatprep.subr.mxu0 0.0
        %2809 = vmatpush1.msra.mxu0 0.0
        %2810 = vmatprep.subr.mxu0 0.0
        %2811 = vmatpush1.msra.mxu0 0.0
        %2812 = vmatprep.subr.mxu0 0.0
        %2813 = vmatpush1.msra.mxu0 0.0
        %2814 = vmatprep.subr.mxu0 0.0
        %2815 = vmatpush1.msra.mxu0 0.0
        %2816 = vmatprep.subr.mxu0 0.0
        %2817 = vmatpush1.msra.mxu0 0.0
        %2818 = vmatprep.subr.mxu0 0.0
        %2819 = vmatpush1.msra.mxu0 0.0
        %2820 = vmatprep.subr.mxu0 0.0
        %2821 = vmatpush1.msra.mxu0 0.0
        %2822 = vmatprep.subr.mxu0 0.0
        %2823 = vmatpush1.msra.mxu0 0.0
        %2824 = vmatprep.subr.mxu0 0.0
        %2825 = vmatpush1.msra.mxu0 0.0
        %2826 = vmatprep.subr.mxu0 0.0
        %2827 = vmatpush1.msra.mxu0 0.0
        %2828 = vmatprep.subr.mxu0 0.0
        %2829 = vmatpush1.msra.mxu0 0.0
        %2830 = vmatprep.subr.mxu0 0.0
        %2831 = vmatpush1.msra.mxu0 0.0
        %2832 = vmatprep.subr.mxu0 0.0
        %2833 = vmatpush1.msra.mxu0 0.0
        %2834 = vmatprep.subr.mxu0 0.0
        %2835 = vmatpush1.msra.mxu0 0.0
        %2836 = vmatprep.subr.mxu0 0.0
        %2837 = vmatpush1.msra.mxu0 0.0
        %2838 = vmatprep.mubr.f32.mxu0 0.0
        %2839 = vmatmul.mubr.f32.gmra.mrb[0].mxu0 %v2701
        %v2840 = vpop.f32.mrb[0].mxu0
        %v2841 = vadd.f32 %v2698, %v2840
        %v2842 = vpop.f32.mrb[0].mxu0
        %v2843 = vadd.f32 %v2698, %v2842
        %2844 = vdwg.mxu0
        %v2845 = vadd.f32 %v1532, %v2770
        %v2846 = vadd.f32 %v1533, %v2772
        %v2847 = vadd.f32 %v1534, %v2841
        %v2848 = vadd.f32 %v1535, %v2843
        %s2849 = sld [smem:[#allocation3 + $0x5]]
        %s2850 = sld [smem:[#allocation3 + $0x6]]
        %s2851 = sld [smem:[#allocation3 + $0x7]]
        %s2852 = sld [smem:[#allocation3 + $0x8]]
        %s2853 = sld [smem:[#allocation3 + $0x9]]
        %s2854 = scalar_lea.vmem %s1, 24
        %v2855 = vld [vmem:[%s2854] sm:$0xff]
        %v2856 = vld [vmem:[%s2854 + $0x8] sm:$0xff]
        %v2857 = vld [vmem:[%s2854 + $0x10] sm:$0xff]
        %2858 = vset.pattern.permute.xlu0 12
        %2859 = vperm.xlu0 %2858, %v431
        %v2860 = vpop.permute.xlu0 %2859
        %2862 = vset.pattern.permute.xlu0 12
        %2863 = vperm.xlu0 %2862, %v432
        %v2864 = vpop.permute.xlu0 %2863
        %2866 = vset.pattern.permute.xlu0 12
        %2867 = vperm.xlu0 %2866, %v433
        %v2868 = vpop.permute.xlu0 %2867
        %v2871 = vsel %vm535, %v2855, 0
        %v2874 = vsel %vm535, %v2856, 0
        %v2877 = vsel %vm535, %v2857, 0
        %2879 = vmatprep.subr.mxu0 %v2846
        %2880 = vmatpush1.msra.mxu0 %v2845
        %2881 = vmatprep.subr.mxu0 0.0
        %2882 = vmatpush1.msra.mxu0 0.0
        %2883 = vmatprep.subr.mxu0 0.0
        %2884 = vmatpush1.msra.mxu0 0.0
        %2885 = vmatprep.subr.mxu0 0.0
        %2886 = vmatpush1.msra.mxu0 0.0
        %2887 = vmatprep.subr.mxu0 0.0
        %2888 = vmatpush1.msra.mxu0 0.0
        %2889 = vmatprep.subr.mxu0 0.0
        %2890 = vmatpush1.msra.mxu0 0.0
        %2891 = vmatprep.subr.mxu0 0.0
        %2892 = vmatpush1.msra.mxu0 0.0
        %2893 = vmatprep.subr.mxu0 0.0
        %2894 = vmatpush1.msra.mxu0 0.0
        %2895 = vmatprep.subr.mxu0 0.0
        %2896 = vmatpush1.msra.mxu0 0.0
        %2897 = vmatprep.subr.mxu0 0.0
        %2898 = vmatpush1.msra.mxu0 0.0
        %2899 = vmatprep.subr.mxu0 0.0
        %2900 = vmatpush1.msra.mxu0 0.0
        %2901 = vmatprep.subr.mxu0 0.0
        %2902 = vmatpush1.msra.mxu0 0.0
        %2903 = vmatprep.subr.mxu0 0.0
        %2904 = vmatpush1.msra.mxu0 0.0
        %2905 = vmatprep.subr.mxu0 0.0
        %2906 = vmatpush1.msra.mxu0 0.0
        %2907 = vmatprep.subr.mxu0 0.0
        %2908 = vmatpush1.msra.mxu0 0.0
        %2909 = vmatprep.subr.mxu0 0.0
        %2910 = vmatpush1.msra.mxu0 0.0
        %2911 = vmatprep.subr.mxu0 0.0
        %2912 = vmatpush1.msra.mxu0 0.0
        %2913 = vmatprep.subr.mxu0 0.0
        %2914 = vmatpush1.msra.mxu0 0.0
        %2915 = vmatprep.subr.mxu0 0.0
        %2916 = vmatpush1.msra.mxu0 0.0
        %2917 = vmatprep.subr.mxu0 0.0
        %2918 = vmatpush1.msra.mxu0 0.0
        %2919 = vmatprep.subr.mxu0 0.0
        %2920 = vmatpush1.msra.mxu0 0.0
        %2921 = vmatprep.subr.mxu0 0.0
        %2922 = vmatpush1.msra.mxu0 0.0
        %2923 = vmatprep.subr.mxu0 0.0
        %2924 = vmatpush1.msra.mxu0 0.0
        %2925 = vmatprep.subr.mxu0 0.0
        %2926 = vmatpush1.msra.mxu0 0.0
        %2927 = vmatprep.subr.mxu0 0.0
        %2928 = vmatpush1.msra.mxu0 0.0
        %2929 = vmatprep.subr.mxu0 0.0
        %2930 = vmatpush1.msra.mxu0 0.0
        %2931 = vmatprep.subr.mxu0 0.0
        %2932 = vmatpush1.msra.mxu0 0.0
        %2933 = vmatprep.subr.mxu0 0.0
        %2934 = vmatpush1.msra.mxu0 0.0
        %2935 = vmatprep.subr.mxu0 0.0
        %2936 = vmatpush1.msra.mxu0 0.0
        %2937 = vmatprep.subr.mxu0 0.0
        %2938 = vmatpush1.msra.mxu0 0.0
        %2939 = vmatprep.subr.mxu0 0.0
        %2940 = vmatpush1.msra.mxu0 0.0
        %2941 = vmatprep.subr.mxu0 0.0
        %2942 = vmatpush1.msra.mxu0 0.0
        %2943 = vmatprep.mubr.f32.mxu0 0.0
        %2944 = vmatmul.mubr.f32.gmra.mrb[0].mxu0 %v2871
        %v2945 = vpop.f32.mrb[0].mxu0
        %v2946 = vadd.f32 %v2860, %v2945
        %v2947 = vpop.f32.mrb[0].mxu0
        %v2948 = vadd.f32 %v2860, %v2947
        %2949 = vmatprep.mubr.f32.mxu0 0.0
        %2950 = vmatmul.mubr.f32.gmra.mrb[0].mxu0 %v2874
        %v2951 = vpop.f32.mrb[0].mxu0
        %v2952 = vadd.f32 %v2864, %v2951
        %v2953 = vpop.f32.mrb[0].mxu0
        %v2954 = vadd.f32 %v2864, %v2953
        %2955 = vmatprep.mubr.f32.mxu0 0.0
        %2956 = vmatmul.mubr.f32.gmra.mrb[0].mxu0 %v2877
        %v2957 = vpop.f32.mrb[0].mxu0
        %v2958 = vadd.f32 %v2868, %v2957
        %v2959 = vpop.f32.mrb[0].mxu0
        %v2960 = vadd.f32 %v2868, %v2959
        %2961 = vdwg.mxu0
        %2962 = vmatprep.subr.mxu0 %v2848
        %2963 = vmatpush1.msra.mxu0 %v2847
        %2964 = vmatprep.subr.mxu0 0.0
        %2965 = vmatpush1.msra.mxu0 0.0
        %2966 = vmatprep.subr.mxu0 0.0
        %2967 = vmatpush1.msra.mxu0 0.0
        %2968 = vmatprep.subr.mxu0 0.0
        %2969 = vmatpush1.msra.mxu0 0.0
        %2970 = vmatprep.subr.mxu0 0.0
        %2971 = vmatpush1.msra.mxu0 0.0
        %2972 = vmatprep.subr.mxu0 0.0
        %2973 = vmatpush1.msra.mxu0 0.0
        %2974 = vmatprep.subr.mxu0 0.0
        %2975 = vmatpush1.msra.mxu0 0.0
        %2976 = vmatprep.subr.mxu0 0.0
        %2977 = vmatpush1.msra.mxu0 0.0
        %2978 = vmatprep.subr.mxu0 0.0
        %2979 = vmatpush1.msra.mxu0 0.0
        %2980 = vmatprep.subr.mxu0 0.0
        %2981 = vmatpush1.msra.mxu0 0.0
        %2982 = vmatprep.subr.mxu0 0.0
        %2983 = vmatpush1.msra.mxu0 0.0
        %2984 = vmatprep.subr.mxu0 0.0
        %2985 = vmatpush1.msra.mxu0 0.0
        %2986 = vmatprep.subr.mxu0 0.0
        %2987 = vmatpush1.msra.mxu0 0.0
        %2988 = vmatprep.subr.mxu0 0.0
        %2989 = vmatpush1.msra.mxu0 0.0
        %2990 = vmatprep.subr.mxu0 0.0
        %2991 = vmatpush1.msra.mxu0 0.0
        %2992 = vmatprep.subr.mxu0 0.0
        %2993 = vmatpush1.msra.mxu0 0.0
        %2994 = vmatprep.subr.mxu0 0.0
        %2995 = vmatpush1.msra.mxu0 0.0
        %2996 = vmatprep.subr.mxu0 0.0
        %2997 = vmatpush1.msra.mxu0 0.0
        %2998 = vmatprep.subr.mxu0 0.0
        %2999 = vmatpush1.msra.mxu0 0.0
        %3000 = vmatprep.subr.mxu0 0.0
        %3001 = vmatpush1.msra.mxu0 0.0
        %3002 = vmatprep.subr.mxu0 0.0
        %3003 = vmatpush1.msra.mxu0 0.0
        %3004 = vmatprep.subr.mxu0 0.0
        %3005 = vmatpush1.msra.mxu0 0.0
        %3006 = vmatprep.subr.mxu0 0.0
        %3007 = vmatpush1.msra.mxu0 0.0
        %3008 = vmatprep.subr.mxu0 0.0
        %3009 = vmatpush1.msra.mxu0 0.0
        %3010 = vmatprep.subr.mxu0 0.0
        %3011 = vmatpush1.msra.mxu0 0.0
        %3012 = vmatprep.subr.mxu0 0.0
        %3013 = vmatpush1.msra.mxu0 0.0
        %3014 = vmatprep.subr.mxu0 0.0
        %3015 = vmatpush1.msra.mxu0 0.0
        %3016 = vmatprep.subr.mxu0 0.0
        %3017 = vmatpush1.msra.mxu0 0.0
        %3018 = vmatprep.subr.mxu0 0.0
        %3019 = vmatpush1.msra.mxu0 0.0
        %3020 = vmatprep.subr.mxu0 0.0
        %3021 = vmatpush1.msra.mxu0 0.0
        %3022 = vmatprep.subr.mxu0 0.0
        %3023 = vmatpush1.msra.mxu0 0.0
        %3024 = vmatprep.subr.mxu0 0.0
        %3025 = vmatpush1.msra.mxu0 0.0
        %3026 = vmatprep.mubr.f32.mxu0 0.0
        %3027 = vmatmul.mubr.f32.gmra.mrb[0].mxu0 %v2871
        %v3028 = vpop.f32.mrb[0].mxu0
        %v3029 = vadd.f32 %v2860, %v3028
        %v3030 = vpop.f32.mrb[0].mxu0
        %v3031 = vadd.f32 %v2860, %v3030
        %3032 = vmatprep.mubr.f32.mxu0 0.0
        %3033 = vmatmul.mubr.f32.gmra.mrb[0].mxu0 %v2874
        %v3034 = vpop.f32.mrb[0].mxu0
        %v3035 = vadd.f32 %v2864, %v3034
        %v3036 = vpop.f32.mrb[0].mxu0
        %v3037 = vadd.f32 %v2864, %v3036
        %3038 = vmatprep.mubr.f32.mxu0 0.0
        %3039 = vmatmul.mubr.f32.gmra.mrb[0].mxu0 %v2877
        %v3040 = vpop.f32.mrb[0].mxu0
        %v3041 = vadd.f32 %v2868, %v3040
        %v3042 = vpop.f32.mrb[0].mxu0
        %v3043 = vadd.f32 %v2868, %v3042
        %3044 = vdwg.mxu0
        %vm3045 = vcmp.ge.f32.partialorder %v2946, 0.0
        %vm3046 = vcmp.ge.f32.partialorder %v2948, 0.0
        %vm3047 = vcmp.ge.f32.partialorder %v3029, 0.0
        %vm3048 = vcmp.ge.f32.partialorder %v3031, 0.0
        %vm3049 = vcmp.ge.f32.partialorder %v2952, 0.0
        %vm3050 = vcmp.ge.f32.partialorder %v2954, 0.0
        %vm3051 = vcmp.ge.f32.partialorder %v3035, 0.0
        %vm3052 = vcmp.ge.f32.partialorder %v3037, 0.0
        %vm3053 = vcmp.ge.f32.partialorder %v2958, 0.0
        %vm3054 = vcmp.ge.f32.partialorder %v2960, 0.0
        %vm3055 = vcmp.ge.f32.partialorder %v3041, 0.0
        %vm3056 = vcmp.ge.f32.partialorder %v3043, 0.0
        %v3057 = vstv %s2849
        %v3058 = vmul.f32 %v3057, %v2946
        %v3059 = vmul.f32 %v3057, %v2948
        %v3060 = vmul.f32 %v3057, %v3029
        %v3061 = vmul.f32 %v3057, %v3031
        %v3062 = vmul.f32 %v3057, %v2952
        %v3063 = vmul.f32 %v3057, %v2954
        %v3064 = vmul.f32 %v3057, %v3035
        %v3065 = vmul.f32 %v3057, %v3037
        %v3066 = vmul.f32 %v3057, %v2958
        %v3067 = vmul.f32 %v3057, %v2960
        %v3068 = vmul.f32 %v3057, %v3041
        %v3069 = vmul.f32 %v3057, %v3043
        %v3070 = vsel %vm3045, %v2946, %v3058
        %v3071 = vsel %vm3046, %v2948, %v3059
        %v3072 = vsel %vm3047, %v3029, %v3060
        %v3073 = vsel %vm3048, %v3031, %v3061
        %v3074 = vsel %vm3049, %v2952, %v3062
        %v3075 = vsel %vm3050, %v2954, %v3063
        %v3076 = vsel %vm3051, %v3035, %v3064
        %v3077 = vsel %vm3052, %v3037, %v3065
        %v3078 = vsel %vm3053, %v2958, %v3066
        %v3079 = vsel %vm3054, %v2960, %v3067
        %v3080 = vsel %vm3055, %v3041, %v3068
        %v3081 = vsel %vm3056, %v3043, %v3069
        %v3082 = vadd.f32 %v3070, %v3072
        %v3083 = vadd.f32 %v3071, %v3073
        %v3084 = vadd.f32 %v3074, %v3076
        %v3085 = vadd.f32 %v3075, %v3077
        %v3086 = vadd.f32 %v3078, %v3080
        %v3087 = vadd.f32 %v3079, %v3081
        %s3088 = scalar_lea.vmem %s2, 24
        %v3089 = vld [vmem:[%s3088] sm:$0xff]
        %v3090 = vld [vmem:[%s3088 + $0x8] sm:$0xff]
        %v3091 = vld [vmem:[%s3088 + $0x10] sm:$0xff]
        %v3092 = vmul.f32 %v3082, 0.5
        %v3093 = vmul.f32 %v3083, 0.5
        %v3094 = vmul.f32 %v3084, 0.5
        %v3095 = vmul.f32 %v3085, 0.5
        %v3096 = vmul.f32 %v3086, 0.5
        %v3097 = vmul.f32 %v3087, 0.5
        %3098 = vset.pattern.permute.xlu0 13
        %3099 = vperm.xlu0 %3098, %v431
        %v3100 = vpop.permute.xlu0 %3099
        %3102 = vset.pattern.permute.xlu0 13
        %3103 = vperm.xlu0 %3102, %v432
        %v3104 = vpop.permute.xlu0 %3103
        %3106 = vset.pattern.permute.xlu0 13
        %3107 = vperm.xlu0 %3106, %v433
        %v3108 = vpop.permute.xlu0 %3107
        %v3111 = vsel %vm775, %v3089, 0
        %v3114 = vsel %vm775, %v3090, 0
        %v3117 = vsel %vm775, %v3091, 0
        %3119 = vmatprep.subr.mxu0 %v3093
        %3120 = vmatpush1.msra.mxu0 %v3092
        %3121 = vmatprep.subr.mxu0 %v3095
        %3122 = vmatpush1.msra.mxu0 %v3094
        %3123 = vmatprep.subr.mxu0 %v3097
        %3124 = vmatpush1.msra.mxu0 %v3096
        %3125 = vmatprep.subr.mxu0 0.0
        %3126 = vmatpush1.msra.mxu0 0.0
        %3127 = vmatprep.subr.mxu0 0.0
        %3128 = vmatpush1.msra.mxu0 0.0
        %3129 = vmatprep.subr.mxu0 0.0
        %3130 = vmatpush1.msra.mxu0 0.0
        %3131 = vmatprep.subr.mxu0 0.0
        %3132 = vmatpush1.msra.mxu0 0.0
        %3133 = vmatprep.subr.mxu0 0.0
        %3134 = vmatpush1.msra.mxu0 0.0
        %3135 = vmatprep.subr.mxu0 0.0
        %3136 = vmatpush1.msra.mxu0 0.0
        %3137 = vmatprep.subr.mxu0 0.0
        %3138 = vmatpush1.msra.mxu0 0.0
        %3139 = vmatprep.subr.mxu0 0.0
        %3140 = vmatpush1.msra.mxu0 0.0
        %3141 = vmatprep.subr.mxu0 0.0
        %3142 = vmatpush1.msra.mxu0 0.0
        %3143 = vmatprep.subr.mxu0 0.0
        %3144 = vmatpush1.msra.mxu0 0.0
        %3145 = vmatprep.subr.mxu0 0.0
        %3146 = vmatpush1.msra.mxu0 0.0
        %3147 = vmatprep.subr.mxu0 0.0
        %3148 = vmatpush1.msra.mxu0 0.0
        %3149 = vmatprep.subr.mxu0 0.0
        %3150 = vmatpush1.msra.mxu0 0.0
        %3151 = vmatprep.subr.mxu0 0.0
        %3152 = vmatpush1.msra.mxu0 0.0
        %3153 = vmatprep.subr.mxu0 0.0
        %3154 = vmatpush1.msra.mxu0 0.0
        %3155 = vmatprep.subr.mxu0 0.0
        %3156 = vmatpush1.msra.mxu0 0.0
        %3157 = vmatprep.subr.mxu0 0.0
        %3158 = vmatpush1.msra.mxu0 0.0
        %3159 = vmatprep.subr.mxu0 0.0
        %3160 = vmatpush1.msra.mxu0 0.0
        %3161 = vmatprep.subr.mxu0 0.0
        %3162 = vmatpush1.msra.mxu0 0.0
        %3163 = vmatprep.subr.mxu0 0.0
        %3164 = vmatpush1.msra.mxu0 0.0
        %3165 = vmatprep.subr.mxu0 0.0
        %3166 = vmatpush1.msra.mxu0 0.0
        %3167 = vmatprep.subr.mxu0 0.0
        %3168 = vmatpush1.msra.mxu0 0.0
        %3169 = vmatprep.subr.mxu0 0.0
        %3170 = vmatpush1.msra.mxu0 0.0
        %3171 = vmatprep.subr.mxu0 0.0
        %3172 = vmatpush1.msra.mxu0 0.0
        %3173 = vmatprep.subr.mxu0 0.0
        %3174 = vmatpush1.msra.mxu0 0.0
        %3175 = vmatprep.subr.mxu0 0.0
        %3176 = vmatpush1.msra.mxu0 0.0
        %3177 = vmatprep.subr.mxu0 0.0
        %3178 = vmatpush1.msra.mxu0 0.0
        %3179 = vmatprep.subr.mxu0 0.0
        %3180 = vmatpush1.msra.mxu0 0.0
        %3181 = vmatprep.subr.mxu0 0.0
        %3182 = vmatpush1.msra.mxu0 0.0
        %3183 = vmatprep.mubr.f32.mxu0 0.0
        %3184 = vmatmul.mubr.f32.gmra.mrb[0].mxu0 %v3111
        %v3185 = vpop.f32.mrb[0].mxu0
        %v3186 = vadd.f32 %v3100, %v3185
        %v3187 = vpop.f32.mrb[0].mxu0
        %v3188 = vadd.f32 %v3100, %v3187
        %3189 = vmatprep.mubr.f32.mxu0 0.0
        %3190 = vmatmul.mubr.f32.gmra.mrb[0].mxu0 %v3114
        %v3191 = vpop.f32.mrb[0].mxu0
        %v3192 = vadd.f32 %v3104, %v3191
        %v3193 = vpop.f32.mrb[0].mxu0
        %v3194 = vadd.f32 %v3104, %v3193
        %3195 = vmatprep.mubr.f32.mxu0 0.0
        %3196 = vmatmul.mubr.f32.gmra.mrb[0].mxu0 %v3117
        %v3197 = vpop.f32.mrb[0].mxu0
        %v3198 = vadd.f32 %v3108, %v3197
        %v3199 = vpop.f32.mrb[0].mxu0
        %v3200 = vadd.f32 %v3108, %v3199
        %3201 = vdwg.mxu0
        %vm3202 = vcmp.ge.f32.partialorder %v3186, 0.0
        %vm3203 = vcmp.ge.f32.partialorder %v3188, 0.0
        %vm3204 = vcmp.ge.f32.partialorder %v3192, 0.0
        %vm3205 = vcmp.ge.f32.partialorder %v3194, 0.0
        %vm3206 = vcmp.ge.f32.partialorder %v3198, 0.0
        %vm3207 = vcmp.ge.f32.partialorder %v3200, 0.0
        %v3208 = vstv %s2850
        %v3209 = vmul.f32 %v3208, %v3186
        %v3210 = vmul.f32 %v3208, %v3188
        %v3211 = vmul.f32 %v3208, %v3192
        %v3212 = vmul.f32 %v3208, %v3194
        %v3213 = vmul.f32 %v3208, %v3198
        %v3214 = vmul.f32 %v3208, %v3200
        %v3215 = vsel %vm3202, %v3186, %v3209
        %v3216 = vsel %vm3203, %v3188, %v3210
        %v3217 = vsel %vm3204, %v3192, %v3211
        %v3218 = vsel %vm3205, %v3194, %v3212
        %v3219 = vsel %vm3206, %v3198, %v3213
        %v3220 = vsel %vm3207, %v3200, %v3214
        %s3221 = scalar_lea.vmem %s3, 8
        %v3222 = vld [vmem:[%s3221] sm:$0xff]
        %3223 = vset.pattern.permute.xlu0 14
        %3224 = vperm.xlu0 %3223, %v431
        %v3225 = vpop.permute.xlu0 %3224
        %v3228 = vsel %vm892, %v3222, 0
        %3230 = vmatprep.subr.mxu0 %v3071
        %3231 = vmatpush1.msra.mxu0 %v3070
        %3232 = vmatprep.subr.mxu0 %v3075
        %3233 = vmatpush1.msra.mxu0 %v3074
        %3234 = vmatprep.subr.mxu0 %v3079
        %3235 = vmatpush1.msra.mxu0 %v3078
        %3236 = vmatprep.subr.mxu0 %v3216
        %3237 = vmatpush1.msra.mxu0 %v3215
        %3238 = vmatprep.subr.mxu0 %v3218
        %3239 = vmatpush1.msra.mxu0 %v3217
        %3240 = vmatprep.subr.mxu0 %v3220
        %3241 = vmatpush1.msra.mxu0 %v3219
        %3242 = vmatprep.subr.mxu0 0.0
        %3243 = vmatpush1.msra.mxu0 0.0
        %3244 = vmatprep.subr.mxu0 0.0
        %3245 = vmatpush1.msra.mxu0 0.0
        %3246 = vmatprep.subr.mxu0 0.0
        %3247 = vmatpush1.msra.mxu0 0.0
        %3248 = vmatprep.subr.mxu0 0.0
        %3249 = vmatpush1.msra.mxu0 0.0
        %3250 = vmatprep.subr.mxu0 0.0
        %3251 = vmatpush1.msra.mxu0 0.0
        %3252 = vmatprep.subr.mxu0 0.0
        %3253 = vmatpush1.msra.mxu0 0.0
        %3254 = vmatprep.subr.mxu0 0.0
        %3255 = vmatpush1.msra.mxu0 0.0
        %3256 = vmatprep.subr.mxu0 0.0
        %3257 = vmatpush1.msra.mxu0 0.0
        %3258 = vmatprep.subr.mxu0 0.0
        %3259 = vmatpush1.msra.mxu0 0.0
        %3260 = vmatprep.subr.mxu0 0.0
        %3261 = vmatpush1.msra.mxu0 0.0
        %3262 = vmatprep.subr.mxu0 0.0
        %3263 = vmatpush1.msra.mxu0 0.0
        %3264 = vmatprep.subr.mxu0 0.0
        %3265 = vmatpush1.msra.mxu0 0.0
        %3266 = vmatprep.subr.mxu0 0.0
        %3267 = vmatpush1.msra.mxu0 0.0
        %3268 = vmatprep.subr.mxu0 0.0
        %3269 = vmatpush1.msra.mxu0 0.0
        %3270 = vmatprep.subr.mxu0 0.0
        %3271 = vmatpush1.msra.mxu0 0.0
        %3272 = vmatprep.subr.mxu0 0.0
        %3273 = vmatpush1.msra.mxu0 0.0
        %3274 = vmatprep.subr.mxu0 0.0
        %3275 = vmatpush1.msra.mxu0 0.0
        %3276 = vmatprep.subr.mxu0 0.0
        %3277 = vmatpush1.msra.mxu0 0.0
        %3278 = vmatprep.subr.mxu0 0.0
        %3279 = vmatpush1.msra.mxu0 0.0
        %3280 = vmatprep.subr.mxu0 0.0
        %3281 = vmatpush1.msra.mxu0 0.0
        %3282 = vmatprep.subr.mxu0 0.0
        %3283 = vmatpush1.msra.mxu0 0.0
        %3284 = vmatprep.subr.mxu0 0.0
        %3285 = vmatpush1.msra.mxu0 0.0
        %3286 = vmatprep.subr.mxu0 0.0
        %3287 = vmatpush1.msra.mxu0 0.0
        %3288 = vmatprep.subr.mxu0 0.0
        %3289 = vmatpush1.msra.mxu0 0.0
        %3290 = vmatprep.subr.mxu0 0.0
        %3291 = vmatpush1.msra.mxu0 0.0
        %3292 = vmatprep.subr.mxu0 0.0
        %3293 = vmatpush1.msra.mxu0 0.0
        %3294 = vmatprep.mubr.f32.mxu0 0.0
        %3295 = vmatmul.mubr.f32.gmra.mrb[0].mxu0 %v3228
        %v3296 = vpop.f32.mrb[0].mxu0
        %v3297 = vadd.f32 %v3225, %v3296
        %v3298 = vpop.f32.mrb[0].mxu0
        %v3299 = vadd.f32 %v3225, %v3298
        %3300 = vdwg.mxu0
        %3301 = vmatprep.subr.mxu0 %v3073
        %3302 = vmatpush1.msra.mxu0 %v3072
        %3303 = vmatprep.subr.mxu0 %v3077
        %3304 = vmatpush1.msra.mxu0 %v3076
        %3305 = vmatprep.subr.mxu0 %v3081
        %3306 = vmatpush1.msra.mxu0 %v3080
        %3307 = vmatprep.subr.mxu0 %v3216
        %3308 = vmatpush1.msra.mxu0 %v3215
        %3309 = vmatprep.subr.mxu0 %v3218
        %3310 = vmatpush1.msra.mxu0 %v3217
        %3311 = vmatprep.subr.mxu0 %v3220
        %3312 = vmatpush1.msra.mxu0 %v3219
        %3313 = vmatprep.subr.mxu0 0.0
        %3314 = vmatpush1.msra.mxu0 0.0
        %3315 = vmatprep.subr.mxu0 0.0
        %3316 = vmatpush1.msra.mxu0 0.0
        %3317 = vmatprep.subr.mxu0 0.0
        %3318 = vmatpush1.msra.mxu0 0.0
        %3319 = vmatprep.subr.mxu0 0.0
        %3320 = vmatpush1.msra.mxu0 0.0
        %3321 = vmatprep.subr.mxu0 0.0
        %3322 = vmatpush1.msra.mxu0 0.0
        %3323 = vmatprep.subr.mxu0 0.0
        %3324 = vmatpush1.msra.mxu0 0.0
        %3325 = vmatprep.subr.mxu0 0.0
        %3326 = vmatpush1.msra.mxu0 0.0
        %3327 = vmatprep.subr.mxu0 0.0
        %3328 = vmatpush1.msra.mxu0 0.0
        %3329 = vmatprep.subr.mxu0 0.0
        %3330 = vmatpush1.msra.mxu0 0.0
        %3331 = vmatprep.subr.mxu0 0.0
        %3332 = vmatpush1.msra.mxu0 0.0
        %3333 = vmatprep.subr.mxu0 0.0
        %3334 = vmatpush1.msra.mxu0 0.0
        %3335 = vmatprep.subr.mxu0 0.0
        %3336 = vmatpush1.msra.mxu0 0.0
        %3337 = vmatprep.subr.mxu0 0.0
        %3338 = vmatpush1.msra.mxu0 0.0
        %3339 = vmatprep.subr.mxu0 0.0
        %3340 = vmatpush1.msra.mxu0 0.0
        %3341 = vmatprep.subr.mxu0 0.0
        %3342 = vmatpush1.msra.mxu0 0.0
        %3343 = vmatprep.subr.mxu0 0.0
        %3344 = vmatpush1.msra.mxu0 0.0
        %3345 = vmatprep.subr.mxu0 0.0
        %3346 = vmatpush1.msra.mxu0 0.0
        %3347 = vmatprep.subr.mxu0 0.0
        %3348 = vmatpush1.msra.mxu0 0.0
        %3349 = vmatprep.subr.mxu0 0.0
        %3350 = vmatpush1.msra.mxu0 0.0
        %3351 = vmatprep.subr.mxu0 0.0
        %3352 = vmatpush1.msra.mxu0 0.0
        %3353 = vmatprep.subr.mxu0 0.0
        %3354 = vmatpush1.msra.mxu0 0.0
        %3355 = vmatprep.subr.mxu0 0.0
        %3356 = vmatpush1.msra.mxu0 0.0
        %3357 = vmatprep.subr.mxu0 0.0
        %3358 = vmatpush1.msra.mxu0 0.0
        %3359 = vmatprep.subr.mxu0 0.0
        %3360 = vmatpush1.msra.mxu0 0.0
        %3361 = vmatprep.subr.mxu0 0.0
        %3362 = vmatpush1.msra.mxu0 0.0
        %3363 = vmatprep.subr.mxu0 0.0
        %3364 = vmatpush1.msra.mxu0 0.0
        %3365 = vmatprep.mubr.f32.mxu0 0.0
        %3366 = vmatmul.mubr.f32.gmra.mrb[0].mxu0 %v3228
        %v3367 = vpop.f32.mrb[0].mxu0
        %v3368 = vadd.f32 %v3225, %v3367
        %v3369 = vpop.f32.mrb[0].mxu0
        %v3370 = vadd.f32 %v3225, %v3369
        %3371 = vdwg.mxu0
        %vm3372 = vcmp.ge.f32.partialorder %v3297, 0.0
        %vm3373 = vcmp.ge.f32.partialorder %v3299, 0.0
        %vm3374 = vcmp.ge.f32.partialorder %v3368, 0.0
        %vm3375 = vcmp.ge.f32.partialorder %v3370, 0.0
        %v3376 = vstv %s2851
        %v3377 = vmul.f32 %v3376, %v3297
        %v3378 = vmul.f32 %v3376, %v3299
        %v3379 = vmul.f32 %v3376, %v3368
        %v3380 = vmul.f32 %v3376, %v3370
        %v3381 = vsel %vm3372, %v3297, %v3377
        %v3382 = vsel %vm3373, %v3299, %v3378
        %v3383 = vsel %vm3374, %v3368, %v3379
        %v3384 = vsel %vm3375, %v3370, %v3380
        %v3385 = vsel %vm1071, %v3381, 0.0
        %v3386 = vsel %vm1072, %v3382, 0.0
        %v3387 = vsel %vm1073, %v3383, 0.0
        %v3388 = vsel %vm1074, %v3384, 0.0
        %v3389 = vrot.slane %v3385, 4
        %v3390 = vadd.f32 %v3385, %v3389
        %v3391 = vrot.slane %v3390, 2
        %v3392 = vadd.f32 %v3390, %v3391
        %v3393 = vrot.slane %v3392, 1
        %v3394 = vadd.f32 %v3392, %v3393
        %v3395 = vrot.slane %v3386, 4
        %v3396 = vadd.f32 %v3386, %v3395
        %v3397 = vrot.slane %v3396, 2
        %v3398 = vadd.f32 %v3396, %v3397
        %v3399 = vrot.slane %v3398, 1
        %v3400 = vadd.f32 %v3398, %v3399
        %v3401 = vrot.slane %v3387, 4
        %v3402 = vadd.f32 %v3387, %v3401
        %v3403 = vrot.slane %v3402, 2
        %v3404 = vadd.f32 %v3402, %v3403
        %v3405 = vrot.slane %v3404, 1
        %v3406 = vadd.f32 %v3404, %v3405
        %v3407 = vrot.slane %v3388, 4
        %v3408 = vadd.f32 %v3388, %v3407
        %v3409 = vrot.slane %v3408, 2
        %v3410 = vadd.f32 %v3408, %v3409
        %v3411 = vrot.slane %v3410, 1
        %v3412 = vadd.f32 %v3410, %v3411
        %v3413 = vmul.f32 %v3385, %v3385
        %v3414 = vmul.f32 %v3386, %v3386
        %v3415 = vmul.f32 %v3387, %v3387
        %v3416 = vmul.f32 %v3388, %v3388
        %v3417 = vrot.slane %v3413, 4
        %v3418 = vadd.f32 %v3413, %v3417
        %v3419 = vrot.slane %v3418, 2
        %v3420 = vadd.f32 %v3418, %v3419
        %v3421 = vrot.slane %v3420, 1
        %v3422 = vadd.f32 %v3420, %v3421
        %v3423 = vrot.slane %v3414, 4
        %v3424 = vadd.f32 %v3414, %v3423
        %v3425 = vrot.slane %v3424, 2
        %v3426 = vadd.f32 %v3424, %v3425
        %v3427 = vrot.slane %v3426, 1
        %v3428 = vadd.f32 %v3426, %v3427
        %v3429 = vrot.slane %v3415, 4
        %v3430 = vadd.f32 %v3415, %v3429
        %v3431 = vrot.slane %v3430, 2
        %v3432 = vadd.f32 %v3430, %v3431
        %v3433 = vrot.slane %v3432, 1
        %v3434 = vadd.f32 %v3432, %v3433
        %v3435 = vrot.slane %v3416, 4
        %v3436 = vadd.f32 %v3416, %v3435
        %v3437 = vrot.slane %v3436, 2
        %v3438 = vadd.f32 %v3436, %v3437
        %v3439 = vrot.slane %v3438, 1
        %v3440 = vadd.f32 %v3438, %v3439
        %v3441 = vsel %vm1131, %v3394, %v3422
        %v3442 = vsel %vm1131, %v3400, %v3428
        %v3443 = vsel %vm1131, %v3406, %v3434
        %v3444 = vsel %vm1131, %v3412, %v3440
        %3445 = vmatprep.subr.mxu0 0.0
        %3446 = vmatpush1.msra.mxu0 %v434
        %3447 = vmatprep.subr.mxu0 0.0
        %3448 = vmatpush1.msra.mxu0 %v435
        %3449 = vmatprep.subr.mxu0 0.0
        %3450 = vmatpush1.msra.mxu0 %v436
        %3451 = vmatprep.subr.mxu0 0.0
        %3452 = vmatpush1.msra.mxu0 %v437
        %3453 = vmatprep.subr.mxu0 0.0
        %3454 = vmatpush1.msra.mxu0 %v438
        %3455 = vmatprep.subr.mxu0 0.0
        %3456 = vmatpush1.msra.mxu0 %v439
        %3457 = vmatprep.subr.mxu0 0.0
        %3458 = vmatpush1.msra.mxu0 %v440
        %3459 = vmatprep.subr.mxu0 0.0
        %3460 = vmatpush1.msra.mxu0 %v441
        %3461 = vmatprep.subr.mxu0 0.0
        %3462 = vmatpush1.msra.mxu0 %v442
        %3463 = vmatprep.subr.mxu0 0.0
        %3464 = vmatpush1.msra.mxu0 %v443
        %3465 = vmatprep.subr.mxu0 0.0
        %3466 = vmatpush1.msra.mxu0 %v444
        %3467 = vmatprep.subr.mxu0 0.0
        %3468 = vmatpush1.msra.mxu0 %v445
        %3469 = vmatprep.subr.mxu0 0.0
        %3470 = vmatpush1.msra.mxu0 %v446
        %3471 = vmatprep.subr.mxu0 0.0
        %3472 = vmatpush1.msra.mxu0 %v447
        %3473 = vmatprep.subr.mxu0 0.0
        %3474 = vmatpush1.msra.mxu0 %v448
        %3475 = vmatprep.subr.mxu0 0.0
        %3476 = vmatpush1.msra.mxu0 %v449
        %3477 = vmatprep.subr.mxu0 0.0
        %3478 = vmatpush1.msra.mxu0 %v450
        %3479 = vmatprep.subr.mxu0 0.0
        %3480 = vmatpush1.msra.mxu0 %v451
        %3481 = vmatprep.subr.mxu0 0.0
        %3482 = vmatpush1.msra.mxu0 %v452
        %3483 = vmatprep.subr.mxu0 0.0
        %3484 = vmatpush1.msra.mxu0 %v453
        %3485 = vmatprep.subr.mxu0 0.0
        %3486 = vmatpush1.msra.mxu0 %v454
        %3487 = vmatprep.subr.mxu0 0.0
        %3488 = vmatpush1.msra.mxu0 %v455
        %3489 = vmatprep.subr.mxu0 0.0
        %3490 = vmatpush1.msra.mxu0 %v456
        %3491 = vmatprep.subr.mxu0 0.0
        %3492 = vmatpush1.msra.mxu0 %v457
        %3493 = vmatprep.subr.mxu0 0.0
        %3494 = vmatpush1.msra.mxu0 %v458
        %3495 = vmatprep.subr.mxu0 0.0
        %3496 = vmatpush1.msra.mxu0 %v459
        %3497 = vmatprep.subr.mxu0 0.0
        %3498 = vmatpush1.msra.mxu0 %v460
        %3499 = vmatprep.subr.mxu0 0.0
        %3500 = vmatpush1.msra.mxu0 %v461
        %3501 = vmatprep.subr.mxu0 0.0
        %3502 = vmatpush1.msra.mxu0 %v462
        %3503 = vmatprep.subr.mxu0 0.0
        %3504 = vmatpush1.msra.mxu0 %v463
        %3505 = vmatprep.subr.mxu0 0.0
        %3506 = vmatpush1.msra.mxu0 %v464
        %3507 = vmatprep.subr.mxu0 0.0
        %3508 = vmatpush1.msra.mxu0 %v465
        %3509 = vmatprep.mubr.f32.mxu0 %v3442
        %3510 = vmatmul.mubr.f32.gmra.mrb[0].mxu0 %v3441
        %v3511 = vpop.f32.mrb[0].mxu0
        %v3512 = vadd.f32 0.0, %v3511
        %v3513 = vpop.f32.mrb[0].mxu0
        %3514 = vdwg.mxu0
        %3515 = vmatprep.subr.mxu0 0.0
        %3516 = vmatpush1.msra.mxu0 %v466
        %3517 = vmatprep.subr.mxu0 0.0
        %3518 = vmatpush1.msra.mxu0 %v467
        %3519 = vmatprep.subr.mxu0 0.0
        %3520 = vmatpush1.msra.mxu0 %v468
        %3521 = vmatprep.subr.mxu0 0.0
        %3522 = vmatpush1.msra.mxu0 %v469
        %3523 = vmatprep.subr.mxu0 0.0
        %3524 = vmatpush1.msra.mxu0 %v470
        %3525 = vmatprep.subr.mxu0 0.0
        %3526 = vmatpush1.msra.mxu0 %v471
        %3527 = vmatprep.subr.mxu0 0.0
        %3528 = vmatpush1.msra.mxu0 %v472
        %3529 = vmatprep.subr.mxu0 0.0
        %3530 = vmatpush1.msra.mxu0 %v473
        %3531 = vmatprep.subr.mxu0 0.0
        %3532 = vmatpush1.msra.mxu0 %v474
        %3533 = vmatprep.subr.mxu0 0.0
        %3534 = vmatpush1.msra.mxu0 %v475
        %3535 = vmatprep.subr.mxu0 0.0
        %3536 = vmatpush1.msra.mxu0 %v476
        %3537 = vmatprep.subr.mxu0 0.0
        %3538 = vmatpush1.msra.mxu0 %v477
        %3539 = vmatprep.subr.mxu0 0.0
        %3540 = vmatpush1.msra.mxu0 %v478
        %3541 = vmatprep.subr.mxu0 0.0
        %3542 = vmatpush1.msra.mxu0 %v479
        %3543 = vmatprep.subr.mxu0 0.0
        %3544 = vmatpush1.msra.mxu0 %v480
        %3545 = vmatprep.subr.mxu0 0.0
        %3546 = vmatpush1.msra.mxu0 %v481
        %3547 = vmatprep.subr.mxu0 0.0
        %3548 = vmatpush1.msra.mxu0 %v482
        %3549 = vmatprep.subr.mxu0 0.0
        %3550 = vmatpush1.msra.mxu0 %v483
        %3551 = vmatprep.subr.mxu0 0.0
        %3552 = vmatpush1.msra.mxu0 %v484
        %3553 = vmatprep.subr.mxu0 0.0
        %3554 = vmatpush1.msra.mxu0 %v485
        %3555 = vmatprep.subr.mxu0 0.0
        %3556 = vmatpush1.msra.mxu0 %v486
        %3557 = vmatprep.subr.mxu0 0.0
        %3558 = vmatpush1.msra.mxu0 %v487
        %3559 = vmatprep.subr.mxu0 0.0
        %3560 = vmatpush1.msra.mxu0 %v488
        %3561 = vmatprep.subr.mxu0 0.0
        %3562 = vmatpush1.msra.mxu0 %v489
        %3563 = vmatprep.subr.mxu0 0.0
        %3564 = vmatpush1.msra.mxu0 %v490
        %3565 = vmatprep.subr.mxu0 0.0
        %3566 = vmatpush1.msra.mxu0 %v491
        %3567 = vmatprep.subr.mxu0 0.0
        %3568 = vmatpush1.msra.mxu0 %v492
        %3569 = vmatprep.subr.mxu0 0.0
        %3570 = vmatpush1.msra.mxu0 %v493
        %3571 = vmatprep.subr.mxu0 0.0
        %3572 = vmatpush1.msra.mxu0 %v494
        %3573 = vmatprep.subr.mxu0 0.0
        %3574 = vmatpush1.msra.mxu0 %v495
        %3575 = vmatprep.subr.mxu0 0.0
        %3576 = vmatpush1.msra.mxu0 %v496
        %3577 = vmatprep.subr.mxu0 0.0
        %3578 = vmatpush1.msra.mxu0 %v497
        %3579 = vmatprep.mubr.f32.mxu0 %v3444
        %3580 = vmatmul.mubr.f32.gmra.mrb[0].mxu0 %v3443
        %v3581 = vpop.f32.mrb[0].mxu0
        %v3582 = vadd.f32 %v3512, %v3581
        %v3583 = vpop.f32.mrb[0].mxu0
        %3584 = vdwg.mxu0
        %v3586 = vsel %vm1280, %v3582, 0
        %3588 = vmatprep.subr.mxu0 %v1287
        %3589 = vmatpush1.msra.mxu0 %v1285
        %3590 = vmatprep.subr.mxu0 0.0
        %3591 = vmatpush1.msra.mxu0 0.0
        %3592 = vmatprep.subr.mxu0 0.0
        %3593 = vmatpush1.msra.mxu0 0.0
        %3594 = vmatprep.subr.mxu0 0.0
        %3595 = vmatpush1.msra.mxu0 0.0
        %3596 = vmatprep.subr.mxu0 0.0
        %3597 = vmatpush1.msra.mxu0 0.0
        %3598 = vmatprep.subr.mxu0 0.0
        %3599 = vmatpush1.msra.mxu0 0.0
        %3600 = vmatprep.subr.mxu0 0.0
        %3601 = vmatpush1.msra.mxu0 0.0
        %3602 = vmatprep.subr.mxu0 0.0
        %3603 = vmatpush1.msra.mxu0 0.0
        %3604 = vmatprep.subr.mxu0 0.0
        %3605 = vmatpush1.msra.mxu0 0.0
        %3606 = vmatprep.subr.mxu0 0.0
        %3607 = vmatpush1.msra.mxu0 0.0
        %3608 = vmatprep.subr.mxu0 0.0
        %3609 = vmatpush1.msra.mxu0 0.0
        %3610 = vmatprep.subr.mxu0 0.0
        %3611 = vmatpush1.msra.mxu0 0.0
        %3612 = vmatprep.subr.mxu0 0.0
        %3613 = vmatpush1.msra.mxu0 0.0
        %3614 = vmatprep.subr.mxu0 0.0
        %3615 = vmatpush1.msra.mxu0 0.0
        %3616 = vmatprep.subr.mxu0 0.0
        %3617 = vmatpush1.msra.mxu0 0.0
        %3618 = vmatprep.subr.mxu0 0.0
        %3619 = vmatpush1.msra.mxu0 0.0
        %3620 = vmatprep.subr.mxu0 0.0
        %3621 = vmatpush1.msra.mxu0 0.0
        %3622 = vmatprep.subr.mxu0 0.0
        %3623 = vmatpush1.msra.mxu0 0.0
        %3624 = vmatprep.subr.mxu0 0.0
        %3625 = vmatpush1.msra.mxu0 0.0
        %3626 = vmatprep.subr.mxu0 0.0
        %3627 = vmatpush1.msra.mxu0 0.0
        %3628 = vmatprep.subr.mxu0 0.0
        %3629 = vmatpush1.msra.mxu0 0.0
        %3630 = vmatprep.subr.mxu0 0.0
        %3631 = vmatpush1.msra.mxu0 0.0
        %3632 = vmatprep.subr.mxu0 0.0
        %3633 = vmatpush1.msra.mxu0 0.0
        %3634 = vmatprep.subr.mxu0 0.0
        %3635 = vmatpush1.msra.mxu0 0.0
        %3636 = vmatprep.subr.mxu0 0.0
        %3637 = vmatpush1.msra.mxu0 0.0
        %3638 = vmatprep.subr.mxu0 0.0
        %3639 = vmatpush1.msra.mxu0 0.0
        %3640 = vmatprep.subr.mxu0 0.0
        %3641 = vmatpush1.msra.mxu0 0.0
        %3642 = vmatprep.subr.mxu0 0.0
        %3643 = vmatpush1.msra.mxu0 0.0
        %3644 = vmatprep.subr.mxu0 0.0
        %3645 = vmatpush1.msra.mxu0 0.0
        %3646 = vmatprep.subr.mxu0 0.0
        %3647 = vmatpush1.msra.mxu0 0.0
        %3648 = vmatprep.subr.mxu0 0.0
        %3649 = vmatpush1.msra.mxu0 0.0
        %3650 = vmatprep.subr.mxu0 0.0
        %3651 = vmatpush1.msra.mxu0 0.0
        %3652 = vmatprep.mubr.f32.mxu0 0.0
        %3653 = vmatmul.mubr.f32.gmra.mrb[0].mxu0 %v3586
        %v3654 = vpop.f32.mrb[0].mxu0
        %v3655 = vadd.f32 0.0, %v3654
        %v3656 = vpop.f32.mrb[0].mxu0
        %v3657 = vadd.f32 0.0, %v3656
        %3658 = vdwg.mxu0
        %3659 = vmatprep.subr.mxu0 %v1291
        %3660 = vmatpush1.msra.mxu0 %v1289
        %3661 = vmatprep.subr.mxu0 0.0
        %3662 = vmatpush1.msra.mxu0 0.0
        %3663 = vmatprep.subr.mxu0 0.0
        %3664 = vmatpush1.msra.mxu0 0.0
        %3665 = vmatprep.subr.mxu0 0.0
        %3666 = vmatpush1.msra.mxu0 0.0
        %3667 = vmatprep.subr.mxu0 0.0
        %3668 = vmatpush1.msra.mxu0 0.0
        %3669 = vmatprep.subr.mxu0 0.0
        %3670 = vmatpush1.msra.mxu0 0.0
        %3671 = vmatprep.subr.mxu0 0.0
        %3672 = vmatpush1.msra.mxu0 0.0
        %3673 = vmatprep.subr.mxu0 0.0
        %3674 = vmatpush1.msra.mxu0 0.0
        %3675 = vmatprep.subr.mxu0 0.0
        %3676 = vmatpush1.msra.mxu0 0.0
        %3677 = vmatprep.subr.mxu0 0.0
        %3678 = vmatpush1.msra.mxu0 0.0
        %3679 = vmatprep.subr.mxu0 0.0
        %3680 = vmatpush1.msra.mxu0 0.0
        %3681 = vmatprep.subr.mxu0 0.0
        %3682 = vmatpush1.msra.mxu0 0.0
        %3683 = vmatprep.subr.mxu0 0.0
        %3684 = vmatpush1.msra.mxu0 0.0
        %3685 = vmatprep.subr.mxu0 0.0
        %3686 = vmatpush1.msra.mxu0 0.0
        %3687 = vmatprep.subr.mxu0 0.0
        %3688 = vmatpush1.msra.mxu0 0.0
        %3689 = vmatprep.subr.mxu0 0.0
        %3690 = vmatpush1.msra.mxu0 0.0
        %3691 = vmatprep.subr.mxu0 0.0
        %3692 = vmatpush1.msra.mxu0 0.0
        %3693 = vmatprep.subr.mxu0 0.0
        %3694 = vmatpush1.msra.mxu0 0.0
        %3695 = vmatprep.subr.mxu0 0.0
        %3696 = vmatpush1.msra.mxu0 0.0
        %3697 = vmatprep.subr.mxu0 0.0
        %3698 = vmatpush1.msra.mxu0 0.0
        %3699 = vmatprep.subr.mxu0 0.0
        %3700 = vmatpush1.msra.mxu0 0.0
        %3701 = vmatprep.subr.mxu0 0.0
        %3702 = vmatpush1.msra.mxu0 0.0
        %3703 = vmatprep.subr.mxu0 0.0
        %3704 = vmatpush1.msra.mxu0 0.0
        %3705 = vmatprep.subr.mxu0 0.0
        %3706 = vmatpush1.msra.mxu0 0.0
        %3707 = vmatprep.subr.mxu0 0.0
        %3708 = vmatpush1.msra.mxu0 0.0
        %3709 = vmatprep.subr.mxu0 0.0
        %3710 = vmatpush1.msra.mxu0 0.0
        %3711 = vmatprep.subr.mxu0 0.0
        %3712 = vmatpush1.msra.mxu0 0.0
        %3713 = vmatprep.subr.mxu0 0.0
        %3714 = vmatpush1.msra.mxu0 0.0
        %3715 = vmatprep.subr.mxu0 0.0
        %3716 = vmatpush1.msra.mxu0 0.0
        %3717 = vmatprep.subr.mxu0 0.0
        %3718 = vmatpush1.msra.mxu0 0.0
        %3719 = vmatprep.subr.mxu0 0.0
        %3720 = vmatpush1.msra.mxu0 0.0
        %3721 = vmatprep.subr.mxu0 0.0
        %3722 = vmatpush1.msra.mxu0 0.0
        %3723 = vmatprep.mubr.f32.mxu0 0.0
        %3724 = vmatmul.mubr.f32.gmra.mrb[0].mxu0 %v3586
        %v3725 = vpop.f32.mrb[0].mxu0
        %v3726 = vadd.f32 0.0, %v3725
        %v3727 = vpop.f32.mrb[0].mxu0
        %v3728 = vadd.f32 0.0, %v3727
        %3729 = vdwg.mxu0
        %v3730 = vmul.f32 %v3655, 0.125
        %v3731 = vmul.f32 %v3657, 0.125
        %v3732 = vmul.f32 %v3726, 0.125
        %v3733 = vmul.f32 %v3728, 0.125
        %v3734 = vmul.f32 %v3730, %v3730
        %v3735 = vmul.f32 %v3731, %v3731
        %v3736 = vmul.f32 %v3732, %v3732
        %v3737 = vmul.f32 %v3733, %v3733
        %v3742 = vrot.slane %v3734, 7
        %v3743 = vrot.slane %v3735, 7
        %v3744 = vrot.slane %v3736, 7
        %v3745 = vrot.slane %v3737, 7
        %v3750 = vsub.f32 %v3730, %v3742
        %v3751 = vsub.f32 %v3731, %v3743
        %v3752 = vsub.f32 %v3732, %v3744
        %v3753 = vsub.f32 %v3733, %v3745
        %v3754 = vlaneseq
        %v3755 = vshrl.u32 %v3754, 7
        %v3756 = vsub.s32 0, %v3755
        %v3757 = vrot.slane %v3730, %v3756
        %v3758 = vlaneseq
        %v3759 = vshrl.u32 %v3758, 7
        %v3760 = vsub.s32 0, %v3759
        %v3761 = vrot.slane %v3731, %v3760
        %v3762 = vlaneseq
        %v3763 = vshrl.u32 %v3762, 7
        %v3764 = vsub.s32 0, %v3763
        %v3765 = vrot.slane %v3732, %v3764
        %v3766 = vlaneseq
        %v3767 = vshrl.u32 %v3766, 7
        %v3768 = vsub.s32 0, %v3767
        %v3769 = vrot.slane %v3733, %v3768
        %v3770 = vsub.f32 %v3381, %v3757
        %v3771 = vsub.f32 %v3382, %v3761
        %v3772 = vsub.f32 %v3383, %v3765
        %v3773 = vsub.f32 %v3384, %v3769
        %v3774 = vadd.f32 %v3750, 1.1920929e-07
        %v3775 = vadd.f32 %v3751, 1.1920929e-07
        %v3776 = vadd.f32 %v3752, 1.1920929e-07
        %v3777 = vadd.f32 %v3753, 1.1920929e-07
        %v3778 = vrsqrt.pop %v3774
        %v3779 = vrsqrt.pop %v3775
        %v3780 = vrsqrt.pop %v3776
        %v3781 = vrsqrt.pop %v3777
        %v3782 = vlaneseq
        %v3783 = vshrl.u32 %v3782, 7
        %v3784 = vsub.s32 1, %v3783
        %v3785 = vrot.slane %v3778, %v3784
        %v3786 = vlaneseq
        %v3787 = vshrl.u32 %v3786, 7
        %v3788 = vsub.s32 1, %v3787
        %v3789 = vrot.slane %v3779, %v3788
        %v3790 = vlaneseq
        %v3791 = vshrl.u32 %v3790, 7
        %v3792 = vsub.s32 1, %v3791
        %v3793 = vrot.slane %v3780, %v3792
        %v3794 = vlaneseq
        %v3795 = vshrl.u32 %v3794, 7
        %v3796 = vsub.s32 1, %v3795
        %v3797 = vrot.slane %v3781, %v3796
        %v3798 = vmul.f32 %v3770, %v3785
        %v3799 = vmul.f32 %v3771, %v3789
        %v3800 = vmul.f32 %v3772, %v3793
        %v3801 = vmul.f32 %v3773, %v3797
        %3802 = vset.pattern.permute.xlu0 15
        %3803 = vperm.xlu0 %3802, %v431
        %v3804 = vpop.permute.xlu0 %3803
        %v3806 = vmul.f32 %v3798, %v3804
        %v3807 = vmul.f32 %v3799, %v3804
        %v3808 = vmul.f32 %v3800, %v3804
        %v3809 = vmul.f32 %v3801, %v3804
        %3810 = vset.pattern.permute.xlu0 16
        %3811 = vperm.xlu0 %3810, %v431
        %v3812 = vpop.permute.xlu0 %3811
        %v3814 = vadd.f32 %v3806, %v3812
        %v3815 = vadd.f32 %v3807, %v3812
        %v3816 = vadd.f32 %v3808, %v3812
        %v3817 = vadd.f32 %v3809, %v3812
        %v3818 = vadd.f32 %v2845, %v3814
        %v3819 = vadd.f32 %v2846, %v3815
        %v3820 = vadd.f32 %v2847, %v3816
        %v3821 = vadd.f32 %v2848, %v3817
        %3822 = vst [vmem:[#allocation2] sm:$0xff] %v3818
        %3823 = vst [vmem:[#allocation2 + $0x8] sm:$0xff] %v3819
        %3824 = vst [vmem:[#allocation2 + $0x10] sm:$0xff] %v3820
        %3825 = vst [vmem:[#allocation2 + $0x18] sm:$0xff] %v3821
        %s3826 = scalar_lea.vmem %s4, 8
        %v3827 = vld [vmem:[%s3826] sm:$0xff]
        %v3828 = vld [vmem:[#allocation2] sm:$0xff]
        %v3829 = vld [vmem:[#allocation2 + $0x8] sm:$0xff]
        %v3830 = vld [vmem:[#allocation2 + $0x10] sm:$0xff]
        %v3831 = vld [vmem:[#allocation2 + $0x18] sm:$0xff]
        %3832 = vset.pattern.permute.xlu0 17
        %3833 = vperm.xlu0 %3832, %v431
        %v3834 = vpop.permute.xlu0 %3833
        %v3837 = vsel %vm535, %v3827, 0
        %3839 = vmatprep.subr.mxu0 %v3829
        %3840 = vmatpush1.msra.mxu0 %v3828
        %3841 = vmatprep.subr.mxu0 0.0
        %3842 = vmatpush1.msra.mxu0 0.0
        %3843 = vmatprep.subr.mxu0 0.0
        %3844 = vmatpush1.msra.mxu0 0.0
        %3845 = vmatprep.subr.mxu0 0.0
        %3846 = vmatpush1.msra.mxu0 0.0
        %3847 = vmatprep.subr.mxu0 0.0
        %3848 = vmatpush1.msra.mxu0 0.0
        %3849 = vmatprep.subr.mxu0 0.0
        %3850 = vmatpush1.msra.mxu0 0.0
        %3851 = vmatprep.subr.mxu0 0.0
        %3852 = vmatpush1.msra.mxu0 0.0
        %3853 = vmatprep.subr.mxu0 0.0
        %3854 = vmatpush1.msra.mxu0 0.0
        %3855 = vmatprep.subr.mxu0 0.0
        %3856 = vmatpush1.msra.mxu0 0.0
        %3857 = vmatprep.subr.mxu0 0.0
        %3858 = vmatpush1.msra.mxu0 0.0
        %3859 = vmatprep.subr.mxu0 0.0
        %3860 = vmatpush1.msra.mxu0 0.0
        %3861 = vmatprep.subr.mxu0 0.0
        %3862 = vmatpush1.msra.mxu0 0.0
        %3863 = vmatprep.subr.mxu0 0.0
        %3864 = vmatpush1.msra.mxu0 0.0
        %3865 = vmatprep.subr.mxu0 0.0
        %3866 = vmatpush1.msra.mxu0 0.0
        %3867 = vmatprep.subr.mxu0 0.0
        %3868 = vmatpush1.msra.mxu0 0.0
        %3869 = vmatprep.subr.mxu0 0.0
        %3870 = vmatpush1.msra.mxu0 0.0
        %3871 = vmatprep.subr.mxu0 0.0
        %3872 = vmatpush1.msra.mxu0 0.0
        %3873 = vmatprep.subr.mxu0 0.0
        %3874 = vmatpush1.msra.mxu0 0.0
        %3875 = vmatprep.subr.mxu0 0.0
        %3876 = vmatpush1.msra.mxu0 0.0
        %3877 = vmatprep.subr.mxu0 0.0
        %3878 = vmatpush1.msra.mxu0 0.0
        %3879 = vmatprep.subr.mxu0 0.0
        %3880 = vmatpush1.msra.mxu0 0.0
        %3881 = vmatprep.subr.mxu0 0.0
        %3882 = vmatpush1.msra.mxu0 0.0
        %3883 = vmatprep.subr.mxu0 0.0
        %3884 = vmatpush1.msra.mxu0 0.0
        %3885 = vmatprep.subr.mxu0 0.0
        %3886 = vmatpush1.msra.mxu0 0.0
        %3887 = vmatprep.subr.mxu0 0.0
        %3888 = vmatpush1.msra.mxu0 0.0
        %3889 = vmatprep.subr.mxu0 0.0
        %3890 = vmatpush1.msra.mxu0 0.0
        %3891 = vmatprep.subr.mxu0 0.0
        %3892 = vmatpush1.msra.mxu0 0.0
        %3893 = vmatprep.subr.mxu0 0.0
        %3894 = vmatpush1.msra.mxu0 0.0
        %3895 = vmatprep.subr.mxu0 0.0
        %3896 = vmatpush1.msra.mxu0 0.0
        %3897 = vmatprep.subr.mxu0 0.0
        %3898 = vmatpush1.msra.mxu0 0.0
        %3899 = vmatprep.subr.mxu0 0.0
        %3900 = vmatpush1.msra.mxu0 0.0
        %3901 = vmatprep.subr.mxu0 0.0
        %3902 = vmatpush1.msra.mxu0 0.0
        %3903 = vmatprep.mubr.f32.mxu0 0.0
        %3904 = vmatmul.mubr.f32.gmra.mrb[0].mxu0 %v3837
        %v3905 = vpop.f32.mrb[0].mxu0
        %v3906 = vadd.f32 %v3834, %v3905
        %v3907 = vpop.f32.mrb[0].mxu0
        %v3908 = vadd.f32 %v3834, %v3907
        %3909 = vdwg.mxu0
        %3910 = vmatprep.subr.mxu0 %v3831
        %3911 = vmatpush1.msra.mxu0 %v3830
        %3912 = vmatprep.subr.mxu0 0.0
        %3913 = vmatpush1.msra.mxu0 0.0
        %3914 = vmatprep.subr.mxu0 0.0
        %3915 = vmatpush1.msra.mxu0 0.0
        %3916 = vmatprep.subr.mxu0 0.0
        %3917 = vmatpush1.msra.mxu0 0.0
        %3918 = vmatprep.subr.mxu0 0.0
        %3919 = vmatpush1.msra.mxu0 0.0
        %3920 = vmatprep.subr.mxu0 0.0
        %3921 = vmatpush1.msra.mxu0 0.0
        %3922 = vmatprep.subr.mxu0 0.0
        %3923 = vmatpush1.msra.mxu0 0.0
        %3924 = vmatprep.subr.mxu0 0.0
        %3925 = vmatpush1.msra.mxu0 0.0
        %3926 = vmatprep.subr.mxu0 0.0
        %3927 = vmatpush1.msra.mxu0 0.0
        %3928 = vmatprep.subr.mxu0 0.0
        %3929 = vmatpush1.msra.mxu0 0.0
        %3930 = vmatprep.subr.mxu0 0.0
        %3931 = vmatpush1.msra.mxu0 0.0
        %3932 = vmatprep.subr.mxu0 0.0
        %3933 = vmatpush1.msra.mxu0 0.0
        %3934 = vmatprep.subr.mxu0 0.0
        %3935 = vmatpush1.msra.mxu0 0.0
        %3936 = vmatprep.subr.mxu0 0.0
        %3937 = vmatpush1.msra.mxu0 0.0
        %3938 = vmatprep.subr.mxu0 0.0
        %3939 = vmatpush1.msra.mxu0 0.0
        %3940 = vmatprep.subr.mxu0 0.0
        %3941 = vmatpush1.msra.mxu0 0.0
        %3942 = vmatprep.subr.mxu0 0.0
        %3943 = vmatpush1.msra.mxu0 0.0
        %3944 = vmatprep.subr.mxu0 0.0
        %3945 = vmatpush1.msra.mxu0 0.0
        %3946 = vmatprep.subr.mxu0 0.0
        %3947 = vmatpush1.msra.mxu0 0.0
        %3948 = vmatprep.subr.mxu0 0.0
        %3949 = vmatpush1.msra.mxu0 0.0
        %3950 = vmatprep.subr.mxu0 0.0
        %3951 = vmatpush1.msra.mxu0 0.0
        %3952 = vmatprep.subr.mxu0 0.0
        %3953 = vmatpush1.msra.mxu0 0.0
        %3954 = vmatprep.subr.mxu0 0.0
        %3955 = vmatpush1.msra.mxu0 0.0
        %3956 = vmatprep.subr.mxu0 0.0
        %3957 = vmatpush1.msra.mxu0 0.0
        %3958 = vmatprep.subr.mxu0 0.0
        %3959 = vmatpush1.msra.mxu0 0.0
        %3960 = vmatprep.subr.mxu0 0.0
        %3961 = vmatpush1.msra.mxu0 0.0
        %3962 = vmatprep.subr.mxu0 0.0
        %3963 = vmatpush1.msra.mxu0 0.0
        %3964 = vmatprep.subr.mxu0 0.0
        %3965 = vmatpush1.msra.mxu0 0.0
        %3966 = vmatprep.subr.mxu0 0.0
        %3967 = vmatpush1.msra.mxu0 0.0
        %3968 = vmatprep.subr.mxu0 0.0
        %3969 = vmatpush1.msra.mxu0 0.0
        %3970 = vmatprep.subr.mxu0 0.0
        %3971 = vmatpush1.msra.mxu0 0.0
        %3972 = vmatprep.subr.mxu0 0.0
        %3973 = vmatpush1.msra.mxu0 0.0
        %3974 = vmatprep.mubr.f32.mxu0 0.0
        %3975 = vmatmul.mubr.f32.gmra.mrb[0].mxu0 %v3837
        %v3976 = vpop.f32.mrb[0].mxu0
        %v3977 = vadd.f32 %v3834, %v3976
        %v3978 = vpop.f32.mrb[0].mxu0
        %v3979 = vadd.f32 %v3834, %v3978
        %3980 = vdwg.mxu0
        %vm3981 = vcmp.ge.f32.partialorder %v3906, 0.0
        %vm3982 = vcmp.ge.f32.partialorder %v3908, 0.0
        %vm3983 = vcmp.ge.f32.partialorder %v3977, 0.0
        %vm3984 = vcmp.ge.f32.partialorder %v3979, 0.0
        %v3985 = vstv %s2852
        %v3986 = vmul.f32 %v3985, %v3906
        %v3987 = vmul.f32 %v3985, %v3908
        %v3988 = vmul.f32 %v3985, %v3977
        %v3989 = vmul.f32 %v3985, %v3979
        %v3990 = vsel %vm3981, %v3906, %v3986
        %v3991 = vsel %vm3982, %v3908, %v3987
        %v3992 = vsel %vm3983, %v3977, %v3988
        %v3993 = vsel %vm3984, %v3979, %v3989
        %v3994 = vsel %vm1071, %v3990, 0.0
        %v3995 = vsel %vm1072, %v3991, 0.0
        %v3996 = vsel %vm1073, %v3992, 0.0
        %v3997 = vsel %vm1074, %v3993, 0.0
        %v3998 = vrot.slane %v3994, 4
        %v3999 = vadd.f32 %v3994, %v3998
        %v4000 = vrot.slane %v3999, 2
        %v4001 = vadd.f32 %v3999, %v4000
        %v4002 = vrot.slane %v4001, 1
        %v4003 = vadd.f32 %v4001, %v4002
        %v4004 = vrot.slane %v3995, 4
        %v4005 = vadd.f32 %v3995, %v4004
        %v4006 = vrot.slane %v4005, 2
        %v4007 = vadd.f32 %v4005, %v4006
        %v4008 = vrot.slane %v4007, 1
        %v4009 = vadd.f32 %v4007, %v4008
        %v4010 = vrot.slane %v3996, 4
        %v4011 = vadd.f32 %v3996, %v4010
        %v4012 = vrot.slane %v4011, 2
        %v4013 = vadd.f32 %v4011, %v4012
        %v4014 = vrot.slane %v4013, 1
        %v4015 = vadd.f32 %v4013, %v4014
        %v4016 = vrot.slane %v3997, 4
        %v4017 = vadd.f32 %v3997, %v4016
        %v4018 = vrot.slane %v4017, 2
        %v4019 = vadd.f32 %v4017, %v4018
        %v4020 = vrot.slane %v4019, 1
        %v4021 = vadd.f32 %v4019, %v4020
        %v4022 = vmul.f32 %v3994, %v3994
        %v4023 = vmul.f32 %v3995, %v3995
        %v4024 = vmul.f32 %v3996, %v3996
        %v4025 = vmul.f32 %v3997, %v3997
        %v4026 = vrot.slane %v4022, 4
        %v4027 = vadd.f32 %v4022, %v4026
        %v4028 = vrot.slane %v4027, 2
        %v4029 = vadd.f32 %v4027, %v4028
        %v4030 = vrot.slane %v4029, 1
        %v4031 = vadd.f32 %v4029, %v4030
        %v4032 = vrot.slane %v4023, 4
        %v4033 = vadd.f32 %v4023, %v4032
        %v4034 = vrot.slane %v4033, 2
        %v4035 = vadd.f32 %v4033, %v4034
        %v4036 = vrot.slane %v4035, 1
        %v4037 = vadd.f32 %v4035, %v4036
        %v4038 = vrot.slane %v4024, 4
        %v4039 = vadd.f32 %v4024, %v4038
        %v4040 = vrot.slane %v4039, 2
        %v4041 = vadd.f32 %v4039, %v4040
        %v4042 = vrot.slane %v4041, 1
        %v4043 = vadd.f32 %v4041, %v4042
        %v4044 = vrot.slane %v4025, 4
        %v4045 = vadd.f32 %v4025, %v4044
        %v4046 = vrot.slane %v4045, 2
        %v4047 = vadd.f32 %v4045, %v4046
        %v4048 = vrot.slane %v4047, 1
        %v4049 = vadd.f32 %v4047, %v4048
        %v4050 = vsel %vm1131, %v4003, %v4031
        %v4051 = vsel %vm1131, %v4009, %v4037
        %v4052 = vsel %vm1131, %v4015, %v4043
        %v4053 = vsel %vm1131, %v4021, %v4049
        %4054 = vmatprep.subr.mxu0 0.0
        %4055 = vmatpush1.msra.mxu0 %v434
        %4056 = vmatprep.subr.mxu0 0.0
        %4057 = vmatpush1.msra.mxu0 %v435
        %4058 = vmatprep.subr.mxu0 0.0
        %4059 = vmatpush1.msra.mxu0 %v436
        %4060 = vmatprep.subr.mxu0 0.0
        %4061 = vmatpush1.msra.mxu0 %v437
        %4062 = vmatprep.subr.mxu0 0.0
        %4063 = vmatpush1.msra.mxu0 %v438
        %4064 = vmatprep.subr.mxu0 0.0
        %4065 = vmatpush1.msra.mxu0 %v439
        %4066 = vmatprep.subr.mxu0 0.0
        %4067 = vmatpush1.msra.mxu0 %v440
        %4068 = vmatprep.subr.mxu0 0.0
        %4069 = vmatpush1.msra.mxu0 %v441
        %4070 = vmatprep.subr.mxu0 0.0
        %4071 = vmatpush1.msra.mxu0 %v442
        %4072 = vmatprep.subr.mxu0 0.0
        %4073 = vmatpush1.msra.mxu0 %v443
        %4074 = vmatprep.subr.mxu0 0.0
        %4075 = vmatpush1.msra.mxu0 %v444
        %4076 = vmatprep.subr.mxu0 0.0
        %4077 = vmatpush1.msra.mxu0 %v445
        %4078 = vmatprep.subr.mxu0 0.0
        %4079 = vmatpush1.msra.mxu0 %v446
        %4080 = vmatprep.subr.mxu0 0.0
        %4081 = vmatpush1.msra.mxu0 %v447
        %4082 = vmatprep.subr.mxu0 0.0
        %4083 = vmatpush1.msra.mxu0 %v448
        %4084 = vmatprep.subr.mxu0 0.0
        %4085 = vmatpush1.msra.mxu0 %v449
        %4086 = vmatprep.subr.mxu0 0.0
        %4087 = vmatpush1.msra.mxu0 %v450
        %4088 = vmatprep.subr.mxu0 0.0
        %4089 = vmatpush1.msra.mxu0 %v451
        %4090 = vmatprep.subr.mxu0 0.0
        %4091 = vmatpush1.msra.mxu0 %v452
        %4092 = vmatprep.subr.mxu0 0.0
        %4093 = vmatpush1.msra.mxu0 %v453
        %4094 = vmatprep.subr.mxu0 0.0
        %4095 = vmatpush1.msra.mxu0 %v454
        %4096 = vmatprep.subr.mxu0 0.0
        %4097 = vmatpush1.msra.mxu0 %v455
        %4098 = vmatprep.subr.mxu0 0.0
        %4099 = vmatpush1.msra.mxu0 %v456
        %4100 = vmatprep.subr.mxu0 0.0
        %4101 = vmatpush1.msra.mxu0 %v457
        %4102 = vmatprep.subr.mxu0 0.0
        %4103 = vmatpush1.msra.mxu0 %v458
        %4104 = vmatprep.subr.mxu0 0.0
        %4105 = vmatpush1.msra.mxu0 %v459
        %4106 = vmatprep.subr.mxu0 0.0
        %4107 = vmatpush1.msra.mxu0 %v460
        %4108 = vmatprep.subr.mxu0 0.0
        %4109 = vmatpush1.msra.mxu0 %v461
        %4110 = vmatprep.subr.mxu0 0.0
        %4111 = vmatpush1.msra.mxu0 %v462
        %4112 = vmatprep.subr.mxu0 0.0
        %4113 = vmatpush1.msra.mxu0 %v463
        %4114 = vmatprep.subr.mxu0 0.0
        %4115 = vmatpush1.msra.mxu0 %v464
        %4116 = vmatprep.subr.mxu0 0.0
        %4117 = vmatpush1.msra.mxu0 %v465
        %4118 = vmatprep.mubr.f32.mxu0 %v4051
        %4119 = vmatmul.mubr.f32.gmra.mrb[0].mxu0 %v4050
        %v4120 = vpop.f32.mrb[0].mxu0
        %v4121 = vadd.f32 0.0, %v4120
        %v4122 = vpop.f32.mrb[0].mxu0
        %4123 = vdwg.mxu0
        %4124 = vmatprep.subr.mxu0 0.0
        %4125 = vmatpush1.msra.mxu0 %v466
        %4126 = vmatprep.subr.mxu0 0.0
        %4127 = vmatpush1.msra.mxu0 %v467
        %4128 = vmatprep.subr.mxu0 0.0
        %4129 = vmatpush1.msra.mxu0 %v468
        %4130 = vmatprep.subr.mxu0 0.0
        %4131 = vmatpush1.msra.mxu0 %v469
        %4132 = vmatprep.subr.mxu0 0.0
        %4133 = vmatpush1.msra.mxu0 %v470
        %4134 = vmatprep.subr.mxu0 0.0
        %4135 = vmatpush1.msra.mxu0 %v471
        %4136 = vmatprep.subr.mxu0 0.0
        %4137 = vmatpush1.msra.mxu0 %v472
        %4138 = vmatprep.subr.mxu0 0.0
        %4139 = vmatpush1.msra.mxu0 %v473
        %4140 = vmatprep.subr.mxu0 0.0
        %4141 = vmatpush1.msra.mxu0 %v474
        %4142 = vmatprep.subr.mxu0 0.0
        %4143 = vmatpush1.msra.mxu0 %v475
        %4144 = vmatprep.subr.mxu0 0.0
        %4145 = vmatpush1.msra.mxu0 %v476
        %4146 = vmatprep.subr.mxu0 0.0
        %4147 = vmatpush1.msra.mxu0 %v477
        %4148 = vmatprep.subr.mxu0 0.0
        %4149 = vmatpush1.msra.mxu0 %v478
        %4150 = vmatprep.subr.mxu0 0.0
        %4151 = vmatpush1.msra.mxu0 %v479
        %4152 = vmatprep.subr.mxu0 0.0
        %4153 = vmatpush1.msra.mxu0 %v480
        %4154 = vmatprep.subr.mxu0 0.0
        %4155 = vmatpush1.msra.mxu0 %v481
        %4156 = vmatprep.subr.mxu0 0.0
        %4157 = vmatpush1.msra.mxu0 %v482
        %4158 = vmatprep.subr.mxu0 0.0
        %4159 = vmatpush1.msra.mxu0 %v483
        %4160 = vmatprep.subr.mxu0 0.0
        %4161 = vmatpush1.msra.mxu0 %v484
        %4162 = vmatprep.subr.mxu0 0.0
        %4163 = vmatpush1.msra.mxu0 %v485
        %4164 = vmatprep.subr.mxu0 0.0
        %4165 = vmatpush1.msra.mxu0 %v486
        %4166 = vmatprep.subr.mxu0 0.0
        %4167 = vmatpush1.msra.mxu0 %v487
        %4168 = vmatprep.subr.mxu0 0.0
        %4169 = vmatpush1.msra.mxu0 %v488
        %4170 = vmatprep.subr.mxu0 0.0
        %4171 = vmatpush1.msra.mxu0 %v489
        %4172 = vmatprep.subr.mxu0 0.0
        %4173 = vmatpush1.msra.mxu0 %v490
        %4174 = vmatprep.subr.mxu0 0.0
        %4175 = vmatpush1.msra.mxu0 %v491
        %4176 = vmatprep.subr.mxu0 0.0
        %4177 = vmatpush1.msra.mxu0 %v492
        %4178 = vmatprep.subr.mxu0 0.0
        %4179 = vmatpush1.msra.mxu0 %v493
        %4180 = vmatprep.subr.mxu0 0.0
        %4181 = vmatpush1.msra.mxu0 %v494
        %4182 = vmatprep.subr.mxu0 0.0
        %4183 = vmatpush1.msra.mxu0 %v495
        %4184 = vmatprep.subr.mxu0 0.0
        %4185 = vmatpush1.msra.mxu0 %v496
        %4186 = vmatprep.subr.mxu0 0.0
        %4187 = vmatpush1.msra.mxu0 %v497
        %4188 = vmatprep.mubr.f32.mxu0 %v4053
        %4189 = vmatmul.mubr.f32.gmra.mrb[0].mxu0 %v4052
        %v4190 = vpop.f32.mrb[0].mxu0
        %v4191 = vadd.f32 %v4121, %v4190
        %v4192 = vpop.f32.mrb[0].mxu0
        %4193 = vdwg.mxu0
        %v4195 = vsel %vm1280, %v4191, 0
        %4197 = vmatprep.subr.mxu0 %v1287
        %4198 = vmatpush1.msra.mxu0 %v1285
        %4199 = vmatprep.subr.mxu0 0.0
        %4200 = vmatpush1.msra.mxu0 0.0
        %4201 = vmatprep.subr.mxu0 0.0
        %4202 = vmatpush1.msra.mxu0 0.0
        %4203 = vmatprep.subr.mxu0 0.0
        %4204 = vmatpush1.msra.mxu0 0.0
        %4205 = vmatprep.subr.mxu0 0.0
        %4206 = vmatpush1.msra.mxu0 0.0
        %4207 = vmatprep.subr.mxu0 0.0
        %4208 = vmatpush1.msra.mxu0 0.0
        %4209 = vmatprep.subr.mxu0 0.0
        %4210 = vmatpush1.msra.mxu0 0.0
        %4211 = vmatprep.subr.mxu0 0.0
        %4212 = vmatpush1.msra.mxu0 0.0
        %4213 = vmatprep.subr.mxu0 0.0
        %4214 = vmatpush1.msra.mxu0 0.0
        %4215 = vmatprep.subr.mxu0 0.0
        %4216 = vmatpush1.msra.mxu0 0.0
        %4217 = vmatprep.subr.mxu0 0.0
        %4218 = vmatpush1.msra.mxu0 0.0
        %4219 = vmatprep.subr.mxu0 0.0
        %4220 = vmatpush1.msra.mxu0 0.0
        %4221 = vmatprep.subr.mxu0 0.0
        %4222 = vmatpush1.msra.mxu0 0.0
        %4223 = vmatprep.subr.mxu0 0.0
        %4224 = vmatpush1.msra.mxu0 0.0
        %4225 = vmatprep.subr.mxu0 0.0
        %4226 = vmatpush1.msra.mxu0 0.0
        %4227 = vmatprep.subr.mxu0 0.0
        %4228 = vmatpush1.msra.mxu0 0.0
        %4229 = vmatprep.subr.mxu0 0.0
        %4230 = vmatpush1.msra.mxu0 0.0
        %4231 = vmatprep.subr.mxu0 0.0
        %4232 = vmatpush1.msra.mxu0 0.0
        %4233 = vmatprep.subr.mxu0 0.0
        %4234 = vmatpush1.msra.mxu0 0.0
        %4235 = vmatprep.subr.mxu0 0.0
        %4236 = vmatpush1.msra.mxu0 0.0
        %4237 = vmatprep.subr.mxu0 0.0
        %4238 = vmatpush1.msra.mxu0 0.0
        %4239 = vmatprep.subr.mxu0 0.0
        %4240 = vmatpush1.msra.mxu0 0.0
        %4241 = vmatprep.subr.mxu0 0.0
        %4242 = vmatpush1.msra.mxu0 0.0
        %4243 = vmatprep.subr.mxu0 0.0
        %4244 = vmatpush1.msra.mxu0 0.0
        %4245 = vmatprep.subr.mxu0 0.0
        %4246 = vmatpush1.msra.mxu0 0.0
        %4247 = vmatprep.subr.mxu0 0.0
        %4248 = vmatpush1.msra.mxu0 0.0
        %4249 = vmatprep.subr.mxu0 0.0
        %4250 = vmatpush1.msra.mxu0 0.0
        %4251 = vmatprep.subr.mxu0 0.0
        %4252 = vmatpush1.msra.mxu0 0.0
        %4253 = vmatprep.subr.mxu0 0.0
        %4254 = vmatpush1.msra.mxu0 0.0
        %4255 = vmatprep.subr.mxu0 0.0
        %4256 = vmatpush1.msra.mxu0 0.0
        %4257 = vmatprep.subr.mxu0 0.0
        %4258 = vmatpush1.msra.mxu0 0.0
        %4259 = vmatprep.subr.mxu0 0.0
        %4260 = vmatpush1.msra.mxu0 0.0
        %4261 = vmatprep.mubr.f32.mxu0 0.0
        %4262 = vmatmul.mubr.f32.gmra.mrb[0].mxu0 %v4195
        %v4263 = vpop.f32.mrb[0].mxu0
        %v4264 = vadd.f32 0.0, %v4263
        %v4265 = vpop.f32.mrb[0].mxu0
        %v4266 = vadd.f32 0.0, %v4265
        %4267 = vdwg.mxu0
        %4268 = vmatprep.subr.mxu0 %v1291
        %4269 = vmatpush1.msra.mxu0 %v1289
        %4270 = vmatprep.subr.mxu0 0.0
        %4271 = vmatpush1.msra.mxu0 0.0
        %4272 = vmatprep.subr.mxu0 0.0
        %4273 = vmatpush1.msra.mxu0 0.0
        %4274 = vmatprep.subr.mxu0 0.0
        %4275 = vmatpush1.msra.mxu0 0.0
        %4276 = vmatprep.subr.mxu0 0.0
        %4277 = vmatpush1.msra.mxu0 0.0
        %4278 = vmatprep.subr.mxu0 0.0
        %4279 = vmatpush1.msra.mxu0 0.0
        %4280 = vmatprep.subr.mxu0 0.0
        %4281 = vmatpush1.msra.mxu0 0.0
        %4282 = vmatprep.subr.mxu0 0.0
        %4283 = vmatpush1.msra.mxu0 0.0
        %4284 = vmatprep.subr.mxu0 0.0
        %4285 = vmatpush1.msra.mxu0 0.0
        %4286 = vmatprep.subr.mxu0 0.0
        %4287 = vmatpush1.msra.mxu0 0.0
        %4288 = vmatprep.subr.mxu0 0.0
        %4289 = vmatpush1.msra.mxu0 0.0
        %4290 = vmatprep.subr.mxu0 0.0
        %4291 = vmatpush1.msra.mxu0 0.0
        %4292 = vmatprep.subr.mxu0 0.0
        %4293 = vmatpush1.msra.mxu0 0.0
        %4294 = vmatprep.subr.mxu0 0.0
        %4295 = vmatpush1.msra.mxu0 0.0
        %4296 = vmatprep.subr.mxu0 0.0
        %4297 = vmatpush1.msra.mxu0 0.0
        %4298 = vmatprep.subr.mxu0 0.0
        %4299 = vmatpush1.msra.mxu0 0.0
        %4300 = vmatprep.subr.mxu0 0.0
        %4301 = vmatpush1.msra.mxu0 0.0
        %4302 = vmatprep.subr.mxu0 0.0
        %4303 = vmatpush1.msra.mxu0 0.0
        %4304 = vmatprep.subr.mxu0 0.0
        %4305 = vmatpush1.msra.mxu0 0.0
        %4306 = vmatprep.subr.mxu0 0.0
        %4307 = vmatpush1.msra.mxu0 0.0
        %4308 = vmatprep.subr.mxu0 0.0
        %4309 = vmatpush1.msra.mxu0 0.0
        %4310 = vmatprep.subr.mxu0 0.0
        %4311 = vmatpush1.msra.mxu0 0.0
        %4312 = vmatprep.subr.mxu0 0.0
        %4313 = vmatpush1.msra.mxu0 0.0
        %4314 = vmatprep.subr.mxu0 0.0
        %4315 = vmatpush1.msra.mxu0 0.0
        %4316 = vmatprep.subr.mxu0 0.0
        %4317 = vmatpush1.msra.mxu0 0.0
        %4318 = vmatprep.subr.mxu0 0.0
        %4319 = vmatpush1.msra.mxu0 0.0
        %4320 = vmatprep.subr.mxu0 0.0
        %4321 = vmatpush1.msra.mxu0 0.0
        %4322 = vmatprep.subr.mxu0 0.0
        %4323 = vmatpush1.msra.mxu0 0.0
        %4324 = vmatprep.subr.mxu0 0.0
        %4325 = vmatpush1.msra.mxu0 0.0
        %4326 = vmatprep.subr.mxu0 0.0
        %4327 = vmatpush1.msra.mxu0 0.0
        %4328 = vmatprep.subr.mxu0 0.0
        %4329 = vmatpush1.msra.mxu0 0.0
        %4330 = vmatprep.subr.mxu0 0.0
        %4331 = vmatpush1.msra.mxu0 0.0
        %4332 = vmatprep.mubr.f32.mxu0 0.0
        %4333 = vmatmul.mubr.f32.gmra.mrb[0].mxu0 %v4195
        %v4334 = vpop.f32.mrb[0].mxu0
        %v4335 = vadd.f32 0.0, %v4334
        %v4336 = vpop.f32.mrb[0].mxu0
        %v4337 = vadd.f32 0.0, %v4336
        %4338 = vdwg.mxu0
        %v4339 = vmul.f32 %v4264, 0.125
        %v4340 = vmul.f32 %v4266, 0.125
        %v4341 = vmul.f32 %v4335, 0.125
        %v4342 = vmul.f32 %v4337, 0.125
        %v4343 = vmul.f32 %v4339, %v4339
        %v4344 = vmul.f32 %v4340, %v4340
        %v4345 = vmul.f32 %v4341, %v4341
        %v4346 = vmul.f32 %v4342, %v4342
        %v4351 = vrot.slane %v4343, 7
        %v4352 = vrot.slane %v4344, 7
        %v4353 = vrot.slane %v4345, 7
        %v4354 = vrot.slane %v4346, 7
        %v4359 = vsub.f32 %v4339, %v4351
        %v4360 = vsub.f32 %v4340, %v4352
        %v4361 = vsub.f32 %v4341, %v4353
        %v4362 = vsub.f32 %v4342, %v4354
        %v4363 = vlaneseq
        %v4364 = vshrl.u32 %v4363, 7
        %v4365 = vsub.s32 0, %v4364
        %v4366 = vrot.slane %v4339, %v4365
        %v4367 = vlaneseq
        %v4368 = vshrl.u32 %v4367, 7
        %v4369 = vsub.s32 0, %v4368
        %v4370 = vrot.slane %v4340, %v4369
        %v4371 = vlaneseq
        %v4372 = vshrl.u32 %v4371, 7
        %v4373 = vsub.s32 0, %v4372
        %v4374 = vrot.slane %v4341, %v4373
        %v4375 = vlaneseq
        %v4376 = vshrl.u32 %v4375, 7
        %v4377 = vsub.s32 0, %v4376
        %v4378 = vrot.slane %v4342, %v4377
        %v4379 = vsub.f32 %v3990, %v4366
        %v4380 = vsub.f32 %v3991, %v4370
        %v4381 = vsub.f32 %v3992, %v4374
        %v4382 = vsub.f32 %v3993, %v4378
        %v4383 = vadd.f32 %v4359, 1e-08
        %v4384 = vadd.f32 %v4360, 1e-08
        %v4385 = vadd.f32 %v4361, 1e-08
        %v4386 = vadd.f32 %v4362, 1e-08
        %v4387 = vrsqrt.pop %v4383
        %v4388 = vrsqrt.pop %v4384
        %v4389 = vrsqrt.pop %v4385
        %v4390 = vrsqrt.pop %v4386
        %v4391 = vlaneseq
        %v4392 = vshrl.u32 %v4391, 7
        %v4393 = vsub.s32 1, %v4392
        %v4394 = vrot.slane %v4387, %v4393
        %v4395 = vlaneseq
        %v4396 = vshrl.u32 %v4395, 7
        %v4397 = vsub.s32 1, %v4396
        %v4398 = vrot.slane %v4388, %v4397
        %v4399 = vlaneseq
        %v4400 = vshrl.u32 %v4399, 7
        %v4401 = vsub.s32 1, %v4400
        %v4402 = vrot.slane %v4389, %v4401
        %v4403 = vlaneseq
        %v4404 = vshrl.u32 %v4403, 7
        %v4405 = vsub.s32 1, %v4404
        %v4406 = vrot.slane %v4390, %v4405
        %v4407 = vmul.f32 %v4379, %v4394
        %v4408 = vmul.f32 %v4380, %v4398
        %v4409 = vmul.f32 %v4381, %v4402
        %v4410 = vmul.f32 %v4382, %v4406
        %4411 = vset.pattern.permute.xlu0 18
        %4412 = vperm.xlu0 %4411, %v431
        %v4413 = vpop.permute.xlu0 %4412
        %v4415 = vmul.f32 %v4407, %v4413
        %v4416 = vmul.f32 %v4408, %v4413
        %v4417 = vmul.f32 %v4409, %v4413
        %v4418 = vmul.f32 %v4410, %v4413
        %4419 = vset.pattern.permute.xlu0 19
        %4420 = vperm.xlu0 %4419, %v431
        %v4421 = vpop.permute.xlu0 %4420
        %v4423 = vadd.f32 %v4415, %v4421
        %v4424 = vadd.f32 %v4416, %v4421
        %v4425 = vadd.f32 %v4417, %v4421
        %v4426 = vadd.f32 %v4418, %v4421
        %s4427 = scalar_lea.vmem %s6, 8
        %v4428 = vld [vmem:[%s4427] sm:$0xff]
        %4429 = vrot.lane.b32.xlu0 %v4423, 2
        %v4430 = vpop.permute.xlu0 %4429
        %4431 = vrot.lane.b32.xlu0 %v4424, 2
        %v4432 = vpop.permute.xlu0 %4431
        %4433 = vrot.lane.b32.xlu0 %v4425, 2
        %v4434 = vpop.permute.xlu0 %4433
        %4435 = vrot.lane.b32.xlu0 %v4426, 2
        %v4436 = vpop.permute.xlu0 %4435
        %vm4437 = vcmp.lt.s32.totalorder %v2141, 2
        %v4438 = vsel %vm4437, %v4434, %v4436
        %v4439 = vsel %vm4437, %v4432, %v4434
        %v4440 = vsel %vm4437, %v4430, %v4432
        %v4441 = vsel %vm4437, %v4436, %v4430
        %v4442 = vlaneseq
        %v4443 = vshrl.u32 %v4442, 7
        %v4444 = vsub.s32 3, %v4443
        %v4445 = vrot.slane %v1051, %v4444
        %v4446 = vlaneseq
        %v4447 = vshrl.u32 %v4446, 7
        %v4448 = vsub.s32 3, %v4447
        %v4449 = vrot.slane %v1052, %v4448
        %v4450 = vlaneseq
        %v4451 = vshrl.u32 %v4450, 7
        %v4452 = vsub.s32 3, %v4451
        %v4453 = vrot.slane %v1053, %v4452
        %v4454 = vlaneseq
        %v4455 = vshrl.u32 %v4454, 7
        %v4456 = vsub.s32 3, %v4455
        %v4457 = vrot.slane %v1054, %v4456
        %vm4458 = vcmp.eq.s32.totalorder %v4445, 1
        %vm4459 = vcmp.eq.s32.totalorder %v4449, 1
        %vm4460 = vcmp.eq.s32.totalorder %v4453, 1
        %vm4461 = vcmp.eq.s32.totalorder %v4457, 1
        %v4462 = vsel %vm4458, %v4441, 0.0
        %v4463 = vsel %vm4459, %v4440, 0.0
        %v4464 = vsel %vm4460, %v4439, 0.0
        %v4465 = vsel %vm4461, %v4438, 0.0
        %4467 = vset.pattern.permute.xlu0 0
        %4468 = vperm.xlu0 %4467, %v4428
        %v4469 = vpop.permute.xlu0 %4468
        %v4471 = vmul.f32 %v4469, %v4462
        %v4472 = vmul.f32 %v4469, %v4463
        %v4473 = vmul.f32 %v4469, %v4464
        %v4474 = vmul.f32 %v4469, %v4465
        %4475 = vset.pattern.permute.xlu0 1
        %4476 = vperm.xlu0 %4475, %v4428
        %v4477 = vpop.permute.xlu0 %4476
        %v4479 = vmul.f32 %v4477, %v4423
        %v4480 = vmul.f32 %v4477, %v4424
        %v4481 = vmul.f32 %v4477, %v4425
        %v4482 = vmul.f32 %v4477, %v4426
        %v4483 = vadd.f32 %v4471, %v4479
        %v4484 = vadd.f32 %v4472, %v4480
        %v4485 = vadd.f32 %v4473, %v4481
        %v4486 = vadd.f32 %v4474, %v4482
        %4487 = vrot.lane.b32.xlu0 %v4423, 126
        %v4488 = vpop.permute.xlu0 %4487
        %4489 = vrot.lane.b32.xlu0 %v4424, 126
        %v4490 = vpop.permute.xlu0 %4489
        %4491 = vrot.lane.b32.xlu0 %v4425, 126
        %v4492 = vpop.permute.xlu0 %4491
        %4493 = vrot.lane.b32.xlu0 %v4426, 126
        %v4494 = vpop.permute.xlu0 %4493
        %vm4495 = vcmp.lt.s32.totalorder %v2141, 126
        %v4496 = vsel %vm4495, %v4492, %v4494
        %v4497 = vsel %vm4495, %v4490, %v4492
        %v4498 = vsel %vm4495, %v4488, %v4490
        %v4499 = vsel %vm4495, %v4494, %v4488
        %v4500 = vlaneseq
        %v4501 = vshrl.u32 %v4500, 7
        %v4502 = vsub.s32 4, %v4501
        %v4503 = vrot.slane %v1051, %v4502
        %v4504 = vlaneseq
        %v4505 = vshrl.u32 %v4504, 7
        %v4506 = vsub.s32 4, %v4505
        %v4507 = vrot.slane %v1052, %v4506
        %v4508 = vlaneseq
        %v4509 = vshrl.u32 %v4508, 7
        %v4510 = vsub.s32 4, %v4509
        %v4511 = vrot.slane %v1053, %v4510
        %v4512 = vlaneseq
        %v4513 = vshrl.u32 %v4512, 7
        %v4514 = vsub.s32 4, %v4513
        %v4515 = vrot.slane %v1054, %v4514
        %vm4516 = vcmp.eq.s32.totalorder %v4503, 1
        %vm4517 = vcmp.eq.s32.totalorder %v4507, 1
        %vm4518 = vcmp.eq.s32.totalorder %v4511, 1
        %vm4519 = vcmp.eq.s32.totalorder %v4515, 1
        %v4520 = vsel %vm4516, %v4498, 0.0
        %v4521 = vsel %vm4517, %v4497, 0.0
        %v4522 = vsel %vm4518, %v4496, 0.0
        %v4523 = vsel %vm4519, %v4499, 0.0
        %4524 = vset.pattern.permute.xlu0 2
        %4525 = vperm.xlu0 %4524, %v4428
        %v4526 = vpop.permute.xlu0 %4525
        %v4528 = vmul.f32 %v4526, %v4520
        %v4529 = vmul.f32 %v4526, %v4521
        %v4530 = vmul.f32 %v4526, %v4522
        %v4531 = vmul.f32 %v4526, %v4523
        %v4532 = vadd.f32 %v4483, %v4528
        %v4533 = vadd.f32 %v4484, %v4529
        %v4534 = vadd.f32 %v4485, %v4530
        %v4535 = vadd.f32 %v4486, %v4531
        %4536 = vset.pattern.permute.xlu0 20
        %4537 = vperm.xlu0 %4536, %v431
        %v4538 = vpop.permute.xlu0 %4537
        %v4540 = vadd.f32 %v4532, %v4538
        %v4541 = vadd.f32 %v4533, %v4538
        %v4542 = vadd.f32 %v4534, %v4538
        %v4543 = vadd.f32 %v4535, %v4538
        %vm4544 = vcmp.ge.f32.partialorder %v4540, 0.0
        %vm4545 = vcmp.ge.f32.partialorder %v4541, 0.0
        %vm4546 = vcmp.ge.f32.partialorder %v4542, 0.0
        %vm4547 = vcmp.ge.f32.partialorder %v4543, 0.0
        %v4548 = vstv %s2853
        %v4549 = vmul.f32 %v4548, %v4540
        %v4550 = vmul.f32 %v4548, %v4541
        %v4551 = vmul.f32 %v4548, %v4542
        %v4552 = vmul.f32 %v4548, %v4543
        %v4553 = vsel %vm4544, %v4540, %v4549
        %v4554 = vsel %vm4545, %v4541, %v4550
        %v4555 = vsel %vm4546, %v4542, %v4551
        %v4556 = vsel %vm4547, %v4543, %v4552
        %v4557 = vsel %vm1071, %v4553, 0.0
        %v4558 = vsel %vm1072, %v4554, 0.0
        %v4559 = vsel %vm1073, %v4555, 0.0
        %v4560 = vsel %vm1074, %v4556, 0.0
        %v4561 = vrot.slane %v4557, 4
        %v4562 = vadd.f32 %v4557, %v4561
        %v4563 = vrot.slane %v4562, 2
        %v4564 = vadd.f32 %v4562, %v4563
        %v4565 = vrot.slane %v4564, 1
        %v4566 = vadd.f32 %v4564, %v4565
        %v4567 = vrot.slane %v4558, 4
        %v4568 = vadd.f32 %v4558, %v4567
        %v4569 = vrot.slane %v4568, 2
        %v4570 = vadd.f32 %v4568, %v4569
        %v4571 = vrot.slane %v4570, 1
        %v4572 = vadd.f32 %v4570, %v4571
        %v4573 = vrot.slane %v4559, 4
        %v4574 = vadd.f32 %v4559, %v4573
        %v4575 = vrot.slane %v4574, 2
        %v4576 = vadd.f32 %v4574, %v4575
        %v4577 = vrot.slane %v4576, 1
        %v4578 = vadd.f32 %v4576, %v4577
        %v4579 = vrot.slane %v4560, 4
        %v4580 = vadd.f32 %v4560, %v4579
        %v4581 = vrot.slane %v4580, 2
        %v4582 = vadd.f32 %v4580, %v4581
        %v4583 = vrot.slane %v4582, 1
        %v4584 = vadd.f32 %v4582, %v4583
        %v4585 = vmul.f32 %v4557, %v4557
        %v4586 = vmul.f32 %v4558, %v4558
        %v4587 = vmul.f32 %v4559, %v4559
        %v4588 = vmul.f32 %v4560, %v4560
        %v4589 = vrot.slane %v4585, 4
        %v4590 = vadd.f32 %v4585, %v4589
        %v4591 = vrot.slane %v4590, 2
        %v4592 = vadd.f32 %v4590, %v4591
        %v4593 = vrot.slane %v4592, 1
        %v4594 = vadd.f32 %v4592, %v4593
        %v4595 = vrot.slane %v4586, 4
        %v4596 = vadd.f32 %v4586, %v4595
        %v4597 = vrot.slane %v4596, 2
        %v4598 = vadd.f32 %v4596, %v4597
        %v4599 = vrot.slane %v4598, 1
        %v4600 = vadd.f32 %v4598, %v4599
        %v4601 = vrot.slane %v4587, 4
        %v4602 = vadd.f32 %v4587, %v4601
        %v4603 = vrot.slane %v4602, 2
        %v4604 = vadd.f32 %v4602, %v4603
        %v4605 = vrot.slane %v4604, 1
        %v4606 = vadd.f32 %v4604, %v4605
        %v4607 = vrot.slane %v4588, 4
        %v4608 = vadd.f32 %v4588, %v4607
        %v4609 = vrot.slane %v4608, 2
        %v4610 = vadd.f32 %v4608, %v4609
        %v4611 = vrot.slane %v4610, 1
        %v4612 = vadd.f32 %v4610, %v4611
        %v4613 = vsel %vm1131, %v4566, %v4594
        %v4614 = vsel %vm1131, %v4572, %v4600
        %v4615 = vsel %vm1131, %v4578, %v4606
        %v4616 = vsel %vm1131, %v4584, %v4612
        %4617 = vmatprep.subr.mxu0 0.0
        %4618 = vmatpush1.msra.mxu0 %v434
        %4619 = vmatprep.subr.mxu0 0.0
        %4620 = vmatpush1.msra.mxu0 %v435
        %4621 = vmatprep.subr.mxu0 0.0
        %4622 = vmatpush1.msra.mxu0 %v436
        %4623 = vmatprep.subr.mxu0 0.0
        %4624 = vmatpush1.msra.mxu0 %v437
        %4625 = vmatprep.subr.mxu0 0.0
        %4626 = vmatpush1.msra.mxu0 %v438
        %4627 = vmatprep.subr.mxu0 0.0
        %4628 = vmatpush1.msra.mxu0 %v439
        %4629 = vmatprep.subr.mxu0 0.0
        %4630 = vmatpush1.msra.mxu0 %v440
        %4631 = vmatprep.subr.mxu0 0.0
        %4632 = vmatpush1.msra.mxu0 %v441
        %4633 = vmatprep.subr.mxu0 0.0
        %4634 = vmatpush1.msra.mxu0 %v442
        %4635 = vmatprep.subr.mxu0 0.0
        %4636 = vmatpush1.msra.mxu0 %v443
        %4637 = vmatprep.subr.mxu0 0.0
        %4638 = vmatpush1.msra.mxu0 %v444
        %4639 = vmatprep.subr.mxu0 0.0
        %4640 = vmatpush1.msra.mxu0 %v445
        %4641 = vmatprep.subr.mxu0 0.0
        %4642 = vmatpush1.msra.mxu0 %v446
        %4643 = vmatprep.subr.mxu0 0.0
        %4644 = vmatpush1.msra.mxu0 %v447
        %4645 = vmatprep.subr.mxu0 0.0
        %4646 = vmatpush1.msra.mxu0 %v448
        %4647 = vmatprep.subr.mxu0 0.0
        %4648 = vmatpush1.msra.mxu0 %v449
        %4649 = vmatprep.subr.mxu0 0.0
        %4650 = vmatpush1.msra.mxu0 %v450
        %4651 = vmatprep.subr.mxu0 0.0
        %4652 = vmatpush1.msra.mxu0 %v451
        %4653 = vmatprep.subr.mxu0 0.0
        %4654 = vmatpush1.msra.mxu0 %v452
        %4655 = vmatprep.subr.mxu0 0.0
        %4656 = vmatpush1.msra.mxu0 %v453
        %4657 = vmatprep.subr.mxu0 0.0
        %4658 = vmatpush1.msra.mxu0 %v454
        %4659 = vmatprep.subr.mxu0 0.0
        %4660 = vmatpush1.msra.mxu0 %v455
        %4661 = vmatprep.subr.mxu0 0.0
        %4662 = vmatpush1.msra.mxu0 %v456
        %4663 = vmatprep.subr.mxu0 0.0
        %4664 = vmatpush1.msra.mxu0 %v457
        %4665 = vmatprep.subr.mxu0 0.0
        %4666 = vmatpush1.msra.mxu0 %v458
        %4667 = vmatprep.subr.mxu0 0.0
        %4668 = vmatpush1.msra.mxu0 %v459
        %4669 = vmatprep.subr.mxu0 0.0
        %4670 = vmatpush1.msra.mxu0 %v460
        %4671 = vmatprep.subr.mxu0 0.0
        %4672 = vmatpush1.msra.mxu0 %v461
        %4673 = vmatprep.subr.mxu0 0.0
        %4674 = vmatpush1.msra.mxu0 %v462
        %4675 = vmatprep.subr.mxu0 0.0
        %4676 = vmatpush1.msra.mxu0 %v463
        %4677 = vmatprep.subr.mxu0 0.0
        %4678 = vmatpush1.msra.mxu0 %v464
        %4679 = vmatprep.subr.mxu0 0.0
        %4680 = vmatpush1.msra.mxu0 %v465
        %4681 = vmatprep.mubr.f32.mxu0 %v4614
        %4682 = vmatmul.mubr.f32.gmra.mrb[0].mxu0 %v4613
        %v4683 = vpop.f32.mrb[0].mxu0
        %v4684 = vadd.f32 0.0, %v4683
        %v4685 = vpop.f32.mrb[0].mxu0
        %4686 = vdwg.mxu0
        %4687 = vmatprep.subr.mxu0 0.0
        %4688 = vmatpush1.msra.mxu0 %v466
        %4689 = vmatprep.subr.mxu0 0.0
        %4690 = vmatpush1.msra.mxu0 %v467
        %4691 = vmatprep.subr.mxu0 0.0
        %4692 = vmatpush1.msra.mxu0 %v468
        %4693 = vmatprep.subr.mxu0 0.0
        %4694 = vmatpush1.msra.mxu0 %v469
        %4695 = vmatprep.subr.mxu0 0.0
        %4696 = vmatpush1.msra.mxu0 %v470
        %4697 = vmatprep.subr.mxu0 0.0
        %4698 = vmatpush1.msra.mxu0 %v471
        %4699 = vmatprep.subr.mxu0 0.0
        %4700 = vmatpush1.msra.mxu0 %v472
        %4701 = vmatprep.subr.mxu0 0.0
        %4702 = vmatpush1.msra.mxu0 %v473
        %4703 = vmatprep.subr.mxu0 0.0
        %4704 = vmatpush1.msra.mxu0 %v474
        %4705 = vmatprep.subr.mxu0 0.0
        %4706 = vmatpush1.msra.mxu0 %v475
        %4707 = vmatprep.subr.mxu0 0.0
        %4708 = vmatpush1.msra.mxu0 %v476
        %4709 = vmatprep.subr.mxu0 0.0
        %4710 = vmatpush1.msra.mxu0 %v477
        %4711 = vmatprep.subr.mxu0 0.0
        %4712 = vmatpush1.msra.mxu0 %v478
        %4713 = vmatprep.subr.mxu0 0.0
        %4714 = vmatpush1.msra.mxu0 %v479
        %4715 = vmatprep.subr.mxu0 0.0
        %4716 = vmatpush1.msra.mxu0 %v480
        %4717 = vmatprep.subr.mxu0 0.0
        %4718 = vmatpush1.msra.mxu0 %v481
        %4719 = vmatprep.subr.mxu0 0.0
        %4720 = vmatpush1.msra.mxu0 %v482
        %4721 = vmatprep.subr.mxu0 0.0
        %4722 = vmatpush1.msra.mxu0 %v483
        %4723 = vmatprep.subr.mxu0 0.0
        %4724 = vmatpush1.msra.mxu0 %v484
        %4725 = vmatprep.subr.mxu0 0.0
        %4726 = vmatpush1.msra.mxu0 %v485
        %4727 = vmatprep.subr.mxu0 0.0
        %4728 = vmatpush1.msra.mxu0 %v486
        %4729 = vmatprep.subr.mxu0 0.0
        %4730 = vmatpush1.msra.mxu0 %v487
        %4731 = vmatprep.subr.mxu0 0.0
        %4732 = vmatpush1.msra.mxu0 %v488
        %4733 = vmatprep.subr.mxu0 0.0
        %4734 = vmatpush1.msra.mxu0 %v489
        %4735 = vmatprep.subr.mxu0 0.0
        %4736 = vmatpush1.msra.mxu0 %v490
        %4737 = vmatprep.subr.mxu0 0.0
        %4738 = vmatpush1.msra.mxu0 %v491
        %4739 = vmatprep.subr.mxu0 0.0
        %4740 = vmatpush1.msra.mxu0 %v492
        %4741 = vmatprep.subr.mxu0 0.0
        %4742 = vmatpush1.msra.mxu0 %v493
        %4743 = vmatprep.subr.mxu0 0.0
        %4744 = vmatpush1.msra.mxu0 %v494
        %4745 = vmatprep.subr.mxu0 0.0
        %4746 = vmatpush1.msra.mxu0 %v495
        %4747 = vmatprep.subr.mxu0 0.0
        %4748 = vmatpush1.msra.mxu0 %v496
        %4749 = vmatprep.subr.mxu0 0.0
        %4750 = vmatpush1.msra.mxu0 %v497
        %4751 = vmatprep.mubr.f32.mxu0 %v4616
        %4752 = vmatmul.mubr.f32.gmra.mrb[0].mxu0 %v4615
        %v4753 = vpop.f32.mrb[0].mxu0
        %v4754 = vadd.f32 %v4684, %v4753
        %v4755 = vpop.f32.mrb[0].mxu0
        %4756 = vdwg.mxu0
        %v4758 = vsel %vm1280, %v4754, 0
        %4760 = vmatprep.subr.mxu0 %v1287
        %4761 = vmatpush1.msra.mxu0 %v1285
        %4762 = vmatprep.subr.mxu0 0.0
        %4763 = vmatpush1.msra.mxu0 0.0
        %4764 = vmatprep.subr.mxu0 0.0
        %4765 = vmatpush1.msra.mxu0 0.0
        %4766 = vmatprep.subr.mxu0 0.0
        %4767 = vmatpush1.msra.mxu0 0.0
        %4768 = vmatprep.subr.mxu0 0.0
        %4769 = vmatpush1.msra.mxu0 0.0
        %4770 = vmatprep.subr.mxu0 0.0
        %4771 = vmatpush1.msra.mxu0 0.0
        %4772 = vmatprep.subr.mxu0 0.0
        %4773 = vmatpush1.msra.mxu0 0.0
        %4774 = vmatprep.subr.mxu0 0.0
        %4775 = vmatpush1.msra.mxu0 0.0
        %4776 = vmatprep.subr.mxu0 0.0
        %4777 = vmatpush1.msra.mxu0 0.0
        %4778 = vmatprep.subr.mxu0 0.0
        %4779 = vmatpush1.msra.mxu0 0.0
        %4780 = vmatprep.subr.mxu0 0.0
        %4781 = vmatpush1.msra.mxu0 0.0
        %4782 = vmatprep.subr.mxu0 0.0
        %4783 = vmatpush1.msra.mxu0 0.0
        %4784 = vmatprep.subr.mxu0 0.0
        %4785 = vmatpush1.msra.mxu0 0.0
        %4786 = vmatprep.subr.mxu0 0.0
        %4787 = vmatpush1.msra.mxu0 0.0
        %4788 = vmatprep.subr.mxu0 0.0
        %4789 = vmatpush1.msra.mxu0 0.0
        %4790 = vmatprep.subr.mxu0 0.0
        %4791 = vmatpush1.msra.mxu0 0.0
        %4792 = vmatprep.subr.mxu0 0.0
        %4793 = vmatpush1.msra.mxu0 0.0
        %4794 = vmatprep.subr.mxu0 0.0
        %4795 = vmatpush1.msra.mxu0 0.0
        %4796 = vmatprep.subr.mxu0 0.0
        %4797 = vmatpush1.msra.mxu0 0.0
        %4798 = vmatprep.subr.mxu0 0.0
        %4799 = vmatpush1.msra.mxu0 0.0
        %4800 = vmatprep.subr.mxu0 0.0
        %4801 = vmatpush1.msra.mxu0 0.0
        %4802 = vmatprep.subr.mxu0 0.0
        %4803 = vmatpush1.msra.mxu0 0.0
        %4804 = vmatprep.subr.mxu0 0.0
        %4805 = vmatpush1.msra.mxu0 0.0
        %4806 = vmatprep.subr.mxu0 0.0
        %4807 = vmatpush1.msra.mxu0 0.0
        %4808 = vmatprep.subr.mxu0 0.0
        %4809 = vmatpush1.msra.mxu0 0.0
        %4810 = vmatprep.subr.mxu0 0.0
        %4811 = vmatpush1.msra.mxu0 0.0
        %4812 = vmatprep.subr.mxu0 0.0
        %4813 = vmatpush1.msra.mxu0 0.0
        %4814 = vmatprep.subr.mxu0 0.0
        %4815 = vmatpush1.msra.mxu0 0.0
        %4816 = vmatprep.subr.mxu0 0.0
        %4817 = vmatpush1.msra.mxu0 0.0
        %4818 = vmatprep.subr.mxu0 0.0
        %4819 = vmatpush1.msra.mxu0 0.0
        %4820 = vmatprep.subr.mxu0 0.0
        %4821 = vmatpush1.msra.mxu0 0.0
        %4822 = vmatprep.subr.mxu0 0.0
        %4823 = vmatpush1.msra.mxu0 0.0
        %4824 = vmatprep.mubr.f32.mxu0 0.0
        %4825 = vmatmul.mubr.f32.gmra.mrb[0].mxu0 %v4758
        %v4826 = vpop.f32.mrb[0].mxu0
        %v4827 = vadd.f32 0.0, %v4826
        %v4828 = vpop.f32.mrb[0].mxu0
        %v4829 = vadd.f32 0.0, %v4828
        %4830 = vdwg.mxu0
        %4831 = vmatprep.subr.mxu0 %v1291
        %4832 = vmatpush1.msra.mxu0 %v1289
        %4833 = vmatprep.subr.mxu0 0.0
        %4834 = vmatpush1.msra.mxu0 0.0
        %4835 = vmatprep.subr.mxu0 0.0
        %4836 = vmatpush1.msra.mxu0 0.0
        %4837 = vmatprep.subr.mxu0 0.0
        %4838 = vmatpush1.msra.mxu0 0.0
        %4839 = vmatprep.subr.mxu0 0.0
        %4840 = vmatpush1.msra.mxu0 0.0
        %4841 = vmatprep.subr.mxu0 0.0
        %4842 = vmatpush1.msra.mxu0 0.0
        %4843 = vmatprep.subr.mxu0 0.0
        %4844 = vmatpush1.msra.mxu0 0.0
        %4845 = vmatprep.subr.mxu0 0.0
        %4846 = vmatpush1.msra.mxu0 0.0
        %4847 = vmatprep.subr.mxu0 0.0
        %4848 = vmatpush1.msra.mxu0 0.0
        %4849 = vmatprep.subr.mxu0 0.0
        %4850 = vmatpush1.msra.mxu0 0.0
        %4851 = vmatprep.subr.mxu0 0.0
        %4852 = vmatpush1.msra.mxu0 0.0
        %4853 = vmatprep.subr.mxu0 0.0
        %4854 = vmatpush1.msra.mxu0 0.0
        %4855 = vmatprep.subr.mxu0 0.0
        %4856 = vmatpush1.msra.mxu0 0.0
        %4857 = vmatprep.subr.mxu0 0.0
        %4858 = vmatpush1.msra.mxu0 0.0
        %4859 = vmatprep.subr.mxu0 0.0
        %4860 = vmatpush1.msra.mxu0 0.0
        %4861 = vmatprep.subr.mxu0 0.0
        %4862 = vmatpush1.msra.mxu0 0.0
        %4863 = vmatprep.subr.mxu0 0.0
        %4864 = vmatpush1.msra.mxu0 0.0
        %4865 = vmatprep.subr.mxu0 0.0
        %4866 = vmatpush1.msra.mxu0 0.0
        %4867 = vmatprep.subr.mxu0 0.0
        %4868 = vmatpush1.msra.mxu0 0.0
        %4869 = vmatprep.subr.mxu0 0.0
        %4870 = vmatpush1.msra.mxu0 0.0
        %4871 = vmatprep.subr.mxu0 0.0
        %4872 = vmatpush1.msra.mxu0 0.0
        %4873 = vmatprep.subr.mxu0 0.0
        %4874 = vmatpush1.msra.mxu0 0.0
        %4875 = vmatprep.subr.mxu0 0.0
        %4876 = vmatpush1.msra.mxu0 0.0
        %4877 = vmatprep.subr.mxu0 0.0
        %4878 = vmatpush1.msra.mxu0 0.0
        %4879 = vmatprep.subr.mxu0 0.0
        %4880 = vmatpush1.msra.mxu0 0.0
        %4881 = vmatprep.subr.mxu0 0.0
        %4882 = vmatpush1.msra.mxu0 0.0
        %4883 = vmatprep.subr.mxu0 0.0
        %4884 = vmatpush1.msra.mxu0 0.0
        %4885 = vmatprep.subr.mxu0 0.0
        %4886 = vmatpush1.msra.mxu0 0.0
        %4887 = vmatprep.subr.mxu0 0.0
        %4888 = vmatpush1.msra.mxu0 0.0
        %4889 = vmatprep.subr.mxu0 0.0
        %4890 = vmatpush1.msra.mxu0 0.0
        %4891 = vmatprep.subr.mxu0 0.0
        %4892 = vmatpush1.msra.mxu0 0.0
        %4893 = vmatprep.subr.mxu0 0.0
        %4894 = vmatpush1.msra.mxu0 0.0
        %4895 = vmatprep.mubr.f32.mxu0 0.0
        %4896 = vmatmul.mubr.f32.gmra.mrb[0].mxu0 %v4758
        %v4897 = vpop.f32.mrb[0].mxu0
        %v4898 = vadd.f32 0.0, %v4897
        %v4899 = vpop.f32.mrb[0].mxu0
        %v4900 = vadd.f32 0.0, %v4899
        %4901 = vdwg.mxu0
        %v4902 = vmul.f32 %v4827, 0.125
        %v4903 = vmul.f32 %v4829, 0.125
        %v4904 = vmul.f32 %v4898, 0.125
        %v4905 = vmul.f32 %v4900, 0.125
        %v4906 = vmul.f32 %v4902, %v4902
        %v4907 = vmul.f32 %v4903, %v4903
        %v4908 = vmul.f32 %v4904, %v4904
        %v4909 = vmul.f32 %v4905, %v4905
        %v4914 = vrot.slane %v4906, 7
        %v4915 = vrot.slane %v4907, 7
        %v4916 = vrot.slane %v4908, 7
        %v4917 = vrot.slane %v4909, 7
        %v4922 = vsub.f32 %v4902, %v4914
        %v4923 = vsub.f32 %v4903, %v4915
        %v4924 = vsub.f32 %v4904, %v4916
        %v4925 = vsub.f32 %v4905, %v4917
        %v4926 = vlaneseq
        %v4927 = vshrl.u32 %v4926, 7
        %v4928 = vsub.s32 0, %v4927
        %v4929 = vrot.slane %v4902, %v4928
        %v4930 = vlaneseq
        %v4931 = vshrl.u32 %v4930, 7
        %v4932 = vsub.s32 0, %v4931
        %v4933 = vrot.slane %v4903, %v4932
        %v4934 = vlaneseq
        %v4935 = vshrl.u32 %v4934, 7
        %v4936 = vsub.s32 0, %v4935
        %v4937 = vrot.slane %v4904, %v4936
        %v4938 = vlaneseq
        %v4939 = vshrl.u32 %v4938, 7
        %v4940 = vsub.s32 0, %v4939
        %v4941 = vrot.slane %v4905, %v4940
        %v4942 = vsub.f32 %v4553, %v4929
        %v4943 = vsub.f32 %v4554, %v4933
        %v4944 = vsub.f32 %v4555, %v4937
        %v4945 = vsub.f32 %v4556, %v4941
        %v4946 = vadd.f32 %v4922, 1e-08
        %v4947 = vadd.f32 %v4923, 1e-08
        %v4948 = vadd.f32 %v4924, 1e-08
        %v4949 = vadd.f32 %v4925, 1e-08
        %v4950 = vrsqrt.pop %v4946
        %v4951 = vrsqrt.pop %v4947
        %v4952 = vrsqrt.pop %v4948
        %v4953 = vrsqrt.pop %v4949
        %v4954 = vlaneseq
        %v4955 = vshrl.u32 %v4954, 7
        %v4956 = vsub.s32 1, %v4955
        %v4957 = vrot.slane %v4950, %v4956
        %v4958 = vlaneseq
        %v4959 = vshrl.u32 %v4958, 7
        %v4960 = vsub.s32 1, %v4959
        %v4961 = vrot.slane %v4951, %v4960
        %v4962 = vlaneseq
        %v4963 = vshrl.u32 %v4962, 7
        %v4964 = vsub.s32 1, %v4963
        %v4965 = vrot.slane %v4952, %v4964
        %v4966 = vlaneseq
        %v4967 = vshrl.u32 %v4966, 7
        %v4968 = vsub.s32 1, %v4967
        %v4969 = vrot.slane %v4953, %v4968
        %v4970 = vmul.f32 %v4942, %v4957
        %v4971 = vmul.f32 %v4943, %v4961
        %v4972 = vmul.f32 %v4944, %v4965
        %v4973 = vmul.f32 %v4945, %v4969
        %4974 = vset.pattern.permute.xlu0 21
        %4975 = vperm.xlu0 %4974, %v431
        %v4976 = vpop.permute.xlu0 %4975
        %v4978 = vmul.f32 %v4970, %v4976
        %v4979 = vmul.f32 %v4971, %v4976
        %v4980 = vmul.f32 %v4972, %v4976
        %v4981 = vmul.f32 %v4973, %v4976
        %4982 = vset.pattern.permute.xlu0 22
        %4983 = vperm.xlu0 %4982, %v431
        %v4984 = vpop.permute.xlu0 %4983
        %v4986 = vadd.f32 %v4978, %v4984
        %v4987 = vadd.f32 %v4979, %v4984
        %v4988 = vadd.f32 %v4980, %v4984
        %v4989 = vadd.f32 %v4981, %v4984
        %s4990 = scalar_lea.vmem %s5, 8
        %v4991 = vld [vmem:[%s4990] sm:$0xff]
        %4992 = vset.pattern.permute.xlu0 23
        %4993 = vperm.xlu0 %4992, %v431
        %v4994 = vpop.permute.xlu0 %4993
        %v4997 = vsel %vm535, %v4991, 0
        %4999 = vmatprep.subr.mxu0 %v4987
        %5000 = vmatpush1.msra.mxu0 %v4986
        %5001 = vmatprep.subr.mxu0 0.0
        %5002 = vmatpush1.msra.mxu0 0.0
        %5003 = vmatprep.subr.mxu0 0.0
        %5004 = vmatpush1.msra.mxu0 0.0
        %5005 = vmatprep.subr.mxu0 0.0
        %5006 = vmatpush1.msra.mxu0 0.0
        %5007 = vmatprep.subr.mxu0 0.0
        %5008 = vmatpush1.msra.mxu0 0.0
        %5009 = vmatprep.subr.mxu0 0.0
        %5010 = vmatpush1.msra.mxu0 0.0
        %5011 = vmatprep.subr.mxu0 0.0
        %5012 = vmatpush1.msra.mxu0 0.0
        %5013 = vmatprep.subr.mxu0 0.0
        %5014 = vmatpush1.msra.mxu0 0.0
        %5015 = vmatprep.subr.mxu0 0.0
        %5016 = vmatpush1.msra.mxu0 0.0
        %5017 = vmatprep.subr.mxu0 0.0
        %5018 = vmatpush1.msra.mxu0 0.0
        %5019 = vmatprep.subr.mxu0 0.0
        %5020 = vmatpush1.msra.mxu0 0.0
        %5021 = vmatprep.subr.mxu0 0.0
        %5022 = vmatpush1.msra.mxu0 0.0
        %5023 = vmatprep.subr.mxu0 0.0
        %5024 = vmatpush1.msra.mxu0 0.0
        %5025 = vmatprep.subr.mxu0 0.0
        %5026 = vmatpush1.msra.mxu0 0.0
        %5027 = vmatprep.subr.mxu0 0.0
        %5028 = vmatpush1.msra.mxu0 0.0
        %5029 = vmatprep.subr.mxu0 0.0
        %5030 = vmatpush1.msra.mxu0 0.0
        %5031 = vmatprep.subr.mxu0 0.0
        %5032 = vmatpush1.msra.mxu0 0.0
        %5033 = vmatprep.subr.mxu0 0.0
        %5034 = vmatpush1.msra.mxu0 0.0
        %5035 = vmatprep.subr.mxu0 0.0
        %5036 = vmatpush1.msra.mxu0 0.0
        %5037 = vmatprep.subr.mxu0 0.0
        %5038 = vmatpush1.msra.mxu0 0.0
        %5039 = vmatprep.subr.mxu0 0.0
        %5040 = vmatpush1.msra.mxu0 0.0
        %5041 = vmatprep.subr.mxu0 0.0
        %5042 = vmatpush1.msra.mxu0 0.0
        %5043 = vmatprep.subr.mxu0 0.0
        %5044 = vmatpush1.msra.mxu0 0.0
        %5045 = vmatprep.subr.mxu0 0.0
        %5046 = vmatpush1.msra.mxu0 0.0
        %5047 = vmatprep.subr.mxu0 0.0
        %5048 = vmatpush1.msra.mxu0 0.0
        %5049 = vmatprep.subr.mxu0 0.0
        %5050 = vmatpush1.msra.mxu0 0.0
        %5051 = vmatprep.subr.mxu0 0.0
        %5052 = vmatpush1.msra.mxu0 0.0
        %5053 = vmatprep.subr.mxu0 0.0
        %5054 = vmatpush1.msra.mxu0 0.0
        %5055 = vmatprep.subr.mxu0 0.0
        %5056 = vmatpush1.msra.mxu0 0.0
        %5057 = vmatprep.subr.mxu0 0.0
        %5058 = vmatpush1.msra.mxu0 0.0
        %5059 = vmatprep.subr.mxu0 0.0
        %5060 = vmatpush1.msra.mxu0 0.0
        %5061 = vmatprep.subr.mxu0 0.0
        %5062 = vmatpush1.msra.mxu0 0.0
        %5063 = vmatprep.mubr.f32.mxu0 0.0
        %5064 = vmatmul.mubr.f32.gmra.mrb[0].mxu0 %v4997
        %v5065 = vpop.f32.mrb[0].mxu0
        %v5066 = vadd.f32 %v4994, %v5065
        %v5067 = vpop.f32.mrb[0].mxu0
        %v5068 = vadd.f32 %v4994, %v5067
        %5069 = vdwg.mxu0
        %5070 = vmatprep.subr.mxu0 %v4989
        %5071 = vmatpush1.msra.mxu0 %v4988
        %5072 = vmatprep.subr.mxu0 0.0
        %5073 = vmatpush1.msra.mxu0 0.0
        %5074 = vmatprep.subr.mxu0 0.0
        %5075 = vmatpush1.msra.mxu0 0.0
        %5076 = vmatprep.subr.mxu0 0.0
        %5077 = vmatpush1.msra.mxu0 0.0
        %5078 = vmatprep.subr.mxu0 0.0
        %5079 = vmatpush1.msra.mxu0 0.0
        %5080 = vmatprep.subr.mxu0 0.0
        %5081 = vmatpush1.msra.mxu0 0.0
        %5082 = vmatprep.subr.mxu0 0.0
        %5083 = vmatpush1.msra.mxu0 0.0
        %5084 = vmatprep.subr.mxu0 0.0
        %5085 = vmatpush1.msra.mxu0 0.0
        %5086 = vmatprep.subr.mxu0 0.0
        %5087 = vmatpush1.msra.mxu0 0.0
        %5088 = vmatprep.subr.mxu0 0.0
        %5089 = vmatpush1.msra.mxu0 0.0
        %5090 = vmatprep.subr.mxu0 0.0
        %5091 = vmatpush1.msra.mxu0 0.0
        %5092 = vmatprep.subr.mxu0 0.0
        %5093 = vmatpush1.msra.mxu0 0.0
        %5094 = vmatprep.subr.mxu0 0.0
        %5095 = vmatpush1.msra.mxu0 0.0
        %5096 = vmatprep.subr.mxu0 0.0
        %5097 = vmatpush1.msra.mxu0 0.0
        %5098 = vmatprep.subr.mxu0 0.0
        %5099 = vmatpush1.msra.mxu0 0.0
        %5100 = vmatprep.subr.mxu0 0.0
        %5101 = vmatpush1.msra.mxu0 0.0
        %5102 = vmatprep.subr.mxu0 0.0
        %5103 = vmatpush1.msra.mxu0 0.0
        %5104 = vmatprep.subr.mxu0 0.0
        %5105 = vmatpush1.msra.mxu0 0.0
        %5106 = vmatprep.subr.mxu0 0.0
        %5107 = vmatpush1.msra.mxu0 0.0
        %5108 = vmatprep.subr.mxu0 0.0
        %5109 = vmatpush1.msra.mxu0 0.0
        %5110 = vmatprep.subr.mxu0 0.0
        %5111 = vmatpush1.msra.mxu0 0.0
        %5112 = vmatprep.subr.mxu0 0.0
        %5113 = vmatpush1.msra.mxu0 0.0
        %5114 = vmatprep.subr.mxu0 0.0
        %5115 = vmatpush1.msra.mxu0 0.0
        %5116 = vmatprep.subr.mxu0 0.0
        %5117 = vmatpush1.msra.mxu0 0.0
        %5118 = vmatprep.subr.mxu0 0.0
        %5119 = vmatpush1.msra.mxu0 0.0
        %5120 = vmatprep.subr.mxu0 0.0
        %5121 = vmatpush1.msra.mxu0 0.0
        %5122 = vmatprep.subr.mxu0 0.0
        %5123 = vmatpush1.msra.mxu0 0.0
        %5124 = vmatprep.subr.mxu0 0.0
        %5125 = vmatpush1.msra.mxu0 0.0
        %5126 = vmatprep.subr.mxu0 0.0
        %5127 = vmatpush1.msra.mxu0 0.0
        %5128 = vmatprep.subr.mxu0 0.0
        %5129 = vmatpush1.msra.mxu0 0.0
        %5130 = vmatprep.subr.mxu0 0.0
        %5131 = vmatpush1.msra.mxu0 0.0
        %5132 = vmatprep.subr.mxu0 0.0
        %5133 = vmatpush1.msra.mxu0 0.0
        %5134 = vmatprep.mubr.f32.mxu0 0.0
        %5135 = vmatmul.mubr.f32.gmra.mrb[0].mxu0 %v4997
        %v5136 = vpop.f32.mrb[0].mxu0
        %v5137 = vadd.f32 %v4994, %v5136
        %v5138 = vpop.f32.mrb[0].mxu0
        %v5139 = vadd.f32 %v4994, %v5138
        %5140 = vdwg.mxu0
        %v5141 = vadd.f32 %v3828, %v5066
        %v5142 = vadd.f32 %v3829, %v5068
        %v5143 = vadd.f32 %v3830, %v5137
        %v5144 = vadd.f32 %v3831, %v5139
        %s5145 = sld [smem:[#allocation3 + $0xa]]
        %s5146 = sld [smem:[#allocation3 + $0xb]]
        %s5147 = sld [smem:[#allocation3 + $0xc]]
        %s5148 = sld [smem:[#allocation3 + $0xd]]
        %s5149 = sld [smem:[#allocation3 + $0xe]]
        %s5150 = scalar_lea.vmem %s1, 48
        %v5151 = vld [vmem:[%s5150] sm:$0xff]
        %v5152 = vld [vmem:[%s5150 + $0x8] sm:$0xff]
        %v5153 = vld [vmem:[%s5150 + $0x10] sm:$0xff]
        %5154 = vset.pattern.permute.xlu0 24
        %5155 = vperm.xlu0 %5154, %v431
        %v5156 = vpop.permute.xlu0 %5155
        %5158 = vset.pattern.permute.xlu0 24
        %5159 = vperm.xlu0 %5158, %v432
        %v5160 = vpop.permute.xlu0 %5159
        %5162 = vset.pattern.permute.xlu0 24
        %5163 = vperm.xlu0 %5162, %v433
        %v5164 = vpop.permute.xlu0 %5163
        %v5167 = vsel %vm535, %v5151, 0
        %v5170 = vsel %vm535, %v5152, 0
        %v5173 = vsel %vm535, %v5153, 0
        %5175 = vmatprep.subr.mxu0 %v5142
        %5176 = vmatpush1.msra.mxu0 %v5141
        %5177 = vmatprep.subr.mxu0 0.0
        %5178 = vmatpush1.msra.mxu0 0.0
        %5179 = vmatprep.subr.mxu0 0.0
        %5180 = vmatpush1.msra.mxu0 0.0
        %5181 = vmatprep.subr.mxu0 0.0
        %5182 = vmatpush1.msra.mxu0 0.0
        %5183 = vmatprep.subr.mxu0 0.0
        %5184 = vmatpush1.msra.mxu0 0.0
        %5185 = vmatprep.subr.mxu0 0.0
        %5186 = vmatpush1.msra.mxu0 0.0
        %5187 = vmatprep.subr.mxu0 0.0
        %5188 = vmatpush1.msra.mxu0 0.0
        %5189 = vmatprep.subr.mxu0 0.0
        %5190 = vmatpush1.msra.mxu0 0.0
        %5191 = vmatprep.subr.mxu0 0.0
        %5192 = vmatpush1.msra.mxu0 0.0
        %5193 = vmatprep.subr.mxu0 0.0
        %5194 = vmatpush1.msra.mxu0 0.0
        %5195 = vmatprep.subr.mxu0 0.0
        %5196 = vmatpush1.msra.mxu0 0.0
        %5197 = vmatprep.subr.mxu0 0.0
        %5198 = vmatpush1.msra.mxu0 0.0
        %5199 = vmatprep.subr.mxu0 0.0
        %5200 = vmatpush1.msra.mxu0 0.0
        %5201 = vmatprep.subr.mxu0 0.0
        %5202 = vmatpush1.msra.mxu0 0.0
        %5203 = vmatprep.subr.mxu0 0.0
        %5204 = vmatpush1.msra.mxu0 0.0
        %5205 = vmatprep.subr.mxu0 0.0
        %5206 = vmatpush1.msra.mxu0 0.0
        %5207 = vmatprep.subr.mxu0 0.0
        %5208 = vmatpush1.msra.mxu0 0.0
        %5209 = vmatprep.subr.mxu0 0.0
        %5210 = vmatpush1.msra.mxu0 0.0
        %5211 = vmatprep.subr.mxu0 0.0
        %5212 = vmatpush1.msra.mxu0 0.0
        %5213 = vmatprep.subr.mxu0 0.0
        %5214 = vmatpush1.msra.mxu0 0.0
        %5215 = vmatprep.subr.mxu0 0.0
        %5216 = vmatpush1.msra.mxu0 0.0
        %5217 = vmatprep.subr.mxu0 0.0
        %5218 = vmatpush1.msra.mxu0 0.0
        %5219 = vmatprep.subr.mxu0 0.0
        %5220 = vmatpush1.msra.mxu0 0.0
        %5221 = vmatprep.subr.mxu0 0.0
        %5222 = vmatpush1.msra.mxu0 0.0
        %5223 = vmatprep.subr.mxu0 0.0
        %5224 = vmatpush1.msra.mxu0 0.0
        %5225 = vmatprep.subr.mxu0 0.0
        %5226 = vmatpush1.msra.mxu0 0.0
        %5227 = vmatprep.subr.mxu0 0.0
        %5228 = vmatpush1.msra.mxu0 0.0
        %5229 = vmatprep.subr.mxu0 0.0
        %5230 = vmatpush1.msra.mxu0 0.0
        %5231 = vmatprep.subr.mxu0 0.0
        %5232 = vmatpush1.msra.mxu0 0.0
        %5233 = vmatprep.subr.mxu0 0.0
        %5234 = vmatpush1.msra.mxu0 0.0
        %5235 = vmatprep.subr.mxu0 0.0
        %5236 = vmatpush1.msra.mxu0 0.0
        %5237 = vmatprep.subr.mxu0 0.0
        %5238 = vmatpush1.msra.mxu0 0.0
        %5239 = vmatprep.mubr.f32.mxu0 0.0
        %5240 = vmatmul.mubr.f32.gmra.mrb[0].mxu0 %v5167
        %v5241 = vpop.f32.mrb[0].mxu0
        %v5242 = vadd.f32 %v5156, %v5241
        %v5243 = vpop.f32.mrb[0].mxu0
        %v5244 = vadd.f32 %v5156, %v5243
        %5245 = vmatprep.mubr.f32.mxu0 0.0
        %5246 = vmatmul.mubr.f32.gmra.mrb[0].mxu0 %v5170
        %v5247 = vpop.f32.mrb[0].mxu0
        %v5248 = vadd.f32 %v5160, %v5247
        %v5249 = vpop.f32.mrb[0].mxu0
        %v5250 = vadd.f32 %v5160, %v5249
        %5251 = vmatprep.mubr.f32.mxu0 0.0
        %5252 = vmatmul.mubr.f32.gmra.mrb[0].mxu0 %v5173
        %v5253 = vpop.f32.mrb[0].mxu0
        %v5254 = vadd.f32 %v5164, %v5253
        %v5255 = vpop.f32.mrb[0].mxu0
        %v5256 = vadd.f32 %v5164, %v5255
        %5257 = vdwg.mxu0
        %5258 = vmatprep.subr.mxu0 %v5144
        %5259 = vmatpush1.msra.mxu0 %v5143
        %5260 = vmatprep.subr.mxu0 0.0
        %5261 = vmatpush1.msra.mxu0 0.0
        %5262 = vmatprep.subr.mxu0 0.0
        %5263 = vmatpush1.msra.mxu0 0.0
        %5264 = vmatprep.subr.mxu0 0.0
        %5265 = vmatpush1.msra.mxu0 0.0
        %5266 = vmatprep.subr.mxu0 0.0
        %5267 = vmatpush1.msra.mxu0 0.0
        %5268 = vmatprep.subr.mxu0 0.0
        %5269 = vmatpush1.msra.mxu0 0.0
        %5270 = vmatprep.subr.mxu0 0.0
        %5271 = vmatpush1.msra.mxu0 0.0
        %5272 = vmatprep.subr.mxu0 0.0
        %5273 = vmatpush1.msra.mxu0 0.0
        %5274 = vmatprep.subr.mxu0 0.0
        %5275 = vmatpush1.msra.mxu0 0.0
        %5276 = vmatprep.subr.mxu0 0.0
        %5277 = vmatpush1.msra.mxu0 0.0
        %5278 = vmatprep.subr.mxu0 0.0
        %5279 = vmatpush1.msra.mxu0 0.0
        %5280 = vmatprep.subr.mxu0 0.0
        %5281 = vmatpush1.msra.mxu0 0.0
        %5282 = vmatprep.subr.mxu0 0.0
        %5283 = vmatpush1.msra.mxu0 0.0
        %5284 = vmatprep.subr.mxu0 0.0
        %5285 = vmatpush1.msra.mxu0 0.0
        %5286 = vmatprep.subr.mxu0 0.0
        %5287 = vmatpush1.msra.mxu0 0.0
        %5288 = vmatprep.subr.mxu0 0.0
        %5289 = vmatpush1.msra.mxu0 0.0
        %5290 = vmatprep.subr.mxu0 0.0
        %5291 = vmatpush1.msra.mxu0 0.0
        %5292 = vmatprep.subr.mxu0 0.0
        %5293 = vmatpush1.msra.mxu0 0.0
        %5294 = vmatprep.subr.mxu0 0.0
        %5295 = vmatpush1.msra.mxu0 0.0
        %5296 = vmatprep.subr.mxu0 0.0
        %5297 = vmatpush1.msra.mxu0 0.0
        %5298 = vmatprep.subr.mxu0 0.0
        %5299 = vmatpush1.msra.mxu0 0.0
        %5300 = vmatprep.subr.mxu0 0.0
        %5301 = vmatpush1.msra.mxu0 0.0
        %5302 = vmatprep.subr.mxu0 0.0
        %5303 = vmatpush1.msra.mxu0 0.0
        %5304 = vmatprep.subr.mxu0 0.0
        %5305 = vmatpush1.msra.mxu0 0.0
        %5306 = vmatprep.subr.mxu0 0.0
        %5307 = vmatpush1.msra.mxu0 0.0
        %5308 = vmatprep.subr.mxu0 0.0
        %5309 = vmatpush1.msra.mxu0 0.0
        %5310 = vmatprep.subr.mxu0 0.0
        %5311 = vmatpush1.msra.mxu0 0.0
        %5312 = vmatprep.subr.mxu0 0.0
        %5313 = vmatpush1.msra.mxu0 0.0
        %5314 = vmatprep.subr.mxu0 0.0
        %5315 = vmatpush1.msra.mxu0 0.0
        %5316 = vmatprep.subr.mxu0 0.0
        %5317 = vmatpush1.msra.mxu0 0.0
        %5318 = vmatprep.subr.mxu0 0.0
        %5319 = vmatpush1.msra.mxu0 0.0
        %5320 = vmatprep.subr.mxu0 0.0
        %5321 = vmatpush1.msra.mxu0 0.0
        %5322 = vmatprep.mubr.f32.mxu0 0.0
        %5323 = vmatmul.mubr.f32.gmra.mrb[0].mxu0 %v5167
        %v5324 = vpop.f32.mrb[0].mxu0
        %v5325 = vadd.f32 %v5156, %v5324
        %v5326 = vpop.f32.mrb[0].mxu0
        %v5327 = vadd.f32 %v5156, %v5326
        %5328 = vmatprep.mubr.f32.mxu0 0.0
        %5329 = vmatmul.mubr.f32.gmra.mrb[0].mxu0 %v5170
        %v5330 = vpop.f32.mrb[0].mxu0
        %v5331 = vadd.f32 %v5160, %v5330
        %v5332 = vpop.f32.mrb[0].mxu0
        %v5333 = vadd.f32 %v5160, %v5332
        %5334 = vmatprep.mubr.f32.mxu0 0.0
        %5335 = vmatmul.mubr.f32.gmra.mrb[0].mxu0 %v5173
        %v5336 = vpop.f32.mrb[0].mxu0
        %v5337 = vadd.f32 %v5164, %v5336
        %v5338 = vpop.f32.mrb[0].mxu0
        %v5339 = vadd.f32 %v5164, %v5338
        %5340 = vdwg.mxu0
        %vm5341 = vcmp.ge.f32.partialorder %v5242, 0.0
        %vm5342 = vcmp.ge.f32.partialorder %v5244, 0.0
        %vm5343 = vcmp.ge.f32.partialorder %v5325, 0.0
        %vm5344 = vcmp.ge.f32.partialorder %v5327, 0.0
        %vm5345 = vcmp.ge.f32.partialorder %v5248, 0.0
        %vm5346 = vcmp.ge.f32.partialorder %v5250, 0.0
        %vm5347 = vcmp.ge.f32.partialorder %v5331, 0.0
        %vm5348 = vcmp.ge.f32.partialorder %v5333, 0.0
        %vm5349 = vcmp.ge.f32.partialorder %v5254, 0.0
        %vm5350 = vcmp.ge.f32.partialorder %v5256, 0.0
        %vm5351 = vcmp.ge.f32.partialorder %v5337, 0.0
        %vm5352 = vcmp.ge.f32.partialorder %v5339, 0.0
        %v5353 = vstv %s5145
        %v5354 = vmul.f32 %v5353, %v5242
        %v5355 = vmul.f32 %v5353, %v5244
        %v5356 = vmul.f32 %v5353, %v5325
        %v5357 = vmul.f32 %v5353, %v5327
        %v5358 = vmul.f32 %v5353, %v5248
        %v5359 = vmul.f32 %v5353, %v5250
        %v5360 = vmul.f32 %v5353, %v5331
        %v5361 = vmul.f32 %v5353, %v5333
        %v5362 = vmul.f32 %v5353, %v5254
        %v5363 = vmul.f32 %v5353, %v5256
        %v5364 = vmul.f32 %v5353, %v5337
        %v5365 = vmul.f32 %v5353, %v5339
        %v5366 = vsel %vm5341, %v5242, %v5354
        %v5367 = vsel %vm5342, %v5244, %v5355
        %v5368 = vsel %vm5343, %v5325, %v5356
        %v5369 = vsel %vm5344, %v5327, %v5357
        %v5370 = vsel %vm5345, %v5248, %v5358
        %v5371 = vsel %vm5346, %v5250, %v5359
        %v5372 = vsel %vm5347, %v5331, %v5360
        %v5373 = vsel %vm5348, %v5333, %v5361
        %v5374 = vsel %vm5349, %v5254, %v5362
        %v5375 = vsel %vm5350, %v5256, %v5363
        %v5376 = vsel %vm5351, %v5337, %v5364
        %v5377 = vsel %vm5352, %v5339, %v5365
        %v5378 = vadd.f32 %v5366, %v5368
        %v5379 = vadd.f32 %v5367, %v5369
        %v5380 = vadd.f32 %v5370, %v5372
        %v5381 = vadd.f32 %v5371, %v5373
        %v5382 = vadd.f32 %v5374, %v5376
        %v5383 = vadd.f32 %v5375, %v5377
        %s5384 = scalar_lea.vmem %s2, 48
        %v5385 = vld [vmem:[%s5384] sm:$0xff]
        %v5386 = vld [vmem:[%s5384 + $0x8] sm:$0xff]
        %v5387 = vld [vmem:[%s5384 + $0x10] sm:$0xff]
        %v5388 = vmul.f32 %v5378, 0.5
        %v5389 = vmul.f32 %v5379, 0.5
        %v5390 = vmul.f32 %v5380, 0.5
        %v5391 = vmul.f32 %v5381, 0.5
        %v5392 = vmul.f32 %v5382, 0.5
        %v5393 = vmul.f32 %v5383, 0.5
        %5394 = vset.pattern.permute.xlu0 25
        %5395 = vperm.xlu0 %5394, %v431
        %v5396 = vpop.permute.xlu0 %5395
        %5398 = vset.pattern.permute.xlu0 25
        %5399 = vperm.xlu0 %5398, %v432
        %v5400 = vpop.permute.xlu0 %5399
        %5402 = vset.pattern.permute.xlu0 25
        %5403 = vperm.xlu0 %5402, %v433
        %v5404 = vpop.permute.xlu0 %5403
        %v5407 = vsel %vm775, %v5385, 0
        %v5410 = vsel %vm775, %v5386, 0
        %v5413 = vsel %vm775, %v5387, 0
        %5415 = vmatprep.subr.mxu0 %v5389
        %5416 = vmatpush1.msra.mxu0 %v5388
        %5417 = vmatprep.subr.mxu0 %v5391
        %5418 = vmatpush1.msra.mxu0 %v5390
        %5419 = vmatprep.subr.mxu0 %v5393
        %5420 = vmatpush1.msra.mxu0 %v5392
        %5421 = vmatprep.subr.mxu0 0.0
        %5422 = vmatpush1.msra.mxu0 0.0
        %5423 = vmatprep.subr.mxu0 0.0
        %5424 = vmatpush1.msra.mxu0 0.0
        %5425 = vmatprep.subr.mxu0 0.0
        %5426 = vmatpush1.msra.mxu0 0.0
        %5427 = vmatprep.subr.mxu0 0.0
        %5428 = vmatpush1.msra.mxu0 0.0
        %5429 = vmatprep.subr.mxu0 0.0
        %5430 = vmatpush1.msra.mxu0 0.0
        %5431 = vmatprep.subr.mxu0 0.0
        %5432 = vmatpush1.msra.mxu0 0.0
        %5433 = vmatprep.subr.mxu0 0.0
        %5434 = vmatpush1.msra.mxu0 0.0
        %5435 = vmatprep.subr.mxu0 0.0
        %5436 = vmatpush1.msra.mxu0 0.0
        %5437 = vmatprep.subr.mxu0 0.0
        %5438 = vmatpush1.msra.mxu0 0.0
        %5439 = vmatprep.subr.mxu0 0.0
        %5440 = vmatpush1.msra.mxu0 0.0
        %5441 = vmatprep.subr.mxu0 0.0
        %5442 = vmatpush1.msra.mxu0 0.0
        %5443 = vmatprep.subr.mxu0 0.0
        %5444 = vmatpush1.msra.mxu0 0.0
        %5445 = vmatprep.subr.mxu0 0.0
        %5446 = vmatpush1.msra.mxu0 0.0
        %5447 = vmatprep.subr.mxu0 0.0
        %5448 = vmatpush1.msra.mxu0 0.0
        %5449 = vmatprep.subr.mxu0 0.0
        %5450 = vmatpush1.msra.mxu0 0.0
        %5451 = vmatprep.subr.mxu0 0.0
        %5452 = vmatpush1.msra.mxu0 0.0
        %5453 = vmatprep.subr.mxu0 0.0
        %5454 = vmatpush1.msra.mxu0 0.0
        %5455 = vmatprep.subr.mxu0 0.0
        %5456 = vmatpush1.msra.mxu0 0.0
        %5457 = vmatprep.subr.mxu0 0.0
        %5458 = vmatpush1.msra.mxu0 0.0
        %5459 = vmatprep.subr.mxu0 0.0
        %5460 = vmatpush1.msra.mxu0 0.0
        %5461 = vmatprep.subr.mxu0 0.0
        %5462 = vmatpush1.msra.mxu0 0.0
        %5463 = vmatprep.subr.mxu0 0.0
        %5464 = vmatpush1.msra.mxu0 0.0
        %5465 = vmatprep.subr.mxu0 0.0
        %5466 = vmatpush1.msra.mxu0 0.0
        %5467 = vmatprep.subr.mxu0 0.0
        %5468 = vmatpush1.msra.mxu0 0.0
        %5469 = vmatprep.subr.mxu0 0.0
        %5470 = vmatpush1.msra.mxu0 0.0
        %5471 = vmatprep.subr.mxu0 0.0
        %5472 = vmatpush1.msra.mxu0 0.0
        %5473 = vmatprep.subr.mxu0 0.0
        %5474 = vmatpush1.msra.mxu0 0.0
        %5475 = vmatprep.subr.mxu0 0.0
        %5476 = vmatpush1.msra.mxu0 0.0
        %5477 = vmatprep.subr.mxu0 0.0
        %5478 = vmatpush1.msra.mxu0 0.0
        %5479 = vmatprep.mubr.f32.mxu0 0.0
        %5480 = vmatmul.mubr.f32.gmra.mrb[0].mxu0 %v5407
        %v5481 = vpop.f32.mrb[0].mxu0
        %v5482 = vadd.f32 %v5396, %v5481
        %v5483 = vpop.f32.mrb[0].mxu0
        %v5484 = vadd.f32 %v5396, %v5483
        %5485 = vmatprep.mubr.f32.mxu0 0.0
        %5486 = vmatmul.mubr.f32.gmra.mrb[0].mxu0 %v5410
        %v5487 = vpop.f32.mrb[0].mxu0
        %v5488 = vadd.f32 %v5400, %v5487
        %v5489 = vpop.f32.mrb[0].mxu0
        %v5490 = vadd.f32 %v5400, %v5489
        %5491 = vmatprep.mubr.f32.mxu0 0.0
        %5492 = vmatmul.mubr.f32.gmra.mrb[0].mxu0 %v5413
        %v5493 = vpop.f32.mrb[0].mxu0
        %v5494 = vadd.f32 %v5404, %v5493
        %v5495 = vpop.f32.mrb[0].mxu0
        %v5496 = vadd.f32 %v5404, %v5495
        %5497 = vdwg.mxu0
        %vm5498 = vcmp.ge.f32.partialorder %v5482, 0.0
        %vm5499 = vcmp.ge.f32.partialorder %v5484, 0.0
        %vm5500 = vcmp.ge.f32.partialorder %v5488, 0.0
        %vm5501 = vcmp.ge.f32.partialorder %v5490, 0.0
        %vm5502 = vcmp.ge.f32.partialorder %v5494, 0.0
        %vm5503 = vcmp.ge.f32.partialorder %v5496, 0.0
        %v5504 = vstv %s5146
        %v5505 = vmul.f32 %v5504, %v5482
        %v5506 = vmul.f32 %v5504, %v5484
        %v5507 = vmul.f32 %v5504, %v5488
        %v5508 = vmul.f32 %v5504, %v5490
        %v5509 = vmul.f32 %v5504, %v5494
        %v5510 = vmul.f32 %v5504, %v5496
        %v5511 = vsel %vm5498, %v5482, %v5505
        %v5512 = vsel %vm5499, %v5484, %v5506
        %v5513 = vsel %vm5500, %v5488, %v5507
        %v5514 = vsel %vm5501, %v5490, %v5508
        %v5515 = vsel %vm5502, %v5494, %v5509
        %v5516 = vsel %vm5503, %v5496, %v5510
        %s5517 = scalar_lea.vmem %s3, 16
        %v5518 = vld [vmem:[%s5517] sm:$0xff]
        %5519 = vset.pattern.permute.xlu0 26
        %5520 = vperm.xlu0 %5519, %v431
        %v5521 = vpop.permute.xlu0 %5520
        %v5524 = vsel %vm892, %v5518, 0
        %5526 = vmatprep.subr.mxu0 %v5367
        %5527 = vmatpush1.msra.mxu0 %v5366
        %5528 = vmatprep.subr.mxu0 %v5371
        %5529 = vmatpush1.msra.mxu0 %v5370
        %5530 = vmatprep.subr.mxu0 %v5375
        %5531 = vmatpush1.msra.mxu0 %v5374
        %5532 = vmatprep.subr.mxu0 %v5512
        %5533 = vmatpush1.msra.mxu0 %v5511
        %5534 = vmatprep.subr.mxu0 %v5514
        %5535 = vmatpush1.msra.mxu0 %v5513
        %5536 = vmatprep.subr.mxu0 %v5516
        %5537 = vmatpush1.msra.mxu0 %v5515
        %5538 = vmatprep.subr.mxu0 0.0
        %5539 = vmatpush1.msra.mxu0 0.0
        %5540 = vmatprep.subr.mxu0 0.0
        %5541 = vmatpush1.msra.mxu0 0.0
        %5542 = vmatprep.subr.mxu0 0.0
        %5543 = vmatpush1.msra.mxu0 0.0
        %5544 = vmatprep.subr.mxu0 0.0
        %5545 = vmatpush1.msra.mxu0 0.0
        %5546 = vmatprep.subr.mxu0 0.0
        %5547 = vmatpush1.msra.mxu0 0.0
        %5548 = vmatprep.subr.mxu0 0.0
        %5549 = vmatpush1.msra.mxu0 0.0
        %5550 = vmatprep.subr.mxu0 0.0
        %5551 = vmatpush1.msra.mxu0 0.0
        %5552 = vmatprep.subr.mxu0 0.0
        %5553 = vmatpush1.msra.mxu0 0.0
        %5554 = vmatprep.subr.mxu0 0.0
        %5555 = vmatpush1.msra.mxu0 0.0
        %5556 = vmatprep.subr.mxu0 0.0
        %5557 = vmatpush1.msra.mxu0 0.0
        %5558 = vmatprep.subr.mxu0 0.0
        %5559 = vmatpush1.msra.mxu0 0.0
        %5560 = vmatprep.subr.mxu0 0.0
        %5561 = vmatpush1.msra.mxu0 0.0
        %5562 = vmatprep.subr.mxu0 0.0
        %5563 = vmatpush1.msra.mxu0 0.0
        %5564 = vmatprep.subr.mxu0 0.0
        %5565 = vmatpush1.msra.mxu0 0.0
        %5566 = vmatprep.subr.mxu0 0.0
        %5567 = vmatpush1.msra.mxu0 0.0
        %5568 = vmatprep.subr.mxu0 0.0
        %5569 = vmatpush1.msra.mxu0 0.0
        %5570 = vmatprep.subr.mxu0 0.0
        %5571 = vmatpush1.msra.mxu0 0.0
        %5572 = vmatprep.subr.mxu0 0.0
        %5573 = vmatpush1.msra.mxu0 0.0
        %5574 = vmatprep.subr.mxu0 0.0
        %5575 = vmatpush1.msra.mxu0 0.0
        %5576 = vmatprep.subr.mxu0 0.0
        %5577 = vmatpush1.msra.mxu0 0.0
        %5578 = vmatprep.subr.mxu0 0.0
        %5579 = vmatpush1.msra.mxu0 0.0
        %5580 = vmatprep.subr.mxu0 0.0
        %5581 = vmatpush1.msra.mxu0 0.0
        %5582 = vmatprep.subr.mxu0 0.0
        %5583 = vmatpush1.msra.mxu0 0.0
        %5584 = vmatprep.subr.mxu0 0.0
        %5585 = vmatpush1.msra.mxu0 0.0
        %5586 = vmatprep.subr.mxu0 0.0
        %5587 = vmatpush1.msra.mxu0 0.0
        %5588 = vmatprep.subr.mxu0 0.0
        %5589 = vmatpush1.msra.mxu0 0.0
        %5590 = vmatprep.mubr.f32.mxu0 0.0
        %5591 = vmatmul.mubr.f32.gmra.mrb[0].mxu0 %v5524
        %v5592 = vpop.f32.mrb[0].mxu0
        %v5593 = vadd.f32 %v5521, %v5592
        %v5594 = vpop.f32.mrb[0].mxu0
        %v5595 = vadd.f32 %v5521, %v5594
        %5596 = vdwg.mxu0
        %5597 = vmatprep.subr.mxu0 %v5369
        %5598 = vmatpush1.msra.mxu0 %v5368
        %5599 = vmatprep.subr.mxu0 %v5373
        %5600 = vmatpush1.msra.mxu0 %v5372
        %5601 = vmatprep.subr.mxu0 %v5377
        %5602 = vmatpush1.msra.mxu0 %v5376
        %5603 = vmatprep.subr.mxu0 %v5512
        %5604 = vmatpush1.msra.mxu0 %v5511
        %5605 = vmatprep.subr.mxu0 %v5514
        %5606 = vmatpush1.msra.mxu0 %v5513
        %5607 = vmatprep.subr.mxu0 %v5516
        %5608 = vmatpush1.msra.mxu0 %v5515
        %5609 = vmatprep.subr.mxu0 0.0
        %5610 = vmatpush1.msra.mxu0 0.0
        %5611 = vmatprep.subr.mxu0 0.0
        %5612 = vmatpush1.msra.mxu0 0.0
        %5613 = vmatprep.subr.mxu0 0.0
        %5614 = vmatpush1.msra.mxu0 0.0
        %5615 = vmatprep.subr.mxu0 0.0
        %5616 = vmatpush1.msra.mxu0 0.0
        %5617 = vmatprep.subr.mxu0 0.0
        %5618 = vmatpush1.msra.mxu0 0.0
        %5619 = vmatprep.subr.mxu0 0.0
        %5620 = vmatpush1.msra.mxu0 0.0
        %5621 = vmatprep.subr.mxu0 0.0
        %5622 = vmatpush1.msra.mxu0 0.0
        %5623 = vmatprep.subr.mxu0 0.0
        %5624 = vmatpush1.msra.mxu0 0.0
        %5625 = vmatprep.subr.mxu0 0.0
        %5626 = vmatpush1.msra.mxu0 0.0
        %5627 = vmatprep.subr.mxu0 0.0
        %5628 = vmatpush1.msra.mxu0 0.0
        %5629 = vmatprep.subr.mxu0 0.0
        %5630 = vmatpush1.msra.mxu0 0.0
        %5631 = vmatprep.subr.mxu0 0.0
        %5632 = vmatpush1.msra.mxu0 0.0
        %5633 = vmatprep.subr.mxu0 0.0
        %5634 = vmatpush1.msra.mxu0 0.0
        %5635 = vmatprep.subr.mxu0 0.0
        %5636 = vmatpush1.msra.mxu0 0.0
        %5637 = vmatprep.subr.mxu0 0.0
        %5638 = vmatpush1.msra.mxu0 0.0
        %5639 = vmatprep.subr.mxu0 0.0
        %5640 = vmatpush1.msra.mxu0 0.0
        %5641 = vmatprep.subr.mxu0 0.0
        %5642 = vmatpush1.msra.mxu0 0.0
        %5643 = vmatprep.subr.mxu0 0.0
        %5644 = vmatpush1.msra.mxu0 0.0
        %5645 = vmatprep.subr.mxu0 0.0
        %5646 = vmatpush1.msra.mxu0 0.0
        %5647 = vmatprep.subr.mxu0 0.0
        %5648 = vmatpush1.msra.mxu0 0.0
        %5649 = vmatprep.subr.mxu0 0.0
        %5650 = vmatpush1.msra.mxu0 0.0
        %5651 = vmatprep.subr.mxu0 0.0
        %5652 = vmatpush1.msra.mxu0 0.0
        %5653 = vmatprep.subr.mxu0 0.0
        %5654 = vmatpush1.msra.mxu0 0.0
        %5655 = vmatprep.subr.mxu0 0.0
        %5656 = vmatpush1.msra.mxu0 0.0
        %5657 = vmatprep.subr.mxu0 0.0
        %5658 = vmatpush1.msra.mxu0 0.0
        %5659 = vmatprep.subr.mxu0 0.0
        %5660 = vmatpush1.msra.mxu0 0.0
        %5661 = vmatprep.mubr.f32.mxu0 0.0
        %5662 = vmatmul.mubr.f32.gmra.mrb[0].mxu0 %v5524
        %v5663 = vpop.f32.mrb[0].mxu0
        %v5664 = vadd.f32 %v5521, %v5663
        %v5665 = vpop.f32.mrb[0].mxu0
        %v5666 = vadd.f32 %v5521, %v5665
        %5667 = vdwg.mxu0
        %vm5668 = vcmp.ge.f32.partialorder %v5593, 0.0
        %vm5669 = vcmp.ge.f32.partialorder %v5595, 0.0
        %vm5670 = vcmp.ge.f32.partialorder %v5664, 0.0
        %vm5671 = vcmp.ge.f32.partialorder %v5666, 0.0
        %v5672 = vstv %s5147
        %v5673 = vmul.f32 %v5672, %v5593
        %v5674 = vmul.f32 %v5672, %v5595
        %v5675 = vmul.f32 %v5672, %v5664
        %v5676 = vmul.f32 %v5672, %v5666
        %v5677 = vsel %vm5668, %v5593, %v5673
        %v5678 = vsel %vm5669, %v5595, %v5674
        %v5679 = vsel %vm5670, %v5664, %v5675
        %v5680 = vsel %vm5671, %v5666, %v5676
        %v5681 = vsel %vm1071, %v5677, 0.0
        %v5682 = vsel %vm1072, %v5678, 0.0
        %v5683 = vsel %vm1073, %v5679, 0.0
        %v5684 = vsel %vm1074, %v5680, 0.0
        %v5685 = vrot.slane %v5681, 4
        %v5686 = vadd.f32 %v5681, %v5685
        %v5687 = vrot.slane %v5686, 2
        %v5688 = vadd.f32 %v5686, %v5687
        %v5689 = vrot.slane %v5688, 1
        %v5690 = vadd.f32 %v5688, %v5689
        %v5691 = vrot.slane %v5682, 4
        %v5692 = vadd.f32 %v5682, %v5691
        %v5693 = vrot.slane %v5692, 2
        %v5694 = vadd.f32 %v5692, %v5693
        %v5695 = vrot.slane %v5694, 1
        %v5696 = vadd.f32 %v5694, %v5695
        %v5697 = vrot.slane %v5683, 4
        %v5698 = vadd.f32 %v5683, %v5697
        %v5699 = vrot.slane %v5698, 2
        %v5700 = vadd.f32 %v5698, %v5699
        %v5701 = vrot.slane %v5700, 1
        %v5702 = vadd.f32 %v5700, %v5701
        %v5703 = vrot.slane %v5684, 4
        %v5704 = vadd.f32 %v5684, %v5703
        %v5705 = vrot.slane %v5704, 2
        %v5706 = vadd.f32 %v5704, %v5705
        %v5707 = vrot.slane %v5706, 1
        %v5708 = vadd.f32 %v5706, %v5707
        %v5709 = vmul.f32 %v5681, %v5681
        %v5710 = vmul.f32 %v5682, %v5682
        %v5711 = vmul.f32 %v5683, %v5683
        %v5712 = vmul.f32 %v5684, %v5684
        %v5713 = vrot.slane %v5709, 4
        %v5714 = vadd.f32 %v5709, %v5713
        %v5715 = vrot.slane %v5714, 2
        %v5716 = vadd.f32 %v5714, %v5715
        %v5717 = vrot.slane %v5716, 1
        %v5718 = vadd.f32 %v5716, %v5717
        %v5719 = vrot.slane %v5710, 4
        %v5720 = vadd.f32 %v5710, %v5719
        %v5721 = vrot.slane %v5720, 2
        %v5722 = vadd.f32 %v5720, %v5721
        %v5723 = vrot.slane %v5722, 1
        %v5724 = vadd.f32 %v5722, %v5723
        %v5725 = vrot.slane %v5711, 4
        %v5726 = vadd.f32 %v5711, %v5725
        %v5727 = vrot.slane %v5726, 2
        %v5728 = vadd.f32 %v5726, %v5727
        %v5729 = vrot.slane %v5728, 1
        %v5730 = vadd.f32 %v5728, %v5729
        %v5731 = vrot.slane %v5712, 4
        %v5732 = vadd.f32 %v5712, %v5731
        %v5733 = vrot.slane %v5732, 2
        %v5734 = vadd.f32 %v5732, %v5733
        %v5735 = vrot.slane %v5734, 1
        %v5736 = vadd.f32 %v5734, %v5735
        %v5737 = vsel %vm1131, %v5690, %v5718
        %v5738 = vsel %vm1131, %v5696, %v5724
        %v5739 = vsel %vm1131, %v5702, %v5730
        %v5740 = vsel %vm1131, %v5708, %v5736
        %5741 = vmatprep.subr.mxu0 0.0
        %5742 = vmatpush1.msra.mxu0 %v434
        %5743 = vmatprep.subr.mxu0 0.0
        %5744 = vmatpush1.msra.mxu0 %v435
        %5745 = vmatprep.subr.mxu0 0.0
        %5746 = vmatpush1.msra.mxu0 %v436
        %5747 = vmatprep.subr.mxu0 0.0
        %5748 = vmatpush1.msra.mxu0 %v437
        %5749 = vmatprep.subr.mxu0 0.0
        %5750 = vmatpush1.msra.mxu0 %v438
        %5751 = vmatprep.subr.mxu0 0.0
        %5752 = vmatpush1.msra.mxu0 %v439
        %5753 = vmatprep.subr.mxu0 0.0
        %5754 = vmatpush1.msra.mxu0 %v440
        %5755 = vmatprep.subr.mxu0 0.0
        %5756 = vmatpush1.msra.mxu0 %v441
        %5757 = vmatprep.subr.mxu0 0.0
        %5758 = vmatpush1.msra.mxu0 %v442
        %5759 = vmatprep.subr.mxu0 0.0
        %5760 = vmatpush1.msra.mxu0 %v443
        %5761 = vmatprep.subr.mxu0 0.0
        %5762 = vmatpush1.msra.mxu0 %v444
        %5763 = vmatprep.subr.mxu0 0.0
        %5764 = vmatpush1.msra.mxu0 %v445
        %5765 = vmatprep.subr.mxu0 0.0
        %5766 = vmatpush1.msra.mxu0 %v446
        %5767 = vmatprep.subr.mxu0 0.0
        %5768 = vmatpush1.msra.mxu0 %v447
        %5769 = vmatprep.subr.mxu0 0.0
        %5770 = vmatpush1.msra.mxu0 %v448
        %5771 = vmatprep.subr.mxu0 0.0
        %5772 = vmatpush1.msra.mxu0 %v449
        %5773 = vmatprep.subr.mxu0 0.0
        %5774 = vmatpush1.msra.mxu0 %v450
        %5775 = vmatprep.subr.mxu0 0.0
        %5776 = vmatpush1.msra.mxu0 %v451
        %5777 = vmatprep.subr.mxu0 0.0
        %5778 = vmatpush1.msra.mxu0 %v452
        %5779 = vmatprep.subr.mxu0 0.0
        %5780 = vmatpush1.msra.mxu0 %v453
        %5781 = vmatprep.subr.mxu0 0.0
        %5782 = vmatpush1.msra.mxu0 %v454
        %5783 = vmatprep.subr.mxu0 0.0
        %5784 = vmatpush1.msra.mxu0 %v455
        %5785 = vmatprep.subr.mxu0 0.0
        %5786 = vmatpush1.msra.mxu0 %v456
        %5787 = vmatprep.subr.mxu0 0.0
        %5788 = vmatpush1.msra.mxu0 %v457
        %5789 = vmatprep.subr.mxu0 0.0
        %5790 = vmatpush1.msra.mxu0 %v458
        %5791 = vmatprep.subr.mxu0 0.0
        %5792 = vmatpush1.msra.mxu0 %v459
        %5793 = vmatprep.subr.mxu0 0.0
        %5794 = vmatpush1.msra.mxu0 %v460
        %5795 = vmatprep.subr.mxu0 0.0
        %5796 = vmatpush1.msra.mxu0 %v461
        %5797 = vmatprep.subr.mxu0 0.0
        %5798 = vmatpush1.msra.mxu0 %v462
        %5799 = vmatprep.subr.mxu0 0.0
        %5800 = vmatpush1.msra.mxu0 %v463
        %5801 = vmatprep.subr.mxu0 0.0
        %5802 = vmatpush1.msra.mxu0 %v464
        %5803 = vmatprep.subr.mxu0 0.0
        %5804 = vmatpush1.msra.mxu0 %v465
        %5805 = vmatprep.mubr.f32.mxu0 %v5738
        %5806 = vmatmul.mubr.f32.gmra.mrb[0].mxu0 %v5737
        %v5807 = vpop.f32.mrb[0].mxu0
        %v5808 = vadd.f32 0.0, %v5807
        %v5809 = vpop.f32.mrb[0].mxu0
        %5810 = vdwg.mxu0
        %5811 = vmatprep.subr.mxu0 0.0
        %5812 = vmatpush1.msra.mxu0 %v466
        %5813 = vmatprep.subr.mxu0 0.0
        %5814 = vmatpush1.msra.mxu0 %v467
        %5815 = vmatprep.subr.mxu0 0.0
        %5816 = vmatpush1.msra.mxu0 %v468
        %5817 = vmatprep.subr.mxu0 0.0
        %5818 = vmatpush1.msra.mxu0 %v469
        %5819 = vmatprep.subr.mxu0 0.0
        %5820 = vmatpush1.msra.mxu0 %v470
        %5821 = vmatprep.subr.mxu0 0.0
        %5822 = vmatpush1.msra.mxu0 %v471
        %5823 = vmatprep.subr.mxu0 0.0
        %5824 = vmatpush1.msra.mxu0 %v472
        %5825 = vmatprep.subr.mxu0 0.0
        %5826 = vmatpush1.msra.mxu0 %v473
        %5827 = vmatprep.subr.mxu0 0.0
        %5828 = vmatpush1.msra.mxu0 %v474
        %5829 = vmatprep.subr.mxu0 0.0
        %5830 = vmatpush1.msra.mxu0 %v475
        %5831 = vmatprep.subr.mxu0 0.0
        %5832 = vmatpush1.msra.mxu0 %v476
        %5833 = vmatprep.subr.mxu0 0.0
        %5834 = vmatpush1.msra.mxu0 %v477
        %5835 = vmatprep.subr.mxu0 0.0
        %5836 = vmatpush1.msra.mxu0 %v478
        %5837 = vmatprep.subr.mxu0 0.0
        %5838 = vmatpush1.msra.mxu0 %v479
        %5839 = vmatprep.subr.mxu0 0.0
        %5840 = vmatpush1.msra.mxu0 %v480
        %5841 = vmatprep.subr.mxu0 0.0
        %5842 = vmatpush1.msra.mxu0 %v481
        %5843 = vmatprep.subr.mxu0 0.0
        %5844 = vmatpush1.msra.mxu0 %v482
        %5845 = vmatprep.subr.mxu0 0.0
        %5846 = vmatpush1.msra.mxu0 %v483
        %5847 = vmatprep.subr.mxu0 0.0
        %5848 = vmatpush1.msra.mxu0 %v484
        %5849 = vmatprep.subr.mxu0 0.0
        %5850 = vmatpush1.msra.mxu0 %v485
        %5851 = vmatprep.subr.mxu0 0.0
        %5852 = vmatpush1.msra.mxu0 %v486
        %5853 = vmatprep.subr.mxu0 0.0
        %5854 = vmatpush1.msra.mxu0 %v487
        %5855 = vmatprep.subr.mxu0 0.0
        %5856 = vmatpush1.msra.mxu0 %v488
        %5857 = vmatprep.subr.mxu0 0.0
        %5858 = vmatpush1.msra.mxu0 %v489
        %5859 = vmatprep.subr.mxu0 0.0
        %5860 = vmatpush1.msra.mxu0 %v490
        %5861 = vmatprep.subr.mxu0 0.0
        %5862 = vmatpush1.msra.mxu0 %v491
        %5863 = vmatprep.subr.mxu0 0.0
        %5864 = vmatpush1.msra.mxu0 %v492
        %5865 = vmatprep.subr.mxu0 0.0
        %5866 = vmatpush1.msra.mxu0 %v493
        %5867 = vmatprep.subr.mxu0 0.0
        %5868 = vmatpush1.msra.mxu0 %v494
        %5869 = vmatprep.subr.mxu0 0.0
        %5870 = vmatpush1.msra.mxu0 %v495
        %5871 = vmatprep.subr.mxu0 0.0
        %5872 = vmatpush1.msra.mxu0 %v496
        %5873 = vmatprep.subr.mxu0 0.0
        %5874 = vmatpush1.msra.mxu0 %v497
        %5875 = vmatprep.mubr.f32.mxu0 %v5740
        %5876 = vmatmul.mubr.f32.gmra.mrb[0].mxu0 %v5739
        %v5877 = vpop.f32.mrb[0].mxu0
        %v5878 = vadd.f32 %v5808, %v5877
        %v5879 = vpop.f32.mrb[0].mxu0
        %5880 = vdwg.mxu0
        %v5882 = vsel %vm1280, %v5878, 0
        %5884 = vmatprep.subr.mxu0 %v1287
        %5885 = vmatpush1.msra.mxu0 %v1285
        %5886 = vmatprep.subr.mxu0 0.0
        %5887 = vmatpush1.msra.mxu0 0.0
        %5888 = vmatprep.subr.mxu0 0.0
        %5889 = vmatpush1.msra.mxu0 0.0
        %5890 = vmatprep.subr.mxu0 0.0
        %5891 = vmatpush1.msra.mxu0 0.0
        %5892 = vmatprep.subr.mxu0 0.0
        %5893 = vmatpush1.msra.mxu0 0.0
        %5894 = vmatprep.subr.mxu0 0.0
        %5895 = vmatpush1.msra.mxu0 0.0
        %5896 = vmatprep.subr.mxu0 0.0
        %5897 = vmatpush1.msra.mxu0 0.0
        %5898 = vmatprep.subr.mxu0 0.0
        %5899 = vmatpush1.msra.mxu0 0.0
        %5900 = vmatprep.subr.mxu0 0.0
        %5901 = vmatpush1.msra.mxu0 0.0
        %5902 = vmatprep.subr.mxu0 0.0
        %5903 = vmatpush1.msra.mxu0 0.0
        %5904 = vmatprep.subr.mxu0 0.0
        %5905 = vmatpush1.msra.mxu0 0.0
        %5906 = vmatprep.subr.mxu0 0.0
        %5907 = vmatpush1.msra.mxu0 0.0
        %5908 = vmatprep.subr.mxu0 0.0
        %5909 = vmatpush1.msra.mxu0 0.0
        %5910 = vmatprep.subr.mxu0 0.0
        %5911 = vmatpush1.msra.mxu0 0.0
        %5912 = vmatprep.subr.mxu0 0.0
        %5913 = vmatpush1.msra.mxu0 0.0
        %5914 = vmatprep.subr.mxu0 0.0
        %5915 = vmatpush1.msra.mxu0 0.0
        %5916 = vmatprep.subr.mxu0 0.0
        %5917 = vmatpush1.msra.mxu0 0.0
        %5918 = vmatprep.subr.mxu0 0.0
        %5919 = vmatpush1.msra.mxu0 0.0
        %5920 = vmatprep.subr.mxu0 0.0
        %5921 = vmatpush1.msra.mxu0 0.0
        %5922 = vmatprep.subr.mxu0 0.0
        %5923 = vmatpush1.msra.mxu0 0.0
        %5924 = vmatprep.subr.mxu0 0.0
        %5925 = vmatpush1.msra.mxu0 0.0
        %5926 = vmatprep.subr.mxu0 0.0
        %5927 = vmatpush1.msra.mxu0 0.0
        %5928 = vmatprep.subr.mxu0 0.0
        %5929 = vmatpush1.msra.mxu0 0.0
        %5930 = vmatprep.subr.mxu0 0.0
        %5931 = vmatpush1.msra.mxu0 0.0
        %5932 = vmatprep.subr.mxu0 0.0
        %5933 = vmatpush1.msra.mxu0 0.0
        %5934 = vmatprep.subr.mxu0 0.0
        %5935 = vmatpush1.msra.mxu0 0.0
        %5936 = vmatprep.subr.mxu0 0.0
        %5937 = vmatpush1.msra.mxu0 0.0
        %5938 = vmatprep.subr.mxu0 0.0
        %5939 = vmatpush1.msra.mxu0 0.0
        %5940 = vmatprep.subr.mxu0 0.0
        %5941 = vmatpush1.msra.mxu0 0.0
        %5942 = vmatprep.subr.mxu0 0.0
        %5943 = vmatpush1.msra.mxu0 0.0
        %5944 = vmatprep.subr.mxu0 0.0
        %5945 = vmatpush1.msra.mxu0 0.0
        %5946 = vmatprep.subr.mxu0 0.0
        %5947 = vmatpush1.msra.mxu0 0.0
        %5948 = vmatprep.mubr.f32.mxu0 0.0
        %5949 = vmatmul.mubr.f32.gmra.mrb[0].mxu0 %v5882
        %v5950 = vpop.f32.mrb[0].mxu0
        %v5951 = vadd.f32 0.0, %v5950
        %v5952 = vpop.f32.mrb[0].mxu0
        %v5953 = vadd.f32 0.0, %v5952
        %5954 = vdwg.mxu0
        %5955 = vmatprep.subr.mxu0 %v1291
        %5956 = vmatpush1.msra.mxu0 %v1289
        %5957 = vmatprep.subr.mxu0 0.0
        %5958 = vmatpush1.msra.mxu0 0.0
        %5959 = vmatprep.subr.mxu0 0.0
        %5960 = vmatpush1.msra.mxu0 0.0
        %5961 = vmatprep.subr.mxu0 0.0
        %5962 = vmatpush1.msra.mxu0 0.0
        %5963 = vmatprep.subr.mxu0 0.0
        %5964 = vmatpush1.msra.mxu0 0.0
        %5965 = vmatprep.subr.mxu0 0.0
        %5966 = vmatpush1.msra.mxu0 0.0
        %5967 = vmatprep.subr.mxu0 0.0
        %5968 = vmatpush1.msra.mxu0 0.0
        %5969 = vmatprep.subr.mxu0 0.0
        %5970 = vmatpush1.msra.mxu0 0.0
        %5971 = vmatprep.subr.mxu0 0.0
        %5972 = vmatpush1.msra.mxu0 0.0
        %5973 = vmatprep.subr.mxu0 0.0
        %5974 = vmatpush1.msra.mxu0 0.0
        %5975 = vmatprep.subr.mxu0 0.0
        %5976 = vmatpush1.msra.mxu0 0.0
        %5977 = vmatprep.subr.mxu0 0.0
        %5978 = vmatpush1.msra.mxu0 0.0
        %5979 = vmatprep.subr.mxu0 0.0
        %5980 = vmatpush1.msra.mxu0 0.0
        %5981 = vmatprep.subr.mxu0 0.0
        %5982 = vmatpush1.msra.mxu0 0.0
        %5983 = vmatprep.subr.mxu0 0.0
        %5984 = vmatpush1.msra.mxu0 0.0
        %5985 = vmatprep.subr.mxu0 0.0
        %5986 = vmatpush1.msra.mxu0 0.0
        %5987 = vmatprep.subr.mxu0 0.0
        %5988 = vmatpush1.msra.mxu0 0.0
        %5989 = vmatprep.subr.mxu0 0.0
        %5990 = vmatpush1.msra.mxu0 0.0
        %5991 = vmatprep.subr.mxu0 0.0
        %5992 = vmatpush1.msra.mxu0 0.0
        %5993 = vmatprep.subr.mxu0 0.0
        %5994 = vmatpush1.msra.mxu0 0.0
        %5995 = vmatprep.subr.mxu0 0.0
        %5996 = vmatpush1.msra.mxu0 0.0
        %5997 = vmatprep.subr.mxu0 0.0
        %5998 = vmatpush1.msra.mxu0 0.0
        %5999 = vmatprep.subr.mxu0 0.0
        %6000 = vmatpush1.msra.mxu0 0.0
        %6001 = vmatprep.subr.mxu0 0.0
        %6002 = vmatpush1.msra.mxu0 0.0
        %6003 = vmatprep.subr.mxu0 0.0
        %6004 = vmatpush1.msra.mxu0 0.0
        %6005 = vmatprep.subr.mxu0 0.0
        %6006 = vmatpush1.msra.mxu0 0.0
        %6007 = vmatprep.subr.mxu0 0.0
        %6008 = vmatpush1.msra.mxu0 0.0
        %6009 = vmatprep.subr.mxu0 0.0
        %6010 = vmatpush1.msra.mxu0 0.0
        %6011 = vmatprep.subr.mxu0 0.0
        %6012 = vmatpush1.msra.mxu0 0.0
        %6013 = vmatprep.subr.mxu0 0.0
        %6014 = vmatpush1.msra.mxu0 0.0
        %6015 = vmatprep.subr.mxu0 0.0
        %6016 = vmatpush1.msra.mxu0 0.0
        %6017 = vmatprep.subr.mxu0 0.0
        %6018 = vmatpush1.msra.mxu0 0.0
        %6019 = vmatprep.mubr.f32.mxu0 0.0
        %6020 = vmatmul.mubr.f32.gmra.mrb[0].mxu0 %v5882
        %v6021 = vpop.f32.mrb[0].mxu0
        %v6022 = vadd.f32 0.0, %v6021
        %v6023 = vpop.f32.mrb[0].mxu0
        %v6024 = vadd.f32 0.0, %v6023
        %6025 = vdwg.mxu0
        %v6026 = vmul.f32 %v5951, 0.125
        %v6027 = vmul.f32 %v5953, 0.125
        %v6028 = vmul.f32 %v6022, 0.125
        %v6029 = vmul.f32 %v6024, 0.125
        %v6030 = vmul.f32 %v6026, %v6026
        %v6031 = vmul.f32 %v6027, %v6027
        %v6032 = vmul.f32 %v6028, %v6028
        %v6033 = vmul.f32 %v6029, %v6029
        %v6038 = vrot.slane %v6030, 7
        %v6039 = vrot.slane %v6031, 7
        %v6040 = vrot.slane %v6032, 7
        %v6041 = vrot.slane %v6033, 7
        %v6046 = vsub.f32 %v6026, %v6038
        %v6047 = vsub.f32 %v6027, %v6039
        %v6048 = vsub.f32 %v6028, %v6040
        %v6049 = vsub.f32 %v6029, %v6041
        %v6050 = vlaneseq
        %v6051 = vshrl.u32 %v6050, 7
        %v6052 = vsub.s32 0, %v6051
        %v6053 = vrot.slane %v6026, %v6052
        %v6054 = vlaneseq
        %v6055 = vshrl.u32 %v6054, 7
        %v6056 = vsub.s32 0, %v6055
        %v6057 = vrot.slane %v6027, %v6056
        %v6058 = vlaneseq
        %v6059 = vshrl.u32 %v6058, 7
        %v6060 = vsub.s32 0, %v6059
        %v6061 = vrot.slane %v6028, %v6060
        %v6062 = vlaneseq
        %v6063 = vshrl.u32 %v6062, 7
        %v6064 = vsub.s32 0, %v6063
        %v6065 = vrot.slane %v6029, %v6064
        %v6066 = vsub.f32 %v5677, %v6053
        %v6067 = vsub.f32 %v5678, %v6057
        %v6068 = vsub.f32 %v5679, %v6061
        %v6069 = vsub.f32 %v5680, %v6065
        %v6070 = vadd.f32 %v6046, 1.1920929e-07
        %v6071 = vadd.f32 %v6047, 1.1920929e-07
        %v6072 = vadd.f32 %v6048, 1.1920929e-07
        %v6073 = vadd.f32 %v6049, 1.1920929e-07
        %v6074 = vrsqrt.pop %v6070
        %v6075 = vrsqrt.pop %v6071
        %v6076 = vrsqrt.pop %v6072
        %v6077 = vrsqrt.pop %v6073
        %v6078 = vlaneseq
        %v6079 = vshrl.u32 %v6078, 7
        %v6080 = vsub.s32 1, %v6079
        %v6081 = vrot.slane %v6074, %v6080
        %v6082 = vlaneseq
        %v6083 = vshrl.u32 %v6082, 7
        %v6084 = vsub.s32 1, %v6083
        %v6085 = vrot.slane %v6075, %v6084
        %v6086 = vlaneseq
        %v6087 = vshrl.u32 %v6086, 7
        %v6088 = vsub.s32 1, %v6087
        %v6089 = vrot.slane %v6076, %v6088
        %v6090 = vlaneseq
        %v6091 = vshrl.u32 %v6090, 7
        %v6092 = vsub.s32 1, %v6091
        %v6093 = vrot.slane %v6077, %v6092
        %v6094 = vmul.f32 %v6066, %v6081
        %v6095 = vmul.f32 %v6067, %v6085
        %v6096 = vmul.f32 %v6068, %v6089
        %v6097 = vmul.f32 %v6069, %v6093
        %6098 = vset.pattern.permute.xlu0 27
        %6099 = vperm.xlu0 %6098, %v431
        %v6100 = vpop.permute.xlu0 %6099
        %v6102 = vmul.f32 %v6094, %v6100
        %v6103 = vmul.f32 %v6095, %v6100
        %v6104 = vmul.f32 %v6096, %v6100
        %v6105 = vmul.f32 %v6097, %v6100
        %6106 = vset.pattern.permute.xlu0 28
        %6107 = vperm.xlu0 %6106, %v431
        %v6108 = vpop.permute.xlu0 %6107
        %v6110 = vadd.f32 %v6102, %v6108
        %v6111 = vadd.f32 %v6103, %v6108
        %v6112 = vadd.f32 %v6104, %v6108
        %v6113 = vadd.f32 %v6105, %v6108
        %v6114 = vadd.f32 %v5141, %v6110
        %v6115 = vadd.f32 %v5142, %v6111
        %v6116 = vadd.f32 %v5143, %v6112
        %v6117 = vadd.f32 %v5144, %v6113
        %6118 = vst [vmem:[#allocation2] sm:$0xff] %v6114
        %6119 = vst [vmem:[#allocation2 + $0x8] sm:$0xff] %v6115
        %6120 = vst [vmem:[#allocation2 + $0x10] sm:$0xff] %v6116
        %6121 = vst [vmem:[#allocation2 + $0x18] sm:$0xff] %v6117
        %s6122 = scalar_lea.vmem %s4, 16
        %v6123 = vld [vmem:[%s6122] sm:$0xff]
        %v6124 = vld [vmem:[#allocation2] sm:$0xff]
        %v6125 = vld [vmem:[#allocation2 + $0x8] sm:$0xff]
        %v6126 = vld [vmem:[#allocation2 + $0x10] sm:$0xff]
        %v6127 = vld [vmem:[#allocation2 + $0x18] sm:$0xff]
        %6128 = vset.pattern.permute.xlu0 29
        %6129 = vperm.xlu0 %6128, %v431
        %v6130 = vpop.permute.xlu0 %6129
        %v6133 = vsel %vm535, %v6123, 0
        %6135 = vmatprep.subr.mxu0 %v6125
        %6136 = vmatpush1.msra.mxu0 %v6124
        %6137 = vmatprep.subr.mxu0 0.0
        %6138 = vmatpush1.msra.mxu0 0.0
        %6139 = vmatprep.subr.mxu0 0.0
        %6140 = vmatpush1.msra.mxu0 0.0
        %6141 = vmatprep.subr.mxu0 0.0
        %6142 = vmatpush1.msra.mxu0 0.0
        %6143 = vmatprep.subr.mxu0 0.0
        %6144 = vmatpush1.msra.mxu0 0.0
        %6145 = vmatprep.subr.mxu0 0.0
        %6146 = vmatpush1.msra.mxu0 0.0
        %6147 = vmatprep.subr.mxu0 0.0
        %6148 = vmatpush1.msra.mxu0 0.0
        %6149 = vmatprep.subr.mxu0 0.0
        %6150 = vmatpush1.msra.mxu0 0.0
        %6151 = vmatprep.subr.mxu0 0.0
        %6152 = vmatpush1.msra.mxu0 0.0
        %6153 = vmatprep.subr.mxu0 0.0
        %6154 = vmatpush1.msra.mxu0 0.0
        %6155 = vmatprep.subr.mxu0 0.0
        %6156 = vmatpush1.msra.mxu0 0.0
        %6157 = vmatprep.subr.mxu0 0.0
        %6158 = vmatpush1.msra.mxu0 0.0
        %6159 = vmatprep.subr.mxu0 0.0
        %6160 = vmatpush1.msra.mxu0 0.0
        %6161 = vmatprep.subr.mxu0 0.0
        %6162 = vmatpush1.msra.mxu0 0.0
        %6163 = vmatprep.subr.mxu0 0.0
        %6164 = vmatpush1.msra.mxu0 0.0
        %6165 = vmatprep.subr.mxu0 0.0
        %6166 = vmatpush1.msra.mxu0 0.0
        %6167 = vmatprep.subr.mxu0 0.0
        %6168 = vmatpush1.msra.mxu0 0.0
        %6169 = vmatprep.subr.mxu0 0.0
        %6170 = vmatpush1.msra.mxu0 0.0
        %6171 = vmatprep.subr.mxu0 0.0
        %6172 = vmatpush1.msra.mxu0 0.0
        %6173 = vmatprep.subr.mxu0 0.0
        %6174 = vmatpush1.msra.mxu0 0.0
        %6175 = vmatprep.subr.mxu0 0.0
        %6176 = vmatpush1.msra.mxu0 0.0
        %6177 = vmatprep.subr.mxu0 0.0
        %6178 = vmatpush1.msra.mxu0 0.0
        %6179 = vmatprep.subr.mxu0 0.0
        %6180 = vmatpush1.msra.mxu0 0.0
        %6181 = vmatprep.subr.mxu0 0.0
        %6182 = vmatpush1.msra.mxu0 0.0
        %6183 = vmatprep.subr.mxu0 0.0
        %6184 = vmatpush1.msra.mxu0 0.0
        %6185 = vmatprep.subr.mxu0 0.0
        %6186 = vmatpush1.msra.mxu0 0.0
        %6187 = vmatprep.subr.mxu0 0.0
        %6188 = vmatpush1.msra.mxu0 0.0
        %6189 = vmatprep.subr.mxu0 0.0
        %6190 = vmatpush1.msra.mxu0 0.0
        %6191 = vmatprep.subr.mxu0 0.0
        %6192 = vmatpush1.msra.mxu0 0.0
        %6193 = vmatprep.subr.mxu0 0.0
        %6194 = vmatpush1.msra.mxu0 0.0
        %6195 = vmatprep.subr.mxu0 0.0
        %6196 = vmatpush1.msra.mxu0 0.0
        %6197 = vmatprep.subr.mxu0 0.0
        %6198 = vmatpush1.msra.mxu0 0.0
        %6199 = vmatprep.mubr.f32.mxu0 0.0
        %6200 = vmatmul.mubr.f32.gmra.mrb[0].mxu0 %v6133
        %v6201 = vpop.f32.mrb[0].mxu0
        %v6202 = vadd.f32 %v6130, %v6201
        %v6203 = vpop.f32.mrb[0].mxu0
        %v6204 = vadd.f32 %v6130, %v6203
        %6205 = vdwg.mxu0
        %6206 = vmatprep.subr.mxu0 %v6127
        %6207 = vmatpush1.msra.mxu0 %v6126
        %6208 = vmatprep.subr.mxu0 0.0
        %6209 = vmatpush1.msra.mxu0 0.0
        %6210 = vmatprep.subr.mxu0 0.0
        %6211 = vmatpush1.msra.mxu0 0.0
        %6212 = vmatprep.subr.mxu0 0.0
        %6213 = vmatpush1.msra.mxu0 0.0
        %6214 = vmatprep.subr.mxu0 0.0
        %6215 = vmatpush1.msra.mxu0 0.0
        %6216 = vmatprep.subr.mxu0 0.0
        %6217 = vmatpush1.msra.mxu0 0.0
        %6218 = vmatprep.subr.mxu0 0.0
        %6219 = vmatpush1.msra.mxu0 0.0
        %6220 = vmatprep.subr.mxu0 0.0
        %6221 = vmatpush1.msra.mxu0 0.0
        %6222 = vmatprep.subr.mxu0 0.0
        %6223 = vmatpush1.msra.mxu0 0.0
        %6224 = vmatprep.subr.mxu0 0.0
        %6225 = vmatpush1.msra.mxu0 0.0
        %6226 = vmatprep.subr.mxu0 0.0
        %6227 = vmatpush1.msra.mxu0 0.0
        %6228 = vmatprep.subr.mxu0 0.0
        %6229 = vmatpush1.msra.mxu0 0.0
        %6230 = vmatprep.subr.mxu0 0.0
        %6231 = vmatpush1.msra.mxu0 0.0
        %6232 = vmatprep.subr.mxu0 0.0
        %6233 = vmatpush1.msra.mxu0 0.0
        %6234 = vmatprep.subr.mxu0 0.0
        %6235 = vmatpush1.msra.mxu0 0.0
        %6236 = vmatprep.subr.mxu0 0.0
        %6237 = vmatpush1.msra.mxu0 0.0
        %6238 = vmatprep.subr.mxu0 0.0
        %6239 = vmatpush1.msra.mxu0 0.0
        %6240 = vmatprep.subr.mxu0 0.0
        %6241 = vmatpush1.msra.mxu0 0.0
        %6242 = vmatprep.subr.mxu0 0.0
        %6243 = vmatpush1.msra.mxu0 0.0
        %6244 = vmatprep.subr.mxu0 0.0
        %6245 = vmatpush1.msra.mxu0 0.0
        %6246 = vmatprep.subr.mxu0 0.0
        %6247 = vmatpush1.msra.mxu0 0.0
        %6248 = vmatprep.subr.mxu0 0.0
        %6249 = vmatpush1.msra.mxu0 0.0
        %6250 = vmatprep.subr.mxu0 0.0
        %6251 = vmatpush1.msra.mxu0 0.0
        %6252 = vmatprep.subr.mxu0 0.0
        %6253 = vmatpush1.msra.mxu0 0.0
        %6254 = vmatprep.subr.mxu0 0.0
        %6255 = vmatpush1.msra.mxu0 0.0
        %6256 = vmatprep.subr.mxu0 0.0
        %6257 = vmatpush1.msra.mxu0 0.0
        %6258 = vmatprep.subr.mxu0 0.0
        %6259 = vmatpush1.msra.mxu0 0.0
        %6260 = vmatprep.subr.mxu0 0.0
        %6261 = vmatpush1.msra.mxu0 0.0
        %6262 = vmatprep.subr.mxu0 0.0
        %6263 = vmatpush1.msra.mxu0 0.0
        %6264 = vmatprep.subr.mxu0 0.0
        %6265 = vmatpush1.msra.mxu0 0.0
        %6266 = vmatprep.subr.mxu0 0.0
        %6267 = vmatpush1.msra.mxu0 0.0
        %6268 = vmatprep.subr.mxu0 0.0
        %6269 = vmatpush1.msra.mxu0 0.0
        %6270 = vmatprep.mubr.f32.mxu0 0.0
        %6271 = vmatmul.mubr.f32.gmra.mrb[0].mxu0 %v6133
        %v6272 = vpop.f32.mrb[0].mxu0
        %v6273 = vadd.f32 %v6130, %v6272
        %v6274 = vpop.f32.mrb[0].mxu0
        %v6275 = vadd.f32 %v6130, %v6274
        %6276 = vdwg.mxu0
        %vm6277 = vcmp.ge.f32.partialorder %v6202, 0.0
        %vm6278 = vcmp.ge.f32.partialorder %v6204, 0.0
        %vm6279 = vcmp.ge.f32.partialorder %v6273, 0.0
        %vm6280 = vcmp.ge.f32.partialorder %v6275, 0.0
        %v6281 = vstv %s5148
        %v6282 = vmul.f32 %v6281, %v6202
        %v6283 = vmul.f32 %v6281, %v6204
        %v6284 = vmul.f32 %v6281, %v6273
        %v6285 = vmul.f32 %v6281, %v6275
        %v6286 = vsel %vm6277, %v6202, %v6282
        %v6287 = vsel %vm6278, %v6204, %v6283
        %v6288 = vsel %vm6279, %v6273, %v6284
        %v6289 = vsel %vm6280, %v6275, %v6285
        %v6290 = vsel %vm1071, %v6286, 0.0
        %v6291 = vsel %vm1072, %v6287, 0.0
        %v6292 = vsel %vm1073, %v6288, 0.0
        %v6293 = vsel %vm1074, %v6289, 0.0
        %v6294 = vrot.slane %v6290, 4
        %v6295 = vadd.f32 %v6290, %v6294
        %v6296 = vrot.slane %v6295, 2
        %v6297 = vadd.f32 %v6295, %v6296
        %v6298 = vrot.slane %v6297, 1
        %v6299 = vadd.f32 %v6297, %v6298
        %v6300 = vrot.slane %v6291, 4
        %v6301 = vadd.f32 %v6291, %v6300
        %v6302 = vrot.slane %v6301, 2
        %v6303 = vadd.f32 %v6301, %v6302
        %v6304 = vrot.slane %v6303, 1
        %v6305 = vadd.f32 %v6303, %v6304
        %v6306 = vrot.slane %v6292, 4
        %v6307 = vadd.f32 %v6292, %v6306
        %v6308 = vrot.slane %v6307, 2
        %v6309 = vadd.f32 %v6307, %v6308
        %v6310 = vrot.slane %v6309, 1
        %v6311 = vadd.f32 %v6309, %v6310
        %v6312 = vrot.slane %v6293, 4
        %v6313 = vadd.f32 %v6293, %v6312
        %v6314 = vrot.slane %v6313, 2
        %v6315 = vadd.f32 %v6313, %v6314
        %v6316 = vrot.slane %v6315, 1
        %v6317 = vadd.f32 %v6315, %v6316
        %v6318 = vmul.f32 %v6290, %v6290
        %v6319 = vmul.f32 %v6291, %v6291
        %v6320 = vmul.f32 %v6292, %v6292
        %v6321 = vmul.f32 %v6293, %v6293
        %v6322 = vrot.slane %v6318, 4
        %v6323 = vadd.f32 %v6318, %v6322
        %v6324 = vrot.slane %v6323, 2
        %v6325 = vadd.f32 %v6323, %v6324
        %v6326 = vrot.slane %v6325, 1
        %v6327 = vadd.f32 %v6325, %v6326
        %v6328 = vrot.slane %v6319, 4
        %v6329 = vadd.f32 %v6319, %v6328
        %v6330 = vrot.slane %v6329, 2
        %v6331 = vadd.f32 %v6329, %v6330
        %v6332 = vrot.slane %v6331, 1
        %v6333 = vadd.f32 %v6331, %v6332
        %v6334 = vrot.slane %v6320, 4
        %v6335 = vadd.f32 %v6320, %v6334
        %v6336 = vrot.slane %v6335, 2
        %v6337 = vadd.f32 %v6335, %v6336
        %v6338 = vrot.slane %v6337, 1
        %v6339 = vadd.f32 %v6337, %v6338
        %v6340 = vrot.slane %v6321, 4
        %v6341 = vadd.f32 %v6321, %v6340
        %v6342 = vrot.slane %v6341, 2
        %v6343 = vadd.f32 %v6341, %v6342
        %v6344 = vrot.slane %v6343, 1
        %v6345 = vadd.f32 %v6343, %v6344
        %v6346 = vsel %vm1131, %v6299, %v6327
        %v6347 = vsel %vm1131, %v6305, %v6333
        %v6348 = vsel %vm1131, %v6311, %v6339
        %v6349 = vsel %vm1131, %v6317, %v6345
        %6350 = vmatprep.subr.mxu0 0.0
        %6351 = vmatpush1.msra.mxu0 %v434
        %6352 = vmatprep.subr.mxu0 0.0
        %6353 = vmatpush1.msra.mxu0 %v435
        %6354 = vmatprep.subr.mxu0 0.0
        %6355 = vmatpush1.msra.mxu0 %v436
        %6356 = vmatprep.subr.mxu0 0.0
        %6357 = vmatpush1.msra.mxu0 %v437
        %6358 = vmatprep.subr.mxu0 0.0
        %6359 = vmatpush1.msra.mxu0 %v438
        %6360 = vmatprep.subr.mxu0 0.0
        %6361 = vmatpush1.msra.mxu0 %v439
        %6362 = vmatprep.subr.mxu0 0.0
        %6363 = vmatpush1.msra.mxu0 %v440
        %6364 = vmatprep.subr.mxu0 0.0
        %6365 = vmatpush1.msra.mxu0 %v441
        %6366 = vmatprep.subr.mxu0 0.0
        %6367 = vmatpush1.msra.mxu0 %v442
        %6368 = vmatprep.subr.mxu0 0.0
        %6369 = vmatpush1.msra.mxu0 %v443
        %6370 = vmatprep.subr.mxu0 0.0
        %6371 = vmatpush1.msra.mxu0 %v444
        %6372 = vmatprep.subr.mxu0 0.0
        %6373 = vmatpush1.msra.mxu0 %v445
        %6374 = vmatprep.subr.mxu0 0.0
        %6375 = vmatpush1.msra.mxu0 %v446
        %6376 = vmatprep.subr.mxu0 0.0
        %6377 = vmatpush1.msra.mxu0 %v447
        %6378 = vmatprep.subr.mxu0 0.0
        %6379 = vmatpush1.msra.mxu0 %v448
        %6380 = vmatprep.subr.mxu0 0.0
        %6381 = vmatpush1.msra.mxu0 %v449
        %6382 = vmatprep.subr.mxu0 0.0
        %6383 = vmatpush1.msra.mxu0 %v450
        %6384 = vmatprep.subr.mxu0 0.0
        %6385 = vmatpush1.msra.mxu0 %v451
        %6386 = vmatprep.subr.mxu0 0.0
        %6387 = vmatpush1.msra.mxu0 %v452
        %6388 = vmatprep.subr.mxu0 0.0
        %6389 = vmatpush1.msra.mxu0 %v453
        %6390 = vmatprep.subr.mxu0 0.0
        %6391 = vmatpush1.msra.mxu0 %v454
        %6392 = vmatprep.subr.mxu0 0.0
        %6393 = vmatpush1.msra.mxu0 %v455
        %6394 = vmatprep.subr.mxu0 0.0
        %6395 = vmatpush1.msra.mxu0 %v456
        %6396 = vmatprep.subr.mxu0 0.0
        %6397 = vmatpush1.msra.mxu0 %v457
        %6398 = vmatprep.subr.mxu0 0.0
        %6399 = vmatpush1.msra.mxu0 %v458
        %6400 = vmatprep.subr.mxu0 0.0
        %6401 = vmatpush1.msra.mxu0 %v459
        %6402 = vmatprep.subr.mxu0 0.0
        %6403 = vmatpush1.msra.mxu0 %v460
        %6404 = vmatprep.subr.mxu0 0.0
        %6405 = vmatpush1.msra.mxu0 %v461
        %6406 = vmatprep.subr.mxu0 0.0
        %6407 = vmatpush1.msra.mxu0 %v462
        %6408 = vmatprep.subr.mxu0 0.0
        %6409 = vmatpush1.msra.mxu0 %v463
        %6410 = vmatprep.subr.mxu0 0.0
        %6411 = vmatpush1.msra.mxu0 %v464
        %6412 = vmatprep.subr.mxu0 0.0
        %6413 = vmatpush1.msra.mxu0 %v465
        %6414 = vmatprep.mubr.f32.mxu0 %v6347
        %6415 = vmatmul.mubr.f32.gmra.mrb[0].mxu0 %v6346
        %v6416 = vpop.f32.mrb[0].mxu0
        %v6417 = vadd.f32 0.0, %v6416
        %v6418 = vpop.f32.mrb[0].mxu0
        %6419 = vdwg.mxu0
        %6420 = vmatprep.subr.mxu0 0.0
        %6421 = vmatpush1.msra.mxu0 %v466
        %6422 = vmatprep.subr.mxu0 0.0
        %6423 = vmatpush1.msra.mxu0 %v467
        %6424 = vmatprep.subr.mxu0 0.0
        %6425 = vmatpush1.msra.mxu0 %v468
        %6426 = vmatprep.subr.mxu0 0.0
        %6427 = vmatpush1.msra.mxu0 %v469
        %6428 = vmatprep.subr.mxu0 0.0
        %6429 = vmatpush1.msra.mxu0 %v470
        %6430 = vmatprep.subr.mxu0 0.0
        %6431 = vmatpush1.msra.mxu0 %v471
        %6432 = vmatprep.subr.mxu0 0.0
        %6433 = vmatpush1.msra.mxu0 %v472
        %6434 = vmatprep.subr.mxu0 0.0
        %6435 = vmatpush1.msra.mxu0 %v473
        %6436 = vmatprep.subr.mxu0 0.0
        %6437 = vmatpush1.msra.mxu0 %v474
        %6438 = vmatprep.subr.mxu0 0.0
        %6439 = vmatpush1.msra.mxu0 %v475
        %6440 = vmatprep.subr.mxu0 0.0
        %6441 = vmatpush1.msra.mxu0 %v476
        %6442 = vmatprep.subr.mxu0 0.0
        %6443 = vmatpush1.msra.mxu0 %v477
        %6444 = vmatprep.subr.mxu0 0.0
        %6445 = vmatpush1.msra.mxu0 %v478
        %6446 = vmatprep.subr.mxu0 0.0
        %6447 = vmatpush1.msra.mxu0 %v479
        %6448 = vmatprep.subr.mxu0 0.0
        %6449 = vmatpush1.msra.mxu0 %v480
        %6450 = vmatprep.subr.mxu0 0.0
        %6451 = vmatpush1.msra.mxu0 %v481
        %6452 = vmatprep.subr.mxu0 0.0
        %6453 = vmatpush1.msra.mxu0 %v482
        %6454 = vmatprep.subr.mxu0 0.0
        %6455 = vmatpush1.msra.mxu0 %v483
        %6456 = vmatprep.subr.mxu0 0.0
        %6457 = vmatpush1.msra.mxu0 %v484
        %6458 = vmatprep.subr.mxu0 0.0
        %6459 = vmatpush1.msra.mxu0 %v485
        %6460 = vmatprep.subr.mxu0 0.0
        %6461 = vmatpush1.msra.mxu0 %v486
        %6462 = vmatprep.subr.mxu0 0.0
        %6463 = vmatpush1.msra.mxu0 %v487
        %6464 = vmatprep.subr.mxu0 0.0
        %6465 = vmatpush1.msra.mxu0 %v488
        %6466 = vmatprep.subr.mxu0 0.0
        %6467 = vmatpush1.msra.mxu0 %v489
        %6468 = vmatprep.subr.mxu0 0.0
        %6469 = vmatpush1.msra.mxu0 %v490
        %6470 = vmatprep.subr.mxu0 0.0
        %6471 = vmatpush1.msra.mxu0 %v491
        %6472 = vmatprep.subr.mxu0 0.0
        %6473 = vmatpush1.msra.mxu0 %v492
        %6474 = vmatprep.subr.mxu0 0.0
        %6475 = vmatpush1.msra.mxu0 %v493
        %6476 = vmatprep.subr.mxu0 0.0
        %6477 = vmatpush1.msra.mxu0 %v494
        %6478 = vmatprep.subr.mxu0 0.0
        %6479 = vmatpush1.msra.mxu0 %v495
        %6480 = vmatprep.subr.mxu0 0.0
        %6481 = vmatpush1.msra.mxu0 %v496
        %6482 = vmatprep.subr.mxu0 0.0
        %6483 = vmatpush1.msra.mxu0 %v497
        %6484 = vmatprep.mubr.f32.mxu0 %v6349
        %6485 = vmatmul.mubr.f32.gmra.mrb[0].mxu0 %v6348
        %v6486 = vpop.f32.mrb[0].mxu0
        %v6487 = vadd.f32 %v6417, %v6486
        %v6488 = vpop.f32.mrb[0].mxu0
        %6489 = vdwg.mxu0
        %v6491 = vsel %vm1280, %v6487, 0
        %6493 = vmatprep.subr.mxu0 %v1287
        %6494 = vmatpush1.msra.mxu0 %v1285
        %6495 = vmatprep.subr.mxu0 0.0
        %6496 = vmatpush1.msra.mxu0 0.0
        %6497 = vmatprep.subr.mxu0 0.0
        %6498 = vmatpush1.msra.mxu0 0.0
        %6499 = vmatprep.subr.mxu0 0.0
        %6500 = vmatpush1.msra.mxu0 0.0
        %6501 = vmatprep.subr.mxu0 0.0
        %6502 = vmatpush1.msra.mxu0 0.0
        %6503 = vmatprep.subr.mxu0 0.0
        %6504 = vmatpush1.msra.mxu0 0.0
        %6505 = vmatprep.subr.mxu0 0.0
        %6506 = vmatpush1.msra.mxu0 0.0
        %6507 = vmatprep.subr.mxu0 0.0
        %6508 = vmatpush1.msra.mxu0 0.0
        %6509 = vmatprep.subr.mxu0 0.0
        %6510 = vmatpush1.msra.mxu0 0.0
        %6511 = vmatprep.subr.mxu0 0.0
        %6512 = vmatpush1.msra.mxu0 0.0
        %6513 = vmatprep.subr.mxu0 0.0
        %6514 = vmatpush1.msra.mxu0 0.0
        %6515 = vmatprep.subr.mxu0 0.0
        %6516 = vmatpush1.msra.mxu0 0.0
        %6517 = vmatprep.subr.mxu0 0.0
        %6518 = vmatpush1.msra.mxu0 0.0
        %6519 = vmatprep.subr.mxu0 0.0
        %6520 = vmatpush1.msra.mxu0 0.0
        %6521 = vmatprep.subr.mxu0 0.0
        %6522 = vmatpush1.msra.mxu0 0.0
        %6523 = vmatprep.subr.mxu0 0.0
        %6524 = vmatpush1.msra.mxu0 0.0
        %6525 = vmatprep.subr.mxu0 0.0
        %6526 = vmatpush1.msra.mxu0 0.0
        %6527 = vmatprep.subr.mxu0 0.0
        %6528 = vmatpush1.msra.mxu0 0.0
        %6529 = vmatprep.subr.mxu0 0.0
        %6530 = vmatpush1.msra.mxu0 0.0
        %6531 = vmatprep.subr.mxu0 0.0
        %6532 = vmatpush1.msra.mxu0 0.0
        %6533 = vmatprep.subr.mxu0 0.0
        %6534 = vmatpush1.msra.mxu0 0.0
        %6535 = vmatprep.subr.mxu0 0.0
        %6536 = vmatpush1.msra.mxu0 0.0
        %6537 = vmatprep.subr.mxu0 0.0
        %6538 = vmatpush1.msra.mxu0 0.0
        %6539 = vmatprep.subr.mxu0 0.0
        %6540 = vmatpush1.msra.mxu0 0.0
        %6541 = vmatprep.subr.mxu0 0.0
        %6542 = vmatpush1.msra.mxu0 0.0
        %6543 = vmatprep.subr.mxu0 0.0
        %6544 = vmatpush1.msra.mxu0 0.0
        %6545 = vmatprep.subr.mxu0 0.0
        %6546 = vmatpush1.msra.mxu0 0.0
        %6547 = vmatprep.subr.mxu0 0.0
        %6548 = vmatpush1.msra.mxu0 0.0
        %6549 = vmatprep.subr.mxu0 0.0
        %6550 = vmatpush1.msra.mxu0 0.0
        %6551 = vmatprep.subr.mxu0 0.0
        %6552 = vmatpush1.msra.mxu0 0.0
        %6553 = vmatprep.subr.mxu0 0.0
        %6554 = vmatpush1.msra.mxu0 0.0
        %6555 = vmatprep.subr.mxu0 0.0
        %6556 = vmatpush1.msra.mxu0 0.0
        %6557 = vmatprep.mubr.f32.mxu0 0.0
        %6558 = vmatmul.mubr.f32.gmra.mrb[0].mxu0 %v6491
        %v6559 = vpop.f32.mrb[0].mxu0
        %v6560 = vadd.f32 0.0, %v6559
        %v6561 = vpop.f32.mrb[0].mxu0
        %v6562 = vadd.f32 0.0, %v6561
        %6563 = vdwg.mxu0
        %6564 = vmatprep.subr.mxu0 %v1291
        %6565 = vmatpush1.msra.mxu0 %v1289
        %6566 = vmatprep.subr.mxu0 0.0
        %6567 = vmatpush1.msra.mxu0 0.0
        %6568 = vmatprep.subr.mxu0 0.0
        %6569 = vmatpush1.msra.mxu0 0.0
        %6570 = vmatprep.subr.mxu0 0.0
        %6571 = vmatpush1.msra.mxu0 0.0
        %6572 = vmatprep.subr.mxu0 0.0
        %6573 = vmatpush1.msra.mxu0 0.0
        %6574 = vmatprep.subr.mxu0 0.0
        %6575 = vmatpush1.msra.mxu0 0.0
        %6576 = vmatprep.subr.mxu0 0.0
        %6577 = vmatpush1.msra.mxu0 0.0
        %6578 = vmatprep.subr.mxu0 0.0
        %6579 = vmatpush1.msra.mxu0 0.0
        %6580 = vmatprep.subr.mxu0 0.0
        %6581 = vmatpush1.msra.mxu0 0.0
        %6582 = vmatprep.subr.mxu0 0.0
        %6583 = vmatpush1.msra.mxu0 0.0
        %6584 = vmatprep.subr.mxu0 0.0
        %6585 = vmatpush1.msra.mxu0 0.0
        %6586 = vmatprep.subr.mxu0 0.0
        %6587 = vmatpush1.msra.mxu0 0.0
        %6588 = vmatprep.subr.mxu0 0.0
        %6589 = vmatpush1.msra.mxu0 0.0
        %6590 = vmatprep.subr.mxu0 0.0
        %6591 = vmatpush1.msra.mxu0 0.0
        %6592 = vmatprep.subr.mxu0 0.0
        %6593 = vmatpush1.msra.mxu0 0.0
        %6594 = vmatprep.subr.mxu0 0.0
        %6595 = vmatpush1.msra.mxu0 0.0
        %6596 = vmatprep.subr.mxu0 0.0
        %6597 = vmatpush1.msra.mxu0 0.0
        %6598 = vmatprep.subr.mxu0 0.0
        %6599 = vmatpush1.msra.mxu0 0.0
        %6600 = vmatprep.subr.mxu0 0.0
        %6601 = vmatpush1.msra.mxu0 0.0
        %6602 = vmatprep.subr.mxu0 0.0
        %6603 = vmatpush1.msra.mxu0 0.0
        %6604 = vmatprep.subr.mxu0 0.0
        %6605 = vmatpush1.msra.mxu0 0.0
        %6606 = vmatprep.subr.mxu0 0.0
        %6607 = vmatpush1.msra.mxu0 0.0
        %6608 = vmatprep.subr.mxu0 0.0
        %6609 = vmatpush1.msra.mxu0 0.0
        %6610 = vmatprep.subr.mxu0 0.0
        %6611 = vmatpush1.msra.mxu0 0.0
        %6612 = vmatprep.subr.mxu0 0.0
        %6613 = vmatpush1.msra.mxu0 0.0
        %6614 = vmatprep.subr.mxu0 0.0
        %6615 = vmatpush1.msra.mxu0 0.0
        %6616 = vmatprep.subr.mxu0 0.0
        %6617 = vmatpush1.msra.mxu0 0.0
        %6618 = vmatprep.subr.mxu0 0.0
        %6619 = vmatpush1.msra.mxu0 0.0
        %6620 = vmatprep.subr.mxu0 0.0
        %6621 = vmatpush1.msra.mxu0 0.0
        %6622 = vmatprep.subr.mxu0 0.0
        %6623 = vmatpush1.msra.mxu0 0.0
        %6624 = vmatprep.subr.mxu0 0.0
        %6625 = vmatpush1.msra.mxu0 0.0
        %6626 = vmatprep.subr.mxu0 0.0
        %6627 = vmatpush1.msra.mxu0 0.0
        %6628 = vmatprep.mubr.f32.mxu0 0.0
        %6629 = vmatmul.mubr.f32.gmra.mrb[0].mxu0 %v6491
        %v6630 = vpop.f32.mrb[0].mxu0
        %v6631 = vadd.f32 0.0, %v6630
        %v6632 = vpop.f32.mrb[0].mxu0
        %v6633 = vadd.f32 0.0, %v6632
        %6634 = vdwg.mxu0
        %v6635 = vmul.f32 %v6560, 0.125
        %v6636 = vmul.f32 %v6562, 0.125
        %v6637 = vmul.f32 %v6631, 0.125
        %v6638 = vmul.f32 %v6633, 0.125
        %v6639 = vmul.f32 %v6635, %v6635
        %v6640 = vmul.f32 %v6636, %v6636
        %v6641 = vmul.f32 %v6637, %v6637
        %v6642 = vmul.f32 %v6638, %v6638
        %v6647 = vrot.slane %v6639, 7
        %v6648 = vrot.slane %v6640, 7
        %v6649 = vrot.slane %v6641, 7
        %v6650 = vrot.slane %v6642, 7
        %v6655 = vsub.f32 %v6635, %v6647
        %v6656 = vsub.f32 %v6636, %v6648
        %v6657 = vsub.f32 %v6637, %v6649
        %v6658 = vsub.f32 %v6638, %v6650
        %v6659 = vlaneseq
        %v6660 = vshrl.u32 %v6659, 7
        %v6661 = vsub.s32 0, %v6660
        %v6662 = vrot.slane %v6635, %v6661
        %v6663 = vlaneseq
        %v6664 = vshrl.u32 %v6663, 7
        %v6665 = vsub.s32 0, %v6664
        %v6666 = vrot.slane %v6636, %v6665
        %v6667 = vlaneseq
        %v6668 = vshrl.u32 %v6667, 7
        %v6669 = vsub.s32 0, %v6668
        %v6670 = vrot.slane %v6637, %v6669
        %v6671 = vlaneseq
        %v6672 = vshrl.u32 %v6671, 7
        %v6673 = vsub.s32 0, %v6672
        %v6674 = vrot.slane %v6638, %v6673
        %v6675 = vsub.f32 %v6286, %v6662
        %v6676 = vsub.f32 %v6287, %v6666
        %v6677 = vsub.f32 %v6288, %v6670
        %v6678 = vsub.f32 %v6289, %v6674
        %v6679 = vadd.f32 %v6655, 1e-08
        %v6680 = vadd.f32 %v6656, 1e-08
        %v6681 = vadd.f32 %v6657, 1e-08
        %v6682 = vadd.f32 %v6658, 1e-08
        %v6683 = vrsqrt.pop %v6679
        %v6684 = vrsqrt.pop %v6680
        %v6685 = vrsqrt.pop %v6681
        %v6686 = vrsqrt.pop %v6682
        %v6687 = vlaneseq
        %v6688 = vshrl.u32 %v6687, 7
        %v6689 = vsub.s32 1, %v6688
        %v6690 = vrot.slane %v6683, %v6689
        %v6691 = vlaneseq
        %v6692 = vshrl.u32 %v6691, 7
        %v6693 = vsub.s32 1, %v6692
        %v6694 = vrot.slane %v6684, %v6693
        %v6695 = vlaneseq
        %v6696 = vshrl.u32 %v6695, 7
        %v6697 = vsub.s32 1, %v6696
        %v6698 = vrot.slane %v6685, %v6697
        %v6699 = vlaneseq
        %v6700 = vshrl.u32 %v6699, 7
        %v6701 = vsub.s32 1, %v6700
        %v6702 = vrot.slane %v6686, %v6701
        %v6703 = vmul.f32 %v6675, %v6690
        %v6704 = vmul.f32 %v6676, %v6694
        %v6705 = vmul.f32 %v6677, %v6698
        %v6706 = vmul.f32 %v6678, %v6702
        %6707 = vset.pattern.permute.xlu0 30
        %6708 = vperm.xlu0 %6707, %v431
        %v6709 = vpop.permute.xlu0 %6708
        %v6711 = vmul.f32 %v6703, %v6709
        %v6712 = vmul.f32 %v6704, %v6709
        %v6713 = vmul.f32 %v6705, %v6709
        %v6714 = vmul.f32 %v6706, %v6709
        %6715 = vset.pattern.permute.xlu0 31
        %6716 = vperm.xlu0 %6715, %v431
        %v6717 = vpop.permute.xlu0 %6716
        %v6719 = vadd.f32 %v6711, %v6717
        %v6720 = vadd.f32 %v6712, %v6717
        %v6721 = vadd.f32 %v6713, %v6717
        %v6722 = vadd.f32 %v6714, %v6717
        %s6723 = scalar_lea.vmem %s6, 16
        %v6724 = vld [vmem:[%s6723] sm:$0xff]
        %6725 = vrot.lane.b32.xlu0 %v6719, 1
        %v6726 = vpop.permute.xlu0 %6725
        %6727 = vrot.lane.b32.xlu0 %v6720, 1
        %v6728 = vpop.permute.xlu0 %6727
        %6729 = vrot.lane.b32.xlu0 %v6721, 1
        %v6730 = vpop.permute.xlu0 %6729
        %6731 = vrot.lane.b32.xlu0 %v6722, 1
        %v6732 = vpop.permute.xlu0 %6731
        %v6733 = vsel %vm2142, %v6730, %v6732
        %v6734 = vsel %vm2142, %v6728, %v6730
        %v6735 = vsel %vm2142, %v6726, %v6728
        %v6736 = vsel %vm2142, %v6732, %v6726
        %v6737 = vsel %vm2163, %v6736, 0.0
        %v6738 = vsel %vm2164, %v6735, 0.0
        %v6739 = vsel %vm2165, %v6734, 0.0
        %v6740 = vsel %vm2166, %v6733, 0.0
        %6742 = vset.pattern.permute.xlu0 0
        %6743 = vperm.xlu0 %6742, %v6724
        %v6744 = vpop.permute.xlu0 %6743
        %v6746 = vmul.f32 %v6744, %v6737
        %v6747 = vmul.f32 %v6744, %v6738
        %v6748 = vmul.f32 %v6744, %v6739
        %v6749 = vmul.f32 %v6744, %v6740
        %6750 = vset.pattern.permute.xlu0 1
        %6751 = vperm.xlu0 %6750, %v6724
        %v6752 = vpop.permute.xlu0 %6751
        %v6754 = vmul.f32 %v6752, %v6719
        %v6755 = vmul.f32 %v6752, %v6720
        %v6756 = vmul.f32 %v6752, %v6721
        %v6757 = vmul.f32 %v6752, %v6722
        %v6758 = vadd.f32 %v6746, %v6754
        %v6759 = vadd.f32 %v6747, %v6755
        %v6760 = vadd.f32 %v6748, %v6756
        %v6761 = vadd.f32 %v6749, %v6757
        %6762 = vrot.lane.b32.xlu0 %v6719, 127
        %v6763 = vpop.permute.xlu0 %6762
        %6764 = vrot.lane.b32.xlu0 %v6720, 127
        %v6765 = vpop.permute.xlu0 %6764
        %6766 = vrot.lane.b32.xlu0 %v6721, 127
        %v6767 = vpop.permute.xlu0 %6766
        %6768 = vrot.lane.b32.xlu0 %v6722, 127
        %v6769 = vpop.permute.xlu0 %6768
        %v6770 = vsel %vm2200, %v6767, %v6769
        %v6771 = vsel %vm2200, %v6765, %v6767
        %v6772 = vsel %vm2200, %v6763, %v6765
        %v6773 = vsel %vm2200, %v6769, %v6763
        %v6774 = vsel %vm2221, %v6772, 0.0
        %v6775 = vsel %vm2222, %v6771, 0.0
        %v6776 = vsel %vm2223, %v6770, 0.0
        %v6777 = vsel %vm2224, %v6773, 0.0
        %6778 = vset.pattern.permute.xlu0 2
        %6779 = vperm.xlu0 %6778, %v6724
        %v6780 = vpop.permute.xlu0 %6779
        %v6782 = vmul.f32 %v6780, %v6774
        %v6783 = vmul.f32 %v6780, %v6775
        %v6784 = vmul.f32 %v6780, %v6776
        %v6785 = vmul.f32 %v6780, %v6777
        %v6786 = vadd.f32 %v6758, %v6782
        %v6787 = vadd.f32 %v6759, %v6783
        %v6788 = vadd.f32 %v6760, %v6784
        %v6789 = vadd.f32 %v6761, %v6785
        %6790 = vset.pattern.permute.xlu0 32
        %6791 = vperm.xlu0 %6790, %v431
        %v6792 = vpop.permute.xlu0 %6791
        %v6794 = vadd.f32 %v6786, %v6792
        %v6795 = vadd.f32 %v6787, %v6792
        %v6796 = vadd.f32 %v6788, %v6792
        %v6797 = vadd.f32 %v6789, %v6792
        %vm6798 = vcmp.ge.f32.partialorder %v6794, 0.0
        %vm6799 = vcmp.ge.f32.partialorder %v6795, 0.0
        %vm6800 = vcmp.ge.f32.partialorder %v6796, 0.0
        %vm6801 = vcmp.ge.f32.partialorder %v6797, 0.0
        %v6802 = vstv %s5149
        %v6803 = vmul.f32 %v6802, %v6794
        %v6804 = vmul.f32 %v6802, %v6795
        %v6805 = vmul.f32 %v6802, %v6796
        %v6806 = vmul.f32 %v6802, %v6797
        %v6807 = vsel %vm6798, %v6794, %v6803
        %v6808 = vsel %vm6799, %v6795, %v6804
        %v6809 = vsel %vm6800, %v6796, %v6805
        %v6810 = vsel %vm6801, %v6797, %v6806
        %v6811 = vsel %vm1071, %v6807, 0.0
        %v6812 = vsel %vm1072, %v6808, 0.0
        %v6813 = vsel %vm1073, %v6809, 0.0
        %v6814 = vsel %vm1074, %v6810, 0.0
        %v6815 = vrot.slane %v6811, 4
        %v6816 = vadd.f32 %v6811, %v6815
        %v6817 = vrot.slane %v6816, 2
        %v6818 = vadd.f32 %v6816, %v6817
        %v6819 = vrot.slane %v6818, 1
        %v6820 = vadd.f32 %v6818, %v6819
        %v6821 = vrot.slane %v6812, 4
        %v6822 = vadd.f32 %v6812, %v6821
        %v6823 = vrot.slane %v6822, 2
        %v6824 = vadd.f32 %v6822, %v6823
        %v6825 = vrot.slane %v6824, 1
        %v6826 = vadd.f32 %v6824, %v6825
        %v6827 = vrot.slane %v6813, 4
        %v6828 = vadd.f32 %v6813, %v6827
        %v6829 = vrot.slane %v6828, 2
        %v6830 = vadd.f32 %v6828, %v6829
        %v6831 = vrot.slane %v6830, 1
        %v6832 = vadd.f32 %v6830, %v6831
        %v6833 = vrot.slane %v6814, 4
        %v6834 = vadd.f32 %v6814, %v6833
        %v6835 = vrot.slane %v6834, 2
        %v6836 = vadd.f32 %v6834, %v6835
        %v6837 = vrot.slane %v6836, 1
        %v6838 = vadd.f32 %v6836, %v6837
        %v6839 = vmul.f32 %v6811, %v6811
        %v6840 = vmul.f32 %v6812, %v6812
        %v6841 = vmul.f32 %v6813, %v6813
        %v6842 = vmul.f32 %v6814, %v6814
        %v6843 = vrot.slane %v6839, 4
        %v6844 = vadd.f32 %v6839, %v6843
        %v6845 = vrot.slane %v6844, 2
        %v6846 = vadd.f32 %v6844, %v6845
        %v6847 = vrot.slane %v6846, 1
        %v6848 = vadd.f32 %v6846, %v6847
        %v6849 = vrot.slane %v6840, 4
        %v6850 = vadd.f32 %v6840, %v6849
        %v6851 = vrot.slane %v6850, 2
        %v6852 = vadd.f32 %v6850, %v6851
        %v6853 = vrot.slane %v6852, 1
        %v6854 = vadd.f32 %v6852, %v6853
        %v6855 = vrot.slane %v6841, 4
        %v6856 = vadd.f32 %v6841, %v6855
        %v6857 = vrot.slane %v6856, 2
        %v6858 = vadd.f32 %v6856, %v6857
        %v6859 = vrot.slane %v6858, 1
        %v6860 = vadd.f32 %v6858, %v6859
        %v6861 = vrot.slane %v6842, 4
        %v6862 = vadd.f32 %v6842, %v6861
        %v6863 = vrot.slane %v6862, 2
        %v6864 = vadd.f32 %v6862, %v6863
        %v6865 = vrot.slane %v6864, 1
        %v6866 = vadd.f32 %v6864, %v6865
        %v6867 = vsel %vm1131, %v6820, %v6848
        %v6868 = vsel %vm1131, %v6826, %v6854
        %v6869 = vsel %vm1131, %v6832, %v6860
        %v6870 = vsel %vm1131, %v6838, %v6866
        %6871 = vmatprep.subr.mxu0 0.0
        %6872 = vmatpush1.msra.mxu0 %v434
        %6873 = vmatprep.subr.mxu0 0.0
        %6874 = vmatpush1.msra.mxu0 %v435
        %6875 = vmatprep.subr.mxu0 0.0
        %6876 = vmatpush1.msra.mxu0 %v436
        %6877 = vmatprep.subr.mxu0 0.0
        %6878 = vmatpush1.msra.mxu0 %v437
        %6879 = vmatprep.subr.mxu0 0.0
        %6880 = vmatpush1.msra.mxu0 %v438
        %6881 = vmatprep.subr.mxu0 0.0
        %6882 = vmatpush1.msra.mxu0 %v439
        %6883 = vmatprep.subr.mxu0 0.0
        %6884 = vmatpush1.msra.mxu0 %v440
        %6885 = vmatprep.subr.mxu0 0.0
        %6886 = vmatpush1.msra.mxu0 %v441
        %6887 = vmatprep.subr.mxu0 0.0
        %6888 = vmatpush1.msra.mxu0 %v442
        %6889 = vmatprep.subr.mxu0 0.0
        %6890 = vmatpush1.msra.mxu0 %v443
        %6891 = vmatprep.subr.mxu0 0.0
        %6892 = vmatpush1.msra.mxu0 %v444
        %6893 = vmatprep.subr.mxu0 0.0
        %6894 = vmatpush1.msra.mxu0 %v445
        %6895 = vmatprep.subr.mxu0 0.0
        %6896 = vmatpush1.msra.mxu0 %v446
        %6897 = vmatprep.subr.mxu0 0.0
        %6898 = vmatpush1.msra.mxu0 %v447
        %6899 = vmatprep.subr.mxu0 0.0
        %6900 = vmatpush1.msra.mxu0 %v448
        %6901 = vmatprep.subr.mxu0 0.0
        %6902 = vmatpush1.msra.mxu0 %v449
        %6903 = vmatprep.subr.mxu0 0.0
        %6904 = vmatpush1.msra.mxu0 %v450
        %6905 = vmatprep.subr.mxu0 0.0
        %6906 = vmatpush1.msra.mxu0 %v451
        %6907 = vmatprep.subr.mxu0 0.0
        %6908 = vmatpush1.msra.mxu0 %v452
        %6909 = vmatprep.subr.mxu0 0.0
        %6910 = vmatpush1.msra.mxu0 %v453
        %6911 = vmatprep.subr.mxu0 0.0
        %6912 = vmatpush1.msra.mxu0 %v454
        %6913 = vmatprep.subr.mxu0 0.0
        %6914 = vmatpush1.msra.mxu0 %v455
        %6915 = vmatprep.subr.mxu0 0.0
        %6916 = vmatpush1.msra.mxu0 %v456
        %6917 = vmatprep.subr.mxu0 0.0
        %6918 = vmatpush1.msra.mxu0 %v457
        %6919 = vmatprep.subr.mxu0 0.0
        %6920 = vmatpush1.msra.mxu0 %v458
        %6921 = vmatprep.subr.mxu0 0.0
        %6922 = vmatpush1.msra.mxu0 %v459
        %6923 = vmatprep.subr.mxu0 0.0
        %6924 = vmatpush1.msra.mxu0 %v460
        %6925 = vmatprep.subr.mxu0 0.0
        %6926 = vmatpush1.msra.mxu0 %v461
        %6927 = vmatprep.subr.mxu0 0.0
        %6928 = vmatpush1.msra.mxu0 %v462
        %6929 = vmatprep.subr.mxu0 0.0
        %6930 = vmatpush1.msra.mxu0 %v463
        %6931 = vmatprep.subr.mxu0 0.0
        %6932 = vmatpush1.msra.mxu0 %v464
        %6933 = vmatprep.subr.mxu0 0.0
        %6934 = vmatpush1.msra.mxu0 %v465
        %6935 = vmatprep.mubr.f32.mxu0 %v6868
        %6936 = vmatmul.mubr.f32.gmra.mrb[0].mxu0 %v6867
        %v6937 = vpop.f32.mrb[0].mxu0
        %v6938 = vadd.f32 0.0, %v6937
        %v6939 = vpop.f32.mrb[0].mxu0
        %6940 = vdwg.mxu0
        %6941 = vmatprep.subr.mxu0 0.0
        %6942 = vmatpush1.msra.mxu0 %v466
        %6943 = vmatprep.subr.mxu0 0.0
        %6944 = vmatpush1.msra.mxu0 %v467
        %6945 = vmatprep.subr.mxu0 0.0
        %6946 = vmatpush1.msra.mxu0 %v468
        %6947 = vmatprep.subr.mxu0 0.0
        %6948 = vmatpush1.msra.mxu0 %v469
        %6949 = vmatprep.subr.mxu0 0.0
        %6950 = vmatpush1.msra.mxu0 %v470
        %6951 = vmatprep.subr.mxu0 0.0
        %6952 = vmatpush1.msra.mxu0 %v471
        %6953 = vmatprep.subr.mxu0 0.0
        %6954 = vmatpush1.msra.mxu0 %v472
        %6955 = vmatprep.subr.mxu0 0.0
        %6956 = vmatpush1.msra.mxu0 %v473
        %6957 = vmatprep.subr.mxu0 0.0
        %6958 = vmatpush1.msra.mxu0 %v474
        %6959 = vmatprep.subr.mxu0 0.0
        %6960 = vmatpush1.msra.mxu0 %v475
        %6961 = vmatprep.subr.mxu0 0.0
        %6962 = vmatpush1.msra.mxu0 %v476
        %6963 = vmatprep.subr.mxu0 0.0
        %6964 = vmatpush1.msra.mxu0 %v477
        %6965 = vmatprep.subr.mxu0 0.0
        %6966 = vmatpush1.msra.mxu0 %v478
        %6967 = vmatprep.subr.mxu0 0.0
        %6968 = vmatpush1.msra.mxu0 %v479
        %6969 = vmatprep.subr.mxu0 0.0
        %6970 = vmatpush1.msra.mxu0 %v480
        %6971 = vmatprep.subr.mxu0 0.0
        %6972 = vmatpush1.msra.mxu0 %v481
        %6973 = vmatprep.subr.mxu0 0.0
        %6974 = vmatpush1.msra.mxu0 %v482
        %6975 = vmatprep.subr.mxu0 0.0
        %6976 = vmatpush1.msra.mxu0 %v483
        %6977 = vmatprep.subr.mxu0 0.0
        %6978 = vmatpush1.msra.mxu0 %v484
        %6979 = vmatprep.subr.mxu0 0.0
        %6980 = vmatpush1.msra.mxu0 %v485
        %6981 = vmatprep.subr.mxu0 0.0
        %6982 = vmatpush1.msra.mxu0 %v486
        %6983 = vmatprep.subr.mxu0 0.0
        %6984 = vmatpush1.msra.mxu0 %v487
        %6985 = vmatprep.subr.mxu0 0.0
        %6986 = vmatpush1.msra.mxu0 %v488
        %6987 = vmatprep.subr.mxu0 0.0
        %6988 = vmatpush1.msra.mxu0 %v489
        %6989 = vmatprep.subr.mxu0 0.0
        %6990 = vmatpush1.msra.mxu0 %v490
        %6991 = vmatprep.subr.mxu0 0.0
        %6992 = vmatpush1.msra.mxu0 %v491
        %6993 = vmatprep.subr.mxu0 0.0
        %6994 = vmatpush1.msra.mxu0 %v492
        %6995 = vmatprep.subr.mxu0 0.0
        %6996 = vmatpush1.msra.mxu0 %v493
        %6997 = vmatprep.subr.mxu0 0.0
        %6998 = vmatpush1.msra.mxu0 %v494
        %6999 = vmatprep.subr.mxu0 0.0
        %7000 = vmatpush1.msra.mxu0 %v495
        %7001 = vmatprep.subr.mxu0 0.0
        %7002 = vmatpush1.msra.mxu0 %v496
        %7003 = vmatprep.subr.mxu0 0.0
        %7004 = vmatpush1.msra.mxu0 %v497
        %7005 = vmatprep.mubr.f32.mxu0 %v6870
        %7006 = vmatmul.mubr.f32.gmra.mrb[0].mxu0 %v6869
        %v7007 = vpop.f32.mrb[0].mxu0
        %v7008 = vadd.f32 %v6938, %v7007
        %v7009 = vpop.f32.mrb[0].mxu0
        %7010 = vdwg.mxu0
        %v7012 = vsel %vm1280, %v7008, 0
        %7014 = vmatprep.subr.mxu0 %v1287
        %7015 = vmatpush1.msra.mxu0 %v1285
        %7016 = vmatprep.subr.mxu0 0.0
        %7017 = vmatpush1.msra.mxu0 0.0
        %7018 = vmatprep.subr.mxu0 0.0
        %7019 = vmatpush1.msra.mxu0 0.0
        %7020 = vmatprep.subr.mxu0 0.0
        %7021 = vmatpush1.msra.mxu0 0.0
        %7022 = vmatprep.subr.mxu0 0.0
        %7023 = vmatpush1.msra.mxu0 0.0
        %7024 = vmatprep.subr.mxu0 0.0
        %7025 = vmatpush1.msra.mxu0 0.0
        %7026 = vmatprep.subr.mxu0 0.0
        %7027 = vmatpush1.msra.mxu0 0.0
        %7028 = vmatprep.subr.mxu0 0.0
        %7029 = vmatpush1.msra.mxu0 0.0
        %7030 = vmatprep.subr.mxu0 0.0
        %7031 = vmatpush1.msra.mxu0 0.0
        %7032 = vmatprep.subr.mxu0 0.0
        %7033 = vmatpush1.msra.mxu0 0.0
        %7034 = vmatprep.subr.mxu0 0.0
        %7035 = vmatpush1.msra.mxu0 0.0
        %7036 = vmatprep.subr.mxu0 0.0
        %7037 = vmatpush1.msra.mxu0 0.0
        %7038 = vmatprep.subr.mxu0 0.0
        %7039 = vmatpush1.msra.mxu0 0.0
        %7040 = vmatprep.subr.mxu0 0.0
        %7041 = vmatpush1.msra.mxu0 0.0
        %7042 = vmatprep.subr.mxu0 0.0
        %7043 = vmatpush1.msra.mxu0 0.0
        %7044 = vmatprep.subr.mxu0 0.0
        %7045 = vmatpush1.msra.mxu0 0.0
        %7046 = vmatprep.subr.mxu0 0.0
        %7047 = vmatpush1.msra.mxu0 0.0
        %7048 = vmatprep.subr.mxu0 0.0
        %7049 = vmatpush1.msra.mxu0 0.0
        %7050 = vmatprep.subr.mxu0 0.0
        %7051 = vmatpush1.msra.mxu0 0.0
        %7052 = vmatprep.subr.mxu0 0.0
        %7053 = vmatpush1.msra.mxu0 0.0
        %7054 = vmatprep.subr.mxu0 0.0
        %7055 = vmatpush1.msra.mxu0 0.0
        %7056 = vmatprep.subr.mxu0 0.0
        %7057 = vmatpush1.msra.mxu0 0.0
        %7058 = vmatprep.subr.mxu0 0.0
        %7059 = vmatpush1.msra.mxu0 0.0
        %7060 = vmatprep.subr.mxu0 0.0
        %7061 = vmatpush1.msra.mxu0 0.0
        %7062 = vmatprep.subr.mxu0 0.0
        %7063 = vmatpush1.msra.mxu0 0.0
        %7064 = vmatprep.subr.mxu0 0.0
        %7065 = vmatpush1.msra.mxu0 0.0
        %7066 = vmatprep.subr.mxu0 0.0
        %7067 = vmatpush1.msra.mxu0 0.0
        %7068 = vmatprep.subr.mxu0 0.0
        %7069 = vmatpush1.msra.mxu0 0.0
        %7070 = vmatprep.subr.mxu0 0.0
        %7071 = vmatpush1.msra.mxu0 0.0
        %7072 = vmatprep.subr.mxu0 0.0
        %7073 = vmatpush1.msra.mxu0 0.0
        %7074 = vmatprep.subr.mxu0 0.0
        %7075 = vmatpush1.msra.mxu0 0.0
        %7076 = vmatprep.subr.mxu0 0.0
        %7077 = vmatpush1.msra.mxu0 0.0
        %7078 = vmatprep.mubr.f32.mxu0 0.0
        %7079 = vmatmul.mubr.f32.gmra.mrb[0].mxu0 %v7012
        %v7080 = vpop.f32.mrb[0].mxu0
        %v7081 = vadd.f32 0.0, %v7080
        %v7082 = vpop.f32.mrb[0].mxu0
        %v7083 = vadd.f32 0.0, %v7082
        %7084 = vdwg.mxu0
        %7085 = vmatprep.subr.mxu0 %v1291
        %7086 = vmatpush1.msra.mxu0 %v1289
        %7087 = vmatprep.subr.mxu0 0.0
        %7088 = vmatpush1.msra.mxu0 0.0
        %7089 = vmatprep.subr.mxu0 0.0
        %7090 = vmatpush1.msra.mxu0 0.0
        %7091 = vmatprep.subr.mxu0 0.0
        %7092 = vmatpush1.msra.mxu0 0.0
        %7093 = vmatprep.subr.mxu0 0.0
        %7094 = vmatpush1.msra.mxu0 0.0
        %7095 = vmatprep.subr.mxu0 0.0
        %7096 = vmatpush1.msra.mxu0 0.0
        %7097 = vmatprep.subr.mxu0 0.0
        %7098 = vmatpush1.msra.mxu0 0.0
        %7099 = vmatprep.subr.mxu0 0.0
        %7100 = vmatpush1.msra.mxu0 0.0
        %7101 = vmatprep.subr.mxu0 0.0
        %7102 = vmatpush1.msra.mxu0 0.0
        %7103 = vmatprep.subr.mxu0 0.0
        %7104 = vmatpush1.msra.mxu0 0.0
        %7105 = vmatprep.subr.mxu0 0.0
        %7106 = vmatpush1.msra.mxu0 0.0
        %7107 = vmatprep.subr.mxu0 0.0
        %7108 = vmatpush1.msra.mxu0 0.0
        %7109 = vmatprep.subr.mxu0 0.0
        %7110 = vmatpush1.msra.mxu0 0.0
        %7111 = vmatprep.subr.mxu0 0.0
        %7112 = vmatpush1.msra.mxu0 0.0
        %7113 = vmatprep.subr.mxu0 0.0
        %7114 = vmatpush1.msra.mxu0 0.0
        %7115 = vmatprep.subr.mxu0 0.0
        %7116 = vmatpush1.msra.mxu0 0.0
        %7117 = vmatprep.subr.mxu0 0.0
        %7118 = vmatpush1.msra.mxu0 0.0
        %7119 = vmatprep.subr.mxu0 0.0
        %7120 = vmatpush1.msra.mxu0 0.0
        %7121 = vmatprep.subr.mxu0 0.0
        %7122 = vmatpush1.msra.mxu0 0.0
        %7123 = vmatprep.subr.mxu0 0.0
        %7124 = vmatpush1.msra.mxu0 0.0
        %7125 = vmatprep.subr.mxu0 0.0
        %7126 = vmatpush1.msra.mxu0 0.0
        %7127 = vmatprep.subr.mxu0 0.0
        %7128 = vmatpush1.msra.mxu0 0.0
        %7129 = vmatprep.subr.mxu0 0.0
        %7130 = vmatpush1.msra.mxu0 0.0
        %7131 = vmatprep.subr.mxu0 0.0
        %7132 = vmatpush1.msra.mxu0 0.0
        %7133 = vmatprep.subr.mxu0 0.0
        %7134 = vmatpush1.msra.mxu0 0.0
        %7135 = vmatprep.subr.mxu0 0.0
        %7136 = vmatpush1.msra.mxu0 0.0
        %7137 = vmatprep.subr.mxu0 0.0
        %7138 = vmatpush1.msra.mxu0 0.0
        %7139 = vmatprep.subr.mxu0 0.0
        %7140 = vmatpush1.msra.mxu0 0.0
        %7141 = vmatprep.subr.mxu0 0.0
        %7142 = vmatpush1.msra.mxu0 0.0
        %7143 = vmatprep.subr.mxu0 0.0
        %7144 = vmatpush1.msra.mxu0 0.0
        %7145 = vmatprep.subr.mxu0 0.0
        %7146 = vmatpush1.msra.mxu0 0.0
        %7147 = vmatprep.subr.mxu0 0.0
        %7148 = vmatpush1.msra.mxu0 0.0
        %7149 = vmatprep.mubr.f32.mxu0 0.0
        %7150 = vmatmul.mubr.f32.gmra.mrb[0].mxu0 %v7012
        %v7151 = vpop.f32.mrb[0].mxu0
        %v7152 = vadd.f32 0.0, %v7151
        %v7153 = vpop.f32.mrb[0].mxu0
        %v7154 = vadd.f32 0.0, %v7153
        %7155 = vdwg.mxu0
        %v7156 = vmul.f32 %v7081, 0.125
        %v7157 = vmul.f32 %v7083, 0.125
        %v7158 = vmul.f32 %v7152, 0.125
        %v7159 = vmul.f32 %v7154, 0.125
        %v7160 = vmul.f32 %v7156, %v7156
        %v7161 = vmul.f32 %v7157, %v7157
        %v7162 = vmul.f32 %v7158, %v7158
        %v7163 = vmul.f32 %v7159, %v7159
        %v7168 = vrot.slane %v7160, 7
        %v7169 = vrot.slane %v7161, 7
        %v7170 = vrot.slane %v7162, 7
        %v7171 = vrot.slane %v7163, 7
        %v7176 = vsub.f32 %v7156, %v7168
        %v7177 = vsub.f32 %v7157, %v7169
        %v7178 = vsub.f32 %v7158, %v7170
        %v7179 = vsub.f32 %v7159, %v7171
        %v7180 = vlaneseq
        %v7181 = vshrl.u32 %v7180, 7
        %v7182 = vsub.s32 0, %v7181
        %v7183 = vrot.slane %v7156, %v7182
        %v7184 = vlaneseq
        %v7185 = vshrl.u32 %v7184, 7
        %v7186 = vsub.s32 0, %v7185
        %v7187 = vrot.slane %v7157, %v7186
        %v7188 = vlaneseq
        %v7189 = vshrl.u32 %v7188, 7
        %v7190 = vsub.s32 0, %v7189
        %v7191 = vrot.slane %v7158, %v7190
        %v7192 = vlaneseq
        %v7193 = vshrl.u32 %v7192, 7
        %v7194 = vsub.s32 0, %v7193
        %v7195 = vrot.slane %v7159, %v7194
        %v7196 = vsub.f32 %v6807, %v7183
        %v7197 = vsub.f32 %v6808, %v7187
        %v7198 = vsub.f32 %v6809, %v7191
        %v7199 = vsub.f32 %v6810, %v7195
        %v7200 = vadd.f32 %v7176, 1e-08
        %v7201 = vadd.f32 %v7177, 1e-08
        %v7202 = vadd.f32 %v7178, 1e-08
        %v7203 = vadd.f32 %v7179, 1e-08
        %v7204 = vrsqrt.pop %v7200
        %v7205 = vrsqrt.pop %v7201
        %v7206 = vrsqrt.pop %v7202
        %v7207 = vrsqrt.pop %v7203
        %v7208 = vlaneseq
        %v7209 = vshrl.u32 %v7208, 7
        %v7210 = vsub.s32 1, %v7209
        %v7211 = vrot.slane %v7204, %v7210
        %v7212 = vlaneseq
        %v7213 = vshrl.u32 %v7212, 7
        %v7214 = vsub.s32 1, %v7213
        %v7215 = vrot.slane %v7205, %v7214
        %v7216 = vlaneseq
        %v7217 = vshrl.u32 %v7216, 7
        %v7218 = vsub.s32 1, %v7217
        %v7219 = vrot.slane %v7206, %v7218
        %v7220 = vlaneseq
        %v7221 = vshrl.u32 %v7220, 7
        %v7222 = vsub.s32 1, %v7221
        %v7223 = vrot.slane %v7207, %v7222
        %v7224 = vmul.f32 %v7196, %v7211
        %v7225 = vmul.f32 %v7197, %v7215
        %v7226 = vmul.f32 %v7198, %v7219
        %v7227 = vmul.f32 %v7199, %v7223
        %7228 = vset.pattern.permute.xlu0 33
        %7229 = vperm.xlu0 %7228, %v431
        %v7230 = vpop.permute.xlu0 %7229
        %v7232 = vmul.f32 %v7224, %v7230
        %v7233 = vmul.f32 %v7225, %v7230
        %v7234 = vmul.f32 %v7226, %v7230
        %v7235 = vmul.f32 %v7227, %v7230
        %7236 = vset.pattern.permute.xlu0 34
        %7237 = vperm.xlu0 %7236, %v431
        %v7238 = vpop.permute.xlu0 %7237
        %v7240 = vadd.f32 %v7232, %v7238
        %v7241 = vadd.f32 %v7233, %v7238
        %v7242 = vadd.f32 %v7234, %v7238
        %v7243 = vadd.f32 %v7235, %v7238
        %s7244 = scalar_lea.vmem %s5, 16
        %v7245 = vld [vmem:[%s7244] sm:$0xff]
        %7246 = vset.pattern.permute.xlu0 35
        %7247 = vperm.xlu0 %7246, %v431
        %v7248 = vpop.permute.xlu0 %7247
        %v7251 = vsel %vm535, %v7245, 0
        %7253 = vmatprep.subr.mxu0 %v7241
        %7254 = vmatpush1.msra.mxu0 %v7240
        %7255 = vmatprep.subr.mxu0 0.0
        %7256 = vmatpush1.msra.mxu0 0.0
        %7257 = vmatprep.subr.mxu0 0.0
        %7258 = vmatpush1.msra.mxu0 0.0
        %7259 = vmatprep.subr.mxu0 0.0
        %7260 = vmatpush1.msra.mxu0 0.0
        %7261 = vmatprep.subr.mxu0 0.0
        %7262 = vmatpush1.msra.mxu0 0.0
        %7263 = vmatprep.subr.mxu0 0.0
        %7264 = vmatpush1.msra.mxu0 0.0
        %7265 = vmatprep.subr.mxu0 0.0
        %7266 = vmatpush1.msra.mxu0 0.0
        %7267 = vmatprep.subr.mxu0 0.0
        %7268 = vmatpush1.msra.mxu0 0.0
        %7269 = vmatprep.subr.mxu0 0.0
        %7270 = vmatpush1.msra.mxu0 0.0
        %7271 = vmatprep.subr.mxu0 0.0
        %7272 = vmatpush1.msra.mxu0 0.0
        %7273 = vmatprep.subr.mxu0 0.0
        %7274 = vmatpush1.msra.mxu0 0.0
        %7275 = vmatprep.subr.mxu0 0.0
        %7276 = vmatpush1.msra.mxu0 0.0
        %7277 = vmatprep.subr.mxu0 0.0
        %7278 = vmatpush1.msra.mxu0 0.0
        %7279 = vmatprep.subr.mxu0 0.0
        %7280 = vmatpush1.msra.mxu0 0.0
        %7281 = vmatprep.subr.mxu0 0.0
        %7282 = vmatpush1.msra.mxu0 0.0
        %7283 = vmatprep.subr.mxu0 0.0
        %7284 = vmatpush1.msra.mxu0 0.0
        %7285 = vmatprep.subr.mxu0 0.0
        %7286 = vmatpush1.msra.mxu0 0.0
        %7287 = vmatprep.subr.mxu0 0.0
        %7288 = vmatpush1.msra.mxu0 0.0
        %7289 = vmatprep.subr.mxu0 0.0
        %7290 = vmatpush1.msra.mxu0 0.0
        %7291 = vmatprep.subr.mxu0 0.0
        %7292 = vmatpush1.msra.mxu0 0.0
        %7293 = vmatprep.subr.mxu0 0.0
        %7294 = vmatpush1.msra.mxu0 0.0
        %7295 = vmatprep.subr.mxu0 0.0
        %7296 = vmatpush1.msra.mxu0 0.0
        %7297 = vmatprep.subr.mxu0 0.0
        %7298 = vmatpush1.msra.mxu0 0.0
        %7299 = vmatprep.subr.mxu0 0.0
        %7300 = vmatpush1.msra.mxu0 0.0
        %7301 = vmatprep.subr.mxu0 0.0
        %7302 = vmatpush1.msra.mxu0 0.0
        %7303 = vmatprep.subr.mxu0 0.0
        %7304 = vmatpush1.msra.mxu0 0.0
        %7305 = vmatprep.subr.mxu0 0.0
        %7306 = vmatpush1.msra.mxu0 0.0
        %7307 = vmatprep.subr.mxu0 0.0
        %7308 = vmatpush1.msra.mxu0 0.0
        %7309 = vmatprep.subr.mxu0 0.0
        %7310 = vmatpush1.msra.mxu0 0.0
        %7311 = vmatprep.subr.mxu0 0.0
        %7312 = vmatpush1.msra.mxu0 0.0
        %7313 = vmatprep.subr.mxu0 0.0
        %7314 = vmatpush1.msra.mxu0 0.0
        %7315 = vmatprep.subr.mxu0 0.0
        %7316 = vmatpush1.msra.mxu0 0.0
        %7317 = vmatprep.mubr.f32.mxu0 0.0
        %7318 = vmatmul.mubr.f32.gmra.mrb[0].mxu0 %v7251
        %v7319 = vpop.f32.mrb[0].mxu0
        %v7320 = vadd.f32 %v7248, %v7319
        %v7321 = vpop.f32.mrb[0].mxu0
        %v7322 = vadd.f32 %v7248, %v7321
        %7323 = vdwg.mxu0
        %7324 = vmatprep.subr.mxu0 %v7243
        %7325 = vmatpush1.msra.mxu0 %v7242
        %7326 = vmatprep.subr.mxu0 0.0
        %7327 = vmatpush1.msra.mxu0 0.0
        %7328 = vmatprep.subr.mxu0 0.0
        %7329 = vmatpush1.msra.mxu0 0.0
        %7330 = vmatprep.subr.mxu0 0.0
        %7331 = vmatpush1.msra.mxu0 0.0
        %7332 = vmatprep.subr.mxu0 0.0
        %7333 = vmatpush1.msra.mxu0 0.0
        %7334 = vmatprep.subr.mxu0 0.0
        %7335 = vmatpush1.msra.mxu0 0.0
        %7336 = vmatprep.subr.mxu0 0.0
        %7337 = vmatpush1.msra.mxu0 0.0
        %7338 = vmatprep.subr.mxu0 0.0
        %7339 = vmatpush1.msra.mxu0 0.0
        %7340 = vmatprep.subr.mxu0 0.0
        %7341 = vmatpush1.msra.mxu0 0.0
        %7342 = vmatprep.subr.mxu0 0.0
        %7343 = vmatpush1.msra.mxu0 0.0
        %7344 = vmatprep.subr.mxu0 0.0
        %7345 = vmatpush1.msra.mxu0 0.0
        %7346 = vmatprep.subr.mxu0 0.0
        %7347 = vmatpush1.msra.mxu0 0.0
        %7348 = vmatprep.subr.mxu0 0.0
        %7349 = vmatpush1.msra.mxu0 0.0
        %7350 = vmatprep.subr.mxu0 0.0
        %7351 = vmatpush1.msra.mxu0 0.0
        %7352 = vmatprep.subr.mxu0 0.0
        %7353 = vmatpush1.msra.mxu0 0.0
        %7354 = vmatprep.subr.mxu0 0.0
        %7355 = vmatpush1.msra.mxu0 0.0
        %7356 = vmatprep.subr.mxu0 0.0
        %7357 = vmatpush1.msra.mxu0 0.0
        %7358 = vmatprep.subr.mxu0 0.0
        %7359 = vmatpush1.msra.mxu0 0.0
        %7360 = vmatprep.subr.mxu0 0.0
        %7361 = vmatpush1.msra.mxu0 0.0
        %7362 = vmatprep.subr.mxu0 0.0
        %7363 = vmatpush1.msra.mxu0 0.0
        %7364 = vmatprep.subr.mxu0 0.0
        %7365 = vmatpush1.msra.mxu0 0.0
        %7366 = vmatprep.subr.mxu0 0.0
        %7367 = vmatpush1.msra.mxu0 0.0
        %7368 = vmatprep.subr.mxu0 0.0
        %7369 = vmatpush1.msra.mxu0 0.0
        %7370 = vmatprep.subr.mxu0 0.0
        %7371 = vmatpush1.msra.mxu0 0.0
        %7372 = vmatprep.subr.mxu0 0.0
        %7373 = vmatpush1.msra.mxu0 0.0
        %7374 = vmatprep.subr.mxu0 0.0
        %7375 = vmatpush1.msra.mxu0 0.0
        %7376 = vmatprep.subr.mxu0 0.0
        %7377 = vmatpush1.msra.mxu0 0.0
        %7378 = vmatprep.subr.mxu0 0.0
        %7379 = vmatpush1.msra.mxu0 0.0
        %7380 = vmatprep.subr.mxu0 0.0
        %7381 = vmatpush1.msra.mxu0 0.0
        %7382 = vmatprep.subr.mxu0 0.0
        %7383 = vmatpush1.msra.mxu0 0.0
        %7384 = vmatprep.subr.mxu0 0.0
        %7385 = vmatpush1.msra.mxu0 0.0
        %7386 = vmatprep.subr.mxu0 0.0
        %7387 = vmatpush1.msra.mxu0 0.0
        %7388 = vmatprep.mubr.f32.mxu0 0.0
        %7389 = vmatmul.mubr.f32.gmra.mrb[0].mxu0 %v7251
        %v7390 = vpop.f32.mrb[0].mxu0
        %v7391 = vadd.f32 %v7248, %v7390
        %v7392 = vpop.f32.mrb[0].mxu0
        %v7393 = vadd.f32 %v7248, %v7392
        %7394 = vdwg.mxu0
        %v7395 = vadd.f32 %v6124, %v7320
        %v7396 = vadd.f32 %v6125, %v7322
        %v7397 = vadd.f32 %v6126, %v7391
        %v7398 = vadd.f32 %v6127, %v7393
        %s7399 = sld [smem:[#allocation3 + $0xf]]
        %s7400 = sld [smem:[#allocation3 + $0x10]]
        %s7401 = sld [smem:[#allocation3 + $0x11]]
        %s7402 = sld [smem:[#allocation3 + $0x12]]
        %s7403 = sld [smem:[#allocation3 + $0x13]]
        %s7404 = scalar_lea.vmem %s1, 72
        %v7405 = vld [vmem:[%s7404] sm:$0xff]
        %v7406 = vld [vmem:[%s7404 + $0x8] sm:$0xff]
        %v7407 = vld [vmem:[%s7404 + $0x10] sm:$0xff]
        %7408 = vset.pattern.permute.xlu0 36
        %7409 = vperm.xlu0 %7408, %v431
        %v7410 = vpop.permute.xlu0 %7409
        %7412 = vset.pattern.permute.xlu0 36
        %7413 = vperm.xlu0 %7412, %v432
        %v7414 = vpop.permute.xlu0 %7413
        %7416 = vset.pattern.permute.xlu0 36
        %7417 = vperm.xlu0 %7416, %v433
        %v7418 = vpop.permute.xlu0 %7417
        %v7421 = vsel %vm535, %v7405, 0
        %v7424 = vsel %vm535, %v7406, 0
        %v7427 = vsel %vm535, %v7407, 0
        %7429 = vmatprep.subr.mxu0 %v7396
        %7430 = vmatpush1.msra.mxu0 %v7395
        %7431 = vmatprep.subr.mxu0 0.0
        %7432 = vmatpush1.msra.mxu0 0.0
        %7433 = vmatprep.subr.mxu0 0.0
        %7434 = vmatpush1.msra.mxu0 0.0
        %7435 = vmatprep.subr.mxu0 0.0
        %7436 = vmatpush1.msra.mxu0 0.0
        %7437 = vmatprep.subr.mxu0 0.0
        %7438 = vmatpush1.msra.mxu0 0.0
        %7439 = vmatprep.subr.mxu0 0.0
        %7440 = vmatpush1.msra.mxu0 0.0
        %7441 = vmatprep.subr.mxu0 0.0
        %7442 = vmatpush1.msra.mxu0 0.0
        %7443 = vmatprep.subr.mxu0 0.0
        %7444 = vmatpush1.msra.mxu0 0.0
        %7445 = vmatprep.subr.mxu0 0.0
        %7446 = vmatpush1.msra.mxu0 0.0
        %7447 = vmatprep.subr.mxu0 0.0
        %7448 = vmatpush1.msra.mxu0 0.0
        %7449 = vmatprep.subr.mxu0 0.0
        %7450 = vmatpush1.msra.mxu0 0.0
        %7451 = vmatprep.subr.mxu0 0.0
        %7452 = vmatpush1.msra.mxu0 0.0
        %7453 = vmatprep.subr.mxu0 0.0
        %7454 = vmatpush1.msra.mxu0 0.0
        %7455 = vmatprep.subr.mxu0 0.0
        %7456 = vmatpush1.msra.mxu0 0.0
        %7457 = vmatprep.subr.mxu0 0.0
        %7458 = vmatpush1.msra.mxu0 0.0
        %7459 = vmatprep.subr.mxu0 0.0
        %7460 = vmatpush1.msra.mxu0 0.0
        %7461 = vmatprep.subr.mxu0 0.0
        %7462 = vmatpush1.msra.mxu0 0.0
        %7463 = vmatprep.subr.mxu0 0.0
        %7464 = vmatpush1.msra.mxu0 0.0
        %7465 = vmatprep.subr.mxu0 0.0
        %7466 = vmatpush1.msra.mxu0 0.0
        %7467 = vmatprep.subr.mxu0 0.0
        %7468 = vmatpush1.msra.mxu0 0.0
        %7469 = vmatprep.subr.mxu0 0.0
        %7470 = vmatpush1.msra.mxu0 0.0
        %7471 = vmatprep.subr.mxu0 0.0
        %7472 = vmatpush1.msra.mxu0 0.0
        %7473 = vmatprep.subr.mxu0 0.0
        %7474 = vmatpush1.msra.mxu0 0.0
        %7475 = vmatprep.subr.mxu0 0.0
        %7476 = vmatpush1.msra.mxu0 0.0
        %7477 = vmatprep.subr.mxu0 0.0
        %7478 = vmatpush1.msra.mxu0 0.0
        %7479 = vmatprep.subr.mxu0 0.0
        %7480 = vmatpush1.msra.mxu0 0.0
        %7481 = vmatprep.subr.mxu0 0.0
        %7482 = vmatpush1.msra.mxu0 0.0
        %7483 = vmatprep.subr.mxu0 0.0
        %7484 = vmatpush1.msra.mxu0 0.0
        %7485 = vmatprep.subr.mxu0 0.0
        %7486 = vmatpush1.msra.mxu0 0.0
        %7487 = vmatprep.subr.mxu0 0.0
        %7488 = vmatpush1.msra.mxu0 0.0
        %7489 = vmatprep.subr.mxu0 0.0
        %7490 = vmatpush1.msra.mxu0 0.0
        %7491 = vmatprep.subr.mxu0 0.0
        %7492 = vmatpush1.msra.mxu0 0.0
        %7493 = vmatprep.mubr.f32.mxu0 0.0
        %7494 = vmatmul.mubr.f32.gmra.mrb[0].mxu0 %v7421
        %v7495 = vpop.f32.mrb[0].mxu0
        %v7496 = vadd.f32 %v7410, %v7495
        %v7497 = vpop.f32.mrb[0].mxu0
        %v7498 = vadd.f32 %v7410, %v7497
        %7499 = vmatprep.mubr.f32.mxu0 0.0
        %7500 = vmatmul.mubr.f32.gmra.mrb[0].mxu0 %v7424
        %v7501 = vpop.f32.mrb[0].mxu0
        %v7502 = vadd.f32 %v7414, %v7501
        %v7503 = vpop.f32.mrb[0].mxu0
        %v7504 = vadd.f32 %v7414, %v7503
        %7505 = vmatprep.mubr.f32.mxu0 0.0
        %7506 = vmatmul.mubr.f32.gmra.mrb[0].mxu0 %v7427
        %v7507 = vpop.f32.mrb[0].mxu0
        %v7508 = vadd.f32 %v7418, %v7507
        %v7509 = vpop.f32.mrb[0].mxu0
        %v7510 = vadd.f32 %v7418, %v7509
        %7511 = vdwg.mxu0
        %7512 = vmatprep.subr.mxu0 %v7398
        %7513 = vmatpush1.msra.mxu0 %v7397
        %7514 = vmatprep.subr.mxu0 0.0
        %7515 = vmatpush1.msra.mxu0 0.0
        %7516 = vmatprep.subr.mxu0 0.0
        %7517 = vmatpush1.msra.mxu0 0.0
        %7518 = vmatprep.subr.mxu0 0.0
        %7519 = vmatpush1.msra.mxu0 0.0
        %7520 = vmatprep.subr.mxu0 0.0
        %7521 = vmatpush1.msra.mxu0 0.0
        %7522 = vmatprep.subr.mxu0 0.0
        %7523 = vmatpush1.msra.mxu0 0.0
        %7524 = vmatprep.subr.mxu0 0.0
        %7525 = vmatpush1.msra.mxu0 0.0
        %7526 = vmatprep.subr.mxu0 0.0
        %7527 = vmatpush1.msra.mxu0 0.0
        %7528 = vmatprep.subr.mxu0 0.0
        %7529 = vmatpush1.msra.mxu0 0.0
        %7530 = vmatprep.subr.mxu0 0.0
        %7531 = vmatpush1.msra.mxu0 0.0
        %7532 = vmatprep.subr.mxu0 0.0
        %7533 = vmatpush1.msra.mxu0 0.0
        %7534 = vmatprep.subr.mxu0 0.0
        %7535 = vmatpush1.msra.mxu0 0.0
        %7536 = vmatprep.subr.mxu0 0.0
        %7537 = vmatpush1.msra.mxu0 0.0
        %7538 = vmatprep.subr.mxu0 0.0
        %7539 = vmatpush1.msra.mxu0 0.0
        %7540 = vmatprep.subr.mxu0 0.0
        %7541 = vmatpush1.msra.mxu0 0.0
        %7542 = vmatprep.subr.mxu0 0.0
        %7543 = vmatpush1.msra.mxu0 0.0
        %7544 = vmatprep.subr.mxu0 0.0
        %7545 = vmatpush1.msra.mxu0 0.0
        %7546 = vmatprep.subr.mxu0 0.0
        %7547 = vmatpush1.msra.mxu0 0.0
        %7548 = vmatprep.subr.mxu0 0.0
        %7549 = vmatpush1.msra.mxu0 0.0
        %7550 = vmatprep.subr.mxu0 0.0
        %7551 = vmatpush1.msra.mxu0 0.0
        %7552 = vmatprep.subr.mxu0 0.0
        %7553 = vmatpush1.msra.mxu0 0.0
        %7554 = vmatprep.subr.mxu0 0.0
        %7555 = vmatpush1.msra.mxu0 0.0
        %7556 = vmatprep.subr.mxu0 0.0
        %7557 = vmatpush1.msra.mxu0 0.0
        %7558 = vmatprep.subr.mxu0 0.0
        %7559 = vmatpush1.msra.mxu0 0.0
        %7560 = vmatprep.subr.mxu0 0.0
        %7561 = vmatpush1.msra.mxu0 0.0
        %7562 = vmatprep.subr.mxu0 0.0
        %7563 = vmatpush1.msra.mxu0 0.0
        %7564 = vmatprep.subr.mxu0 0.0
        %7565 = vmatpush1.msra.mxu0 0.0
        %7566 = vmatprep.subr.mxu0 0.0
        %7567 = vmatpush1.msra.mxu0 0.0
        %7568 = vmatprep.subr.mxu0 0.0
        %7569 = vmatpush1.msra.mxu0 0.0
        %7570 = vmatprep.subr.mxu0 0.0
        %7571 = vmatpush1.msra.mxu0 0.0
        %7572 = vmatprep.subr.mxu0 0.0
        %7573 = vmatpush1.msra.mxu0 0.0
        %7574 = vmatprep.subr.mxu0 0.0
        %7575 = vmatpush1.msra.mxu0 0.0
        %7576 = vmatprep.mubr.f32.mxu0 0.0
        %7577 = vmatmul.mubr.f32.gmra.mrb[0].mxu0 %v7421
        %v7578 = vpop.f32.mrb[0].mxu0
        %v7579 = vadd.f32 %v7410, %v7578
        %v7580 = vpop.f32.mrb[0].mxu0
        %v7581 = vadd.f32 %v7410, %v7580
        %7582 = vmatprep.mubr.f32.mxu0 0.0
        %7583 = vmatmul.mubr.f32.gmra.mrb[0].mxu0 %v7424
        %v7584 = vpop.f32.mrb[0].mxu0
        %v7585 = vadd.f32 %v7414, %v7584
        %v7586 = vpop.f32.mrb[0].mxu0
        %v7587 = vadd.f32 %v7414, %v7586
        %7588 = vmatprep.mubr.f32.mxu0 0.0
        %7589 = vmatmul.mubr.f32.gmra.mrb[0].mxu0 %v7427
        %v7590 = vpop.f32.mrb[0].mxu0
        %v7591 = vadd.f32 %v7418, %v7590
        %v7592 = vpop.f32.mrb[0].mxu0
        %v7593 = vadd.f32 %v7418, %v7592
        %7594 = vdwg.mxu0
        %vm7595 = vcmp.ge.f32.partialorder %v7496, 0.0
        %vm7596 = vcmp.ge.f32.partialorder %v7498, 0.0
        %vm7597 = vcmp.ge.f32.partialorder %v7579, 0.0
        %vm7598 = vcmp.ge.f32.partialorder %v7581, 0.0
        %vm7599 = vcmp.ge.f32.partialorder %v7502, 0.0
        %vm7600 = vcmp.ge.f32.partialorder %v7504, 0.0
        %vm7601 = vcmp.ge.f32.partialorder %v7585, 0.0
        %vm7602 = vcmp.ge.f32.partialorder %v7587, 0.0
        %vm7603 = vcmp.ge.f32.partialorder %v7508, 0.0
        %vm7604 = vcmp.ge.f32.partialorder %v7510, 0.0
        %vm7605 = vcmp.ge.f32.partialorder %v7591, 0.0
        %vm7606 = vcmp.ge.f32.partialorder %v7593, 0.0
        %v7607 = vstv %s7399
        %v7608 = vmul.f32 %v7607, %v7496
        %v7609 = vmul.f32 %v7607, %v7498
        %v7610 = vmul.f32 %v7607, %v7579
        %v7611 = vmul.f32 %v7607, %v7581
        %v7612 = vmul.f32 %v7607, %v7502
        %v7613 = vmul.f32 %v7607, %v7504
        %v7614 = vmul.f32 %v7607, %v7585
        %v7615 = vmul.f32 %v7607, %v7587
        %v7616 = vmul.f32 %v7607, %v7508
        %v7617 = vmul.f32 %v7607, %v7510
        %v7618 = vmul.f32 %v7607, %v7591
        %v7619 = vmul.f32 %v7607, %v7593
        %v7620 = vsel %vm7595, %v7496, %v7608
        %v7621 = vsel %vm7596, %v7498, %v7609
        %v7622 = vsel %vm7597, %v7579, %v7610
        %v7623 = vsel %vm7598, %v7581, %v7611
        %v7624 = vsel %vm7599, %v7502, %v7612
        %v7625 = vsel %vm7600, %v7504, %v7613
        %v7626 = vsel %vm7601, %v7585, %v7614
        %v7627 = vsel %vm7602, %v7587, %v7615
        %v7628 = vsel %vm7603, %v7508, %v7616
        %v7629 = vsel %vm7604, %v7510, %v7617
        %v7630 = vsel %vm7605, %v7591, %v7618
        %v7631 = vsel %vm7606, %v7593, %v7619
        %v7632 = vadd.f32 %v7620, %v7622
        %v7633 = vadd.f32 %v7621, %v7623
        %v7634 = vadd.f32 %v7624, %v7626
        %v7635 = vadd.f32 %v7625, %v7627
        %v7636 = vadd.f32 %v7628, %v7630
        %v7637 = vadd.f32 %v7629, %v7631
        %s7638 = scalar_lea.vmem %s2, 72
        %v7639 = vld [vmem:[%s7638] sm:$0xff]
        %v7640 = vld [vmem:[%s7638 + $0x8] sm:$0xff]
        %v7641 = vld [vmem:[%s7638 + $0x10] sm:$0xff]
        %v7642 = vmul.f32 %v7632, 0.5
        %v7643 = vmul.f32 %v7633, 0.5
        %v7644 = vmul.f32 %v7634, 0.5
        %v7645 = vmul.f32 %v7635, 0.5
        %v7646 = vmul.f32 %v7636, 0.5
        %v7647 = vmul.f32 %v7637, 0.5
        %7648 = vset.pattern.permute.xlu0 37
        %7649 = vperm.xlu0 %7648, %v431
        %v7650 = vpop.permute.xlu0 %7649
        %7652 = vset.pattern.permute.xlu0 37
        %7653 = vperm.xlu0 %7652, %v432
        %v7654 = vpop.permute.xlu0 %7653
        %7656 = vset.pattern.permute.xlu0 37
        %7657 = vperm.xlu0 %7656, %v433
        %v7658 = vpop.permute.xlu0 %7657
        %v7661 = vsel %vm775, %v7639, 0
        %v7664 = vsel %vm775, %v7640, 0
        %v7667 = vsel %vm775, %v7641, 0
        %7669 = vmatprep.subr.mxu0 %v7643
        %7670 = vmatpush1.msra.mxu0 %v7642
        %7671 = vmatprep.subr.mxu0 %v7645
        %7672 = vmatpush1.msra.mxu0 %v7644
        %7673 = vmatprep.subr.mxu0 %v7647
        %7674 = vmatpush1.msra.mxu0 %v7646
        %7675 = vmatprep.subr.mxu0 0.0
        %7676 = vmatpush1.msra.mxu0 0.0
        %7677 = vmatprep.subr.mxu0 0.0
        %7678 = vmatpush1.msra.mxu0 0.0
        %7679 = vmatprep.subr.mxu0 0.0
        %7680 = vmatpush1.msra.mxu0 0.0
        %7681 = vmatprep.subr.mxu0 0.0
        %7682 = vmatpush1.msra.mxu0 0.0
        %7683 = vmatprep.subr.mxu0 0.0
        %7684 = vmatpush1.msra.mxu0 0.0
        %7685 = vmatprep.subr.mxu0 0.0
        %7686 = vmatpush1.msra.mxu0 0.0
        %7687 = vmatprep.subr.mxu0 0.0
        %7688 = vmatpush1.msra.mxu0 0.0
        %7689 = vmatprep.subr.mxu0 0.0
        %7690 = vmatpush1.msra.mxu0 0.0
        %7691 = vmatprep.subr.mxu0 0.0
        %7692 = vmatpush1.msra.mxu0 0.0
        %7693 = vmatprep.subr.mxu0 0.0
        %7694 = vmatpush1.msra.mxu0 0.0
        %7695 = vmatprep.subr.mxu0 0.0
        %7696 = vmatpush1.msra.mxu0 0.0
        %7697 = vmatprep.subr.mxu0 0.0
        %7698 = vmatpush1.msra.mxu0 0.0
        %7699 = vmatprep.subr.mxu0 0.0
        %7700 = vmatpush1.msra.mxu0 0.0
        %7701 = vmatprep.subr.mxu0 0.0
        %7702 = vmatpush1.msra.mxu0 0.0
        %7703 = vmatprep.subr.mxu0 0.0
        %7704 = vmatpush1.msra.mxu0 0.0
        %7705 = vmatprep.subr.mxu0 0.0
        %7706 = vmatpush1.msra.mxu0 0.0
        %7707 = vmatprep.subr.mxu0 0.0
        %7708 = vmatpush1.msra.mxu0 0.0
        %7709 = vmatprep.subr.mxu0 0.0
        %7710 = vmatpush1.msra.mxu0 0.0
        %7711 = vmatprep.subr.mxu0 0.0
        %7712 = vmatpush1.msra.mxu0 0.0
        %7713 = vmatprep.subr.mxu0 0.0
        %7714 = vmatpush1.msra.mxu0 0.0
        %7715 = vmatprep.subr.mxu0 0.0
        %7716 = vmatpush1.msra.mxu0 0.0
        %7717 = vmatprep.subr.mxu0 0.0
        %7718 = vmatpush1.msra.mxu0 0.0
        %7719 = vmatprep.subr.mxu0 0.0
        %7720 = vmatpush1.msra.mxu0 0.0
        %7721 = vmatprep.subr.mxu0 0.0
        %7722 = vmatpush1.msra.mxu0 0.0
        %7723 = vmatprep.subr.mxu0 0.0
        %7724 = vmatpush1.msra.mxu0 0.0
        %7725 = vmatprep.subr.mxu0 0.0
        %7726 = vmatpush1.msra.mxu0 0.0
        %7727 = vmatprep.subr.mxu0 0.0
        %7728 = vmatpush1.msra.mxu0 0.0
        %7729 = vmatprep.subr.mxu0 0.0
        %7730 = vmatpush1.msra.mxu0 0.0
        %7731 = vmatprep.subr.mxu0 0.0
        %7732 = vmatpush1.msra.mxu0 0.0
        %7733 = vmatprep.mubr.f32.mxu0 0.0
        %7734 = vmatmul.mubr.f32.gmra.mrb[0].mxu0 %v7661
        %v7735 = vpop.f32.mrb[0].mxu0
        %v7736 = vadd.f32 %v7650, %v7735
        %v7737 = vpop.f32.mrb[0].mxu0
        %v7738 = vadd.f32 %v7650, %v7737
        %7739 = vmatprep.mubr.f32.mxu0 0.0
        %7740 = vmatmul.mubr.f32.gmra.mrb[0].mxu0 %v7664
        %v7741 = vpop.f32.mrb[0].mxu0
        %v7742 = vadd.f32 %v7654, %v7741
        %v7743 = vpop.f32.mrb[0].mxu0
        %v7744 = vadd.f32 %v7654, %v7743
        %7745 = vmatprep.mubr.f32.mxu0 0.0
        %7746 = vmatmul.mubr.f32.gmra.mrb[0].mxu0 %v7667
        %v7747 = vpop.f32.mrb[0].mxu0
        %v7748 = vadd.f32 %v7658, %v7747
        %v7749 = vpop.f32.mrb[0].mxu0
        %v7750 = vadd.f32 %v7658, %v7749
        %7751 = vdwg.mxu0
        %vm7752 = vcmp.ge.f32.partialorder %v7736, 0.0
        %vm7753 = vcmp.ge.f32.partialorder %v7738, 0.0
        %vm7754 = vcmp.ge.f32.partialorder %v7742, 0.0
        %vm7755 = vcmp.ge.f32.partialorder %v7744, 0.0
        %vm7756 = vcmp.ge.f32.partialorder %v7748, 0.0
        %vm7757 = vcmp.ge.f32.partialorder %v7750, 0.0
        %v7758 = vstv %s7400
        %v7759 = vmul.f32 %v7758, %v7736
        %v7760 = vmul.f32 %v7758, %v7738
        %v7761 = vmul.f32 %v7758, %v7742
        %v7762 = vmul.f32 %v7758, %v7744
        %v7763 = vmul.f32 %v7758, %v7748
        %v7764 = vmul.f32 %v7758, %v7750
        %v7765 = vsel %vm7752, %v7736, %v7759
        %v7766 = vsel %vm7753, %v7738, %v7760
        %v7767 = vsel %vm7754, %v7742, %v7761
        %v7768 = vsel %vm7755, %v7744, %v7762
        %v7769 = vsel %vm7756, %v7748, %v7763
        %v7770 = vsel %vm7757, %v7750, %v7764
        %s7771 = scalar_lea.vmem %s3, 24
        %v7772 = vld [vmem:[%s7771] sm:$0xff]
        %7773 = vset.pattern.permute.xlu0 38
        %7774 = vperm.xlu0 %7773, %v431
        %v7775 = vpop.permute.xlu0 %7774
        %v7778 = vsel %vm892, %v7772, 0
        %7780 = vmatprep.subr.mxu0 %v7621
        %7781 = vmatpush1.msra.mxu0 %v7620
        %7782 = vmatprep.subr.mxu0 %v7625
        %7783 = vmatpush1.msra.mxu0 %v7624
        %7784 = vmatprep.subr.mxu0 %v7629
        %7785 = vmatpush1.msra.mxu0 %v7628
        %7786 = vmatprep.subr.mxu0 %v7766
        %7787 = vmatpush1.msra.mxu0 %v7765
        %7788 = vmatprep.subr.mxu0 %v7768
        %7789 = vmatpush1.msra.mxu0 %v7767
        %7790 = vmatprep.subr.mxu0 %v7770
        %7791 = vmatpush1.msra.mxu0 %v7769
        %7792 = vmatprep.subr.mxu0 0.0
        %7793 = vmatpush1.msra.mxu0 0.0
        %7794 = vmatprep.subr.mxu0 0.0
        %7795 = vmatpush1.msra.mxu0 0.0
        %7796 = vmatprep.subr.mxu0 0.0
        %7797 = vmatpush1.msra.mxu0 0.0
        %7798 = vmatprep.subr.mxu0 0.0
        %7799 = vmatpush1.msra.mxu0 0.0
        %7800 = vmatprep.subr.mxu0 0.0
        %7801 = vmatpush1.msra.mxu0 0.0
        %7802 = vmatprep.subr.mxu0 0.0
        %7803 = vmatpush1.msra.mxu0 0.0
        %7804 = vmatprep.subr.mxu0 0.0
        %7805 = vmatpush1.msra.mxu0 0.0
        %7806 = vmatprep.subr.mxu0 0.0
        %7807 = vmatpush1.msra.mxu0 0.0
        %7808 = vmatprep.subr.mxu0 0.0
        %7809 = vmatpush1.msra.mxu0 0.0
        %7810 = vmatprep.subr.mxu0 0.0
        %7811 = vmatpush1.msra.mxu0 0.0
        %7812 = vmatprep.subr.mxu0 0.0
        %7813 = vmatpush1.msra.mxu0 0.0
        %7814 = vmatprep.subr.mxu0 0.0
        %7815 = vmatpush1.msra.mxu0 0.0
        %7816 = vmatprep.subr.mxu0 0.0
        %7817 = vmatpush1.msra.mxu0 0.0
        %7818 = vmatprep.subr.mxu0 0.0
        %7819 = vmatpush1.msra.mxu0 0.0
        %7820 = vmatprep.subr.mxu0 0.0
        %7821 = vmatpush1.msra.mxu0 0.0
        %7822 = vmatprep.subr.mxu0 0.0
        %7823 = vmatpush1.msra.mxu0 0.0
        %7824 = vmatprep.subr.mxu0 0.0
        %7825 = vmatpush1.msra.mxu0 0.0
        %7826 = vmatprep.subr.mxu0 0.0
        %7827 = vmatpush1.msra.mxu0 0.0
        %7828 = vmatprep.subr.mxu0 0.0
        %7829 = vmatpush1.msra.mxu0 0.0
        %7830 = vmatprep.subr.mxu0 0.0
        %7831 = vmatpush1.msra.mxu0 0.0
        %7832 = vmatprep.subr.mxu0 0.0
        %7833 = vmatpush1.msra.mxu0 0.0
        %7834 = vmatprep.subr.mxu0 0.0
        %7835 = vmatpush1.msra.mxu0 0.0
        %7836 = vmatprep.subr.mxu0 0.0
        %7837 = vmatpush1.msra.mxu0 0.0
        %7838 = vmatprep.subr.mxu0 0.0
        %7839 = vmatpush1.msra.mxu0 0.0
        %7840 = vmatprep.subr.mxu0 0.0
        %7841 = vmatpush1.msra.mxu0 0.0
        %7842 = vmatprep.subr.mxu0 0.0
        %7843 = vmatpush1.msra.mxu0 0.0
        %7844 = vmatprep.mubr.f32.mxu0 0.0
        %7845 = vmatmul.mubr.f32.gmra.mrb[0].mxu0 %v7778
        %v7846 = vpop.f32.mrb[0].mxu0
        %v7847 = vadd.f32 %v7775, %v7846
        %v7848 = vpop.f32.mrb[0].mxu0
        %v7849 = vadd.f32 %v7775, %v7848
        %7850 = vdwg.mxu0
        %7851 = vmatprep.subr.mxu0 %v7623
        %7852 = vmatpush1.msra.mxu0 %v7622
        %7853 = vmatprep.subr.mxu0 %v7627
        %7854 = vmatpush1.msra.mxu0 %v7626
        %7855 = vmatprep.subr.mxu0 %v7631
        %7856 = vmatpush1.msra.mxu0 %v7630
        %7857 = vmatprep.subr.mxu0 %v7766
        %7858 = vmatpush1.msra.mxu0 %v7765
        %7859 = vmatprep.subr.mxu0 %v7768
        %7860 = vmatpush1.msra.mxu0 %v7767
        %7861 = vmatprep.subr.mxu0 %v7770
        %7862 = vmatpush1.msra.mxu0 %v7769
        %7863 = vmatprep.subr.mxu0 0.0
        %7864 = vmatpush1.msra.mxu0 0.0
        %7865 = vmatprep.subr.mxu0 0.0
        %7866 = vmatpush1.msra.mxu0 0.0
        %7867 = vmatprep.subr.mxu0 0.0
        %7868 = vmatpush1.msra.mxu0 0.0
        %7869 = vmatprep.subr.mxu0 0.0
        %7870 = vmatpush1.msra.mxu0 0.0
        %7871 = vmatprep.subr.mxu0 0.0
        %7872 = vmatpush1.msra.mxu0 0.0
        %7873 = vmatprep.subr.mxu0 0.0
        %7874 = vmatpush1.msra.mxu0 0.0
        %7875 = vmatprep.subr.mxu0 0.0
        %7876 = vmatpush1.msra.mxu0 0.0
        %7877 = vmatprep.subr.mxu0 0.0
        %7878 = vmatpush1.msra.mxu0 0.0
        %7879 = vmatprep.subr.mxu0 0.0
        %7880 = vmatpush1.msra.mxu0 0.0
        %7881 = vmatprep.subr.mxu0 0.0
        %7882 = vmatpush1.msra.mxu0 0.0
        %7883 = vmatprep.subr.mxu0 0.0
        %7884 = vmatpush1.msra.mxu0 0.0
        %7885 = vmatprep.subr.mxu0 0.0
        %7886 = vmatpush1.msra.mxu0 0.0
        %7887 = vmatprep.subr.mxu0 0.0
        %7888 = vmatpush1.msra.mxu0 0.0
        %7889 = vmatprep.subr.mxu0 0.0
        %7890 = vmatpush1.msra.mxu0 0.0
        %7891 = vmatprep.subr.mxu0 0.0
        %7892 = vmatpush1.msra.mxu0 0.0
        %7893 = vmatprep.subr.mxu0 0.0
        %7894 = vmatpush1.msra.mxu0 0.0
        %7895 = vmatprep.subr.mxu0 0.0
        %7896 = vmatpush1.msra.mxu0 0.0
        %7897 = vmatprep.subr.mxu0 0.0
        %7898 = vmatpush1.msra.mxu0 0.0
        %7899 = vmatprep.subr.mxu0 0.0
        %7900 = vmatpush1.msra.mxu0 0.0
        %7901 = vmatprep.subr.mxu0 0.0
        %7902 = vmatpush1.msra.mxu0 0.0
        %7903 = vmatprep.subr.mxu0 0.0
        %7904 = vmatpush1.msra.mxu0 0.0
        %7905 = vmatprep.subr.mxu0 0.0
        %7906 = vmatpush1.msra.mxu0 0.0
        %7907 = vmatprep.subr.mxu0 0.0
        %7908 = vmatpush1.msra.mxu0 0.0
        %7909 = vmatprep.subr.mxu0 0.0
        %7910 = vmatpush1.msra.mxu0 0.0
        %7911 = vmatprep.subr.mxu0 0.0
        %7912 = vmatpush1.msra.mxu0 0.0
        %7913 = vmatprep.subr.mxu0 0.0
        %7914 = vmatpush1.msra.mxu0 0.0
        %7915 = vmatprep.mubr.f32.mxu0 0.0
        %7916 = vmatmul.mubr.f32.gmra.mrb[0].mxu0 %v7778
        %v7917 = vpop.f32.mrb[0].mxu0
        %v7918 = vadd.f32 %v7775, %v7917
        %v7919 = vpop.f32.mrb[0].mxu0
        %v7920 = vadd.f32 %v7775, %v7919
        %7921 = vdwg.mxu0
        %vm7922 = vcmp.ge.f32.partialorder %v7847, 0.0
        %vm7923 = vcmp.ge.f32.partialorder %v7849, 0.0
        %vm7924 = vcmp.ge.f32.partialorder %v7918, 0.0
        %vm7925 = vcmp.ge.f32.partialorder %v7920, 0.0
        %v7926 = vstv %s7401
        %v7927 = vmul.f32 %v7926, %v7847
        %v7928 = vmul.f32 %v7926, %v7849
        %v7929 = vmul.f32 %v7926, %v7918
        %v7930 = vmul.f32 %v7926, %v7920
        %v7931 = vsel %vm7922, %v7847, %v7927
        %v7932 = vsel %vm7923, %v7849, %v7928
        %v7933 = vsel %vm7924, %v7918, %v7929
        %v7934 = vsel %vm7925, %v7920, %v7930
        %v7935 = vsel %vm1071, %v7931, 0.0
        %v7936 = vsel %vm1072, %v7932, 0.0
        %v7937 = vsel %vm1073, %v7933, 0.0
        %v7938 = vsel %vm1074, %v7934, 0.0
        %v7939 = vrot.slane %v7935, 4
        %v7940 = vadd.f32 %v7935, %v7939
        %v7941 = vrot.slane %v7940, 2
        %v7942 = vadd.f32 %v7940, %v7941
        %v7943 = vrot.slane %v7942, 1
        %v7944 = vadd.f32 %v7942, %v7943
        %v7945 = vrot.slane %v7936, 4
        %v7946 = vadd.f32 %v7936, %v7945
        %v7947 = vrot.slane %v7946, 2
        %v7948 = vadd.f32 %v7946, %v7947
        %v7949 = vrot.slane %v7948, 1
        %v7950 = vadd.f32 %v7948, %v7949
        %v7951 = vrot.slane %v7937, 4
        %v7952 = vadd.f32 %v7937, %v7951
        %v7953 = vrot.slane %v7952, 2
        %v7954 = vadd.f32 %v7952, %v7953
        %v7955 = vrot.slane %v7954, 1
        %v7956 = vadd.f32 %v7954, %v7955
        %v7957 = vrot.slane %v7938, 4
        %v7958 = vadd.f32 %v7938, %v7957
        %v7959 = vrot.slane %v7958, 2
        %v7960 = vadd.f32 %v7958, %v7959
        %v7961 = vrot.slane %v7960, 1
        %v7962 = vadd.f32 %v7960, %v7961
        %v7963 = vmul.f32 %v7935, %v7935
        %v7964 = vmul.f32 %v7936, %v7936
        %v7965 = vmul.f32 %v7937, %v7937
        %v7966 = vmul.f32 %v7938, %v7938
        %v7967 = vrot.slane %v7963, 4
        %v7968 = vadd.f32 %v7963, %v7967
        %v7969 = vrot.slane %v7968, 2
        %v7970 = vadd.f32 %v7968, %v7969
        %v7971 = vrot.slane %v7970, 1
        %v7972 = vadd.f32 %v7970, %v7971
        %v7973 = vrot.slane %v7964, 4
        %v7974 = vadd.f32 %v7964, %v7973
        %v7975 = vrot.slane %v7974, 2
        %v7976 = vadd.f32 %v7974, %v7975
        %v7977 = vrot.slane %v7976, 1
        %v7978 = vadd.f32 %v7976, %v7977
        %v7979 = vrot.slane %v7965, 4
        %v7980 = vadd.f32 %v7965, %v7979
        %v7981 = vrot.slane %v7980, 2
        %v7982 = vadd.f32 %v7980, %v7981
        %v7983 = vrot.slane %v7982, 1
        %v7984 = vadd.f32 %v7982, %v7983
        %v7985 = vrot.slane %v7966, 4
        %v7986 = vadd.f32 %v7966, %v7985
        %v7987 = vrot.slane %v7986, 2
        %v7988 = vadd.f32 %v7986, %v7987
        %v7989 = vrot.slane %v7988, 1
        %v7990 = vadd.f32 %v7988, %v7989
        %v7991 = vsel %vm1131, %v7944, %v7972
        %v7992 = vsel %vm1131, %v7950, %v7978
        %v7993 = vsel %vm1131, %v7956, %v7984
        %v7994 = vsel %vm1131, %v7962, %v7990
        %7995 = vmatprep.subr.mxu0 0.0
        %7996 = vmatpush1.msra.mxu0 %v434
        %7997 = vmatprep.subr.mxu0 0.0
        %7998 = vmatpush1.msra.mxu0 %v435
        %7999 = vmatprep.subr.mxu0 0.0
        %8000 = vmatpush1.msra.mxu0 %v436
        %8001 = vmatprep.subr.mxu0 0.0
        %8002 = vmatpush1.msra.mxu0 %v437
        %8003 = vmatprep.subr.mxu0 0.0
        %8004 = vmatpush1.msra.mxu0 %v438
        %8005 = vmatprep.subr.mxu0 0.0
        %8006 = vmatpush1.msra.mxu0 %v439
        %8007 = vmatprep.subr.mxu0 0.0
        %8008 = vmatpush1.msra.mxu0 %v440
        %8009 = vmatprep.subr.mxu0 0.0
        %8010 = vmatpush1.msra.mxu0 %v441
        %8011 = vmatprep.subr.mxu0 0.0
        %8012 = vmatpush1.msra.mxu0 %v442
        %8013 = vmatprep.subr.mxu0 0.0
        %8014 = vmatpush1.msra.mxu0 %v443
        %8015 = vmatprep.subr.mxu0 0.0
        %8016 = vmatpush1.msra.mxu0 %v444
        %8017 = vmatprep.subr.mxu0 0.0
        %8018 = vmatpush1.msra.mxu0 %v445
        %8019 = vmatprep.subr.mxu0 0.0
        %8020 = vmatpush1.msra.mxu0 %v446
        %8021 = vmatprep.subr.mxu0 0.0
        %8022 = vmatpush1.msra.mxu0 %v447
        %8023 = vmatprep.subr.mxu0 0.0
        %8024 = vmatpush1.msra.mxu0 %v448
        %8025 = vmatprep.subr.mxu0 0.0
        %8026 = vmatpush1.msra.mxu0 %v449
        %8027 = vmatprep.subr.mxu0 0.0
        %8028 = vmatpush1.msra.mxu0 %v450
        %8029 = vmatprep.subr.mxu0 0.0
        %8030 = vmatpush1.msra.mxu0 %v451
        %8031 = vmatprep.subr.mxu0 0.0
        %8032 = vmatpush1.msra.mxu0 %v452
        %8033 = vmatprep.subr.mxu0 0.0
        %8034 = vmatpush1.msra.mxu0 %v453
        %8035 = vmatprep.subr.mxu0 0.0
        %8036 = vmatpush1.msra.mxu0 %v454
        %8037 = vmatprep.subr.mxu0 0.0
        %8038 = vmatpush1.msra.mxu0 %v455
        %8039 = vmatprep.subr.mxu0 0.0
        %8040 = vmatpush1.msra.mxu0 %v456
        %8041 = vmatprep.subr.mxu0 0.0
        %8042 = vmatpush1.msra.mxu0 %v457
        %8043 = vmatprep.subr.mxu0 0.0
        %8044 = vmatpush1.msra.mxu0 %v458
        %8045 = vmatprep.subr.mxu0 0.0
        %8046 = vmatpush1.msra.mxu0 %v459
        %8047 = vmatprep.subr.mxu0 0.0
        %8048 = vmatpush1.msra.mxu0 %v460
        %8049 = vmatprep.subr.mxu0 0.0
        %8050 = vmatpush1.msra.mxu0 %v461
        %8051 = vmatprep.subr.mxu0 0.0
        %8052 = vmatpush1.msra.mxu0 %v462
        %8053 = vmatprep.subr.mxu0 0.0
        %8054 = vmatpush1.msra.mxu0 %v463
        %8055 = vmatprep.subr.mxu0 0.0
        %8056 = vmatpush1.msra.mxu0 %v464
        %8057 = vmatprep.subr.mxu0 0.0
        %8058 = vmatpush1.msra.mxu0 %v465
        %8059 = vmatprep.mubr.f32.mxu0 %v7992
        %8060 = vmatmul.mubr.f32.gmra.mrb[0].mxu0 %v7991
        %v8061 = vpop.f32.mrb[0].mxu0
        %v8062 = vadd.f32 0.0, %v8061
        %v8063 = vpop.f32.mrb[0].mxu0
        %8064 = vdwg.mxu0
        %8065 = vmatprep.subr.mxu0 0.0
        %8066 = vmatpush1.msra.mxu0 %v466
        %8067 = vmatprep.subr.mxu0 0.0
        %8068 = vmatpush1.msra.mxu0 %v467
        %8069 = vmatprep.subr.mxu0 0.0
        %8070 = vmatpush1.msra.mxu0 %v468
        %8071 = vmatprep.subr.mxu0 0.0
        %8072 = vmatpush1.msra.mxu0 %v469
        %8073 = vmatprep.subr.mxu0 0.0
        %8074 = vmatpush1.msra.mxu0 %v470
        %8075 = vmatprep.subr.mxu0 0.0
        %8076 = vmatpush1.msra.mxu0 %v471
        %8077 = vmatprep.subr.mxu0 0.0
        %8078 = vmatpush1.msra.mxu0 %v472
        %8079 = vmatprep.subr.mxu0 0.0
        %8080 = vmatpush1.msra.mxu0 %v473
        %8081 = vmatprep.subr.mxu0 0.0
        %8082 = vmatpush1.msra.mxu0 %v474
        %8083 = vmatprep.subr.mxu0 0.0
        %8084 = vmatpush1.msra.mxu0 %v475
        %8085 = vmatprep.subr.mxu0 0.0
        %8086 = vmatpush1.msra.mxu0 %v476
        %8087 = vmatprep.subr.mxu0 0.0
        %8088 = vmatpush1.msra.mxu0 %v477
        %8089 = vmatprep.subr.mxu0 0.0
        %8090 = vmatpush1.msra.mxu0 %v478
        %8091 = vmatprep.subr.mxu0 0.0
        %8092 = vmatpush1.msra.mxu0 %v479
        %8093 = vmatprep.subr.mxu0 0.0
        %8094 = vmatpush1.msra.mxu0 %v480
        %8095 = vmatprep.subr.mxu0 0.0
        %8096 = vmatpush1.msra.mxu0 %v481
        %8097 = vmatprep.subr.mxu0 0.0
        %8098 = vmatpush1.msra.mxu0 %v482
        %8099 = vmatprep.subr.mxu0 0.0
        %8100 = vmatpush1.msra.mxu0 %v483
        %8101 = vmatprep.subr.mxu0 0.0
        %8102 = vmatpush1.msra.mxu0 %v484
        %8103 = vmatprep.subr.mxu0 0.0
        %8104 = vmatpush1.msra.mxu0 %v485
        %8105 = vmatprep.subr.mxu0 0.0
        %8106 = vmatpush1.msra.mxu0 %v486
        %8107 = vmatprep.subr.mxu0 0.0
        %8108 = vmatpush1.msra.mxu0 %v487
        %8109 = vmatprep.subr.mxu0 0.0
        %8110 = vmatpush1.msra.mxu0 %v488
        %8111 = vmatprep.subr.mxu0 0.0
        %8112 = vmatpush1.msra.mxu0 %v489
        %8113 = vmatprep.subr.mxu0 0.0
        %8114 = vmatpush1.msra.mxu0 %v490
        %8115 = vmatprep.subr.mxu0 0.0
        %8116 = vmatpush1.msra.mxu0 %v491
        %8117 = vmatprep.subr.mxu0 0.0
        %8118 = vmatpush1.msra.mxu0 %v492
        %8119 = vmatprep.subr.mxu0 0.0
        %8120 = vmatpush1.msra.mxu0 %v493
        %8121 = vmatprep.subr.mxu0 0.0
        %8122 = vmatpush1.msra.mxu0 %v494
        %8123 = vmatprep.subr.mxu0 0.0
        %8124 = vmatpush1.msra.mxu0 %v495
        %8125 = vmatprep.subr.mxu0 0.0
        %8126 = vmatpush1.msra.mxu0 %v496
        %8127 = vmatprep.subr.mxu0 0.0
        %8128 = vmatpush1.msra.mxu0 %v497
        %8129 = vmatprep.mubr.f32.mxu0 %v7994
        %8130 = vmatmul.mubr.f32.gmra.mrb[0].mxu0 %v7993
        %v8131 = vpop.f32.mrb[0].mxu0
        %v8132 = vadd.f32 %v8062, %v8131
        %v8133 = vpop.f32.mrb[0].mxu0
        %8134 = vdwg.mxu0
        %v8136 = vsel %vm1280, %v8132, 0
        %8138 = vmatprep.subr.mxu0 %v1287
        %8139 = vmatpush1.msra.mxu0 %v1285
        %8140 = vmatprep.subr.mxu0 0.0
        %8141 = vmatpush1.msra.mxu0 0.0
        %8142 = vmatprep.subr.mxu0 0.0
        %8143 = vmatpush1.msra.mxu0 0.0
        %8144 = vmatprep.subr.mxu0 0.0
        %8145 = vmatpush1.msra.mxu0 0.0
        %8146 = vmatprep.subr.mxu0 0.0
        %8147 = vmatpush1.msra.mxu0 0.0
        %8148 = vmatprep.subr.mxu0 0.0
        %8149 = vmatpush1.msra.mxu0 0.0
        %8150 = vmatprep.subr.mxu0 0.0
        %8151 = vmatpush1.msra.mxu0 0.0
        %8152 = vmatprep.subr.mxu0 0.0
        %8153 = vmatpush1.msra.mxu0 0.0
        %8154 = vmatprep.subr.mxu0 0.0
        %8155 = vmatpush1.msra.mxu0 0.0
        %8156 = vmatprep.subr.mxu0 0.0
        %8157 = vmatpush1.msra.mxu0 0.0
        %8158 = vmatprep.subr.mxu0 0.0
        %8159 = vmatpush1.msra.mxu0 0.0
        %8160 = vmatprep.subr.mxu0 0.0
        %8161 = vmatpush1.msra.mxu0 0.0
        %8162 = vmatprep.subr.mxu0 0.0
        %8163 = vmatpush1.msra.mxu0 0.0
        %8164 = vmatprep.subr.mxu0 0.0
        %8165 = vmatpush1.msra.mxu0 0.0
        %8166 = vmatprep.subr.mxu0 0.0
        %8167 = vmatpush1.msra.mxu0 0.0
        %8168 = vmatprep.subr.mxu0 0.0
        %8169 = vmatpush1.msra.mxu0 0.0
        %8170 = vmatprep.subr.mxu0 0.0
        %8171 = vmatpush1.msra.mxu0 0.0
        %8172 = vmatprep.subr.mxu0 0.0
        %8173 = vmatpush1.msra.mxu0 0.0
        %8174 = vmatprep.subr.mxu0 0.0
        %8175 = vmatpush1.msra.mxu0 0.0
        %8176 = vmatprep.subr.mxu0 0.0
        %8177 = vmatpush1.msra.mxu0 0.0
        %8178 = vmatprep.subr.mxu0 0.0
        %8179 = vmatpush1.msra.mxu0 0.0
        %8180 = vmatprep.subr.mxu0 0.0
        %8181 = vmatpush1.msra.mxu0 0.0
        %8182 = vmatprep.subr.mxu0 0.0
        %8183 = vmatpush1.msra.mxu0 0.0
        %8184 = vmatprep.subr.mxu0 0.0
        %8185 = vmatpush1.msra.mxu0 0.0
        %8186 = vmatprep.subr.mxu0 0.0
        %8187 = vmatpush1.msra.mxu0 0.0
        %8188 = vmatprep.subr.mxu0 0.0
        %8189 = vmatpush1.msra.mxu0 0.0
        %8190 = vmatprep.subr.mxu0 0.0
        %8191 = vmatpush1.msra.mxu0 0.0
        %8192 = vmatprep.subr.mxu0 0.0
        %8193 = vmatpush1.msra.mxu0 0.0
        %8194 = vmatprep.subr.mxu0 0.0
        %8195 = vmatpush1.msra.mxu0 0.0
        %8196 = vmatprep.subr.mxu0 0.0
        %8197 = vmatpush1.msra.mxu0 0.0
        %8198 = vmatprep.subr.mxu0 0.0
        %8199 = vmatpush1.msra.mxu0 0.0
        %8200 = vmatprep.subr.mxu0 0.0
        %8201 = vmatpush1.msra.mxu0 0.0
        %8202 = vmatprep.mubr.f32.mxu0 0.0
        %8203 = vmatmul.mubr.f32.gmra.mrb[0].mxu0 %v8136
        %v8204 = vpop.f32.mrb[0].mxu0
        %v8205 = vadd.f32 0.0, %v8204
        %v8206 = vpop.f32.mrb[0].mxu0
        %v8207 = vadd.f32 0.0, %v8206
        %8208 = vdwg.mxu0
        %8209 = vmatprep.subr.mxu0 %v1291
        %8210 = vmatpush1.msra.mxu0 %v1289
        %8211 = vmatprep.subr.mxu0 0.0
        %8212 = vmatpush1.msra.mxu0 0.0
        %8213 = vmatprep.subr.mxu0 0.0
        %8214 = vmatpush1.msra.mxu0 0.0
        %8215 = vmatprep.subr.mxu0 0.0
        %8216 = vmatpush1.msra.mxu0 0.0
        %8217 = vmatprep.subr.mxu0 0.0
        %8218 = vmatpush1.msra.mxu0 0.0
        %8219 = vmatprep.subr.mxu0 0.0
        %8220 = vmatpush1.msra.mxu0 0.0
        %8221 = vmatprep.subr.mxu0 0.0
        %8222 = vmatpush1.msra.mxu0 0.0
        %8223 = vmatprep.subr.mxu0 0.0
        %8224 = vmatpush1.msra.mxu0 0.0
        %8225 = vmatprep.subr.mxu0 0.0
        %8226 = vmatpush1.msra.mxu0 0.0
        %8227 = vmatprep.subr.mxu0 0.0
        %8228 = vmatpush1.msra.mxu0 0.0
        %8229 = vmatprep.subr.mxu0 0.0
        %8230 = vmatpush1.msra.mxu0 0.0
        %8231 = vmatprep.subr.mxu0 0.0
        %8232 = vmatpush1.msra.mxu0 0.0
        %8233 = vmatprep.subr.mxu0 0.0
        %8234 = vmatpush1.msra.mxu0 0.0
        %8235 = vmatprep.subr.mxu0 0.0
        %8236 = vmatpush1.msra.mxu0 0.0
        %8237 = vmatprep.subr.mxu0 0.0
        %8238 = vmatpush1.msra.mxu0 0.0
        %8239 = vmatprep.subr.mxu0 0.0
        %8240 = vmatpush1.msra.mxu0 0.0
        %8241 = vmatprep.subr.mxu0 0.0
        %8242 = vmatpush1.msra.mxu0 0.0
        %8243 = vmatprep.subr.mxu0 0.0
        %8244 = vmatpush1.msra.mxu0 0.0
        %8245 = vmatprep.subr.mxu0 0.0
        %8246 = vmatpush1.msra.mxu0 0.0
        %8247 = vmatprep.subr.mxu0 0.0
        %8248 = vmatpush1.msra.mxu0 0.0
        %8249 = vmatprep.subr.mxu0 0.0
        %8250 = vmatpush1.msra.mxu0 0.0
        %8251 = vmatprep.subr.mxu0 0.0
        %8252 = vmatpush1.msra.mxu0 0.0
        %8253 = vmatprep.subr.mxu0 0.0
        %8254 = vmatpush1.msra.mxu0 0.0
        %8255 = vmatprep.subr.mxu0 0.0
        %8256 = vmatpush1.msra.mxu0 0.0
        %8257 = vmatprep.subr.mxu0 0.0
        %8258 = vmatpush1.msra.mxu0 0.0
        %8259 = vmatprep.subr.mxu0 0.0
        %8260 = vmatpush1.msra.mxu0 0.0
        %8261 = vmatprep.subr.mxu0 0.0
        %8262 = vmatpush1.msra.mxu0 0.0
        %8263 = vmatprep.subr.mxu0 0.0
        %8264 = vmatpush1.msra.mxu0 0.0
        %8265 = vmatprep.subr.mxu0 0.0
        %8266 = vmatpush1.msra.mxu0 0.0
        %8267 = vmatprep.subr.mxu0 0.0
        %8268 = vmatpush1.msra.mxu0 0.0
        %8269 = vmatprep.subr.mxu0 0.0
        %8270 = vmatpush1.msra.mxu0 0.0
        %8271 = vmatprep.subr.mxu0 0.0
        %8272 = vmatpush1.msra.mxu0 0.0
        %8273 = vmatprep.mubr.f32.mxu0 0.0
        %8274 = vmatmul.mubr.f32.gmra.mrb[0].mxu0 %v8136
        %v8275 = vpop.f32.mrb[0].mxu0
        %v8276 = vadd.f32 0.0, %v8275
        %v8277 = vpop.f32.mrb[0].mxu0
        %v8278 = vadd.f32 0.0, %v8277
        %8279 = vdwg.mxu0
        %v8280 = vmul.f32 %v8205, 0.125
        %v8281 = vmul.f32 %v8207, 0.125
        %v8282 = vmul.f32 %v8276, 0.125
        %v8283 = vmul.f32 %v8278, 0.125
        %v8284 = vmul.f32 %v8280, %v8280
        %v8285 = vmul.f32 %v8281, %v8281
        %v8286 = vmul.f32 %v8282, %v8282
        %v8287 = vmul.f32 %v8283, %v8283
        %v8292 = vrot.slane %v8284, 7
        %v8293 = vrot.slane %v8285, 7
        %v8294 = vrot.slane %v8286, 7
        %v8295 = vrot.slane %v8287, 7
        %v8300 = vsub.f32 %v8280, %v8292
        %v8301 = vsub.f32 %v8281, %v8293
        %v8302 = vsub.f32 %v8282, %v8294
        %v8303 = vsub.f32 %v8283, %v8295
        %v8304 = vlaneseq
        %v8305 = vshrl.u32 %v8304, 7
        %v8306 = vsub.s32 0, %v8305
        %v8307 = vrot.slane %v8280, %v8306
        %v8308 = vlaneseq
        %v8309 = vshrl.u32 %v8308, 7
        %v8310 = vsub.s32 0, %v8309
        %v8311 = vrot.slane %v8281, %v8310
        %v8312 = vlaneseq
        %v8313 = vshrl.u32 %v8312, 7
        %v8314 = vsub.s32 0, %v8313
        %v8315 = vrot.slane %v8282, %v8314
        %v8316 = vlaneseq
        %v8317 = vshrl.u32 %v8316, 7
        %v8318 = vsub.s32 0, %v8317
        %v8319 = vrot.slane %v8283, %v8318
        %v8320 = vsub.f32 %v7931, %v8307
        %v8321 = vsub.f32 %v7932, %v8311
        %v8322 = vsub.f32 %v7933, %v8315
        %v8323 = vsub.f32 %v7934, %v8319
        %v8324 = vadd.f32 %v8300, 1.1920929e-07
        %v8325 = vadd.f32 %v8301, 1.1920929e-07
        %v8326 = vadd.f32 %v8302, 1.1920929e-07
        %v8327 = vadd.f32 %v8303, 1.1920929e-07
        %v8328 = vrsqrt.pop %v8324
        %v8329 = vrsqrt.pop %v8325
        %v8330 = vrsqrt.pop %v8326
        %v8331 = vrsqrt.pop %v8327
        %v8332 = vlaneseq
        %v8333 = vshrl.u32 %v8332, 7
        %v8334 = vsub.s32 1, %v8333
        %v8335 = vrot.slane %v8328, %v8334
        %v8336 = vlaneseq
        %v8337 = vshrl.u32 %v8336, 7
        %v8338 = vsub.s32 1, %v8337
        %v8339 = vrot.slane %v8329, %v8338
        %v8340 = vlaneseq
        %v8341 = vshrl.u32 %v8340, 7
        %v8342 = vsub.s32 1, %v8341
        %v8343 = vrot.slane %v8330, %v8342
        %v8344 = vlaneseq
        %v8345 = vshrl.u32 %v8344, 7
        %v8346 = vsub.s32 1, %v8345
        %v8347 = vrot.slane %v8331, %v8346
        %v8348 = vmul.f32 %v8320, %v8335
        %v8349 = vmul.f32 %v8321, %v8339
        %v8350 = vmul.f32 %v8322, %v8343
        %v8351 = vmul.f32 %v8323, %v8347
        %8352 = vset.pattern.permute.xlu0 39
        %8353 = vperm.xlu0 %8352, %v431
        %v8354 = vpop.permute.xlu0 %8353
        %v8356 = vmul.f32 %v8348, %v8354
        %v8357 = vmul.f32 %v8349, %v8354
        %v8358 = vmul.f32 %v8350, %v8354
        %v8359 = vmul.f32 %v8351, %v8354
        %8360 = vset.pattern.permute.xlu0 40
        %8361 = vperm.xlu0 %8360, %v431
        %v8362 = vpop.permute.xlu0 %8361
        %v8364 = vadd.f32 %v8356, %v8362
        %v8365 = vadd.f32 %v8357, %v8362
        %v8366 = vadd.f32 %v8358, %v8362
        %v8367 = vadd.f32 %v8359, %v8362
        %v8368 = vadd.f32 %v7395, %v8364
        %v8369 = vadd.f32 %v7396, %v8365
        %v8370 = vadd.f32 %v7397, %v8366
        %v8371 = vadd.f32 %v7398, %v8367
        %8372 = vst [vmem:[#allocation2] sm:$0xff] %v8368
        %8373 = vst [vmem:[#allocation2 + $0x8] sm:$0xff] %v8369
        %8374 = vst [vmem:[#allocation2 + $0x10] sm:$0xff] %v8370
        %8375 = vst [vmem:[#allocation2 + $0x18] sm:$0xff] %v8371
        %s8376 = scalar_lea.vmem %s4, 24
        %v8377 = vld [vmem:[%s8376] sm:$0xff]
        %v8378 = vld [vmem:[#allocation2] sm:$0xff]
        %v8379 = vld [vmem:[#allocation2 + $0x8] sm:$0xff]
        %v8380 = vld [vmem:[#allocation2 + $0x10] sm:$0xff]
        %v8381 = vld [vmem:[#allocation2 + $0x18] sm:$0xff]
        %8382 = vset.pattern.permute.xlu0 41
        %8383 = vperm.xlu0 %8382, %v431
        %v8384 = vpop.permute.xlu0 %8383
        %v8387 = vsel %vm535, %v8377, 0
        %8389 = vmatprep.subr.mxu0 %v8379
        %8390 = vmatpush1.msra.mxu0 %v8378
        %8391 = vmatprep.subr.mxu0 0.0
        %8392 = vmatpush1.msra.mxu0 0.0
        %8393 = vmatprep.subr.mxu0 0.0
        %8394 = vmatpush1.msra.mxu0 0.0
        %8395 = vmatprep.subr.mxu0 0.0
        %8396 = vmatpush1.msra.mxu0 0.0
        %8397 = vmatprep.subr.mxu0 0.0
        %8398 = vmatpush1.msra.mxu0 0.0
        %8399 = vmatprep.subr.mxu0 0.0
        %8400 = vmatpush1.msra.mxu0 0.0
        %8401 = vmatprep.subr.mxu0 0.0
        %8402 = vmatpush1.msra.mxu0 0.0
        %8403 = vmatprep.subr.mxu0 0.0
        %8404 = vmatpush1.msra.mxu0 0.0
        %8405 = vmatprep.subr.mxu0 0.0
        %8406 = vmatpush1.msra.mxu0 0.0
        %8407 = vmatprep.subr.mxu0 0.0
        %8408 = vmatpush1.msra.mxu0 0.0
        %8409 = vmatprep.subr.mxu0 0.0
        %8410 = vmatpush1.msra.mxu0 0.0
        %8411 = vmatprep.subr.mxu0 0.0
        %8412 = vmatpush1.msra.mxu0 0.0
        %8413 = vmatprep.subr.mxu0 0.0
        %8414 = vmatpush1.msra.mxu0 0.0
        %8415 = vmatprep.subr.mxu0 0.0
        %8416 = vmatpush1.msra.mxu0 0.0
        %8417 = vmatprep.subr.mxu0 0.0
        %8418 = vmatpush1.msra.mxu0 0.0
        %8419 = vmatprep.subr.mxu0 0.0
        %8420 = vmatpush1.msra.mxu0 0.0
        %8421 = vmatprep.subr.mxu0 0.0
        %8422 = vmatpush1.msra.mxu0 0.0
        %8423 = vmatprep.subr.mxu0 0.0
        %8424 = vmatpush1.msra.mxu0 0.0
        %8425 = vmatprep.subr.mxu0 0.0
        %8426 = vmatpush1.msra.mxu0 0.0
        %8427 = vmatprep.subr.mxu0 0.0
        %8428 = vmatpush1.msra.mxu0 0.0
        %8429 = vmatprep.subr.mxu0 0.0
        %8430 = vmatpush1.msra.mxu0 0.0
        %8431 = vmatprep.subr.mxu0 0.0
        %8432 = vmatpush1.msra.mxu0 0.0
        %8433 = vmatprep.subr.mxu0 0.0
        %8434 = vmatpush1.msra.mxu0 0.0
        %8435 = vmatprep.subr.mxu0 0.0
        %8436 = vmatpush1.msra.mxu0 0.0
        %8437 = vmatprep.subr.mxu0 0.0
        %8438 = vmatpush1.msra.mxu0 0.0
        %8439 = vmatprep.subr.mxu0 0.0
        %8440 = vmatpush1.msra.mxu0 0.0
        %8441 = vmatprep.subr.mxu0 0.0
        %8442 = vmatpush1.msra.mxu0 0.0
        %8443 = vmatprep.subr.mxu0 0.0
        %8444 = vmatpush1.msra.mxu0 0.0
        %8445 = vmatprep.subr.mxu0 0.0
        %8446 = vmatpush1.msra.mxu0 0.0
        %8447 = vmatprep.subr.mxu0 0.0
        %8448 = vmatpush1.msra.mxu0 0.0
        %8449 = vmatprep.subr.mxu0 0.0
        %8450 = vmatpush1.msra.mxu0 0.0
        %8451 = vmatprep.subr.mxu0 0.0
        %8452 = vmatpush1.msra.mxu0 0.0
        %8453 = vmatprep.mubr.f32.mxu0 0.0
        %8454 = vmatmul.mubr.f32.gmra.mrb[0].mxu0 %v8387
        %v8455 = vpop.f32.mrb[0].mxu0
        %v8456 = vadd.f32 %v8384, %v8455
        %v8457 = vpop.f32.mrb[0].mxu0
        %v8458 = vadd.f32 %v8384, %v8457
        %8459 = vdwg.mxu0
        %8460 = vmatprep.subr.mxu0 %v8381
        %8461 = vmatpush1.msra.mxu0 %v8380
        %8462 = vmatprep.subr.mxu0 0.0
        %8463 = vmatpush1.msra.mxu0 0.0
        %8464 = vmatprep.subr.mxu0 0.0
        %8465 = vmatpush1.msra.mxu0 0.0
        %8466 = vmatprep.subr.mxu0 0.0
        %8467 = vmatpush1.msra.mxu0 0.0
        %8468 = vmatprep.subr.mxu0 0.0
        %8469 = vmatpush1.msra.mxu0 0.0
        %8470 = vmatprep.subr.mxu0 0.0
        %8471 = vmatpush1.msra.mxu0 0.0
        %8472 = vmatprep.subr.mxu0 0.0
        %8473 = vmatpush1.msra.mxu0 0.0
        %8474 = vmatprep.subr.mxu0 0.0
        %8475 = vmatpush1.msra.mxu0 0.0
        %8476 = vmatprep.subr.mxu0 0.0
        %8477 = vmatpush1.msra.mxu0 0.0
        %8478 = vmatprep.subr.mxu0 0.0
        %8479 = vmatpush1.msra.mxu0 0.0
        %8480 = vmatprep.subr.mxu0 0.0
        %8481 = vmatpush1.msra.mxu0 0.0
        %8482 = vmatprep.subr.mxu0 0.0
        %8483 = vmatpush1.msra.mxu0 0.0
        %8484 = vmatprep.subr.mxu0 0.0
        %8485 = vmatpush1.msra.mxu0 0.0
        %8486 = vmatprep.subr.mxu0 0.0
        %8487 = vmatpush1.msra.mxu0 0.0
        %8488 = vmatprep.subr.mxu0 0.0
        %8489 = vmatpush1.msra.mxu0 0.0
        %8490 = vmatprep.subr.mxu0 0.0
        %8491 = vmatpush1.msra.mxu0 0.0
        %8492 = vmatprep.subr.mxu0 0.0
        %8493 = vmatpush1.msra.mxu0 0.0
        %8494 = vmatprep.subr.mxu0 0.0
        %8495 = vmatpush1.msra.mxu0 0.0
        %8496 = vmatprep.subr.mxu0 0.0
        %8497 = vmatpush1.msra.mxu0 0.0
        %8498 = vmatprep.subr.mxu0 0.0
        %8499 = vmatpush1.msra.mxu0 0.0
        %8500 = vmatprep.subr.mxu0 0.0
        %8501 = vmatpush1.msra.mxu0 0.0
        %8502 = vmatprep.subr.mxu0 0.0
        %8503 = vmatpush1.msra.mxu0 0.0
        %8504 = vmatprep.subr.mxu0 0.0
        %8505 = vmatpush1.msra.mxu0 0.0
        %8506 = vmatprep.subr.mxu0 0.0
        %8507 = vmatpush1.msra.mxu0 0.0
        %8508 = vmatprep.subr.mxu0 0.0
        %8509 = vmatpush1.msra.mxu0 0.0
        %8510 = vmatprep.subr.mxu0 0.0
        %8511 = vmatpush1.msra.mxu0 0.0
        %8512 = vmatprep.subr.mxu0 0.0
        %8513 = vmatpush1.msra.mxu0 0.0
        %8514 = vmatprep.subr.mxu0 0.0
        %8515 = vmatpush1.msra.mxu0 0.0
        %8516 = vmatprep.subr.mxu0 0.0
        %8517 = vmatpush1.msra.mxu0 0.0
        %8518 = vmatprep.subr.mxu0 0.0
        %8519 = vmatpush1.msra.mxu0 0.0
        %8520 = vmatprep.subr.mxu0 0.0
        %8521 = vmatpush1.msra.mxu0 0.0
        %8522 = vmatprep.subr.mxu0 0.0
        %8523 = vmatpush1.msra.mxu0 0.0
        %8524 = vmatprep.mubr.f32.mxu0 0.0
        %8525 = vmatmul.mubr.f32.gmra.mrb[0].mxu0 %v8387
        %v8526 = vpop.f32.mrb[0].mxu0
        %v8527 = vadd.f32 %v8384, %v8526
        %v8528 = vpop.f32.mrb[0].mxu0
        %v8529 = vadd.f32 %v8384, %v8528
        %8530 = vdwg.mxu0
        %vm8531 = vcmp.ge.f32.partialorder %v8456, 0.0
        %vm8532 = vcmp.ge.f32.partialorder %v8458, 0.0
        %vm8533 = vcmp.ge.f32.partialorder %v8527, 0.0
        %vm8534 = vcmp.ge.f32.partialorder %v8529, 0.0
        %v8535 = vstv %s7402
        %v8536 = vmul.f32 %v8535, %v8456
        %v8537 = vmul.f32 %v8535, %v8458
        %v8538 = vmul.f32 %v8535, %v8527
        %v8539 = vmul.f32 %v8535, %v8529
        %v8540 = vsel %vm8531, %v8456, %v8536
        %v8541 = vsel %vm8532, %v8458, %v8537
        %v8542 = vsel %vm8533, %v8527, %v8538
        %v8543 = vsel %vm8534, %v8529, %v8539
        %v8544 = vsel %vm1071, %v8540, 0.0
        %v8545 = vsel %vm1072, %v8541, 0.0
        %v8546 = vsel %vm1073, %v8542, 0.0
        %v8547 = vsel %vm1074, %v8543, 0.0
        %v8548 = vrot.slane %v8544, 4
        %v8549 = vadd.f32 %v8544, %v8548
        %v8550 = vrot.slane %v8549, 2
        %v8551 = vadd.f32 %v8549, %v8550
        %v8552 = vrot.slane %v8551, 1
        %v8553 = vadd.f32 %v8551, %v8552
        %v8554 = vrot.slane %v8545, 4
        %v8555 = vadd.f32 %v8545, %v8554
        %v8556 = vrot.slane %v8555, 2
        %v8557 = vadd.f32 %v8555, %v8556
        %v8558 = vrot.slane %v8557, 1
        %v8559 = vadd.f32 %v8557, %v8558
        %v8560 = vrot.slane %v8546, 4
        %v8561 = vadd.f32 %v8546, %v8560
        %v8562 = vrot.slane %v8561, 2
        %v8563 = vadd.f32 %v8561, %v8562
        %v8564 = vrot.slane %v8563, 1
        %v8565 = vadd.f32 %v8563, %v8564
        %v8566 = vrot.slane %v8547, 4
        %v8567 = vadd.f32 %v8547, %v8566
        %v8568 = vrot.slane %v8567, 2
        %v8569 = vadd.f32 %v8567, %v8568
        %v8570 = vrot.slane %v8569, 1
        %v8571 = vadd.f32 %v8569, %v8570
        %v8572 = vmul.f32 %v8544, %v8544
        %v8573 = vmul.f32 %v8545, %v8545
        %v8574 = vmul.f32 %v8546, %v8546
        %v8575 = vmul.f32 %v8547, %v8547
        %v8576 = vrot.slane %v8572, 4
        %v8577 = vadd.f32 %v8572, %v8576
        %v8578 = vrot.slane %v8577, 2
        %v8579 = vadd.f32 %v8577, %v8578
        %v8580 = vrot.slane %v8579, 1
        %v8581 = vadd.f32 %v8579, %v8580
        %v8582 = vrot.slane %v8573, 4
        %v8583 = vadd.f32 %v8573, %v8582
        %v8584 = vrot.slane %v8583, 2
        %v8585 = vadd.f32 %v8583, %v8584
        %v8586 = vrot.slane %v8585, 1
        %v8587 = vadd.f32 %v8585, %v8586
        %v8588 = vrot.slane %v8574, 4
        %v8589 = vadd.f32 %v8574, %v8588
        %v8590 = vrot.slane %v8589, 2
        %v8591 = vadd.f32 %v8589, %v8590
        %v8592 = vrot.slane %v8591, 1
        %v8593 = vadd.f32 %v8591, %v8592
        %v8594 = vrot.slane %v8575, 4
        %v8595 = vadd.f32 %v8575, %v8594
        %v8596 = vrot.slane %v8595, 2
        %v8597 = vadd.f32 %v8595, %v8596
        %v8598 = vrot.slane %v8597, 1
        %v8599 = vadd.f32 %v8597, %v8598
        %v8600 = vsel %vm1131, %v8553, %v8581
        %v8601 = vsel %vm1131, %v8559, %v8587
        %v8602 = vsel %vm1131, %v8565, %v8593
        %v8603 = vsel %vm1131, %v8571, %v8599
        %8604 = vmatprep.subr.mxu0 0.0
        %8605 = vmatpush1.msra.mxu0 %v434
        %8606 = vmatprep.subr.mxu0 0.0
        %8607 = vmatpush1.msra.mxu0 %v435
        %8608 = vmatprep.subr.mxu0 0.0
        %8609 = vmatpush1.msra.mxu0 %v436
        %8610 = vmatprep.subr.mxu0 0.0
        %8611 = vmatpush1.msra.mxu0 %v437
        %8612 = vmatprep.subr.mxu0 0.0
        %8613 = vmatpush1.msra.mxu0 %v438
        %8614 = vmatprep.subr.mxu0 0.0
        %8615 = vmatpush1.msra.mxu0 %v439
        %8616 = vmatprep.subr.mxu0 0.0
        %8617 = vmatpush1.msra.mxu0 %v440
        %8618 = vmatprep.subr.mxu0 0.0
        %8619 = vmatpush1.msra.mxu0 %v441
        %8620 = vmatprep.subr.mxu0 0.0
        %8621 = vmatpush1.msra.mxu0 %v442
        %8622 = vmatprep.subr.mxu0 0.0
        %8623 = vmatpush1.msra.mxu0 %v443
        %8624 = vmatprep.subr.mxu0 0.0
        %8625 = vmatpush1.msra.mxu0 %v444
        %8626 = vmatprep.subr.mxu0 0.0
        %8627 = vmatpush1.msra.mxu0 %v445
        %8628 = vmatprep.subr.mxu0 0.0
        %8629 = vmatpush1.msra.mxu0 %v446
        %8630 = vmatprep.subr.mxu0 0.0
        %8631 = vmatpush1.msra.mxu0 %v447
        %8632 = vmatprep.subr.mxu0 0.0
        %8633 = vmatpush1.msra.mxu0 %v448
        %8634 = vmatprep.subr.mxu0 0.0
        %8635 = vmatpush1.msra.mxu0 %v449
        %8636 = vmatprep.subr.mxu0 0.0
        %8637 = vmatpush1.msra.mxu0 %v450
        %8638 = vmatprep.subr.mxu0 0.0
        %8639 = vmatpush1.msra.mxu0 %v451
        %8640 = vmatprep.subr.mxu0 0.0
        %8641 = vmatpush1.msra.mxu0 %v452
        %8642 = vmatprep.subr.mxu0 0.0
        %8643 = vmatpush1.msra.mxu0 %v453
        %8644 = vmatprep.subr.mxu0 0.0
        %8645 = vmatpush1.msra.mxu0 %v454
        %8646 = vmatprep.subr.mxu0 0.0
        %8647 = vmatpush1.msra.mxu0 %v455
        %8648 = vmatprep.subr.mxu0 0.0
        %8649 = vmatpush1.msra.mxu0 %v456
        %8650 = vmatprep.subr.mxu0 0.0
        %8651 = vmatpush1.msra.mxu0 %v457
        %8652 = vmatprep.subr.mxu0 0.0
        %8653 = vmatpush1.msra.mxu0 %v458
        %8654 = vmatprep.subr.mxu0 0.0
        %8655 = vmatpush1.msra.mxu0 %v459
        %8656 = vmatprep.subr.mxu0 0.0
        %8657 = vmatpush1.msra.mxu0 %v460
        %8658 = vmatprep.subr.mxu0 0.0
        %8659 = vmatpush1.msra.mxu0 %v461
        %8660 = vmatprep.subr.mxu0 0.0
        %8661 = vmatpush1.msra.mxu0 %v462
        %8662 = vmatprep.subr.mxu0 0.0
        %8663 = vmatpush1.msra.mxu0 %v463
        %8664 = vmatprep.subr.mxu0 0.0
        %8665 = vmatpush1.msra.mxu0 %v464
        %8666 = vmatprep.subr.mxu0 0.0
        %8667 = vmatpush1.msra.mxu0 %v465
        %8668 = vmatprep.mubr.f32.mxu0 %v8601
        %8669 = vmatmul.mubr.f32.gmra.mrb[0].mxu0 %v8600
        %v8670 = vpop.f32.mrb[0].mxu0
        %v8671 = vadd.f32 0.0, %v8670
        %v8672 = vpop.f32.mrb[0].mxu0
        %8673 = vdwg.mxu0
        %8674 = vmatprep.subr.mxu0 0.0
        %8675 = vmatpush1.msra.mxu0 %v466
        %8676 = vmatprep.subr.mxu0 0.0
        %8677 = vmatpush1.msra.mxu0 %v467
        %8678 = vmatprep.subr.mxu0 0.0
        %8679 = vmatpush1.msra.mxu0 %v468
        %8680 = vmatprep.subr.mxu0 0.0
        %8681 = vmatpush1.msra.mxu0 %v469
        %8682 = vmatprep.subr.mxu0 0.0
        %8683 = vmatpush1.msra.mxu0 %v470
        %8684 = vmatprep.subr.mxu0 0.0
        %8685 = vmatpush1.msra.mxu0 %v471
        %8686 = vmatprep.subr.mxu0 0.0
        %8687 = vmatpush1.msra.mxu0 %v472
        %8688 = vmatprep.subr.mxu0 0.0
        %8689 = vmatpush1.msra.mxu0 %v473
        %8690 = vmatprep.subr.mxu0 0.0
        %8691 = vmatpush1.msra.mxu0 %v474
        %8692 = vmatprep.subr.mxu0 0.0
        %8693 = vmatpush1.msra.mxu0 %v475
        %8694 = vmatprep.subr.mxu0 0.0
        %8695 = vmatpush1.msra.mxu0 %v476
        %8696 = vmatprep.subr.mxu0 0.0
        %8697 = vmatpush1.msra.mxu0 %v477
        %8698 = vmatprep.subr.mxu0 0.0
        %8699 = vmatpush1.msra.mxu0 %v478
        %8700 = vmatprep.subr.mxu0 0.0
        %8701 = vmatpush1.msra.mxu0 %v479
        %8702 = vmatprep.subr.mxu0 0.0
        %8703 = vmatpush1.msra.mxu0 %v480
        %8704 = vmatprep.subr.mxu0 0.0
        %8705 = vmatpush1.msra.mxu0 %v481
        %8706 = vmatprep.subr.mxu0 0.0
        %8707 = vmatpush1.msra.mxu0 %v482
        %8708 = vmatprep.subr.mxu0 0.0
        %8709 = vmatpush1.msra.mxu0 %v483
        %8710 = vmatprep.subr.mxu0 0.0
        %8711 = vmatpush1.msra.mxu0 %v484
        %8712 = vmatprep.subr.mxu0 0.0
        %8713 = vmatpush1.msra.mxu0 %v485
        %8714 = vmatprep.subr.mxu0 0.0
        %8715 = vmatpush1.msra.mxu0 %v486
        %8716 = vmatprep.subr.mxu0 0.0
        %8717 = vmatpush1.msra.mxu0 %v487
        %8718 = vmatprep.subr.mxu0 0.0
        %8719 = vmatpush1.msra.mxu0 %v488
        %8720 = vmatprep.subr.mxu0 0.0
        %8721 = vmatpush1.msra.mxu0 %v489
        %8722 = vmatprep.subr.mxu0 0.0
        %8723 = vmatpush1.msra.mxu0 %v490
        %8724 = vmatprep.subr.mxu0 0.0
        %8725 = vmatpush1.msra.mxu0 %v491
        %8726 = vmatprep.subr.mxu0 0.0
        %8727 = vmatpush1.msra.mxu0 %v492
        %8728 = vmatprep.subr.mxu0 0.0
        %8729 = vmatpush1.msra.mxu0 %v493
        %8730 = vmatprep.subr.mxu0 0.0
        %8731 = vmatpush1.msra.mxu0 %v494
        %8732 = vmatprep.subr.mxu0 0.0
        %8733 = vmatpush1.msra.mxu0 %v495
        %8734 = vmatprep.subr.mxu0 0.0
        %8735 = vmatpush1.msra.mxu0 %v496
        %8736 = vmatprep.subr.mxu0 0.0
        %8737 = vmatpush1.msra.mxu0 %v497
        %8738 = vmatprep.mubr.f32.mxu0 %v8603
        %8739 = vmatmul.mubr.f32.gmra.mrb[0].mxu0 %v8602
        %v8740 = vpop.f32.mrb[0].mxu0
        %v8741 = vadd.f32 %v8671, %v8740
        %v8742 = vpop.f32.mrb[0].mxu0
        %8743 = vdwg.mxu0
        %v8745 = vsel %vm1280, %v8741, 0
        %8747 = vmatprep.subr.mxu0 %v1287
        %8748 = vmatpush1.msra.mxu0 %v1285
        %8749 = vmatprep.subr.mxu0 0.0
        %8750 = vmatpush1.msra.mxu0 0.0
        %8751 = vmatprep.subr.mxu0 0.0
        %8752 = vmatpush1.msra.mxu0 0.0
        %8753 = vmatprep.subr.mxu0 0.0
        %8754 = vmatpush1.msra.mxu0 0.0
        %8755 = vmatprep.subr.mxu0 0.0
        %8756 = vmatpush1.msra.mxu0 0.0
        %8757 = vmatprep.subr.mxu0 0.0
        %8758 = vmatpush1.msra.mxu0 0.0
        %8759 = vmatprep.subr.mxu0 0.0
        %8760 = vmatpush1.msra.mxu0 0.0
        %8761 = vmatprep.subr.mxu0 0.0
        %8762 = vmatpush1.msra.mxu0 0.0
        %8763 = vmatprep.subr.mxu0 0.0
        %8764 = vmatpush1.msra.mxu0 0.0
        %8765 = vmatprep.subr.mxu0 0.0
        %8766 = vmatpush1.msra.mxu0 0.0
        %8767 = vmatprep.subr.mxu0 0.0
        %8768 = vmatpush1.msra.mxu0 0.0
        %8769 = vmatprep.subr.mxu0 0.0
        %8770 = vmatpush1.msra.mxu0 0.0
        %8771 = vmatprep.subr.mxu0 0.0
        %8772 = vmatpush1.msra.mxu0 0.0
        %8773 = vmatprep.subr.mxu0 0.0
        %8774 = vmatpush1.msra.mxu0 0.0
        %8775 = vmatprep.subr.mxu0 0.0
        %8776 = vmatpush1.msra.mxu0 0.0
        %8777 = vmatprep.subr.mxu0 0.0
        %8778 = vmatpush1.msra.mxu0 0.0
        %8779 = vmatprep.subr.mxu0 0.0
        %8780 = vmatpush1.msra.mxu0 0.0
        %8781 = vmatprep.subr.mxu0 0.0
        %8782 = vmatpush1.msra.mxu0 0.0
        %8783 = vmatprep.subr.mxu0 0.0
        %8784 = vmatpush1.msra.mxu0 0.0
        %8785 = vmatprep.subr.mxu0 0.0
        %8786 = vmatpush1.msra.mxu0 0.0
        %8787 = vmatprep.subr.mxu0 0.0
        %8788 = vmatpush1.msra.mxu0 0.0
        %8789 = vmatprep.subr.mxu0 0.0
        %8790 = vmatpush1.msra.mxu0 0.0
        %8791 = vmatprep.subr.mxu0 0.0
        %8792 = vmatpush1.msra.mxu0 0.0
        %8793 = vmatprep.subr.mxu0 0.0
        %8794 = vmatpush1.msra.mxu0 0.0
        %8795 = vmatprep.subr.mxu0 0.0
        %8796 = vmatpush1.msra.mxu0 0.0
        %8797 = vmatprep.subr.mxu0 0.0
        %8798 = vmatpush1.msra.mxu0 0.0
        %8799 = vmatprep.subr.mxu0 0.0
        %8800 = vmatpush1.msra.mxu0 0.0
        %8801 = vmatprep.subr.mxu0 0.0
        %8802 = vmatpush1.msra.mxu0 0.0
        %8803 = vmatprep.subr.mxu0 0.0
        %8804 = vmatpush1.msra.mxu0 0.0
        %8805 = vmatprep.subr.mxu0 0.0
        %8806 = vmatpush1.msra.mxu0 0.0
        %8807 = vmatprep.subr.mxu0 0.0
        %8808 = vmatpush1.msra.mxu0 0.0
        %8809 = vmatprep.subr.mxu0 0.0
        %8810 = vmatpush1.msra.mxu0 0.0
        %8811 = vmatprep.mubr.f32.mxu0 0.0
        %8812 = vmatmul.mubr.f32.gmra.mrb[0].mxu0 %v8745
        %v8813 = vpop.f32.mrb[0].mxu0
        %v8814 = vadd.f32 0.0, %v8813
        %v8815 = vpop.f32.mrb[0].mxu0
        %v8816 = vadd.f32 0.0, %v8815
        %8817 = vdwg.mxu0
        %8818 = vmatprep.subr.mxu0 %v1291
        %8819 = vmatpush1.msra.mxu0 %v1289
        %8820 = vmatprep.subr.mxu0 0.0
        %8821 = vmatpush1.msra.mxu0 0.0
        %8822 = vmatprep.subr.mxu0 0.0
        %8823 = vmatpush1.msra.mxu0 0.0
        %8824 = vmatprep.subr.mxu0 0.0
        %8825 = vmatpush1.msra.mxu0 0.0
        %8826 = vmatprep.subr.mxu0 0.0
        %8827 = vmatpush1.msra.mxu0 0.0
        %8828 = vmatprep.subr.mxu0 0.0
        %8829 = vmatpush1.msra.mxu0 0.0
        %8830 = vmatprep.subr.mxu0 0.0
        %8831 = vmatpush1.msra.mxu0 0.0
        %8832 = vmatprep.subr.mxu0 0.0
        %8833 = vmatpush1.msra.mxu0 0.0
        %8834 = vmatprep.subr.mxu0 0.0
        %8835 = vmatpush1.msra.mxu0 0.0
        %8836 = vmatprep.subr.mxu0 0.0
        %8837 = vmatpush1.msra.mxu0 0.0
        %8838 = vmatprep.subr.mxu0 0.0
        %8839 = vmatpush1.msra.mxu0 0.0
        %8840 = vmatprep.subr.mxu0 0.0
        %8841 = vmatpush1.msra.mxu0 0.0
        %8842 = vmatprep.subr.mxu0 0.0
        %8843 = vmatpush1.msra.mxu0 0.0
        %8844 = vmatprep.subr.mxu0 0.0
        %8845 = vmatpush1.msra.mxu0 0.0
        %8846 = vmatprep.subr.mxu0 0.0
        %8847 = vmatpush1.msra.mxu0 0.0
        %8848 = vmatprep.subr.mxu0 0.0
        %8849 = vmatpush1.msra.mxu0 0.0
        %8850 = vmatprep.subr.mxu0 0.0
        %8851 = vmatpush1.msra.mxu0 0.0
        %8852 = vmatprep.subr.mxu0 0.0
        %8853 = vmatpush1.msra.mxu0 0.0
        %8854 = vmatprep.subr.mxu0 0.0
        %8855 = vmatpush1.msra.mxu0 0.0
        %8856 = vmatprep.subr.mxu0 0.0
        %8857 = vmatpush1.msra.mxu0 0.0
        %8858 = vmatprep.subr.mxu0 0.0
        %8859 = vmatpush1.msra.mxu0 0.0
        %8860 = vmatprep.subr.mxu0 0.0
        %8861 = vmatpush1.msra.mxu0 0.0
        %8862 = vmatprep.subr.mxu0 0.0
        %8863 = vmatpush1.msra.mxu0 0.0
        %8864 = vmatprep.subr.mxu0 0.0
        %8865 = vmatpush1.msra.mxu0 0.0
        %8866 = vmatprep.subr.mxu0 0.0
        %8867 = vmatpush1.msra.mxu0 0.0
        %8868 = vmatprep.subr.mxu0 0.0
        %8869 = vmatpush1.msra.mxu0 0.0
        %8870 = vmatprep.subr.mxu0 0.0
        %8871 = vmatpush1.msra.mxu0 0.0
        %8872 = vmatprep.subr.mxu0 0.0
        %8873 = vmatpush1.msra.mxu0 0.0
        %8874 = vmatprep.subr.mxu0 0.0
        %8875 = vmatpush1.msra.mxu0 0.0
        %8876 = vmatprep.subr.mxu0 0.0
        %8877 = vmatpush1.msra.mxu0 0.0
        %8878 = vmatprep.subr.mxu0 0.0
        %8879 = vmatpush1.msra.mxu0 0.0
        %8880 = vmatprep.subr.mxu0 0.0
        %8881 = vmatpush1.msra.mxu0 0.0
        %8882 = vmatprep.mubr.f32.mxu0 0.0
        %8883 = vmatmul.mubr.f32.gmra.mrb[0].mxu0 %v8745
        %v8884 = vpop.f32.mrb[0].mxu0
        %v8885 = vadd.f32 0.0, %v8884
        %v8886 = vpop.f32.mrb[0].mxu0
        %v8887 = vadd.f32 0.0, %v8886
        %8888 = vdwg.mxu0
        %v8889 = vmul.f32 %v8814, 0.125
        %v8890 = vmul.f32 %v8816, 0.125
        %v8891 = vmul.f32 %v8885, 0.125
        %v8892 = vmul.f32 %v8887, 0.125
        %v8893 = vmul.f32 %v8889, %v8889
        %v8894 = vmul.f32 %v8890, %v8890
        %v8895 = vmul.f32 %v8891, %v8891
        %v8896 = vmul.f32 %v8892, %v8892
        %v8901 = vrot.slane %v8893, 7
        %v8902 = vrot.slane %v8894, 7
        %v8903 = vrot.slane %v8895, 7
        %v8904 = vrot.slane %v8896, 7
        %v8909 = vsub.f32 %v8889, %v8901
        %v8910 = vsub.f32 %v8890, %v8902
        %v8911 = vsub.f32 %v8891, %v8903
        %v8912 = vsub.f32 %v8892, %v8904
        %v8913 = vlaneseq
        %v8914 = vshrl.u32 %v8913, 7
        %v8915 = vsub.s32 0, %v8914
        %v8916 = vrot.slane %v8889, %v8915
        %v8917 = vlaneseq
        %v8918 = vshrl.u32 %v8917, 7
        %v8919 = vsub.s32 0, %v8918
        %v8920 = vrot.slane %v8890, %v8919
        %v8921 = vlaneseq
        %v8922 = vshrl.u32 %v8921, 7
        %v8923 = vsub.s32 0, %v8922
        %v8924 = vrot.slane %v8891, %v8923
        %v8925 = vlaneseq
        %v8926 = vshrl.u32 %v8925, 7
        %v8927 = vsub.s32 0, %v8926
        %v8928 = vrot.slane %v8892, %v8927
        %v8929 = vsub.f32 %v8540, %v8916
        %v8930 = vsub.f32 %v8541, %v8920
        %v8931 = vsub.f32 %v8542, %v8924
        %v8932 = vsub.f32 %v8543, %v8928
        %v8933 = vadd.f32 %v8909, 1e-08
        %v8934 = vadd.f32 %v8910, 1e-08
        %v8935 = vadd.f32 %v8911, 1e-08
        %v8936 = vadd.f32 %v8912, 1e-08
        %v8937 = vrsqrt.pop %v8933
        %v8938 = vrsqrt.pop %v8934
        %v8939 = vrsqrt.pop %v8935
        %v8940 = vrsqrt.pop %v8936
        %v8941 = vlaneseq
        %v8942 = vshrl.u32 %v8941, 7
        %v8943 = vsub.s32 1, %v8942
        %v8944 = vrot.slane %v8937, %v8943
        %v8945 = vlaneseq
        %v8946 = vshrl.u32 %v8945, 7
        %v8947 = vsub.s32 1, %v8946
        %v8948 = vrot.slane %v8938, %v8947
        %v8949 = vlaneseq
        %v8950 = vshrl.u32 %v8949, 7
        %v8951 = vsub.s32 1, %v8950
        %v8952 = vrot.slane %v8939, %v8951
        %v8953 = vlaneseq
        %v8954 = vshrl.u32 %v8953, 7
        %v8955 = vsub.s32 1, %v8954
        %v8956 = vrot.slane %v8940, %v8955
        %v8957 = vmul.f32 %v8929, %v8944
        %v8958 = vmul.f32 %v8930, %v8948
        %v8959 = vmul.f32 %v8931, %v8952
        %v8960 = vmul.f32 %v8932, %v8956
        %8961 = vset.pattern.permute.xlu0 42
        %8962 = vperm.xlu0 %8961, %v431
        %v8963 = vpop.permute.xlu0 %8962
        %v8965 = vmul.f32 %v8957, %v8963
        %v8966 = vmul.f32 %v8958, %v8963
        %v8967 = vmul.f32 %v8959, %v8963
        %v8968 = vmul.f32 %v8960, %v8963
        %8969 = vset.pattern.permute.xlu0 43
        %8970 = vperm.xlu0 %8969, %v431
        %v8971 = vpop.permute.xlu0 %8970
        %v8973 = vadd.f32 %v8965, %v8971
        %v8974 = vadd.f32 %v8966, %v8971
        %v8975 = vadd.f32 %v8967, %v8971
        %v8976 = vadd.f32 %v8968, %v8971
        %s8977 = scalar_lea.vmem %s6, 24
        %v8978 = vld [vmem:[%s8977] sm:$0xff]
        %8979 = vrot.lane.b32.xlu0 %v8973, 2
        %v8980 = vpop.permute.xlu0 %8979
        %8981 = vrot.lane.b32.xlu0 %v8974, 2
        %v8982 = vpop.permute.xlu0 %8981
        %8983 = vrot.lane.b32.xlu0 %v8975, 2
        %v8984 = vpop.permute.xlu0 %8983
        %8985 = vrot.lane.b32.xlu0 %v8976, 2
        %v8986 = vpop.permute.xlu0 %8985
        %v8987 = vsel %vm4437, %v8984, %v8986
        %v8988 = vsel %vm4437, %v8982, %v8984
        %v8989 = vsel %vm4437, %v8980, %v8982
        %v8990 = vsel %vm4437, %v8986, %v8980
        %v8991 = vsel %vm4458, %v8990, 0.0
        %v8992 = vsel %vm4459, %v8989, 0.0
        %v8993 = vsel %vm4460, %v8988, 0.0
        %v8994 = vsel %vm4461, %v8987, 0.0
        %8996 = vset.pattern.permute.xlu0 0
        %8997 = vperm.xlu0 %8996, %v8978
        %v8998 = vpop.permute.xlu0 %8997
        %v9000 = vmul.f32 %v8998, %v8991
        %v9001 = vmul.f32 %v8998, %v8992
        %v9002 = vmul.f32 %v8998, %v8993
        %v9003 = vmul.f32 %v8998, %v8994
        %9004 = vset.pattern.permute.xlu0 1
        %9005 = vperm.xlu0 %9004, %v8978
        %v9006 = vpop.permute.xlu0 %9005
        %v9008 = vmul.f32 %v9006, %v8973
        %v9009 = vmul.f32 %v9006, %v8974
        %v9010 = vmul.f32 %v9006, %v8975
        %v9011 = vmul.f32 %v9006, %v8976
        %v9012 = vadd.f32 %v9000, %v9008
        %v9013 = vadd.f32 %v9001, %v9009
        %v9014 = vadd.f32 %v9002, %v9010
        %v9015 = vadd.f32 %v9003, %v9011
        %9016 = vrot.lane.b32.xlu0 %v8973, 126
        %v9017 = vpop.permute.xlu0 %9016
        %9018 = vrot.lane.b32.xlu0 %v8974, 126
        %v9019 = vpop.permute.xlu0 %9018
        %9020 = vrot.lane.b32.xlu0 %v8975, 126
        %v9021 = vpop.permute.xlu0 %9020
        %9022 = vrot.lane.b32.xlu0 %v8976, 126
        %v9023 = vpop.permute.xlu0 %9022
        %v9024 = vsel %vm4495, %v9021, %v9023
        %v9025 = vsel %vm4495, %v9019, %v9021
        %v9026 = vsel %vm4495, %v9017, %v9019
        %v9027 = vsel %vm4495, %v9023, %v9017
        %v9028 = vsel %vm4516, %v9026, 0.0
        %v9029 = vsel %vm4517, %v9025, 0.0
        %v9030 = vsel %vm4518, %v9024, 0.0
        %v9031 = vsel %vm4519, %v9027, 0.0
        %9032 = vset.pattern.permute.xlu0 2
        %9033 = vperm.xlu0 %9032, %v8978
        %v9034 = vpop.permute.xlu0 %9033
        %v9036 = vmul.f32 %v9034, %v9028
        %v9037 = vmul.f32 %v9034, %v9029
        %v9038 = vmul.f32 %v9034, %v9030
        %v9039 = vmul.f32 %v9034, %v9031
        %v9040 = vadd.f32 %v9012, %v9036
        %v9041 = vadd.f32 %v9013, %v9037
        %v9042 = vadd.f32 %v9014, %v9038
        %v9043 = vadd.f32 %v9015, %v9039
        %9044 = vset.pattern.permute.xlu0 44
        %9045 = vperm.xlu0 %9044, %v431
        %v9046 = vpop.permute.xlu0 %9045
        %v9048 = vadd.f32 %v9040, %v9046
        %v9049 = vadd.f32 %v9041, %v9046
        %v9050 = vadd.f32 %v9042, %v9046
        %v9051 = vadd.f32 %v9043, %v9046
        %vm9052 = vcmp.ge.f32.partialorder %v9048, 0.0
        %vm9053 = vcmp.ge.f32.partialorder %v9049, 0.0
        %vm9054 = vcmp.ge.f32.partialorder %v9050, 0.0
        %vm9055 = vcmp.ge.f32.partialorder %v9051, 0.0
        %v9056 = vstv %s7403
        %v9057 = vmul.f32 %v9056, %v9048
        %v9058 = vmul.f32 %v9056, %v9049
        %v9059 = vmul.f32 %v9056, %v9050
        %v9060 = vmul.f32 %v9056, %v9051
        %v9061 = vsel %vm9052, %v9048, %v9057
        %v9062 = vsel %vm9053, %v9049, %v9058
        %v9063 = vsel %vm9054, %v9050, %v9059
        %v9064 = vsel %vm9055, %v9051, %v9060
        %v9065 = vsel %vm1071, %v9061, 0.0
        %v9066 = vsel %vm1072, %v9062, 0.0
        %v9067 = vsel %vm1073, %v9063, 0.0
        %v9068 = vsel %vm1074, %v9064, 0.0
        %v9069 = vrot.slane %v9065, 4
        %v9070 = vadd.f32 %v9065, %v9069
        %v9071 = vrot.slane %v9070, 2
        %v9072 = vadd.f32 %v9070, %v9071
        %v9073 = vrot.slane %v9072, 1
        %v9074 = vadd.f32 %v9072, %v9073
        %v9075 = vrot.slane %v9066, 4
        %v9076 = vadd.f32 %v9066, %v9075
        %v9077 = vrot.slane %v9076, 2
        %v9078 = vadd.f32 %v9076, %v9077
        %v9079 = vrot.slane %v9078, 1
        %v9080 = vadd.f32 %v9078, %v9079
        %v9081 = vrot.slane %v9067, 4
        %v9082 = vadd.f32 %v9067, %v9081
        %v9083 = vrot.slane %v9082, 2
        %v9084 = vadd.f32 %v9082, %v9083
        %v9085 = vrot.slane %v9084, 1
        %v9086 = vadd.f32 %v9084, %v9085
        %v9087 = vrot.slane %v9068, 4
        %v9088 = vadd.f32 %v9068, %v9087
        %v9089 = vrot.slane %v9088, 2
        %v9090 = vadd.f32 %v9088, %v9089
        %v9091 = vrot.slane %v9090, 1
        %v9092 = vadd.f32 %v9090, %v9091
        %v9093 = vmul.f32 %v9065, %v9065
        %v9094 = vmul.f32 %v9066, %v9066
        %v9095 = vmul.f32 %v9067, %v9067
        %v9096 = vmul.f32 %v9068, %v9068
        %v9097 = vrot.slane %v9093, 4
        %v9098 = vadd.f32 %v9093, %v9097
        %v9099 = vrot.slane %v9098, 2
        %v9100 = vadd.f32 %v9098, %v9099
        %v9101 = vrot.slane %v9100, 1
        %v9102 = vadd.f32 %v9100, %v9101
        %v9103 = vrot.slane %v9094, 4
        %v9104 = vadd.f32 %v9094, %v9103
        %v9105 = vrot.slane %v9104, 2
        %v9106 = vadd.f32 %v9104, %v9105
        %v9107 = vrot.slane %v9106, 1
        %v9108 = vadd.f32 %v9106, %v9107
        %v9109 = vrot.slane %v9095, 4
        %v9110 = vadd.f32 %v9095, %v9109
        %v9111 = vrot.slane %v9110, 2
        %v9112 = vadd.f32 %v9110, %v9111
        %v9113 = vrot.slane %v9112, 1
        %v9114 = vadd.f32 %v9112, %v9113
        %v9115 = vrot.slane %v9096, 4
        %v9116 = vadd.f32 %v9096, %v9115
        %v9117 = vrot.slane %v9116, 2
        %v9118 = vadd.f32 %v9116, %v9117
        %v9119 = vrot.slane %v9118, 1
        %v9120 = vadd.f32 %v9118, %v9119
        %v9121 = vsel %vm1131, %v9074, %v9102
        %v9122 = vsel %vm1131, %v9080, %v9108
        %v9123 = vsel %vm1131, %v9086, %v9114
        %v9124 = vsel %vm1131, %v9092, %v9120
        %9125 = vmatprep.subr.mxu0 0.0
        %9126 = vmatpush1.msra.mxu0 %v434
        %9127 = vmatprep.subr.mxu0 0.0
        %9128 = vmatpush1.msra.mxu0 %v435
        %9129 = vmatprep.subr.mxu0 0.0
        %9130 = vmatpush1.msra.mxu0 %v436
        %9131 = vmatprep.subr.mxu0 0.0
        %9132 = vmatpush1.msra.mxu0 %v437
        %9133 = vmatprep.subr.mxu0 0.0
        %9134 = vmatpush1.msra.mxu0 %v438
        %9135 = vmatprep.subr.mxu0 0.0
        %9136 = vmatpush1.msra.mxu0 %v439
        %9137 = vmatprep.subr.mxu0 0.0
        %9138 = vmatpush1.msra.mxu0 %v440
        %9139 = vmatprep.subr.mxu0 0.0
        %9140 = vmatpush1.msra.mxu0 %v441
        %9141 = vmatprep.subr.mxu0 0.0
        %9142 = vmatpush1.msra.mxu0 %v442
        %9143 = vmatprep.subr.mxu0 0.0
        %9144 = vmatpush1.msra.mxu0 %v443
        %9145 = vmatprep.subr.mxu0 0.0
        %9146 = vmatpush1.msra.mxu0 %v444
        %9147 = vmatprep.subr.mxu0 0.0
        %9148 = vmatpush1.msra.mxu0 %v445
        %9149 = vmatprep.subr.mxu0 0.0
        %9150 = vmatpush1.msra.mxu0 %v446
        %9151 = vmatprep.subr.mxu0 0.0
        %9152 = vmatpush1.msra.mxu0 %v447
        %9153 = vmatprep.subr.mxu0 0.0
        %9154 = vmatpush1.msra.mxu0 %v448
        %9155 = vmatprep.subr.mxu0 0.0
        %9156 = vmatpush1.msra.mxu0 %v449
        %9157 = vmatprep.subr.mxu0 0.0
        %9158 = vmatpush1.msra.mxu0 %v450
        %9159 = vmatprep.subr.mxu0 0.0
        %9160 = vmatpush1.msra.mxu0 %v451
        %9161 = vmatprep.subr.mxu0 0.0
        %9162 = vmatpush1.msra.mxu0 %v452
        %9163 = vmatprep.subr.mxu0 0.0
        %9164 = vmatpush1.msra.mxu0 %v453
        %9165 = vmatprep.subr.mxu0 0.0
        %9166 = vmatpush1.msra.mxu0 %v454
        %9167 = vmatprep.subr.mxu0 0.0
        %9168 = vmatpush1.msra.mxu0 %v455
        %9169 = vmatprep.subr.mxu0 0.0
        %9170 = vmatpush1.msra.mxu0 %v456
        %9171 = vmatprep.subr.mxu0 0.0
        %9172 = vmatpush1.msra.mxu0 %v457
        %9173 = vmatprep.subr.mxu0 0.0
        %9174 = vmatpush1.msra.mxu0 %v458
        %9175 = vmatprep.subr.mxu0 0.0
        %9176 = vmatpush1.msra.mxu0 %v459
        %9177 = vmatprep.subr.mxu0 0.0
        %9178 = vmatpush1.msra.mxu0 %v460
        %9179 = vmatprep.subr.mxu0 0.0
        %9180 = vmatpush1.msra.mxu0 %v461
        %9181 = vmatprep.subr.mxu0 0.0
        %9182 = vmatpush1.msra.mxu0 %v462
        %9183 = vmatprep.subr.mxu0 0.0
        %9184 = vmatpush1.msra.mxu0 %v463
        %9185 = vmatprep.subr.mxu0 0.0
        %9186 = vmatpush1.msra.mxu0 %v464
        %9187 = vmatprep.subr.mxu0 0.0
        %9188 = vmatpush1.msra.mxu0 %v465
        %9189 = vmatprep.mubr.f32.mxu0 %v9122
        %9190 = vmatmul.mubr.f32.gmra.mrb[0].mxu0 %v9121
        %v9191 = vpop.f32.mrb[0].mxu0
        %v9192 = vadd.f32 0.0, %v9191
        %v9193 = vpop.f32.mrb[0].mxu0
        %9194 = vdwg.mxu0
        %9195 = vmatprep.subr.mxu0 0.0
        %9196 = vmatpush1.msra.mxu0 %v466
        %9197 = vmatprep.subr.mxu0 0.0
        %9198 = vmatpush1.msra.mxu0 %v467
        %9199 = vmatprep.subr.mxu0 0.0
        %9200 = vmatpush1.msra.mxu0 %v468
        %9201 = vmatprep.subr.mxu0 0.0
        %9202 = vmatpush1.msra.mxu0 %v469
        %9203 = vmatprep.subr.mxu0 0.0
        %9204 = vmatpush1.msra.mxu0 %v470
        %9205 = vmatprep.subr.mxu0 0.0
        %9206 = vmatpush1.msra.mxu0 %v471
        %9207 = vmatprep.subr.mxu0 0.0
        %9208 = vmatpush1.msra.mxu0 %v472
        %9209 = vmatprep.subr.mxu0 0.0
        %9210 = vmatpush1.msra.mxu0 %v473
        %9211 = vmatprep.subr.mxu0 0.0
        %9212 = vmatpush1.msra.mxu0 %v474
        %9213 = vmatprep.subr.mxu0 0.0
        %9214 = vmatpush1.msra.mxu0 %v475
        %9215 = vmatprep.subr.mxu0 0.0
        %9216 = vmatpush1.msra.mxu0 %v476
        %9217 = vmatprep.subr.mxu0 0.0
        %9218 = vmatpush1.msra.mxu0 %v477
        %9219 = vmatprep.subr.mxu0 0.0
        %9220 = vmatpush1.msra.mxu0 %v478
        %9221 = vmatprep.subr.mxu0 0.0
        %9222 = vmatpush1.msra.mxu0 %v479
        %9223 = vmatprep.subr.mxu0 0.0
        %9224 = vmatpush1.msra.mxu0 %v480
        %9225 = vmatprep.subr.mxu0 0.0
        %9226 = vmatpush1.msra.mxu0 %v481
        %9227 = vmatprep.subr.mxu0 0.0
        %9228 = vmatpush1.msra.mxu0 %v482
        %9229 = vmatprep.subr.mxu0 0.0
        %9230 = vmatpush1.msra.mxu0 %v483
        %9231 = vmatprep.subr.mxu0 0.0
        %9232 = vmatpush1.msra.mxu0 %v484
        %9233 = vmatprep.subr.mxu0 0.0
        %9234 = vmatpush1.msra.mxu0 %v485
        %9235 = vmatprep.subr.mxu0 0.0
        %9236 = vmatpush1.msra.mxu0 %v486
        %9237 = vmatprep.subr.mxu0 0.0
        %9238 = vmatpush1.msra.mxu0 %v487
        %9239 = vmatprep.subr.mxu0 0.0
        %9240 = vmatpush1.msra.mxu0 %v488
        %9241 = vmatprep.subr.mxu0 0.0
        %9242 = vmatpush1.msra.mxu0 %v489
        %9243 = vmatprep.subr.mxu0 0.0
        %9244 = vmatpush1.msra.mxu0 %v490
        %9245 = vmatprep.subr.mxu0 0.0
        %9246 = vmatpush1.msra.mxu0 %v491
        %9247 = vmatprep.subr.mxu0 0.0
        %9248 = vmatpush1.msra.mxu0 %v492
        %9249 = vmatprep.subr.mxu0 0.0
        %9250 = vmatpush1.msra.mxu0 %v493
        %9251 = vmatprep.subr.mxu0 0.0
        %9252 = vmatpush1.msra.mxu0 %v494
        %9253 = vmatprep.subr.mxu0 0.0
        %9254 = vmatpush1.msra.mxu0 %v495
        %9255 = vmatprep.subr.mxu0 0.0
        %9256 = vmatpush1.msra.mxu0 %v496
        %9257 = vmatprep.subr.mxu0 0.0
        %9258 = vmatpush1.msra.mxu0 %v497
        %9259 = vmatprep.mubr.f32.mxu0 %v9124
        %9260 = vmatmul.mubr.f32.gmra.mrb[0].mxu0 %v9123
        %v9261 = vpop.f32.mrb[0].mxu0
        %v9262 = vadd.f32 %v9192, %v9261
        %v9263 = vpop.f32.mrb[0].mxu0
        %9264 = vdwg.mxu0
        %v9266 = vsel %vm1280, %v9262, 0
        %9268 = vmatprep.subr.mxu0 %v1287
        %9269 = vmatpush1.msra.mxu0 %v1285
        %9270 = vmatprep.subr.mxu0 0.0
        %9271 = vmatpush1.msra.mxu0 0.0
        %9272 = vmatprep.subr.mxu0 0.0
        %9273 = vmatpush1.msra.mxu0 0.0
        %9274 = vmatprep.subr.mxu0 0.0
        %9275 = vmatpush1.msra.mxu0 0.0
        %9276 = vmatprep.subr.mxu0 0.0
        %9277 = vmatpush1.msra.mxu0 0.0
        %9278 = vmatprep.subr.mxu0 0.0
        %9279 = vmatpush1.msra.mxu0 0.0
        %9280 = vmatprep.subr.mxu0 0.0
        %9281 = vmatpush1.msra.mxu0 0.0
        %9282 = vmatprep.subr.mxu0 0.0
        %9283 = vmatpush1.msra.mxu0 0.0
        %9284 = vmatprep.subr.mxu0 0.0
        %9285 = vmatpush1.msra.mxu0 0.0
        %9286 = vmatprep.subr.mxu0 0.0
        %9287 = vmatpush1.msra.mxu0 0.0
        %9288 = vmatprep.subr.mxu0 0.0
        %9289 = vmatpush1.msra.mxu0 0.0
        %9290 = vmatprep.subr.mxu0 0.0
        %9291 = vmatpush1.msra.mxu0 0.0
        %9292 = vmatprep.subr.mxu0 0.0
        %9293 = vmatpush1.msra.mxu0 0.0
        %9294 = vmatprep.subr.mxu0 0.0
        %9295 = vmatpush1.msra.mxu0 0.0
        %9296 = vmatprep.subr.mxu0 0.0
        %9297 = vmatpush1.msra.mxu0 0.0
        %9298 = vmatprep.subr.mxu0 0.0
        %9299 = vmatpush1.msra.mxu0 0.0
        %9300 = vmatprep.subr.mxu0 0.0
        %9301 = vmatpush1.msra.mxu0 0.0
        %9302 = vmatprep.subr.mxu0 0.0
        %9303 = vmatpush1.msra.mxu0 0.0
        %9304 = vmatprep.subr.mxu0 0.0
        %9305 = vmatpush1.msra.mxu0 0.0
        %9306 = vmatprep.subr.mxu0 0.0
        %9307 = vmatpush1.msra.mxu0 0.0
        %9308 = vmatprep.subr.mxu0 0.0
        %9309 = vmatpush1.msra.mxu0 0.0
        %9310 = vmatprep.subr.mxu0 0.0
        %9311 = vmatpush1.msra.mxu0 0.0
        %9312 = vmatprep.subr.mxu0 0.0
        %9313 = vmatpush1.msra.mxu0 0.0
        %9314 = vmatprep.subr.mxu0 0.0
        %9315 = vmatpush1.msra.mxu0 0.0
        %9316 = vmatprep.subr.mxu0 0.0
        %9317 = vmatpush1.msra.mxu0 0.0
        %9318 = vmatprep.subr.mxu0 0.0
        %9319 = vmatpush1.msra.mxu0 0.0
        %9320 = vmatprep.subr.mxu0 0.0
        %9321 = vmatpush1.msra.mxu0 0.0
        %9322 = vmatprep.subr.mxu0 0.0
        %9323 = vmatpush1.msra.mxu0 0.0
        %9324 = vmatprep.subr.mxu0 0.0
        %9325 = vmatpush1.msra.mxu0 0.0
        %9326 = vmatprep.subr.mxu0 0.0
        %9327 = vmatpush1.msra.mxu0 0.0
        %9328 = vmatprep.subr.mxu0 0.0
        %9329 = vmatpush1.msra.mxu0 0.0
        %9330 = vmatprep.subr.mxu0 0.0
        %9331 = vmatpush1.msra.mxu0 0.0
        %9332 = vmatprep.mubr.f32.mxu0 0.0
        %9333 = vmatmul.mubr.f32.gmra.mrb[0].mxu0 %v9266
        %v9334 = vpop.f32.mrb[0].mxu0
        %v9335 = vadd.f32 0.0, %v9334
        %v9336 = vpop.f32.mrb[0].mxu0
        %v9337 = vadd.f32 0.0, %v9336
        %9338 = vdwg.mxu0
        %9339 = vmatprep.subr.mxu0 %v1291
        %9340 = vmatpush1.msra.mxu0 %v1289
        %9341 = vmatprep.subr.mxu0 0.0
        %9342 = vmatpush1.msra.mxu0 0.0
        %9343 = vmatprep.subr.mxu0 0.0
        %9344 = vmatpush1.msra.mxu0 0.0
        %9345 = vmatprep.subr.mxu0 0.0
        %9346 = vmatpush1.msra.mxu0 0.0
        %9347 = vmatprep.subr.mxu0 0.0
        %9348 = vmatpush1.msra.mxu0 0.0
        %9349 = vmatprep.subr.mxu0 0.0
        %9350 = vmatpush1.msra.mxu0 0.0
        %9351 = vmatprep.subr.mxu0 0.0
        %9352 = vmatpush1.msra.mxu0 0.0
        %9353 = vmatprep.subr.mxu0 0.0
        %9354 = vmatpush1.msra.mxu0 0.0
        %9355 = vmatprep.subr.mxu0 0.0
        %9356 = vmatpush1.msra.mxu0 0.0
        %9357 = vmatprep.subr.mxu0 0.0
        %9358 = vmatpush1.msra.mxu0 0.0
        %9359 = vmatprep.subr.mxu0 0.0
        %9360 = vmatpush1.msra.mxu0 0.0
        %9361 = vmatprep.subr.mxu0 0.0
        %9362 = vmatpush1.msra.mxu0 0.0
        %9363 = vmatprep.subr.mxu0 0.0
        %9364 = vmatpush1.msra.mxu0 0.0
        %9365 = vmatprep.subr.mxu0 0.0
        %9366 = vmatpush1.msra.mxu0 0.0
        %9367 = vmatprep.subr.mxu0 0.0
        %9368 = vmatpush1.msra.mxu0 0.0
        %9369 = vmatprep.subr.mxu0 0.0
        %9370 = vmatpush1.msra.mxu0 0.0
        %9371 = vmatprep.subr.mxu0 0.0
        %9372 = vmatpush1.msra.mxu0 0.0
        %9373 = vmatprep.subr.mxu0 0.0
        %9374 = vmatpush1.msra.mxu0 0.0
        %9375 = vmatprep.subr.mxu0 0.0
        %9376 = vmatpush1.msra.mxu0 0.0
        %9377 = vmatprep.subr.mxu0 0.0
        %9378 = vmatpush1.msra.mxu0 0.0
        %9379 = vmatprep.subr.mxu0 0.0
        %9380 = vmatpush1.msra.mxu0 0.0
        %9381 = vmatprep.subr.mxu0 0.0
        %9382 = vmatpush1.msra.mxu0 0.0
        %9383 = vmatprep.subr.mxu0 0.0
        %9384 = vmatpush1.msra.mxu0 0.0
        %9385 = vmatprep.subr.mxu0 0.0
        %9386 = vmatpush1.msra.mxu0 0.0
        %9387 = vmatprep.subr.mxu0 0.0
        %9388 = vmatpush1.msra.mxu0 0.0
        %9389 = vmatprep.subr.mxu0 0.0
        %9390 = vmatpush1.msra.mxu0 0.0
        %9391 = vmatprep.subr.mxu0 0.0
        %9392 = vmatpush1.msra.mxu0 0.0
        %9393 = vmatprep.subr.mxu0 0.0
        %9394 = vmatpush1.msra.mxu0 0.0
        %9395 = vmatprep.subr.mxu0 0.0
        %9396 = vmatpush1.msra.mxu0 0.0
        %9397 = vmatprep.subr.mxu0 0.0
        %9398 = vmatpush1.msra.mxu0 0.0
        %9399 = vmatprep.subr.mxu0 0.0
        %9400 = vmatpush1.msra.mxu0 0.0
        %9401 = vmatprep.subr.mxu0 0.0
        %9402 = vmatpush1.msra.mxu0 0.0
        %9403 = vmatprep.mubr.f32.mxu0 0.0
        %9404 = vmatmul.mubr.f32.gmra.mrb[0].mxu0 %v9266
        %v9405 = vpop.f32.mrb[0].mxu0
        %v9406 = vadd.f32 0.0, %v9405
        %v9407 = vpop.f32.mrb[0].mxu0
        %v9408 = vadd.f32 0.0, %v9407
        %9409 = vdwg.mxu0
        %v9410 = vmul.f32 %v9335, 0.125
        %v9411 = vmul.f32 %v9337, 0.125
        %v9412 = vmul.f32 %v9406, 0.125
        %v9413 = vmul.f32 %v9408, 0.125
        %v9414 = vmul.f32 %v9410, %v9410
        %v9415 = vmul.f32 %v9411, %v9411
        %v9416 = vmul.f32 %v9412, %v9412
        %v9417 = vmul.f32 %v9413, %v9413
        %v9422 = vrot.slane %v9414, 7
        %v9423 = vrot.slane %v9415, 7
        %v9424 = vrot.slane %v9416, 7
        %v9425 = vrot.slane %v9417, 7
        %v9430 = vsub.f32 %v9410, %v9422
        %v9431 = vsub.f32 %v9411, %v9423
        %v9432 = vsub.f32 %v9412, %v9424
        %v9433 = vsub.f32 %v9413, %v9425
        %v9434 = vlaneseq
        %v9435 = vshrl.u32 %v9434, 7
        %v9436 = vsub.s32 0, %v9435
        %v9437 = vrot.slane %v9410, %v9436
        %v9438 = vlaneseq
        %v9439 = vshrl.u32 %v9438, 7
        %v9440 = vsub.s32 0, %v9439
        %v9441 = vrot.slane %v9411, %v9440
        %v9442 = vlaneseq
        %v9443 = vshrl.u32 %v9442, 7
        %v9444 = vsub.s32 0, %v9443
        %v9445 = vrot.slane %v9412, %v9444
        %v9446 = vlaneseq
        %v9447 = vshrl.u32 %v9446, 7
        %v9448 = vsub.s32 0, %v9447
        %v9449 = vrot.slane %v9413, %v9448
        %v9450 = vsub.f32 %v9061, %v9437
        %v9451 = vsub.f32 %v9062, %v9441
        %v9452 = vsub.f32 %v9063, %v9445
        %v9453 = vsub.f32 %v9064, %v9449
        %v9454 = vadd.f32 %v9430, 1e-08
        %v9455 = vadd.f32 %v9431, 1e-08
        %v9456 = vadd.f32 %v9432, 1e-08
        %v9457 = vadd.f32 %v9433, 1e-08
        %v9458 = vrsqrt.pop %v9454
        %v9459 = vrsqrt.pop %v9455
        %v9460 = vrsqrt.pop %v9456
        %v9461 = vrsqrt.pop %v9457
        %v9462 = vlaneseq
        %v9463 = vshrl.u32 %v9462, 7
        %v9464 = vsub.s32 1, %v9463
        %v9465 = vrot.slane %v9458, %v9464
        %v9466 = vlaneseq
        %v9467 = vshrl.u32 %v9466, 7
        %v9468 = vsub.s32 1, %v9467
        %v9469 = vrot.slane %v9459, %v9468
        %v9470 = vlaneseq
        %v9471 = vshrl.u32 %v9470, 7
        %v9472 = vsub.s32 1, %v9471
        %v9473 = vrot.slane %v9460, %v9472
        %v9474 = vlaneseq
        %v9475 = vshrl.u32 %v9474, 7
        %v9476 = vsub.s32 1, %v9475
        %v9477 = vrot.slane %v9461, %v9476
        %v9478 = vmul.f32 %v9450, %v9465
        %v9479 = vmul.f32 %v9451, %v9469
        %v9480 = vmul.f32 %v9452, %v9473
        %v9481 = vmul.f32 %v9453, %v9477
        %9482 = vset.pattern.permute.xlu0 45
        %9483 = vperm.xlu0 %9482, %v431
        %v9484 = vpop.permute.xlu0 %9483
        %v9486 = vmul.f32 %v9478, %v9484
        %v9487 = vmul.f32 %v9479, %v9484
        %v9488 = vmul.f32 %v9480, %v9484
        %v9489 = vmul.f32 %v9481, %v9484
        %9490 = vset.pattern.permute.xlu0 46
        %9491 = vperm.xlu0 %9490, %v431
        %v9492 = vpop.permute.xlu0 %9491
        %v9494 = vadd.f32 %v9486, %v9492
        %v9495 = vadd.f32 %v9487, %v9492
        %v9496 = vadd.f32 %v9488, %v9492
        %v9497 = vadd.f32 %v9489, %v9492
        %s9498 = scalar_lea.vmem %s5, 24
        %v9499 = vld [vmem:[%s9498] sm:$0xff]
        %9500 = vset.pattern.permute.xlu0 47
        %9501 = vperm.xlu0 %9500, %v431
        %v9502 = vpop.permute.xlu0 %9501
        %v9505 = vsel %vm535, %v9499, 0
        %9507 = vmatprep.subr.mxu0 %v9495
        %9508 = vmatpush1.msra.mxu0 %v9494
        %9509 = vmatprep.subr.mxu0 0.0
        %9510 = vmatpush1.msra.mxu0 0.0
        %9511 = vmatprep.subr.mxu0 0.0
        %9512 = vmatpush1.msra.mxu0 0.0
        %9513 = vmatprep.subr.mxu0 0.0
        %9514 = vmatpush1.msra.mxu0 0.0
        %9515 = vmatprep.subr.mxu0 0.0
        %9516 = vmatpush1.msra.mxu0 0.0
        %9517 = vmatprep.subr.mxu0 0.0
        %9518 = vmatpush1.msra.mxu0 0.0
        %9519 = vmatprep.subr.mxu0 0.0
        %9520 = vmatpush1.msra.mxu0 0.0
        %9521 = vmatprep.subr.mxu0 0.0
        %9522 = vmatpush1.msra.mxu0 0.0
        %9523 = vmatprep.subr.mxu0 0.0
        %9524 = vmatpush1.msra.mxu0 0.0
        %9525 = vmatprep.subr.mxu0 0.0
        %9526 = vmatpush1.msra.mxu0 0.0
        %9527 = vmatprep.subr.mxu0 0.0
        %9528 = vmatpush1.msra.mxu0 0.0
        %9529 = vmatprep.subr.mxu0 0.0
        %9530 = vmatpush1.msra.mxu0 0.0
        %9531 = vmatprep.subr.mxu0 0.0
        %9532 = vmatpush1.msra.mxu0 0.0
        %9533 = vmatprep.subr.mxu0 0.0
        %9534 = vmatpush1.msra.mxu0 0.0
        %9535 = vmatprep.subr.mxu0 0.0
        %9536 = vmatpush1.msra.mxu0 0.0
        %9537 = vmatprep.subr.mxu0 0.0
        %9538 = vmatpush1.msra.mxu0 0.0
        %9539 = vmatprep.subr.mxu0 0.0
        %9540 = vmatpush1.msra.mxu0 0.0
        %9541 = vmatprep.subr.mxu0 0.0
        %9542 = vmatpush1.msra.mxu0 0.0
        %9543 = vmatprep.subr.mxu0 0.0
        %9544 = vmatpush1.msra.mxu0 0.0
        %9545 = vmatprep.subr.mxu0 0.0
        %9546 = vmatpush1.msra.mxu0 0.0
        %9547 = vmatprep.subr.mxu0 0.0
        %9548 = vmatpush1.msra.mxu0 0.0
        %9549 = vmatprep.subr.mxu0 0.0
        %9550 = vmatpush1.msra.mxu0 0.0
        %9551 = vmatprep.subr.mxu0 0.0
        %9552 = vmatpush1.msra.mxu0 0.0
        %9553 = vmatprep.subr.mxu0 0.0
        %9554 = vmatpush1.msra.mxu0 0.0
        %9555 = vmatprep.subr.mxu0 0.0
        %9556 = vmatpush1.msra.mxu0 0.0
        %9557 = vmatprep.subr.mxu0 0.0
        %9558 = vmatpush1.msra.mxu0 0.0
        %9559 = vmatprep.subr.mxu0 0.0
        %9560 = vmatpush1.msra.mxu0 0.0
        %9561 = vmatprep.subr.mxu0 0.0
        %9562 = vmatpush1.msra.mxu0 0.0
        %9563 = vmatprep.subr.mxu0 0.0
        %9564 = vmatpush1.msra.mxu0 0.0
        %9565 = vmatprep.subr.mxu0 0.0
        %9566 = vmatpush1.msra.mxu0 0.0
        %9567 = vmatprep.subr.mxu0 0.0
        %9568 = vmatpush1.msra.mxu0 0.0
        %9569 = vmatprep.subr.mxu0 0.0
        %9570 = vmatpush1.msra.mxu0 0.0
        %9571 = vmatprep.mubr.f32.mxu0 0.0
        %9572 = vmatmul.mubr.f32.gmra.mrb[0].mxu0 %v9505
        %v9573 = vpop.f32.mrb[0].mxu0
        %v9574 = vadd.f32 %v9502, %v9573
        %v9575 = vpop.f32.mrb[0].mxu0
        %v9576 = vadd.f32 %v9502, %v9575
        %9577 = vdwg.mxu0
        %9578 = vmatprep.subr.mxu0 %v9497
        %9579 = vmatpush1.msra.mxu0 %v9496
        %9580 = vmatprep.subr.mxu0 0.0
        %9581 = vmatpush1.msra.mxu0 0.0
        %9582 = vmatprep.subr.mxu0 0.0
        %9583 = vmatpush1.msra.mxu0 0.0
        %9584 = vmatprep.subr.mxu0 0.0
        %9585 = vmatpush1.msra.mxu0 0.0
        %9586 = vmatprep.subr.mxu0 0.0
        %9587 = vmatpush1.msra.mxu0 0.0
        %9588 = vmatprep.subr.mxu0 0.0
        %9589 = vmatpush1.msra.mxu0 0.0
        %9590 = vmatprep.subr.mxu0 0.0
        %9591 = vmatpush1.msra.mxu0 0.0
        %9592 = vmatprep.subr.mxu0 0.0
        %9593 = vmatpush1.msra.mxu0 0.0
        %9594 = vmatprep.subr.mxu0 0.0
        %9595 = vmatpush1.msra.mxu0 0.0
        %9596 = vmatprep.subr.mxu0 0.0
        %9597 = vmatpush1.msra.mxu0 0.0
        %9598 = vmatprep.subr.mxu0 0.0
        %9599 = vmatpush1.msra.mxu0 0.0
        %9600 = vmatprep.subr.mxu0 0.0
        %9601 = vmatpush1.msra.mxu0 0.0
        %9602 = vmatprep.subr.mxu0 0.0
        %9603 = vmatpush1.msra.mxu0 0.0
        %9604 = vmatprep.subr.mxu0 0.0
        %9605 = vmatpush1.msra.mxu0 0.0
        %9606 = vmatprep.subr.mxu0 0.0
        %9607 = vmatpush1.msra.mxu0 0.0
        %9608 = vmatprep.subr.mxu0 0.0
        %9609 = vmatpush1.msra.mxu0 0.0
        %9610 = vmatprep.subr.mxu0 0.0
        %9611 = vmatpush1.msra.mxu0 0.0
        %9612 = vmatprep.subr.mxu0 0.0
        %9613 = vmatpush1.msra.mxu0 0.0
        %9614 = vmatprep.subr.mxu0 0.0
        %9615 = vmatpush1.msra.mxu0 0.0
        %9616 = vmatprep.subr.mxu0 0.0
        %9617 = vmatpush1.msra.mxu0 0.0
        %9618 = vmatprep.subr.mxu0 0.0
        %9619 = vmatpush1.msra.mxu0 0.0
        %9620 = vmatprep.subr.mxu0 0.0
        %9621 = vmatpush1.msra.mxu0 0.0
        %9622 = vmatprep.subr.mxu0 0.0
        %9623 = vmatpush1.msra.mxu0 0.0
        %9624 = vmatprep.subr.mxu0 0.0
        %9625 = vmatpush1.msra.mxu0 0.0
        %9626 = vmatprep.subr.mxu0 0.0
        %9627 = vmatpush1.msra.mxu0 0.0
        %9628 = vmatprep.subr.mxu0 0.0
        %9629 = vmatpush1.msra.mxu0 0.0
        %9630 = vmatprep.subr.mxu0 0.0
        %9631 = vmatpush1.msra.mxu0 0.0
        %9632 = vmatprep.subr.mxu0 0.0
        %9633 = vmatpush1.msra.mxu0 0.0
        %9634 = vmatprep.subr.mxu0 0.0
        %9635 = vmatpush1.msra.mxu0 0.0
        %9636 = vmatprep.subr.mxu0 0.0
        %9637 = vmatpush1.msra.mxu0 0.0
        %9638 = vmatprep.subr.mxu0 0.0
        %9639 = vmatpush1.msra.mxu0 0.0
        %9640 = vmatprep.subr.mxu0 0.0
        %9641 = vmatpush1.msra.mxu0 0.0
        %9642 = vmatprep.mubr.f32.mxu0 0.0
        %9643 = vmatmul.mubr.f32.gmra.mrb[0].mxu0 %v9505
        %v9644 = vpop.f32.mrb[0].mxu0
        %v9645 = vadd.f32 %v9502, %v9644
        %v9646 = vpop.f32.mrb[0].mxu0
        %v9647 = vadd.f32 %v9502, %v9646
        %9648 = vdwg.mxu0
        %v9649 = vadd.f32 %v8378, %v9574
        %v9650 = vadd.f32 %v8379, %v9576
        %v9651 = vadd.f32 %v8380, %v9645
        %v9652 = vadd.f32 %v8381, %v9647
        %v9653 = vsel %vm1071, %v9649, 0.0
        %v9654 = vsel %vm1072, %v9650, 0.0
        %v9655 = vsel %vm1073, %v9651, 0.0
        %v9656 = vsel %vm1074, %v9652, 0.0
        %9657 = vst [vmem:[%s429] sm:$0xff] %v9653
        %9658 = vst [vmem:[%s429 + $0x8] sm:$0xff] %v9654
        %9659 = vst [vmem:[%s429 + $0x10] sm:$0xff] %v9655
        %9660 = vst [vmem:[%s429 + $0x18] sm:$0xff] %v9656
        %s9661 = smul.u32 4, %s24
        %p9662 = scmp.lt.s32.totalorder %s9661, 7
        %s9663 = scalar_select %p9662, %s9661, 7
        %s9664 = smul.addr %s9663, 8
        %s9665 = scalar_lea.vmem %s12, %s9664
        // Predicated region
        $region73: #{_lambda_.1} parent=67 // pred_check
          %p9666 = pneg %p299
        $region74: #{_lambda_.1} parent=67 // pred_check_branch
          %9668 = sbr.rel (%p9666) target = $region76
        $region75: #{_lambda_.1} parent=67 // pred_region
          %s9669 = smul.u32 4, %s24
        $region76: #{_lambda_.1} parent=67 // pred_fallthru
          _
      $region68: #{_lambda_.1} parent=5 // pred_fallthru
        _
      %p9670 = scmp.le.s32.totalorder 2, %s19
      // Predicated region
      $region77: #{_lambda_.1} parent=5 // pred_check
        %p9671 = pneg %p9670
      $region78: #{_lambda_.1} parent=5 // pred_check_branch
        %9673 = sbr.rel (%p9671) target = $region80
      $region79: #{_lambda_.1} parent=5 // pred_region
        %s9674 = ssub.s32 %s19, 2
        // Predicated region
        $region81: #{_lambda_.1} parent=79 // pred_check
          %p9675 = pneg %p305
        $region82: #{_lambda_.1} parent=79 // pred_check_branch
          %9677 = sbr.rel (%p9675) target = $region84
        $region83: #{_lambda_.1} parent=79 // pred_region
          %s9678 = smul.u32 4, %s25
          %p9679 = scmp.lt.s32.totalorder %s9678, 7
          %s9680 = scalar_select %p9679, %s9678, 7
          %s9681 = smul.addr %s9680, 8
          %s9682 = scalar_lea.vmem %s12, %s9681
        $region84: #{_lambda_.1} parent=79 // pred_fallthru
          _
      $region80: #{_lambda_.1} parent=5 // pred_fallthru
        _
    $region6: #{_lambda_.1} parent=1 // loop_footer
      %s23 = sadd.s32 1, %s19
    $region7: #{_lambda_.1} parent=1 // loop_footer_branch
      %18 = sbr.rel target = $region3
    $region8: #{_lambda_.1} parent=1 // loop_exit
      _
    %9683 = vsyncpa [#allocation4], 1
    %s9684 = scalar_lea.sflag [#allocation4], 1
    %9685 = vsyncpa %s9684, 1

</llo_original>
